<compile_context>
chip_gen: v7x
topology: tpu7x:2x2x1
jax: 0.10.0
libtpu: 0.0.40
codegen_flags: <defaults>
</compile_context>

<pallas_src>
import functools

import jax
import jax.numpy as jnp
from jax import lax
from jax.experimental import pallas as pl
from jax.experimental.pallas import tpu as pltpu

_LANE = 128       # vreg lane width
_ACC_ROWS = 64    # accumulator slab rows (8 f32 vregs -> independent acc chains)
_CHUNK = 512      # rows per inner-loop sub-slab (bounds vreg live ranges)


def _round_up(n, m):
    return ((n + m - 1) // m) * m


def _num_tensorcores():
    """Best-effort TensorCore count (2 on v7x, 1 on v5e/v6e); safe fallback 1."""
    try:
        info = pltpu.get_tpu_info()
        for attr in ("num_tensorcores", "tensorcores_per_chip", "num_cores",
                     "core_count"):
            v = getattr(info, attr, None)
            if isinstance(v, int) and v > 0:
                return v
    except Exception:
        pass
    try:
        if "v7" in jax.devices()[0].device_kind.lower():
            return 2
    except Exception:
        pass
    return 1


def _vmem_capacity_bytes():
    """Best-effort physical VMEM size; conservative 64 MiB fallback."""
    try:
        info = pltpu.get_tpu_info()
        v = getattr(info, "vmem_capacity_bytes", None)
        if isinstance(v, int) and v > 0:
            return v
    except Exception:
        pass
    try:
        if "v7" in jax.devices()[0].device_kind.lower():
            return 64 << 20
        return 128 << 20
    except Exception:
        pass
    return 64 << 20


def _mse_partial_kernel(x_ref, t_ref, part_ref, *, rows, block_rows,
                        blocks_per_core, chunk_rows, acc_rows):
    """Accumulate per-(row-slot, lane) partial sums of (x - t)^2 into part_ref.

    Grid: (core, step). part_ref is this core's (acc_rows, 128) partial-sum
    slab; it stays VMEM-resident across the "arbitrary" step axis.
    """
    c = pl.program_id(0)
    s = pl.program_id(1)

    @pl.when(s == 0)
    def _():
        part_ref[...] = jnp.zeros_like(part_ref)

    lb = c * blocks_per_core + s          # logical (unclamped) block index
    row0 = lb * block_rows                # first global row of this block
    n_chunks = block_rows // chunk_rows   # static

    def _chunk_sq(i):
        r = pl.multiple_of(i * chunk_rows, chunk_rows)
        d = (x_ref[pl.ds(r, chunk_rows), :].astype(jnp.float32)
             - t_ref[pl.ds(r, chunk_rows), :].astype(jnp.float32))
        return r, d * d

    is_full = row0 + block_rows <= rows

    @pl.when(is_full)
    def _():
        # Steady state: pure sub/mul/acc, no masking on the hot path.
        def body(i, carry):
            _, sq = _chunk_sq(i)
            part_ref[...] += sq.reshape(-1, acc_rows, _LANE).sum(axis=0)
            return carry
        lax.fori_loop(0, n_chunks, body, 0, unroll=True)

    @pl.when(jnp.logical_not(is_full))
    def _():
        # Partial last block, or a fully out-of-range clamped duplicate block
        # on the trailing core: select-zero rows past the valid extent
        # (select, not multiply, so padded NaN/Inf cannot propagate).
        def body(i, carry):
            r, sq = _chunk_sq(i)
            gids = row0 + r + lax.broadcasted_iota(jnp.int32, sq.shape, 0)
            sq = jnp.where(gids < rows, sq, 0.0)
            part_ref[...] += sq.reshape(-1, acc_rows, _LANE).sum(axis=0)
            return carry
        lax.fori_loop(0, n_chunks, body, 0, unroll=True)


def content_loss(x, target, *, target_tile_bytes=4 << 20,
                 min_pallas_bytes=1 << 20):
    """ContentLoss.forward: returns (input_passthrough, mse_loss(x, target))."""
    assert x.shape == target.shape, "input/target shape mismatch"
    n_total = x.size

    xf = x.reshape(-1)
    tf = target.reshape(-1)
    itemsize = jnp.dtype(x.dtype).itemsize

    rows = n_total // _LANE
    main = rows * _LANE
    main_bytes = main * itemsize

    # Tiny feature maps: kernel launch + pipeline prime dominate; XLA's fused
    # reduction is already optimal there.
    if main_bytes < min_pallas_bytes:
        d = xf.astype(jnp.float32) - tf.astype(jnp.float32)
        return x, jnp.sum(d * d) / jnp.float32(n_total)

    # Sub-128 remainder: tiny plain-JAX tail sum (no padding copies in HBM).
    if main != n_total:
        dt = xf[main:].astype(jnp.float32) - tf[main:].astype(jnp.float32)
        tail_sum = jnp.sum(dt * dt)
    else:
        tail_sum = jnp.float32(0.0)

    xm = xf[:main].reshape(rows, _LANE)
    tm = tf[:main].reshape(rows, _LANE)

    # Dtype-scaled ~4 MiB tile (8192 rows f32, 16384 rows bf16), a multiple of
    # _CHUNK so the in-kernel sub-slab loop divides evenly; capped at the
    # chunk-rounded problem size.
    block_rows = max(_CHUNK,
                     (target_tile_bytes // (_LANE * itemsize)) // _CHUNK * _CHUNK)
    block_rows = min(block_rows, _round_up(rows, _CHUNK))

    total_blocks = pl.cdiv(rows, block_rows)
    num_cores = _num_tensorcores() if total_blocks > 1 else 1
    num_cores = max(1, min(num_cores, total_blocks))
    blocks_per_core = pl.cdiv(total_blocks, num_cores)

    def in_index_map(c, s):
        # Clamp so fully-masked (out-of-range) grid points still DMA a valid
        # block; the kernel masks their contribution to zero.
        return (jnp.minimum(c * blocks_per_core + s, total_blocks - 1), 0)

    # Generation-aware scoped-VMEM cap: 48 MiB on 64 MiB-VMEM parts (v7x),
    # 96 MiB on 128 MiB parts (v5e/v6e). 6x tile leaves room for deeper
    # buffering sweeps; 2 inputs x 2 pipeline buffers is the baseline need.
    tile_bytes = block_rows * _LANE * itemsize
    ceiling = (48 << 20) if _vmem_capacity_bytes() <= (64 << 20) else (96 << 20)
    vmem_limit = int(min(max(6 * tile_bytes + (2 << 20), 32 << 20), ceiling))

    kernel = functools.partial(
        _mse_partial_kernel,
        rows=rows,
        block_rows=block_rows,
        blocks_per_core=blocks_per_core,
        chunk_rows=_CHUNK,
        acc_rows=_ACC_ROWS,
    )

    partials = pl.pallas_call(
        kernel,
        out_shape=jax.ShapeDtypeStruct((num_cores, _ACC_ROWS, _LANE), jnp.float32),
        grid=(num_cores, blocks_per_core),
        in_specs=[
            pl.BlockSpec((block_rows, _LANE), in_index_map),
            pl.BlockSpec((block_rows, _LANE), in_index_map),
        ],
        out_specs=pl.BlockSpec((None, _ACC_ROWS, _LANE), lambda c, s: (c, 0, 0)),
        compiler_params=pltpu.CompilerParams(
            dimension_semantics=("parallel", "arbitrary"),
            vmem_limit_bytes=vmem_limit,
        ),
        cost_estimate=pl.CostEstimate(
            flops=3 * main,
            transcendentals=0,
            bytes_accessed=2 * main * itemsize,
        ),
    )(xm, tm)

    loss = (jnp.sum(partials) + tail_sum) / jnp.float32(n_total)
    # forward() returns the input unchanged; the loss is a side value.
    return x, loss


if __name__ == "__main__":
    key = jax.random.PRNGKey(0)
    keys = jax.random.split(key, 10)

    # 1) Small NCHW feature map (consistent with a conv content loss):
    #    exercises the plain-JAX small-input fallback.
    x_s = jax.random.normal(keys[0], (2, 4, 16, 16), dtype=jnp.float32)
    t_s = jax.random.normal(keys[1], (2, 4, 16, 16), dtype=jnp.float32)
    out_s, loss_s = content_loss(x_s, t_s)
    jax.block_until_ready((out_s, loss_s))
    ref_s = jnp.mean((x_s - t_s) ** 2)
    assert out_s.shape == x_s.shape and jnp.allclose(out_s, x_s)
    assert jnp.allclose(loss_s, ref_s, rtol=1e-5, atol=1e-6), (loss_s, ref_s)

    # 2) Pallas path: single exactly-full block (unmasked steady-state branch).
    x1 = jax.random.normal(keys[2], (2, 16, 128, 128), dtype=jnp.float32)
    t1 = jax.random.normal(keys[3], (2, 16, 128, 128), dtype=jnp.float32)
    out1, loss1 = content_loss(x1, t1)
    jax.block_until_ready((out1, loss1))
    ref1 = jnp.mean((x1 - t1) ** 2)
    assert jnp.allclose(out1, x1), "pass-through mismatch"
    assert jnp.allclose(loss1, ref1, rtol=1e-5, atol=1e-7), (loss1, ref1)

    # 3) Pallas path: multi-block accumulation + partial last block (+ clamped
    #    out-of-range block on the trailing core, if two TCs are detected).
    x2 = jax.random.normal(keys[4], (2, 16, 130, 128), dtype=jnp.float32)
    t2 = jax.random.normal(keys[5], (2, 16, 130, 128), dtype=jnp.float32)
    out2, loss2 = content_loss(x2, t2, target_tile_bytes=1 << 20)
    jax.block_until_ready((out2, loss2))
    ref2 = jnp.mean((x2 - t2) ** 2)
    assert jnp.allclose(loss2, ref2, rtol=1e-5, atol=1e-7), (loss2, ref2)

    # 4) Pallas path, odd sizes: in-kernel row mask + sub-128 plain-JAX tail.
    x3 = jax.random.normal(keys[6], (4, 16, 67, 67), dtype=jnp.float32)
    t3 = jax.random.normal(keys[7], (4, 16, 67, 67), dtype=jnp.float32)
    out3, loss3 = content_loss(x3, t3)
    jax.block_until_ready((out3, loss3))
    ref3 = jnp.mean((x3 - t3) ** 2)
    assert jnp.allclose(loss3, ref3, rtol=1e-5, atol=1e-7), (loss3, ref3)

    # 5) bf16 inputs: dtype-scaled tile sizing, in-kernel f32 accumulation.
    x4 = jax.random.normal(keys[8], (2, 16, 130, 128), dtype=jnp.bfloat16)
    t4 = jax.random.normal(keys[9], (2, 16, 130, 128), dtype=jnp.bfloat16)
    out4, loss4 = content_loss(x4, t4)
    jax.block_until_ready((out4, loss4))
    ref4 = jnp.mean((x4.astype(jnp.float32) - t4.astype(jnp.float32)) ** 2)
    assert out4.dtype == x4.dtype
    assert jnp.allclose(loss4, ref4, rtol=1e-5, atol=1e-6), (loss4, ref4)

    print("KERNEL_OK")
</pallas_src>

<mosaic_0001>
module attributes {stable_mosaic.version = 11 : i64} {
  func.func @_mse_partial_kernel(%arg0: i32, %arg1: i32, %arg2: memref<4096x128xf32, #tpu.memory_space<vmem>>, %arg3: memref<4096x128xf32, #tpu.memory_space<vmem>>, %arg4: memref<1x64x128xf32, #tpu.memory_space<vmem>>) attributes {dimension_semantics = [#tpu.dimension_semantics<parallel>, #tpu.dimension_semantics<arbitrary>], iteration_bounds = array<i64: 1, 1>, scalar_prefetch = 0 : i64, scratch_operands = 0 : i64, tpu.core_type = #tpu.core_type<tc>, window_params = [{transform_indices = @transform_0, window_bounds = array<i64: 4096, 128>}, {transform_indices = @transform_1, window_bounds = array<i64: 4096, 128>}, {transform_indices = @transform_2, window_bounds = array<i64: 1, 64, 128>}]} {
    %c0_i32 = arith.constant 0 : i32
    %0 = arith.cmpi eq, %arg1, %c0_i32 : i32
    %1 = arith.extui %0 : i1 to i32
    %c0_i32_0 = arith.constant 0 : i32
    %2 = arith.cmpi ne, %1, %c0_i32_0 : i32
    scf.if %2 {
      %cst = arith.constant 0.000000e+00 : f32
      %13 = vector.broadcast %cst : f32 to vector<64x128xf32>
      %c0 = arith.constant 0 : index
      %c0_5 = arith.constant 0 : index
      %c0_6 = arith.constant 0 : index
      %14 = vector.load %arg4[%c0, %c0_5, %c0_6] : memref<1x64x128xf32, #tpu.memory_space<vmem>>, vector<1x64x128xf32>
      %15 = vector.shape_cast %14 : vector<1x64x128xf32> to vector<64x128xf32>
      %16 = vector.shape_cast %13 : vector<64x128xf32> to vector<1x64x128xf32>
      tpu.vector_store %arg4[%c0, %c0_5, %c0_6], %16 {strides = array<i32>} : memref<1x64x128xf32, #tpu.memory_space<vmem>>, vector<1x64x128xf32>,
    } else {
    }
    %c1_i32 = arith.constant 1 : i32
    %3 = arith.muli %arg0, %c1_i32 : i32
    %4 = arith.addi %3, %arg1 : i32
    %c4096_i32 = arith.constant 4096 : i32
    %5 = arith.muli %4, %c4096_i32 : i32
    %c4096_i32_1 = arith.constant 4096 : i32
    %6 = arith.addi %5, %c4096_i32_1 : i32
    %c4096_i32_2 = arith.constant 4096 : i32
    %7 = arith.cmpi sle, %6, %c4096_i32_2 : i32
    %8 = arith.extui %7 : i1 to i32
    %c0_i32_3 = arith.constant 0 : i32
    %9 = arith.cmpi ne, %8, %c0_i32_3 : i32
    scf.if %9 {
      %c0_i32_5 = arith.constant 0 : i32
      %c512_i32 = arith.constant 512 : i32
      %13 = arith.muli %c0_i32_5, %c512_i32 : i32
      %14 = tpu.assume_multiple %13, 512 : i32
      %15 = arith.index_cast %14 : i32 to index
      %c0 = arith.constant 0 : index
      %16 = vector.load %arg2[%15, %c0] : memref<4096x128xf32, #tpu.memory_space<vmem>>, vector<512x128xf32>
      %17 = arith.index_cast %14 : i32 to index
      %c0_6 = arith.constant 0 : index
      %18 = vector.load %arg3[%17, %c0_6] : memref<4096x128xf32, #tpu.memory_space<vmem>>, vector<512x128xf32>
      %19 = arith.subf %16, %18 : vector<512x128xf32>
      %20 = arith.mulf %19, %19 : vector<512x128xf32>
      %c0_7 = arith.constant 0 : index
      %c0_8 = arith.constant 0 : index
      %c0_9 = arith.constant 0 : index
      %21 = vector.load %arg4[%c0_7, %c0_8, %c0_9] : memref<1x64x128xf32, #tpu.memory_space<vmem>>, vector<1x64x128xf32>
      %22 = vector.shape_cast %21 : vector<1x64x128xf32> to vector<64x128xf32>
      %23 = vector.shape_cast %20 : vector<512x128xf32> to vector<8x64x128xf32>
      %cst = arith.constant dense<0.000000e+00> : vector<64x128xf32>
      %24 = vector.multi_reduction <add>, %23, %cst [0] : vector<8x64x128xf32> to vector<64x128xf32>
      %25 = arith.addf %22, %24 : vector<64x128xf32>
      %c0_10 = arith.constant 0 : index
      %c0_11 = arith.constant 0 : index
      %c0_12 = arith.constant 0 : index
      %26 = vector.load %arg4[%c0_10, %c0_11, %c0_12] : memref<1x64x128xf32, #tpu.memory_space<vmem>>, vector<1x64x128xf32>
      %27 = vector.shape_cast %26 : vector<1x64x128xf32> to vector<64x128xf32>
      %28 = vector.shape_cast %25 : vector<64x128xf32> to vector<1x64x128xf32>
      tpu.vector_store %arg4[%c0_10, %c0_11, %c0_12], %28 {strides = array<i32>} : memref<1x64x128xf32, #tpu.memory_space<vmem>>, vector<1x64x128xf32>,
      %c1_i32_13 = arith.constant 1 : i32
      %c512_i32_14 = arith.constant 512 : i32
      %29 = arith.muli %c1_i32_13, %c512_i32_14 : i32
      %30 = tpu.assume_multiple %29, 512 : i32
      %31 = arith.index_cast %30 : i32 to index
      %c0_15 = arith.constant 0 : index
      %32 = vector.load %arg2[%31, %c0_15] : memref<4096x128xf32, #tpu.memory_space<vmem>>, vector<512x128xf32>
      %33 = arith.index_cast %30 : i32 to index
      %c0_16 = arith.constant 0 : index
      %34 = vector.load %arg3[%33, %c0_16] : memref<4096x128xf32, #tpu.memory_space<vmem>>, vector<512x128xf32>
      %35 = arith.subf %32, %34 : vector<512x128xf32>
      %36 = arith.mulf %35, %35 : vector<512x128xf32>
      %c0_17 = arith.constant 0 : index
      %c0_18 = arith.constant 0 : index
      %c0_19 = arith.constant 0 : index
      %37 = vector.load %arg4[%c0_17, %c0_18, %c0_19] : memref<1x64x128xf32, #tpu.memory_space<vmem>>, vector<1x64x128xf32>
      %38 = vector.shape_cast %37 : vector<1x64x128xf32> to vector<64x128xf32>
      %39 = vector.shape_cast %36 : vector<512x128xf32> to vector<8x64x128xf32>
      %cst_20 = arith.constant dense<0.000000e+00> : vector<64x128xf32>
      %40 = vector.multi_reduction <add>, %39, %cst_20 [0] : vector<8x64x128xf32> to vector<64x128xf32>
      %41 = arith.addf %38, %40 : vector<64x128xf32>
      %c0_21 = arith.constant 0 : index
      %c0_22 = arith.constant 0 : index
      %c0_23 = arith.constant 0 : index
      %42 = vector.load %arg4[%c0_21, %c0_22, %c0_23] : memref<1x64x128xf32, #tpu.memory_space<vmem>>, vector<1x64x128xf32>
      %43 = vector.shape_cast %42 : vector<1x64x128xf32> to vector<64x128xf32>
      %44 = vector.shape_cast %41 : vector<64x128xf32> to vector<1x64x128xf32>
      tpu.vector_store %arg4[%c0_21, %c0_22, %c0_23], %44 {strides = array<i32>} : memref<1x64x128xf32, #tpu.memory_space<vmem>>, vector<1x64x128xf32>,
      %c2_i32 = arith.constant 2 : i32
      %c512_i32_24 = arith.constant 512 : i32
      %45 = arith.muli %c2_i32, %c512_i32_24 : i32
      %46 = tpu.assume_multiple %45, 512 : i32
      %47 = arith.index_cast %46 : i32 to index
      %c0_25 = arith.constant 0 : index
      %48 = vector.load %arg2[%47, %c0_25] : memref<4096x128xf32, #tpu.memory_space<vmem>>, vector<512x128xf32>
      %49 = arith.index_cast %46 : i32 to index
      %c0_26 = arith.constant 0 : index
      %50 = vector.load %arg3[%49, %c0_26] : memref<4096x128xf32, #tpu.memory_space<vmem>>, vector<512x128xf32>
      %51 = arith.subf %48, %50 : vector<512x128xf32>
      %52 = arith.mulf %51, %51 : vector<512x128xf32>
      %c0_27 = arith.constant 0 : index
      %c0_28 = arith.constant 0 : index
      %c0_29 = arith.constant 0 : index
      %53 = vector.load %arg4[%c0_27, %c0_28, %c0_29] : memref<1x64x128xf32, #tpu.memory_space<vmem>>, vector<1x64x128xf32>
      %54 = vector.shape_cast %53 : vector<1x64x128xf32> to vector<64x128xf32>
      %55 = vector.shape_cast %52 : vector<512x128xf32> to vector<8x64x128xf32>
      %cst_30 = arith.constant dense<0.000000e+00> : vector<64x128xf32>
      %56 = vector.multi_reduction <add>, %55, %cst_30 [0] : vector<8x64x128xf32> to vector<64x128xf32>
      %57 = arith.addf %54, %56 : vector<64x128xf32>
      %c0_31 = arith.constant 0 : index
      %c0_32 = arith.constant 0 : index
      %c0_33 = arith.constant 0 : index
      %58 = vector.load %arg4[%c0_31, %c0_32, %c0_33] : memref<1x64x128xf32, #tpu.memory_space<vmem>>, vector<1x64x128xf32>
      %59 = vector.shape_cast %58 : vector<1x64x128xf32> to vector<64x128xf32>
      %60 = vector.shape_cast %57 : vector<64x128xf32> to vector<1x64x128xf32>
      tpu.vector_store %arg4[%c0_31, %c0_32, %c0_33], %60 {strides = array<i32>} : memref<1x64x128xf32, #tpu.memory_space<vmem>>, vector<1x64x128xf32>,
      %c3_i32 = arith.constant 3 : i32
      %c512_i32_34 = arith.constant 512 : i32
      %61 = arith.muli %c3_i32, %c512_i32_34 : i32
      %62 = tpu.assume_multiple %61, 512 : i32
      %63 = arith.index_cast %62 : i32 to index
      %c0_35 = arith.constant 0 : index
      %64 = vector.load %arg2[%63, %c0_35] : memref<4096x128xf32, #tpu.memory_space<vmem>>, vector<512x128xf32>
      %65 = arith.index_cast %62 : i32 to index
      %c0_36 = arith.constant 0 : index
      %66 = vector.load %arg3[%65, %c0_36] : memref<4096x128xf32, #tpu.memory_space<vmem>>, vector<512x128xf32>
      %67 = arith.subf %64, %66 : vector<512x128xf32>
      %68 = arith.mulf %67, %67 : vector<512x128xf32>
      %c0_37 = arith.constant 0 : index
      %c0_38 = arith.constant 0 : index
      %c0_39 = arith.constant 0 : index
      %69 = vector.load %arg4[%c0_37, %c0_38, %c0_39] : memref<1x64x128xf32, #tpu.memory_space<vmem>>, vector<1x64x128xf32>
      %70 = vector.shape_cast %69 : vector<1x64x128xf32> to vector<64x128xf32>
      %71 = vector.shape_cast %68 : vector<512x128xf32> to vector<8x64x128xf32>
      %cst_40 = arith.constant dense<0.000000e+00> : vector<64x128xf32>
      %72 = vector.multi_reduction <add>, %71, %cst_40 [0] : vector<8x64x128xf32> to vector<64x128xf32>
      %73 = arith.addf %70, %72 : vector<64x128xf32>
      %c0_41 = arith.constant 0 : index
      %c0_42 = arith.constant 0 : index
      %c0_43 = arith.constant 0 : index
      %74 = vector.load %arg4[%c0_41, %c0_42, %c0_43] : memref<1x64x128xf32, #tpu.memory_space<vmem>>, vector<1x64x128xf32>
      %75 = vector.shape_cast %74 : vector<1x64x128xf32> to vector<64x128xf32>
      %76 = vector.shape_cast %73 : vector<64x128xf32> to vector<1x64x128xf32>
      tpu.vector_store %arg4[%c0_41, %c0_42, %c0_43], %76 {strides = array<i32>} : memref<1x64x128xf32, #tpu.memory_space<vmem>>, vector<1x64x128xf32>,
      %c4_i32 = arith.constant 4 : i32
      %c512_i32_44 = arith.constant 512 : i32
      %77 = arith.muli %c4_i32, %c512_i32_44 : i32
      %78 = tpu.assume_multiple %77, 512 : i32
      %79 = arith.index_cast %78 : i32 to index
      %c0_45 = arith.constant 0 : index
      %80 = vector.load %arg2[%79, %c0_45] : memref<4096x128xf32, #tpu.memory_space<vmem>>, vector<512x128xf32>
      %81 = arith.index_cast %78 : i32 to index
      %c0_46 = arith.constant 0 : index
      %82 = vector.load %arg3[%81, %c0_46] : memref<4096x128xf32, #tpu.memory_space<vmem>>, vector<512x128xf32>
      %83 = arith.subf %80, %82 : vector<512x128xf32>
      %84 = arith.mulf %83, %83 : vector<512x128xf32>
      %c0_47 = arith.constant 0 : index
      %c0_48 = arith.constant 0 : index
      %c0_49 = arith.constant 0 : index
      %85 = vector.load %arg4[%c0_47, %c0_48, %c0_49] : memref<1x64x128xf32, #tpu.memory_space<vmem>>, vector<1x64x128xf32>
      %86 = vector.shape_cast %85 : vector<1x64x128xf32> to vector<64x128xf32>
      %87 = vector.shape_cast %84 : vector<512x128xf32> to vector<8x64x128xf32>
      %cst_50 = arith.constant dense<0.000000e+00> : vector<64x128xf32>
      %88 = vector.multi_reduction <add>, %87, %cst_50 [0] : vector<8x64x128xf32> to vector<64x128xf32>
      %89 = arith.addf %86, %88 : vector<64x128xf32>
      %c0_51 = arith.constant 0 : index
      %c0_52 = arith.constant 0 : index
      %c0_53 = arith.constant 0 : index
      %90 = vector.load %arg4[%c0_51, %c0_52, %c0_53] : memref<1x64x128xf32, #tpu.memory_space<vmem>>, vector<1x64x128xf32>
      %91 = vector.shape_cast %90 : vector<1x64x128xf32> to vector<64x128xf32>
      %92 = vector.shape_cast %89 : vector<64x128xf32> to vector<1x64x128xf32>
      tpu.vector_store %arg4[%c0_51, %c0_52, %c0_53], %92 {strides = array<i32>} : memref<1x64x128xf32, #tpu.memory_space<vmem>>, vector<1x64x128xf32>,
      %c5_i32 = arith.constant 5 : i32
      %c512_i32_54 = arith.constant 512 : i32
      %93 = arith.muli %c5_i32, %c512_i32_54 : i32
      %94 = tpu.assume_multiple %93, 512 : i32
      %95 = arith.index_cast %94 : i32 to index
      %c0_55 = arith.constant 0 : index
      %96 = vector.load %arg2[%95, %c0_55] : memref<4096x128xf32, #tpu.memory_space<vmem>>, vector<512x128xf32>
      %97 = arith.index_cast %94 : i32 to index
      %c0_56 = arith.constant 0 : index
      %98 = vector.load %arg3[%97, %c0_56] : memref<4096x128xf32, #tpu.memory_space<vmem>>, vector<512x128xf32>
      %99 = arith.subf %96, %98 : vector<512x128xf32>
      %100 = arith.mulf %99, %99 : vector<512x128xf32>
      %c0_57 = arith.constant 0 : index
      %c0_58 = arith.constant 0 : index
      %c0_59 = arith.constant 0 : index
      %101 = vector.load %arg4[%c0_57, %c0_58, %c0_59] : memref<1x64x128xf32, #tpu.memory_space<vmem>>, vector<1x64x128xf32>
      %102 = vector.shape_cast %101 : vector<1x64x128xf32> to vector<64x128xf32>
      %103 = vector.shape_cast %100 : vector<512x128xf32> to vector<8x64x128xf32>
      %cst_60 = arith.constant dense<0.000000e+00> : vector<64x128xf32>
      %104 = vector.multi_reduction <add>, %103, %cst_60 [0] : vector<8x64x128xf32> to vector<64x128xf32>
      %105 = arith.addf %102, %104 : vector<64x128xf32>
      %c0_61 = arith.constant 0 : index
      %c0_62 = arith.constant 0 : index
      %c0_63 = arith.constant 0 : index
      %106 = vector.load %arg4[%c0_61, %c0_62, %c0_63] : memref<1x64x128xf32, #tpu.memory_space<vmem>>, vector<1x64x128xf32>
      %107 = vector.shape_cast %106 : vector<1x64x128xf32> to vector<64x128xf32>
      %108 = vector.shape_cast %105 : vector<64x128xf32> to vector<1x64x128xf32>
      tpu.vector_store %arg4[%c0_61, %c0_62, %c0_63], %108 {strides = array<i32>} : memref<1x64x128xf32, #tpu.memory_space<vmem>>, vector<1x64x128xf32>,
      %c6_i32 = arith.constant 6 : i32
      %c512_i32_64 = arith.constant 512 : i32
      %109 = arith.muli %c6_i32, %c512_i32_64 : i32
      %110 = tpu.assume_multiple %109, 512 : i32
      %111 = arith.index_cast %110 : i32 to index
      %c0_65 = arith.constant 0 : index
      %112 = vector.load %arg2[%111, %c0_65] : memref<4096x128xf32, #tpu.memory_space<vmem>>, vector<512x128xf32>
      %113 = arith.index_cast %110 : i32 to index
      %c0_66 = arith.constant 0 : index
      %114 = vector.load %arg3[%113, %c0_66] : memref<4096x128xf32, #tpu.memory_space<vmem>>, vector<512x128xf32>
      %115 = arith.subf %112, %114 : vector<512x128xf32>
      %116 = arith.mulf %115, %115 : vector<512x128xf32>
      %c0_67 = arith.constant 0 : index
      %c0_68 = arith.constant 0 : index
      %c0_69 = arith.constant 0 : index
      %117 = vector.load %arg4[%c0_67, %c0_68, %c0_69] : memref<1x64x128xf32, #tpu.memory_space<vmem>>, vector<1x64x128xf32>
      %118 = vector.shape_cast %117 : vector<1x64x128xf32> to vector<64x128xf32>
      %119 = vector.shape_cast %116 : vector<512x128xf32> to vector<8x64x128xf32>
      %cst_70 = arith.constant dense<0.000000e+00> : vector<64x128xf32>
      %120 = vector.multi_reduction <add>, %119, %cst_70 [0] : vector<8x64x128xf32> to vector<64x128xf32>
      %121 = arith.addf %118, %120 : vector<64x128xf32>
      %c0_71 = arith.constant 0 : index
      %c0_72 = arith.constant 0 : index
      %c0_73 = arith.constant 0 : index
      %122 = vector.load %arg4[%c0_71, %c0_72, %c0_73] : memref<1x64x128xf32, #tpu.memory_space<vmem>>, vector<1x64x128xf32>
      %123 = vector.shape_cast %122 : vector<1x64x128xf32> to vector<64x128xf32>
      %124 = vector.shape_cast %121 : vector<64x128xf32> to vector<1x64x128xf32>
      tpu.vector_store %arg4[%c0_71, %c0_72, %c0_73], %124 {strides = array<i32>} : memref<1x64x128xf32, #tpu.memory_space<vmem>>, vector<1x64x128xf32>,
      %c7_i32 = arith.constant 7 : i32
      %c512_i32_74 = arith.constant 512 : i32
      %125 = arith.muli %c7_i32, %c512_i32_74 : i32
      %126 = tpu.assume_multiple %125, 512 : i32
      %127 = arith.index_cast %126 : i32 to index
      %c0_75 = arith.constant 0 : index
      %128 = vector.load %arg2[%127, %c0_75] : memref<4096x128xf32, #tpu.memory_space<vmem>>, vector<512x128xf32>
      %129 = arith.index_cast %126 : i32 to index
      %c0_76 = arith.constant 0 : index
      %130 = vector.load %arg3[%129, %c0_76] : memref<4096x128xf32, #tpu.memory_space<vmem>>, vector<512x128xf32>
      %131 = arith.subf %128, %130 : vector<512x128xf32>
      %132 = arith.mulf %131, %131 : vector<512x128xf32>
      %c0_77 = arith.constant 0 : index
      %c0_78 = arith.constant 0 : index
      %c0_79 = arith.constant 0 : index
      %133 = vector.load %arg4[%c0_77, %c0_78, %c0_79] : memref<1x64x128xf32, #tpu.memory_space<vmem>>, vector<1x64x128xf32>
      %134 = vector.shape_cast %133 : vector<1x64x128xf32> to vector<64x128xf32>
      %135 = vector.shape_cast %132 : vector<512x128xf32> to vector<8x64x128xf32>
      %cst_80 = arith.constant dense<0.000000e+00> : vector<64x128xf32>
      %136 = vector.multi_reduction <add>, %135, %cst_80 [0] : vector<8x64x128xf32> to vector<64x128xf32>
      %137 = arith.addf %134, %136 : vector<64x128xf32>
      %c0_81 = arith.constant 0 : index
      %c0_82 = arith.constant 0 : index
      %c0_83 = arith.constant 0 : index
      %138 = vector.load %arg4[%c0_81, %c0_82, %c0_83] : memref<1x64x128xf32, #tpu.memory_space<vmem>>, vector<1x64x128xf32>
      %139 = vector.shape_cast %138 : vector<1x64x128xf32> to vector<64x128xf32>
      %140 = vector.shape_cast %137 : vector<64x128xf32> to vector<1x64x128xf32>
      tpu.vector_store %arg4[%c0_81, %c0_82, %c0_83], %140 {strides = array<i32>} : memref<1x64x128xf32, #tpu.memory_space<vmem>>, vector<1x64x128xf32>,
      %c8_i32 = arith.constant 8 : i32
    } else {
    }
    %true = arith.constant true
    %10 = arith.xori %7, %true : i1
    %11 = arith.extui %10 : i1 to i32
    %c0_i32_4 = arith.constant 0 : i32
    %12 = arith.cmpi ne, %11, %c0_i32_4 : i32
    scf.if %12 {
      %c0_i32_5 = arith.constant 0 : i32
      %c512_i32 = arith.constant 512 : i32
      %13 = arith.muli %c0_i32_5, %c512_i32 : i32
      %14 = tpu.assume_multiple %13, 512 : i32
      %15 = arith.index_cast %14 : i32 to index
      %c0 = arith.constant 0 : index
      %16 = vector.load %arg2[%15, %c0] : memref<4096x128xf32, #tpu.memory_space<vmem>>, vector<512x128xf32>
      %17 = arith.index_cast %14 : i32 to index
      %c0_6 = arith.constant 0 : index
      %18 = vector.load %arg3[%17, %c0_6] : memref<4096x128xf32, #tpu.memory_space<vmem>>, vector<512x128xf32>
      %19 = arith.subf %16, %18 : vector<512x128xf32>
      %20 = arith.mulf %19, %19 : vector<512x128xf32>
      %21 = arith.addi %5, %14 : i32
      %22 = tpu.iota {dimensions = array<i32: 0>} : vector<512x128xi32>
      %23 = vector.broadcast %21 : i32 to vector<512x128xi32>
      %24 = arith.addi %23, %22 : vector<512x128xi32>
      %c4096_i32_7 = arith.constant 4096 : i32
      %25 = vector.broadcast %c4096_i32_7 : i32 to vector<512x128xi32>
      %26 = arith.cmpi slt, %24, %25 : vector<512x128xi32>
      %cst = arith.constant 0.000000e+00 : f32
      %27 = vector.broadcast %cst : f32 to vector<512x128xf32>
      %28 = arith.select %26, %20, %27 : vector<512x128xi1>, vector<512x128xf32>
      %c0_8 = arith.constant 0 : index
      %c0_9 = arith.constant 0 : index
      %c0_10 = arith.constant 0 : index
      %29 = vector.load %arg4[%c0_8, %c0_9, %c0_10] : memref<1x64x128xf32, #tpu.memory_space<vmem>>, vector<1x64x128xf32>
      %30 = vector.shape_cast %29 : vector<1x64x128xf32> to vector<64x128xf32>
      %31 = vector.shape_cast %28 : vector<512x128xf32> to vector<8x64x128xf32>
      %cst_11 = arith.constant dense<0.000000e+00> : vector<64x128xf32>
      %32 = vector.multi_reduction <add>, %31, %cst_11 [0] : vector<8x64x128xf32> to vector<64x128xf32>
      %33 = arith.addf %30, %32 : vector<64x128xf32>
      %c0_12 = arith.constant 0 : index
      %c0_13 = arith.constant 0 : index
      %c0_14 = arith.constant 0 : index
      %34 = vector.load %arg4[%c0_12, %c0_13, %c0_14] : memref<1x64x128xf32, #tpu.memory_space<vmem>>, vector<1x64x128xf32>
      %35 = vector.shape_cast %34 : vector<1x64x128xf32> to vector<64x128xf32>
      %36 = vector.shape_cast %33 : vector<64x128xf32> to vector<1x64x128xf32>
      tpu.vector_store %arg4[%c0_12, %c0_13, %c0_14], %36 {strides = array<i32>} : memref<1x64x128xf32, #tpu.memory_space<vmem>>, vector<1x64x128xf32>,
      %c1_i32_15 = arith.constant 1 : i32
      %c512_i32_16 = arith.constant 512 : i32
      %37 = arith.muli %c1_i32_15, %c512_i32_16 : i32
      %38 = tpu.assume_multiple %37, 512 : i32
      %39 = arith.index_cast %38 : i32 to index
      %c0_17 = arith.constant 0 : index
      %40 = vector.load %arg2[%39, %c0_17] : memref<4096x128xf32, #tpu.memory_space<vmem>>, vector<512x128xf32>
      %41 = arith.index_cast %38 : i32 to index
      %c0_18 = arith.constant 0 : index
      %42 = vector.load %arg3[%41, %c0_18] : memref<4096x128xf32, #tpu.memory_space<vmem>>, vector<512x128xf32>
      %43 = arith.subf %40, %42 : vector<512x128xf32>
      %44 = arith.mulf %43, %43 : vector<512x128xf32>
      %45 = arith.addi %5, %38 : i32
      %46 = tpu.iota {dimensions = array<i32: 0>} : vector<512x128xi32>
      %47 = vector.broadcast %45 : i32 to vector<512x128xi32>
      %48 = arith.addi %47, %46 : vector<512x128xi32>
      %c4096_i32_19 = arith.constant 4096 : i32
      %49 = vector.broadcast %c4096_i32_19 : i32 to vector<512x128xi32>
      %50 = arith.cmpi slt, %48, %49 : vector<512x128xi32>
      %cst_20 = arith.constant 0.000000e+00 : f32
      %51 = vector.broadcast %cst_20 : f32 to vector<512x128xf32>
      %52 = arith.select %50, %44, %51 : vector<512x128xi1>, vector<512x128xf32>
      %c0_21 = arith.constant 0 : index
      %c0_22 = arith.constant 0 : index
      %c0_23 = arith.constant 0 : index
      %53 = vector.load %arg4[%c0_21, %c0_22, %c0_23] : memref<1x64x128xf32, #tpu.memory_space<vmem>>, vector<1x64x128xf32>
      %54 = vector.shape_cast %53 : vector<1x64x128xf32> to vector<64x128xf32>
      %55 = vector.shape_cast %52 : vector<512x128xf32> to vector<8x64x128xf32>
      %cst_24 = arith.constant dense<0.000000e+00> : vector<64x128xf32>
      %56 = vector.multi_reduction <add>, %55, %cst_24 [0] : vector<8x64x128xf32> to vector<64x128xf32>
      %57 = arith.addf %54, %56 : vector<64x128xf32>
      %c0_25 = arith.constant 0 : index
      %c0_26 = arith.constant 0 : index
      %c0_27 = arith.constant 0 : index
      %58 = vector.load %arg4[%c0_25, %c0_26, %c0_27] : memref<1x64x128xf32, #tpu.memory_space<vmem>>, vector<1x64x128xf32>
      %59 = vector.shape_cast %58 : vector<1x64x128xf32> to vector<64x128xf32>
      %60 = vector.shape_cast %57 : vector<64x128xf32> to vector<1x64x128xf32>
      tpu.vector_store %arg4[%c0_25, %c0_26, %c0_27], %60 {strides = array<i32>} : memref<1x64x128xf32, #tpu.memory_space<vmem>>, vector<1x64x128xf32>,
      %c2_i32 = arith.constant 2 : i32
      %c512_i32_28 = arith.constant 512 : i32
      %61 = arith.muli %c2_i32, %c512_i32_28 : i32
      %62 = tpu.assume_multiple %61, 512 : i32
      %63 = arith.index_cast %62 : i32 to index
      %c0_29 = arith.constant 0 : index
      %64 = vector.load %arg2[%63, %c0_29] : memref<4096x128xf32, #tpu.memory_space<vmem>>, vector<512x128xf32>
      %65 = arith.index_cast %62 : i32 to index
      %c0_30 = arith.constant 0 : index
      %66 = vector.load %arg3[%65, %c0_30] : memref<4096x128xf32, #tpu.memory_space<vmem>>, vector<512x128xf32>
      %67 = arith.subf %64, %66 : vector<512x128xf32>
      %68 = arith.mulf %67, %67 : vector<512x128xf32>
      %69 = arith.addi %5, %62 : i32
      %70 = tpu.iota {dimensions = array<i32: 0>} : vector<512x128xi32>
      %71 = vector.broadcast %69 : i32 to vector<512x128xi32>
      %72 = arith.addi %71, %70 : vector<512x128xi32>
      %c4096_i32_31 = arith.constant 4096 : i32
      %73 = vector.broadcast %c4096_i32_31 : i32 to vector<512x128xi32>
      %74 = arith.cmpi slt, %72, %73 : vector<512x128xi32>
      %cst_32 = arith.constant 0.000000e+00 : f32
      %75 = vector.broadcast %cst_32 : f32 to vector<512x128xf32>
      %76 = arith.select %74, %68, %75 : vector<512x128xi1>, vector<512x128xf32>
      %c0_33 = arith.constant 0 : index
      %c0_34 = arith.constant 0 : index
      %c0_35 = arith.constant 0 : index
      %77 = vector.load %arg4[%c0_33, %c0_34, %c0_35] : memref<1x64x128xf32, #tpu.memory_space<vmem>>, vector<1x64x128xf32>
      %78 = vector.shape_cast %77 : vector<1x64x128xf32> to vector<64x128xf32>
      %79 = vector.shape_cast %76 : vector<512x128xf32> to vector<8x64x128xf32>
      %cst_36 = arith.constant dense<0.000000e+00> : vector<64x128xf32>
      %80 = vector.multi_reduction <add>, %79, %cst_36 [0] : vector<8x64x128xf32> to vector<64x128xf32>
      %81 = arith.addf %78, %80 : vector<64x128xf32>
      %c0_37 = arith.constant 0 : index
      %c0_38 = arith.constant 0 : index
      %c0_39 = arith.constant 0 : index
      %82 = vector.load %arg4[%c0_37, %c0_38, %c0_39] : memref<1x64x128xf32, #tpu.memory_space<vmem>>, vector<1x64x128xf32>
      %83 = vector.shape_cast %82 : vector<1x64x128xf32> to vector<64x128xf32>
      %84 = vector.shape_cast %81 : vector<64x128xf32> to vector<1x64x128xf32>
      tpu.vector_store %arg4[%c0_37, %c0_38, %c0_39], %84 {strides = array<i32>} : memref<1x64x128xf32, #tpu.memory_space<vmem>>, vector<1x64x128xf32>,
      %c3_i32 = arith.constant 3 : i32
      %c512_i32_40 = arith.constant 512 : i32
      %85 = arith.muli %c3_i32, %c512_i32_40 : i32
      %86 = tpu.assume_multiple %85, 512 : i32
      %87 = arith.index_cast %86 : i32 to index
      %c0_41 = arith.constant 0 : index
      %88 = vector.load %arg2[%87, %c0_41] : memref<4096x128xf32, #tpu.memory_space<vmem>>, vector<512x128xf32>
      %89 = arith.index_cast %86 : i32 to index
      %c0_42 = arith.constant 0 : index
      %90 = vector.load %arg3[%89, %c0_42] : memref<4096x128xf32, #tpu.memory_space<vmem>>, vector<512x128xf32>
      %91 = arith.subf %88, %90 : vector<512x128xf32>
      %92 = arith.mulf %91, %91 : vector<512x128xf32>
      %93 = arith.addi %5, %86 : i32
      %94 = tpu.iota {dimensions = array<i32: 0>} : vector<512x128xi32>
      %95 = vector.broadcast %93 : i32 to vector<512x128xi32>
      %96 = arith.addi %95, %94 : vector<512x128xi32>
      %c4096_i32_43 = arith.constant 4096 : i32
      %97 = vector.broadcast %c4096_i32_43 : i32 to vector<512x128xi32>
      %98 = arith.cmpi slt, %96, %97 : vector<512x128xi32>
      %cst_44 = arith.constant 0.000000e+00 : f32
      %99 = vector.broadcast %cst_44 : f32 to vector<512x128xf32>
      %100 = arith.select %98, %92, %99 : vector<512x128xi1>, vector<512x128xf32>
      %c0_45 = arith.constant 0 : index
      %c0_46 = arith.constant 0 : index
      %c0_47 = arith.constant 0 : index
      %101 = vector.load %arg4[%c0_45, %c0_46, %c0_47] : memref<1x64x128xf32, #tpu.memory_space<vmem>>, vector<1x64x128xf32>
      %102 = vector.shape_cast %101 : vector<1x64x128xf32> to vector<64x128xf32>
      %103 = vector.shape_cast %100 : vector<512x128xf32> to vector<8x64x128xf32>
      %cst_48 = arith.constant dense<0.000000e+00> : vector<64x128xf32>
      %104 = vector.multi_reduction <add>, %103, %cst_48 [0] : vector<8x64x128xf32> to vector<64x128xf32>
      %105 = arith.addf %102, %104 : vector<64x128xf32>
      %c0_49 = arith.constant 0 : index
      %c0_50 = arith.constant 0 : index
      %c0_51 = arith.constant 0 : index
      %106 = vector.load %arg4[%c0_49, %c0_50, %c0_51] : memref<1x64x128xf32, #tpu.memory_space<vmem>>, vector<1x64x128xf32>
      %107 = vector.shape_cast %106 : vector<1x64x128xf32> to vector<64x128xf32>
      %108 = vector.shape_cast %105 : vector<64x128xf32> to vector<1x64x128xf32>
      tpu.vector_store %arg4[%c0_49, %c0_50, %c0_51], %108 {strides = array<i32>} : memref<1x64x128xf32, #tpu.memory_space<vmem>>, vector<1x64x128xf32>,
      %c4_i32 = arith.constant 4 : i32
      %c512_i32_52 = arith.constant 512 : i32
      %109 = arith.muli %c4_i32, %c512_i32_52 : i32
      %110 = tpu.assume_multiple %109, 512 : i32
      %111 = arith.index_cast %110 : i32 to index
      %c0_53 = arith.constant 0 : index
      %112 = vector.load %arg2[%111, %c0_53] : memref<4096x128xf32, #tpu.memory_space<vmem>>, vector<512x128xf32>
      %113 = arith.index_cast %110 : i32 to index
      %c0_54 = arith.constant 0 : index
      %114 = vector.load %arg3[%113, %c0_54] : memref<4096x128xf32, #tpu.memory_space<vmem>>, vector<512x128xf32>
      %115 = arith.subf %112, %114 : vector<512x128xf32>
      %116 = arith.mulf %115, %115 : vector<512x128xf32>
      %117 = arith.addi %5, %110 : i32
      %118 = tpu.iota {dimensions = array<i32: 0>} : vector<512x128xi32>
      %119 = vector.broadcast %117 : i32 to vector<512x128xi32>
      %120 = arith.addi %119, %118 : vector<512x128xi32>
      %c4096_i32_55 = arith.constant 4096 : i32
      %121 = vector.broadcast %c4096_i32_55 : i32 to vector<512x128xi32>
      %122 = arith.cmpi slt, %120, %121 : vector<512x128xi32>
      %cst_56 = arith.constant 0.000000e+00 : f32
      %123 = vector.broadcast %cst_56 : f32 to vector<512x128xf32>
      %124 = arith.select %122, %116, %123 : vector<512x128xi1>, vector<512x128xf32>
      %c0_57 = arith.constant 0 : index
      %c0_58 = arith.constant 0 : index
      %c0_59 = arith.constant 0 : index
      %125 = vector.load %arg4[%c0_57, %c0_58, %c0_59] : memref<1x64x128xf32, #tpu.memory_space<vmem>>, vector<1x64x128xf32>
      %126 = vector.shape_cast %125 : vector<1x64x128xf32> to vector<64x128xf32>
      %127 = vector.shape_cast %124 : vector<512x128xf32> to vector<8x64x128xf32>
      %cst_60 = arith.constant dense<0.000000e+00> : vector<64x128xf32>
      %128 = vector.multi_reduction <add>, %127, %cst_60 [0] : vector<8x64x128xf32> to vector<64x128xf32>
      %129 = arith.addf %126, %128 : vector<64x128xf32>
      %c0_61 = arith.constant 0 : index
      %c0_62 = arith.constant 0 : index
      %c0_63 = arith.constant 0 : index
      %130 = vector.load %arg4[%c0_61, %c0_62, %c0_63] : memref<1x64x128xf32, #tpu.memory_space<vmem>>, vector<1x64x128xf32>
      %131 = vector.shape_cast %130 : vector<1x64x128xf32> to vector<64x128xf32>
      %132 = vector.shape_cast %129 : vector<64x128xf32> to vector<1x64x128xf32>
      tpu.vector_store %arg4[%c0_61, %c0_62, %c0_63], %132 {strides = array<i32>} : memref<1x64x128xf32, #tpu.memory_space<vmem>>, vector<1x64x128xf32>,
      %c5_i32 = arith.constant 5 : i32
      %c512_i32_64 = arith.constant 512 : i32
      %133 = arith.muli %c5_i32, %c512_i32_64 : i32
      %134 = tpu.assume_multiple %133, 512 : i32
      %135 = arith.index_cast %134 : i32 to index
      %c0_65 = arith.constant 0 : index
      %136 = vector.load %arg2[%135, %c0_65] : memref<4096x128xf32, #tpu.memory_space<vmem>>, vector<512x128xf32>
      %137 = arith.index_cast %134 : i32 to index
      %c0_66 = arith.constant 0 : index
      %138 = vector.load %arg3[%137, %c0_66] : memref<4096x128xf32, #tpu.memory_space<vmem>>, vector<512x128xf32>
      %139 = arith.subf %136, %138 : vector<512x128xf32>
      %140 = arith.mulf %139, %139 : vector<512x128xf32>
      %141 = arith.addi %5, %134 : i32
      %142 = tpu.iota {dimensions = array<i32: 0>} : vector<512x128xi32>
      %143 = vector.broadcast %141 : i32 to vector<512x128xi32>
      %144 = arith.addi %143, %142 : vector<512x128xi32>
      %c4096_i32_67 = arith.constant 4096 : i32
      %145 = vector.broadcast %c4096_i32_67 : i32 to vector<512x128xi32>
      %146 = arith.cmpi slt, %144, %145 : vector<512x128xi32>
      %cst_68 = arith.constant 0.000000e+00 : f32
      %147 = vector.broadcast %cst_68 : f32 to vector<512x128xf32>
      %148 = arith.select %146, %140, %147 : vector<512x128xi1>, vector<512x128xf32>
      %c0_69 = arith.constant 0 : index
      %c0_70 = arith.constant 0 : index
      %c0_71 = arith.constant 0 : index
      %149 = vector.load %arg4[%c0_69, %c0_70, %c0_71] : memref<1x64x128xf32, #tpu.memory_space<vmem>>, vector<1x64x128xf32>
      %150 = vector.shape_cast %149 : vector<1x64x128xf32> to vector<64x128xf32>
      %151 = vector.shape_cast %148 : vector<512x128xf32> to vector<8x64x128xf32>
      %cst_72 = arith.constant dense<0.000000e+00> : vector<64x128xf32>
      %152 = vector.multi_reduction <add>, %151, %cst_72 [0] : vector<8x64x128xf32> to vector<64x128xf32>
      %153 = arith.addf %150, %152 : vector<64x128xf32>
      %c0_73 = arith.constant 0 : index
      %c0_74 = arith.constant 0 : index
      %c0_75 = arith.constant 0 : index
      %154 = vector.load %arg4[%c0_73, %c0_74, %c0_75] : memref<1x64x128xf32, #tpu.memory_space<vmem>>, vector<1x64x128xf32>
      %155 = vector.shape_cast %154 : vector<1x64x128xf32> to vector<64x128xf32>
      %156 = vector.shape_cast %153 : vector<64x128xf32> to vector<1x64x128xf32>
      tpu.vector_store %arg4[%c0_73, %c0_74, %c0_75], %156 {strides = array<i32>} : memref<1x64x128xf32, #tpu.memory_space<vmem>>, vector<1x64x128xf32>,
      %c6_i32 = arith.constant 6 : i32
      %c512_i32_76 = arith.constant 512 : i32
      %157 = arith.muli %c6_i32, %c512_i32_76 : i32
      %158 = tpu.assume_multiple %157, 512 : i32
      %159 = arith.index_cast %158 : i32 to index
      %c0_77 = arith.constant 0 : index
      %160 = vector.load %arg2[%159, %c0_77] : memref<4096x128xf32, #tpu.memory_space<vmem>>, vector<512x128xf32>
      %161 = arith.index_cast %158 : i32 to index
      %c0_78 = arith.constant 0 : index
      %162 = vector.load %arg3[%161, %c0_78] : memref<4096x128xf32, #tpu.memory_space<vmem>>, vector<512x128xf32>
      %163 = arith.subf %160, %162 : vector<512x128xf32>
      %164 = arith.mulf %163, %163 : vector<512x128xf32>
      %165 = arith.addi %5, %158 : i32
      %166 = tpu.iota {dimensions = array<i32: 0>} : vector<512x128xi32>
      %167 = vector.broadcast %165 : i32 to vector<512x128xi32>
      %168 = arith.addi %167, %166 : vector<512x128xi32>
      %c4096_i32_79 = arith.constant 4096 : i32
      %169 = vector.broadcast %c4096_i32_79 : i32 to vector<512x128xi32>
      %170 = arith.cmpi slt, %168, %169 : vector<512x128xi32>
      %cst_80 = arith.constant 0.000000e+00 : f32
      %171 = vector.broadcast %cst_80 : f32 to vector<512x128xf32>
      %172 = arith.select %170, %164, %171 : vector<512x128xi1>, vector<512x128xf32>
      %c0_81 = arith.constant 0 : index
      %c0_82 = arith.constant 0 : index
      %c0_83 = arith.constant 0 : index
      %173 = vector.load %arg4[%c0_81, %c0_82, %c0_83] : memref<1x64x128xf32, #tpu.memory_space<vmem>>, vector<1x64x128xf32>
      %174 = vector.shape_cast %173 : vector<1x64x128xf32> to vector<64x128xf32>
      %175 = vector.shape_cast %172 : vector<512x128xf32> to vector<8x64x128xf32>
      %cst_84 = arith.constant dense<0.000000e+00> : vector<64x128xf32>
      %176 = vector.multi_reduction <add>, %175, %cst_84 [0] : vector<8x64x128xf32> to vector<64x128xf32>
      %177 = arith.addf %174, %176 : vector<64x128xf32>
      %c0_85 = arith.constant 0 : index
      %c0_86 = arith.constant 0 : index
      %c0_87 = arith.constant 0 : index
      %178 = vector.load %arg4[%c0_85, %c0_86, %c0_87] : memref<1x64x128xf32, #tpu.memory_space<vmem>>, vector<1x64x128xf32>
      %179 = vector.shape_cast %178 : vector<1x64x128xf32> to vector<64x128xf32>
      %180 = vector.shape_cast %177 : vector<64x128xf32> to vector<1x64x128xf32>
      tpu.vector_store %arg4[%c0_85, %c0_86, %c0_87], %180 {strides = array<i32>} : memref<1x64x128xf32, #tpu.memory_space<vmem>>, vector<1x64x128xf32>,
      %c7_i32 = arith.constant 7 : i32
      %c512_i32_88 = arith.constant 512 : i32
      %181 = arith.muli %c7_i32, %c512_i32_88 : i32
      %182 = tpu.assume_multiple %181, 512 : i32
      %183 = arith.index_cast %182 : i32 to index
      %c0_89 = arith.constant 0 : index
      %184 = vector.load %arg2[%183, %c0_89] : memref<4096x128xf32, #tpu.memory_space<vmem>>, vector<512x128xf32>
      %185 = arith.index_cast %182 : i32 to index
      %c0_90 = arith.constant 0 : index
      %186 = vector.load %arg3[%185, %c0_90] : memref<4096x128xf32, #tpu.memory_space<vmem>>, vector<512x128xf32>
      %187 = arith.subf %184, %186 : vector<512x128xf32>
      %188 = arith.mulf %187, %187 : vector<512x128xf32>
      %189 = arith.addi %5, %182 : i32
      %190 = tpu.iota {dimensions = array<i32: 0>} : vector<512x128xi32>
      %191 = vector.broadcast %189 : i32 to vector<512x128xi32>
      %192 = arith.addi %191, %190 : vector<512x128xi32>
      %c4096_i32_91 = arith.constant 4096 : i32
      %193 = vector.broadcast %c4096_i32_91 : i32 to vector<512x128xi32>
      %194 = arith.cmpi slt, %192, %193 : vector<512x128xi32>
      %cst_92 = arith.constant 0.000000e+00 : f32
      %195 = vector.broadcast %cst_92 : f32 to vector<512x128xf32>
      %196 = arith.select %194, %188, %195 : vector<512x128xi1>, vector<512x128xf32>
      %c0_93 = arith.constant 0 : index
      %c0_94 = arith.constant 0 : index
      %c0_95 = arith.constant 0 : index
      %197 = vector.load %arg4[%c0_93, %c0_94, %c0_95] : memref<1x64x128xf32, #tpu.memory_space<vmem>>, vector<1x64x128xf32>
      %198 = vector.shape_cast %197 : vector<1x64x128xf32> to vector<64x128xf32>
      %199 = vector.shape_cast %196 : vector<512x128xf32> to vector<8x64x128xf32>
      %cst_96 = arith.constant dense<0.000000e+00> : vector<64x128xf32>
      %200 = vector.multi_reduction <add>, %199, %cst_96 [0] : vector<8x64x128xf32> to vector<64x128xf32>
      %201 = arith.addf %198, %200 : vector<64x128xf32>
      %c0_97 = arith.constant 0 : index
      %c0_98 = arith.constant 0 : index
      %c0_99 = arith.constant 0 : index
      %202 = vector.load %arg4[%c0_97, %c0_98, %c0_99] : memref<1x64x128xf32, #tpu.memory_space<vmem>>, vector<1x64x128xf32>
      %203 = vector.shape_cast %202 : vector<1x64x128xf32> to vector<64x128xf32>
      %204 = vector.shape_cast %201 : vector<64x128xf32> to vector<1x64x128xf32>
      tpu.vector_store %arg4[%c0_97, %c0_98, %c0_99], %204 {strides = array<i32>} : memref<1x64x128xf32, #tpu.memory_space<vmem>>, vector<1x64x128xf32>,
      %c8_i32 = arith.constant 8 : i32
    } else {
    }
    return
  }
  func.func @transform_0(%arg0: i32, %arg1: i32) -> (i32, i32) {
    %c1_i32 = arith.constant 1 : i32
    %0 = arith.muli %arg0, %c1_i32 : i32
    %1 = arith.addi %0, %arg1 : i32
    %c0_i32 = arith.constant 0 : i32
    %2 = arith.minsi %1, %c0_i32 : i32
    %c0_i32_0 = arith.constant 0 : i32
    %c0_i32_1 = arith.constant 0 : i32
    return %2, %c0_i32_0 : i32, i32
  }
  func.func @transform_1(%arg0: i32, %arg1: i32) -> (i32, i32) {
    %c1_i32 = arith.constant 1 : i32
    %0 = arith.muli %arg0, %c1_i32 : i32
    %1 = arith.addi %0, %arg1 : i32
    %c0_i32 = arith.constant 0 : i32
    %2 = arith.minsi %1, %c0_i32 : i32
    %c0_i32_0 = arith.constant 0 : i32
    %c0_i32_1 = arith.constant 0 : i32
    return %2, %c0_i32_0 : i32, i32
  }
  func.func @transform_2(%arg0: i32, %arg1: i32) -> (i32, i32, i32) {
    %c0_i32 = arith.constant 0 : i32
    %c0_i32_0 = arith.constant 0 : i32
    %c0_i32_1 = arith.constant 0 : i32
    return %arg0, %c0_i32, %c0_i32_0 : i32, i32, i32
  }
}

</mosaic_0001>

<llo_original>
// kernel: tpu_custom_call.1
$region0: #{tpu_custom_call.1}
  #allocation0 [shape = 'u32[]', space=smem, size = 0x4, offset = 0x4, fixed_abs, tag = 'smem constant byte address 0x4 - core index']
  #allocation1 [shape = 'u32[144,128]{1,0:T(1,128)}', space=vmem, size = 0x12000, scoped, tag = 'internal scratch']
  %s0 = inlined_call_operand.hbm [shape: f32[4096,128], index: 0, kind: input, shape index: {}]
  %s1 = inlined_call_operand.hbm [shape: f32[4096,128], index: 1, kind: input, shape index: {}]
  %s2 = inlined_call_operand.hbm [shape: f32[1,64,128], index: 2, kind: output, shape index: {}]
  %s3 = sld [smem:[#allocation0]]
  $region38: #{tpu_custom_call.1} parent=0
    _
  %s5 = ssub.s32 1, %s3
  %s6 = scalar_select 0, %s5, %s3
  $region1: #{tpu_custom_call.1} parent=0
    #allocation2 [shape = 'u8[2097152]{0}', space=vmem, size = 0x200000, scoped, tag = 'input window, operand 0, single buffered']
    #allocation3 [shape = 's32[1]{0}', space=sflag, size = 0x4, scoped, tag = 'scoped memory for tpu_custom_call.1']
    #allocation4 [shape = 's32[1]{0}', space=sflag, size = 0x4, scoped, tag = 'scoped memory for tpu_custom_call.1']
    #allocation5 [shape = 'u8[2097152]{0}', space=vmem, size = 0x200000, scoped, tag = 'input window, operand 1, single buffered']
    #allocation6 [shape = 's32[1]{0}', space=sflag, size = 0x4, scoped, tag = 'scoped memory for tpu_custom_call.1']
    #allocation7 [shape = 'u8[32768]{0}', space=vmem, size = 0x8000, scoped, tag = 'output window, operand 0, single buffered']
    %7 = vsyncpa [#allocation3], 0
    %8 = vsyncpa [#allocation6], 0
    %9 = vsyncpa [#allocation4], 0
    // Predicated region
    $region2: #{tpu_custom_call.1} parent=1 // pred_check
      _
    $region3: #{tpu_custom_call.1} parent=1 // pred_check_branch
      %11 = sbr.rel (0) target = $region5
    $region4: #{tpu_custom_call.1} parent=1 // pred_region
      %s12 = sadd.s32 0, 0
      %p13 = scmp.lt.s32.totalorder %s12, 0
      %s14 = scalar_select %p13, %s12, 0
      %s15 = smul.u32 512, %s14
      %s17 = ssub.s32 65536, 65536
      %18 = vsyncadd [#allocation3], %s17
      %s19 = smul.addr %s15, 128
      %s20 = scalar_lea.hbm %s0, %s19
      %s21 = sshll.u32 [#allocation2], 4
      %s22 = int_to_ptr.vmem [resolvable:$true] %s21
      %27 = dma.hbm_to_vmem [thread:$0]  %s20, 65536, %s22, [#allocation3], 128, 128, 8
    $region5: #{tpu_custom_call.1} parent=1 // pred_fallthru
      _
    // Predicated region
    $region6: #{tpu_custom_call.1} parent=1 // pred_check
      _
    $region7: #{tpu_custom_call.1} parent=1 // pred_check_branch
      %29 = sbr.rel (0) target = $region9
    $region8: #{tpu_custom_call.1} parent=1 // pred_region
      %s30 = sadd.s32 0, 0
      %p31 = scmp.lt.s32.totalorder %s30, 0
      %s32 = scalar_select %p31, %s30, 0
      %s33 = smul.u32 512, %s32
      %s35 = ssub.s32 65536, 65536
      %36 = vsyncadd [#allocation6], %s35
      %s37 = smul.addr %s33, 128
      %s38 = scalar_lea.hbm %s1, %s37
      %s39 = sshll.u32 [#allocation5], 4
      %s40 = int_to_ptr.vmem [resolvable:$true] %s39
      %45 = dma.hbm_to_vmem [thread:$0]  %s38, 65536, %s40, [#allocation6], 128, 128, 8
    $region9: #{tpu_custom_call.1} parent=1 // pred_fallthru
      _
    // Predicated region
    $region10: #{tpu_custom_call.1} parent=1 // pred_check
      _
    $region11: #{tpu_custom_call.1} parent=1 // pred_check_branch
      %47 = sbr.rel (0) target = $region13
    $region12: #{tpu_custom_call.1} parent=1 // pred_region
      %48 = dma.done [#allocation3], 65536
    $region13: #{tpu_custom_call.1} parent=1 // pred_fallthru
      _
    // Predicated region
    $region14: #{tpu_custom_call.1} parent=1 // pred_check
      _
    $region15: #{tpu_custom_call.1} parent=1 // pred_check_branch
      %50 = sbr.rel (0) target = $region17
    $region16: #{tpu_custom_call.1} parent=1 // pred_region
      %51 = dma.done [#allocation6], 65536
    $region17: #{tpu_custom_call.1} parent=1 // pred_fallthru
      _
    %s52 = sadd.s32 0, 0
    %p53 = scmp.lt.s32.totalorder %s52, 0
    %s54 = scalar_select %p53, %s52, 0
    %s55 = smul.u32 512, %s54
    %s56 = sadd.s32 0, 0
    %p57 = scmp.lt.s32.totalorder %s56, 0
    %s58 = scalar_select %p57, %s56, 0
    %s59 = smul.u32 512, %s58
    %p60 = scmp.eq.s32.totalorder 0, 0
    // Predicated region
    $region18: #{tpu_custom_call.1} parent=1 // pred_check
      %p61 = pneg %p60
    $region19: #{tpu_custom_call.1} parent=1 // pred_check_branch
      %63 = sbr.rel (%p61) target = $region21
    $region20: #{tpu_custom_call.1} parent=1 // pred_region
      %64 = vst [vmem:[#allocation7] sm:$0xff] 0.0
      %65 = vst [vmem:[#allocation7 + $0x8] sm:$0xff] 0.0
      %66 = vst [vmem:[#allocation7 + $0x10] sm:$0xff] 0.0
      %67 = vst [vmem:[#allocation7 + $0x18] sm:$0xff] 0.0
      %68 = vst [vmem:[#allocation7 + $0x20] sm:$0xff] 0.0
      %69 = vst [vmem:[#allocation7 + $0x28] sm:$0xff] 0.0
      %70 = vst [vmem:[#allocation7 + $0x30] sm:$0xff] 0.0
      %71 = vst [vmem:[#allocation7 + $0x38] sm:$0xff] 0.0
    $region21: #{tpu_custom_call.1} parent=1 // pred_fallthru
      _
    %s72 = sadd.s32 0, 0
    %s73 = smul.u32 %s72, 4096
    %s74 = sadd.s32 %s73, 4096
    %p75 = scmp.le.s32.totalorder %s74, 4096
    // Predicated region
    $region22: #{tpu_custom_call.1} parent=1 // pred_check
      %p76 = pneg %p75
    $region23: #{tpu_custom_call.1} parent=1 // pred_check_branch
      %78 = sbr.rel (%p76) target = $region25
    $region24: #{tpu_custom_call.1} parent=1 // pred_region
      %v79 = vld [vmem:[#allocation2] sm:$0xff]
      %v80 = vld [vmem:[#allocation2 + $0x8] sm:$0xff]
      %v81 = vld [vmem:[#allocation2 + $0x10] sm:$0xff]
      %v82 = vld [vmem:[#allocation2 + $0x18] sm:$0xff]
      %v83 = vld [vmem:[#allocation2 + $0x20] sm:$0xff]
      %v84 = vld [vmem:[#allocation2 + $0x28] sm:$0xff]
      %v85 = vld [vmem:[#allocation2 + $0x30] sm:$0xff]
      %v86 = vld [vmem:[#allocation2 + $0x38] sm:$0xff]
      %v87 = vld [vmem:[#allocation2 + $0x40] sm:$0xff]
      %v88 = vld [vmem:[#allocation2 + $0x48] sm:$0xff]
      %v89 = vld [vmem:[#allocation2 + $0x50] sm:$0xff]
      %v90 = vld [vmem:[#allocation2 + $0x58] sm:$0xff]
      %v91 = vld [vmem:[#allocation2 + $0x60] sm:$0xff]
      %v92 = vld [vmem:[#allocation2 + $0x68] sm:$0xff]
      %v93 = vld [vmem:[#allocation2 + $0x70] sm:$0xff]
      %v94 = vld [vmem:[#allocation2 + $0x78] sm:$0xff]
      %v95 = vld [vmem:[#allocation2 + $0x80] sm:$0xff]
      %v96 = vld [vmem:[#allocation2 + $0x88] sm:$0xff]
      %v97 = vld [vmem:[#allocation2 + $0x90] sm:$0xff]
      %v98 = vld [vmem:[#allocation2 + $0x98] sm:$0xff]
      %v99 = vld [vmem:[#allocation2 + $0xa0] sm:$0xff]
      %v100 = vld [vmem:[#allocation2 + $0xa8] sm:$0xff]
      %v101 = vld [vmem:[#allocation2 + $0xb0] sm:$0xff]
      %v102 = vld [vmem:[#allocation2 + $0xb8] sm:$0xff]
      %v103 = vld [vmem:[#allocation2 + $0xc0] sm:$0xff]
      %v104 = vld [vmem:[#allocation2 + $0xc8] sm:$0xff]
      %v105 = vld [vmem:[#allocation2 + $0xd0] sm:$0xff]
      %v106 = vld [vmem:[#allocation2 + $0xd8] sm:$0xff]
      %v107 = vld [vmem:[#allocation2 + $0xe0] sm:$0xff]
      %v108 = vld [vmem:[#allocation2 + $0xe8] sm:$0xff]
      %v109 = vld [vmem:[#allocation2 + $0xf0] sm:$0xff]
      %v110 = vld [vmem:[#allocation2 + $0xf8] sm:$0xff]
      %v111 = vld [vmem:[#allocation2 + $0x100] sm:$0xff]
      %v112 = vld [vmem:[#allocation2 + $0x108] sm:$0xff]
      %v113 = vld [vmem:[#allocation2 + $0x110] sm:$0xff]
      %v114 = vld [vmem:[#allocation2 + $0x118] sm:$0xff]
      %v115 = vld [vmem:[#allocation2 + $0x120] sm:$0xff]
      %v116 = vld [vmem:[#allocation2 + $0x128] sm:$0xff]
      %v117 = vld [vmem:[#allocation2 + $0x130] sm:$0xff]
      %v118 = vld [vmem:[#allocation2 + $0x138] sm:$0xff]
      %v119 = vld [vmem:[#allocation2 + $0x140] sm:$0xff]
      %v120 = vld [vmem:[#allocation2 + $0x148] sm:$0xff]
      %v121 = vld [vmem:[#allocation2 + $0x150] sm:$0xff]
      %v122 = vld [vmem:[#allocation2 + $0x158] sm:$0xff]
      %v123 = vld [vmem:[#allocation2 + $0x160] sm:$0xff]
      %v124 = vld [vmem:[#allocation2 + $0x168] sm:$0xff]
      %v125 = vld [vmem:[#allocation2 + $0x170] sm:$0xff]
      %v126 = vld [vmem:[#allocation2 + $0x178] sm:$0xff]
      %v127 = vld [vmem:[#allocation2 + $0x180] sm:$0xff]
      %v128 = vld [vmem:[#allocation2 + $0x188] sm:$0xff]
      %v129 = vld [vmem:[#allocation2 + $0x190] sm:$0xff]
      %v130 = vld [vmem:[#allocation2 + $0x198] sm:$0xff]
      %v131 = vld [vmem:[#allocation2 + $0x1a0] sm:$0xff]
      %v132 = vld [vmem:[#allocation2 + $0x1a8] sm:$0xff]
      %v133 = vld [vmem:[#allocation2 + $0x1b0] sm:$0xff]
      %v134 = vld [vmem:[#allocation2 + $0x1b8] sm:$0xff]
      %v135 = vld [vmem:[#allocation2 + $0x1c0] sm:$0xff]
      %v136 = vld [vmem:[#allocation2 + $0x1c8] sm:$0xff]
      %v137 = vld [vmem:[#allocation2 + $0x1d0] sm:$0xff]
      %v138 = vld [vmem:[#allocation2 + $0x1d8] sm:$0xff]
      %v139 = vld [vmem:[#allocation2 + $0x1e0] sm:$0xff]
      %v140 = vld [vmem:[#allocation2 + $0x1e8] sm:$0xff]
      %v141 = vld [vmem:[#allocation2 + $0x1f0] sm:$0xff]
      %v142 = vld [vmem:[#allocation2 + $0x1f8] sm:$0xff]
      %v143 = vld [vmem:[#allocation5] sm:$0xff]
      %v144 = vld [vmem:[#allocation5 + $0x8] sm:$0xff]
      %v145 = vld [vmem:[#allocation5 + $0x10] sm:$0xff]
      %v146 = vld [vmem:[#allocation5 + $0x18] sm:$0xff]
      %v147 = vld [vmem:[#allocation5 + $0x20] sm:$0xff]
      %v148 = vld [vmem:[#allocation5 + $0x28] sm:$0xff]
      %v149 = vld [vmem:[#allocation5 + $0x30] sm:$0xff]
      %v150 = vld [vmem:[#allocation5 + $0x38] sm:$0xff]
      %v151 = vld [vmem:[#allocation5 + $0x40] sm:$0xff]
      %v152 = vld [vmem:[#allocation5 + $0x48] sm:$0xff]
      %v153 = vld [vmem:[#allocation5 + $0x50] sm:$0xff]
      %v154 = vld [vmem:[#allocation5 + $0x58] sm:$0xff]
      %v155 = vld [vmem:[#allocation5 + $0x60] sm:$0xff]
      %v156 = vld [vmem:[#allocation5 + $0x68] sm:$0xff]
      %v157 = vld [vmem:[#allocation5 + $0x70] sm:$0xff]
      %v158 = vld [vmem:[#allocation5 + $0x78] sm:$0xff]
      %v159 = vld [vmem:[#allocation5 + $0x80] sm:$0xff]
      %v160 = vld [vmem:[#allocation5 + $0x88] sm:$0xff]
      %v161 = vld [vmem:[#allocation5 + $0x90] sm:$0xff]
      %v162 = vld [vmem:[#allocation5 + $0x98] sm:$0xff]
      %v163 = vld [vmem:[#allocation5 + $0xa0] sm:$0xff]
      %v164 = vld [vmem:[#allocation5 + $0xa8] sm:$0xff]
      %v165 = vld [vmem:[#allocation5 + $0xb0] sm:$0xff]
      %v166 = vld [vmem:[#allocation5 + $0xb8] sm:$0xff]
      %v167 = vld [vmem:[#allocation5 + $0xc0] sm:$0xff]
      %v168 = vld [vmem:[#allocation5 + $0xc8] sm:$0xff]
      %v169 = vld [vmem:[#allocation5 + $0xd0] sm:$0xff]
      %v170 = vld [vmem:[#allocation5 + $0xd8] sm:$0xff]
      %v171 = vld [vmem:[#allocation5 + $0xe0] sm:$0xff]
      %v172 = vld [vmem:[#allocation5 + $0xe8] sm:$0xff]
      %v173 = vld [vmem:[#allocation5 + $0xf0] sm:$0xff]
      %v174 = vld [vmem:[#allocation5 + $0xf8] sm:$0xff]
      %v175 = vld [vmem:[#allocation5 + $0x100] sm:$0xff]
      %v176 = vld [vmem:[#allocation5 + $0x108] sm:$0xff]
      %v177 = vld [vmem:[#allocation5 + $0x110] sm:$0xff]
      %v178 = vld [vmem:[#allocation5 + $0x118] sm:$0xff]
      %v179 = vld [vmem:[#allocation5 + $0x120] sm:$0xff]
      %v180 = vld [vmem:[#allocation5 + $0x128] sm:$0xff]
      %v181 = vld [vmem:[#allocation5 + $0x130] sm:$0xff]
      %v182 = vld [vmem:[#allocation5 + $0x138] sm:$0xff]
      %v183 = vld [vmem:[#allocation5 + $0x140] sm:$0xff]
      %v184 = vld [vmem:[#allocation5 + $0x148] sm:$0xff]
      %v185 = vld [vmem:[#allocation5 + $0x150] sm:$0xff]
      %v186 = vld [vmem:[#allocation5 + $0x158] sm:$0xff]
      %v187 = vld [vmem:[#allocation5 + $0x160] sm:$0xff]
      %v188 = vld [vmem:[#allocation5 + $0x168] sm:$0xff]
      %v189 = vld [vmem:[#allocation5 + $0x170] sm:$0xff]
      %v190 = vld [vmem:[#allocation5 + $0x178] sm:$0xff]
      %v191 = vld [vmem:[#allocation5 + $0x180] sm:$0xff]
      %v192 = vld [vmem:[#allocation5 + $0x188] sm:$0xff]
      %v193 = vld [vmem:[#allocation5 + $0x190] sm:$0xff]
      %v194 = vld [vmem:[#allocation5 + $0x198] sm:$0xff]
      %v195 = vld [vmem:[#allocation5 + $0x1a0] sm:$0xff]
      %v196 = vld [vmem:[#allocation5 + $0x1a8] sm:$0xff]
      %v197 = vld [vmem:[#allocation5 + $0x1b0] sm:$0xff]
      %v198 = vld [vmem:[#allocation5 + $0x1b8] sm:$0xff]
      %v199 = vld [vmem:[#allocation5 + $0x1c0] sm:$0xff]
      %v200 = vld [vmem:[#allocation5 + $0x1c8] sm:$0xff]
      %v201 = vld [vmem:[#allocation5 + $0x1d0] sm:$0xff]
      %v202 = vld [vmem:[#allocation5 + $0x1d8] sm:$0xff]
      %v203 = vld [vmem:[#allocation5 + $0x1e0] sm:$0xff]
      %v204 = vld [vmem:[#allocation5 + $0x1e8] sm:$0xff]
      %v205 = vld [vmem:[#allocation5 + $0x1f0] sm:$0xff]
      %v206 = vld [vmem:[#allocation5 + $0x1f8] sm:$0xff]
      %v207 = vsub.f32 %v79, %v143
      %v208 = vsub.f32 %v80, %v144
      %v209 = vsub.f32 %v81, %v145
      %v210 = vsub.f32 %v82, %v146
      %v211 = vsub.f32 %v83, %v147
      %v212 = vsub.f32 %v84, %v148
      %v213 = vsub.f32 %v85, %v149
      %v214 = vsub.f32 %v86, %v150
      %v215 = vsub.f32 %v87, %v151
      %v216 = vsub.f32 %v88, %v152
      %v217 = vsub.f32 %v89, %v153
      %v218 = vsub.f32 %v90, %v154
      %v219 = vsub.f32 %v91, %v155
      %v220 = vsub.f32 %v92, %v156
      %v221 = vsub.f32 %v93, %v157
      %v222 = vsub.f32 %v94, %v158
      %v223 = vsub.f32 %v95, %v159
      %v224 = vsub.f32 %v96, %v160
      %v225 = vsub.f32 %v97, %v161
      %v226 = vsub.f32 %v98, %v162
      %v227 = vsub.f32 %v99, %v163
      %v228 = vsub.f32 %v100, %v164
      %v229 = vsub.f32 %v101, %v165
      %v230 = vsub.f32 %v102, %v166
      %v231 = vsub.f32 %v103, %v167
      %v232 = vsub.f32 %v104, %v168
      %v233 = vsub.f32 %v105, %v169
      %v234 = vsub.f32 %v106, %v170
      %v235 = vsub.f32 %v107, %v171
      %v236 = vsub.f32 %v108, %v172
      %v237 = vsub.f32 %v109, %v173
      %v238 = vsub.f32 %v110, %v174
      %v239 = vsub.f32 %v111, %v175
      %v240 = vsub.f32 %v112, %v176
      %v241 = vsub.f32 %v113, %v177
      %v242 = vsub.f32 %v114, %v178
      %v243 = vsub.f32 %v115, %v179
      %v244 = vsub.f32 %v116, %v180
      %v245 = vsub.f32 %v117, %v181
      %v246 = vsub.f32 %v118, %v182
      %v247 = vsub.f32 %v119, %v183
      %v248 = vsub.f32 %v120, %v184
      %v249 = vsub.f32 %v121, %v185
      %v250 = vsub.f32 %v122, %v186
      %v251 = vsub.f32 %v123, %v187
      %v252 = vsub.f32 %v124, %v188
      %v253 = vsub.f32 %v125, %v189
      %v254 = vsub.f32 %v126, %v190
      %v255 = vsub.f32 %v127, %v191
      %v256 = vsub.f32 %v128, %v192
      %v257 = vsub.f32 %v129, %v193
      %v258 = vsub.f32 %v130, %v194
      %v259 = vsub.f32 %v131, %v195
      %v260 = vsub.f32 %v132, %v196
      %v261 = vsub.f32 %v133, %v197
      %v262 = vsub.f32 %v134, %v198
      %v263 = vsub.f32 %v135, %v199
      %v264 = vsub.f32 %v136, %v200
      %v265 = vsub.f32 %v137, %v201
      %v266 = vsub.f32 %v138, %v202
      %v267 = vsub.f32 %v139, %v203
      %v268 = vsub.f32 %v140, %v204
      %v269 = vsub.f32 %v141, %v205
      %v270 = vsub.f32 %v142, %v206
      %v271 = vmul.f32 %v207, %v207
      %v272 = vmul.f32 %v208, %v208
      %v273 = vmul.f32 %v209, %v209
      %v274 = vmul.f32 %v210, %v210
      %v275 = vmul.f32 %v211, %v211
      %v276 = vmul.f32 %v212, %v212
      %v277 = vmul.f32 %v213, %v213
      %v278 = vmul.f32 %v214, %v214
      %v279 = vmul.f32 %v215, %v215
      %v280 = vmul.f32 %v216, %v216
      %v281 = vmul.f32 %v217, %v217
      %v282 = vmul.f32 %v218, %v218
      %v283 = vmul.f32 %v219, %v219
      %v284 = vmul.f32 %v220, %v220
      %v285 = vmul.f32 %v221, %v221
      %v286 = vmul.f32 %v222, %v222
      %v287 = vmul.f32 %v223, %v223
      %v288 = vmul.f32 %v224, %v224
      %v289 = vmul.f32 %v225, %v225
      %v290 = vmul.f32 %v226, %v226
      %v291 = vmul.f32 %v227, %v227
      %v292 = vmul.f32 %v228, %v228
      %v293 = vmul.f32 %v229, %v229
      %v294 = vmul.f32 %v230, %v230
      %v295 = vmul.f32 %v231, %v231
      %v296 = vmul.f32 %v232, %v232
      %v297 = vmul.f32 %v233, %v233
      %v298 = vmul.f32 %v234, %v234
      %v299 = vmul.f32 %v235, %v235
      %v300 = vmul.f32 %v236, %v236
      %v301 = vmul.f32 %v237, %v237
      %v302 = vmul.f32 %v238, %v238
      %v303 = vmul.f32 %v239, %v239
      %v304 = vmul.f32 %v240, %v240
      %v305 = vmul.f32 %v241, %v241
      %v306 = vmul.f32 %v242, %v242
      %v307 = vmul.f32 %v243, %v243
      %v308 = vmul.f32 %v244, %v244
      %v309 = vmul.f32 %v245, %v245
      %v310 = vmul.f32 %v246, %v246
      %v311 = vmul.f32 %v247, %v247
      %v312 = vmul.f32 %v248, %v248
      %v313 = vmul.f32 %v249, %v249
      %v314 = vmul.f32 %v250, %v250
      %v315 = vmul.f32 %v251, %v251
      %v316 = vmul.f32 %v252, %v252
      %v317 = vmul.f32 %v253, %v253
      %v318 = vmul.f32 %v254, %v254
      %v319 = vmul.f32 %v255, %v255
      %v320 = vmul.f32 %v256, %v256
      %v321 = vmul.f32 %v257, %v257
      %v322 = vmul.f32 %v258, %v258
      %v323 = vmul.f32 %v259, %v259
      %v324 = vmul.f32 %v260, %v260
      %v325 = vmul.f32 %v261, %v261
      %v326 = vmul.f32 %v262, %v262
      %v327 = vmul.f32 %v263, %v263
      %v328 = vmul.f32 %v264, %v264
      %v329 = vmul.f32 %v265, %v265
      %v330 = vmul.f32 %v266, %v266
      %v331 = vmul.f32 %v267, %v267
      %v332 = vmul.f32 %v268, %v268
      %v333 = vmul.f32 %v269, %v269
      %v334 = vmul.f32 %v270, %v270
      %v335 = vld [vmem:[#allocation7] sm:$0xff]
      %v336 = vld [vmem:[#allocation7 + $0x8] sm:$0xff]
      %v337 = vld [vmem:[#allocation7 + $0x10] sm:$0xff]
      %v338 = vld [vmem:[#allocation7 + $0x18] sm:$0xff]
      %v339 = vld [vmem:[#allocation7 + $0x20] sm:$0xff]
      %v340 = vld [vmem:[#allocation7 + $0x28] sm:$0xff]
      %v341 = vld [vmem:[#allocation7 + $0x30] sm:$0xff]
      %v342 = vld [vmem:[#allocation7 + $0x38] sm:$0xff]
      %v343 = vadd.f32 %v271, %v279
      %v344 = vadd.f32 %v343, %v287
      %v345 = vadd.f32 %v344, %v295
      %v346 = vadd.f32 %v345, %v303
      %v347 = vadd.f32 %v346, %v311
      %v348 = vadd.f32 %v347, %v319
      %v349 = vadd.f32 %v348, %v327
      %v350 = vadd.f32 %v272, %v280
      %v351 = vadd.f32 %v350, %v288
      %v352 = vadd.f32 %v351, %v296
      %v353 = vadd.f32 %v352, %v304
      %v354 = vadd.f32 %v353, %v312
      %v355 = vadd.f32 %v354, %v320
      %v356 = vadd.f32 %v355, %v328
      %v357 = vadd.f32 %v273, %v281
      %v358 = vadd.f32 %v357, %v289
      %v359 = vadd.f32 %v358, %v297
      %v360 = vadd.f32 %v359, %v305
      %v361 = vadd.f32 %v360, %v313
      %v362 = vadd.f32 %v361, %v321
      %v363 = vadd.f32 %v362, %v329
      %v364 = vadd.f32 %v274, %v282
      %v365 = vadd.f32 %v364, %v290
      %v366 = vadd.f32 %v365, %v298
      %v367 = vadd.f32 %v366, %v306
      %v368 = vadd.f32 %v367, %v314
      %v369 = vadd.f32 %v368, %v322
      %v370 = vadd.f32 %v369, %v330
      %v371 = vadd.f32 %v275, %v283
      %v372 = vadd.f32 %v371, %v291
      %v373 = vadd.f32 %v372, %v299
      %v374 = vadd.f32 %v373, %v307
      %v375 = vadd.f32 %v374, %v315
      %v376 = vadd.f32 %v375, %v323
      %v377 = vadd.f32 %v376, %v331
      %v378 = vadd.f32 %v276, %v284
      %v379 = vadd.f32 %v378, %v292
      %v380 = vadd.f32 %v379, %v300
      %v381 = vadd.f32 %v380, %v308
      %v382 = vadd.f32 %v381, %v316
      %v383 = vadd.f32 %v382, %v324
      %v384 = vadd.f32 %v383, %v332
      %v385 = vadd.f32 %v277, %v285
      %v386 = vadd.f32 %v385, %v293
      %v387 = vadd.f32 %v386, %v301
      %v388 = vadd.f32 %v387, %v309
      %v389 = vadd.f32 %v388, %v317
      %v390 = vadd.f32 %v389, %v325
      %v391 = vadd.f32 %v390, %v333
      %v392 = vadd.f32 %v278, %v286
      %v393 = vadd.f32 %v392, %v294
      %v394 = vadd.f32 %v393, %v302
      %v395 = vadd.f32 %v394, %v310
      %v396 = vadd.f32 %v395, %v318
      %v397 = vadd.f32 %v396, %v326
      %v398 = vadd.f32 %v397, %v334
      %v399 = vadd.f32 %v335, %v349
      %v400 = vadd.f32 %v336, %v356
      %v401 = vadd.f32 %v337, %v363
      %v402 = vadd.f32 %v338, %v370
      %v403 = vadd.f32 %v339, %v377
      %v404 = vadd.f32 %v340, %v384
      %v405 = vadd.f32 %v341, %v391
      %v406 = vadd.f32 %v342, %v398
      %407 = vst [vmem:[#allocation7] sm:$0xff] %v399
      %408 = vst [vmem:[#allocation7 + $0x8] sm:$0xff] %v400
      %409 = vst [vmem:[#allocation7 + $0x10] sm:$0xff] %v401
      %410 = vst [vmem:[#allocation7 + $0x18] sm:$0xff] %v402
      %411 = vst [vmem:[#allocation7 + $0x20] sm:$0xff] %v403
      %412 = vst [vmem:[#allocation7 + $0x28] sm:$0xff] %v404
      %413 = vst [vmem:[#allocation7 + $0x30] sm:$0xff] %v405
      %414 = vst [vmem:[#allocation7 + $0x38] sm:$0xff] %v406
      %s415 = scalar_lea.vmem [#allocation2], 512
      %v416 = vld [vmem:[%s415] sm:$0xff]
      %v417 = vld [vmem:[%s415 + $0x8] sm:$0xff]
      %v418 = vld [vmem:[%s415 + $0x10] sm:$0xff]
      %v419 = vld [vmem:[%s415 + $0x18] sm:$0xff]
      %v420 = vld [vmem:[%s415 + $0x20] sm:$0xff]
      %v421 = vld [vmem:[%s415 + $0x28] sm:$0xff]
      %v422 = vld [vmem:[%s415 + $0x30] sm:$0xff]
      %v423 = vld [vmem:[%s415 + $0x38] sm:$0xff]
      %v424 = vld [vmem:[%s415 + $0x40] sm:$0xff]
      %v425 = vld [vmem:[%s415 + $0x48] sm:$0xff]
      %v426 = vld [vmem:[%s415 + $0x50] sm:$0xff]
      %v427 = vld [vmem:[%s415 + $0x58] sm:$0xff]
      %v428 = vld [vmem:[%s415 + $0x60] sm:$0xff]
      %v429 = vld [vmem:[%s415 + $0x68] sm:$0xff]
      %v430 = vld [vmem:[%s415 + $0x70] sm:$0xff]
      %v431 = vld [vmem:[%s415 + $0x78] sm:$0xff]
      %v432 = vld [vmem:[%s415 + $0x80] sm:$0xff]
      %v433 = vld [vmem:[%s415 + $0x88] sm:$0xff]
      %v434 = vld [vmem:[%s415 + $0x90] sm:$0xff]
      %v435 = vld [vmem:[%s415 + $0x98] sm:$0xff]
      %v436 = vld [vmem:[%s415 + $0xa0] sm:$0xff]
      %v437 = vld [vmem:[%s415 + $0xa8] sm:$0xff]
      %v438 = vld [vmem:[%s415 + $0xb0] sm:$0xff]
      %v439 = vld [vmem:[%s415 + $0xb8] sm:$0xff]
      %v440 = vld [vmem:[%s415 + $0xc0] sm:$0xff]
      %v441 = vld [vmem:[%s415 + $0xc8] sm:$0xff]
      %v442 = vld [vmem:[%s415 + $0xd0] sm:$0xff]
      %v443 = vld [vmem:[%s415 + $0xd8] sm:$0xff]
      %v444 = vld [vmem:[%s415 + $0xe0] sm:$0xff]
      %v445 = vld [vmem:[%s415 + $0xe8] sm:$0xff]
      %v446 = vld [vmem:[%s415 + $0xf0] sm:$0xff]
      %v447 = vld [vmem:[%s415 + $0xf8] sm:$0xff]
      %v448 = vld [vmem:[%s415 + $0x100] sm:$0xff]
      %v449 = vld [vmem:[%s415 + $0x108] sm:$0xff]
      %v450 = vld [vmem:[%s415 + $0x110] sm:$0xff]
      %v451 = vld [vmem:[%s415 + $0x118] sm:$0xff]
      %v452 = vld [vmem:[%s415 + $0x120] sm:$0xff]
      %v453 = vld [vmem:[%s415 + $0x128] sm:$0xff]
      %v454 = vld [vmem:[%s415 + $0x130] sm:$0xff]
      %v455 = vld [vmem:[%s415 + $0x138] sm:$0xff]
      %v456 = vld [vmem:[%s415 + $0x140] sm:$0xff]
      %v457 = vld [vmem:[%s415 + $0x148] sm:$0xff]
      %v458 = vld [vmem:[%s415 + $0x150] sm:$0xff]
      %v459 = vld [vmem:[%s415 + $0x158] sm:$0xff]
      %v460 = vld [vmem:[%s415 + $0x160] sm:$0xff]
      %v461 = vld [vmem:[%s415 + $0x168] sm:$0xff]
      %v462 = vld [vmem:[%s415 + $0x170] sm:$0xff]
      %v463 = vld [vmem:[%s415 + $0x178] sm:$0xff]
      %v464 = vld [vmem:[%s415 + $0x180] sm:$0xff]
      %v465 = vld [vmem:[%s415 + $0x188] sm:$0xff]
      %v466 = vld [vmem:[%s415 + $0x190] sm:$0xff]
      %v467 = vld [vmem:[%s415 + $0x198] sm:$0xff]
      %v468 = vld [vmem:[%s415 + $0x1a0] sm:$0xff]
      %v469 = vld [vmem:[%s415 + $0x1a8] sm:$0xff]
      %v470 = vld [vmem:[%s415 + $0x1b0] sm:$0xff]
      %v471 = vld [vmem:[%s415 + $0x1b8] sm:$0xff]
      %v472 = vld [vmem:[%s415 + $0x1c0] sm:$0xff]
      %v473 = vld [vmem:[%s415 + $0x1c8] sm:$0xff]
      %v474 = vld [vmem:[%s415 + $0x1d0] sm:$0xff]
      %v475 = vld [vmem:[%s415 + $0x1d8] sm:$0xff]
      %v476 = vld [vmem:[%s415 + $0x1e0] sm:$0xff]
      %v477 = vld [vmem:[%s415 + $0x1e8] sm:$0xff]
      %v478 = vld [vmem:[%s415 + $0x1f0] sm:$0xff]
      %v479 = vld [vmem:[%s415 + $0x1f8] sm:$0xff]
      %s480 = scalar_lea.vmem [#allocation5], 512
      %v481 = vld [vmem:[%s480] sm:$0xff]
      %v482 = vld [vmem:[%s480 + $0x8] sm:$0xff]
      %v483 = vld [vmem:[%s480 + $0x10] sm:$0xff]
      %v484 = vld [vmem:[%s480 + $0x18] sm:$0xff]
      %v485 = vld [vmem:[%s480 + $0x20] sm:$0xff]
      %v486 = vld [vmem:[%s480 + $0x28] sm:$0xff]
      %v487 = vld [vmem:[%s480 + $0x30] sm:$0xff]
      %v488 = vld [vmem:[%s480 + $0x38] sm:$0xff]
      %v489 = vld [vmem:[%s480 + $0x40] sm:$0xff]
      %v490 = vld [vmem:[%s480 + $0x48] sm:$0xff]
      %v491 = vld [vmem:[%s480 + $0x50] sm:$0xff]
      %v492 = vld [vmem:[%s480 + $0x58] sm:$0xff]
      %v493 = vld [vmem:[%s480 + $0x60] sm:$0xff]
      %v494 = vld [vmem:[%s480 + $0x68] sm:$0xff]
      %v495 = vld [vmem:[%s480 + $0x70] sm:$0xff]
      %v496 = vld [vmem:[%s480 + $0x78] sm:$0xff]
      %v497 = vld [vmem:[%s480 + $0x80] sm:$0xff]
      %v498 = vld [vmem:[%s480 + $0x88] sm:$0xff]
      %v499 = vld [vmem:[%s480 + $0x90] sm:$0xff]
      %v500 = vld [vmem:[%s480 + $0x98] sm:$0xff]
      %v501 = vld [vmem:[%s480 + $0xa0] sm:$0xff]
      %v502 = vld [vmem:[%s480 + $0xa8] sm:$0xff]
      %v503 = vld [vmem:[%s480 + $0xb0] sm:$0xff]
      %v504 = vld [vmem:[%s480 + $0xb8] sm:$0xff]
      %v505 = vld [vmem:[%s480 + $0xc0] sm:$0xff]
      %v506 = vld [vmem:[%s480 + $0xc8] sm:$0xff]
      %v507 = vld [vmem:[%s480 + $0xd0] sm:$0xff]
      %v508 = vld [vmem:[%s480 + $0xd8] sm:$0xff]
      %v509 = vld [vmem:[%s480 + $0xe0] sm:$0xff]
      %v510 = vld [vmem:[%s480 + $0xe8] sm:$0xff]
      %v511 = vld [vmem:[%s480 + $0xf0] sm:$0xff]
      %v512 = vld [vmem:[%s480 + $0xf8] sm:$0xff]
      %v513 = vld [vmem:[%s480 + $0x100] sm:$0xff]
      %v514 = vld [vmem:[%s480 + $0x108] sm:$0xff]
      %v515 = vld [vmem:[%s480 + $0x110] sm:$0xff]
      %v516 = vld [vmem:[%s480 + $0x118] sm:$0xff]
      %v517 = vld [vmem:[%s480 + $0x120] sm:$0xff]
      %v518 = vld [vmem:[%s480 + $0x128] sm:$0xff]
      %v519 = vld [vmem:[%s480 + $0x130] sm:$0xff]
      %v520 = vld [vmem:[%s480 + $0x138] sm:$0xff]
      %v521 = vld [vmem:[%s480 + $0x140] sm:$0xff]
      %v522 = vld [vmem:[%s480 + $0x148] sm:$0xff]
      %v523 = vld [vmem:[%s480 + $0x150] sm:$0xff]
      %v524 = vld [vmem:[%s480 + $0x158] sm:$0xff]
      %v525 = vld [vmem:[%s480 + $0x160] sm:$0xff]
      %v526 = vld [vmem:[%s480 + $0x168] sm:$0xff]
      %v527 = vld [vmem:[%s480 + $0x170] sm:$0xff]
      %v528 = vld [vmem:[%s480 + $0x178] sm:$0xff]
      %v529 = vld [vmem:[%s480 + $0x180] sm:$0xff]
      %v530 = vld [vmem:[%s480 + $0x188] sm:$0xff]
      %v531 = vld [vmem:[%s480 + $0x190] sm:$0xff]
      %v532 = vld [vmem:[%s480 + $0x198] sm:$0xff]
      %v533 = vld [vmem:[%s480 + $0x1a0] sm:$0xff]
      %v534 = vld [vmem:[%s480 + $0x1a8] sm:$0xff]
      %v535 = vld [vmem:[%s480 + $0x1b0] sm:$0xff]
      %v536 = vld [vmem:[%s480 + $0x1b8] sm:$0xff]
      %v537 = vld [vmem:[%s480 + $0x1c0] sm:$0xff]
      %v538 = vld [vmem:[%s480 + $0x1c8] sm:$0xff]
      %v539 = vld [vmem:[%s480 + $0x1d0] sm:$0xff]
      %v540 = vld [vmem:[%s480 + $0x1d8] sm:$0xff]
      %v541 = vld [vmem:[%s480 + $0x1e0] sm:$0xff]
      %v542 = vld [vmem:[%s480 + $0x1e8] sm:$0xff]
      %v543 = vld [vmem:[%s480 + $0x1f0] sm:$0xff]
      %v544 = vld [vmem:[%s480 + $0x1f8] sm:$0xff]
      %v545 = vsub.f32 %v416, %v481
      %v546 = vsub.f32 %v417, %v482
      %v547 = vsub.f32 %v418, %v483
      %v548 = vsub.f32 %v419, %v484
      %v549 = vsub.f32 %v420, %v485
      %v550 = vsub.f32 %v421, %v486
      %v551 = vsub.f32 %v422, %v487
      %v552 = vsub.f32 %v423, %v488
      %v553 = vsub.f32 %v424, %v489
      %v554 = vsub.f32 %v425, %v490
      %v555 = vsub.f32 %v426, %v491
      %v556 = vsub.f32 %v427, %v492
      %v557 = vsub.f32 %v428, %v493
      %v558 = vsub.f32 %v429, %v494
      %v559 = vsub.f32 %v430, %v495
      %v560 = vsub.f32 %v431, %v496
      %v561 = vsub.f32 %v432, %v497
      %v562 = vsub.f32 %v433, %v498
      %v563 = vsub.f32 %v434, %v499
      %v564 = vsub.f32 %v435, %v500
      %v565 = vsub.f32 %v436, %v501
      %v566 = vsub.f32 %v437, %v502
      %v567 = vsub.f32 %v438, %v503
      %v568 = vsub.f32 %v439, %v504
      %v569 = vsub.f32 %v440, %v505
      %v570 = vsub.f32 %v441, %v506
      %v571 = vsub.f32 %v442, %v507
      %v572 = vsub.f32 %v443, %v508
      %v573 = vsub.f32 %v444, %v509
      %v574 = vsub.f32 %v445, %v510
      %v575 = vsub.f32 %v446, %v511
      %v576 = vsub.f32 %v447, %v512
      %v577 = vsub.f32 %v448, %v513
      %v578 = vsub.f32 %v449, %v514
      %v579 = vsub.f32 %v450, %v515
      %v580 = vsub.f32 %v451, %v516
      %v581 = vsub.f32 %v452, %v517
      %v582 = vsub.f32 %v453, %v518
      %v583 = vsub.f32 %v454, %v519
      %v584 = vsub.f32 %v455, %v520
      %v585 = vsub.f32 %v456, %v521
      %v586 = vsub.f32 %v457, %v522
      %v587 = vsub.f32 %v458, %v523
      %v588 = vsub.f32 %v459, %v524
      %v589 = vsub.f32 %v460, %v525
      %v590 = vsub.f32 %v461, %v526
      %v591 = vsub.f32 %v462, %v527
      %v592 = vsub.f32 %v463, %v528
      %v593 = vsub.f32 %v464, %v529
      %v594 = vsub.f32 %v465, %v530
      %v595 = vsub.f32 %v466, %v531
      %v596 = vsub.f32 %v467, %v532
      %v597 = vsub.f32 %v468, %v533
      %v598 = vsub.f32 %v469, %v534
      %v599 = vsub.f32 %v470, %v535
      %v600 = vsub.f32 %v471, %v536
      %v601 = vsub.f32 %v472, %v537
      %v602 = vsub.f32 %v473, %v538
      %v603 = vsub.f32 %v474, %v539
      %v604 = vsub.f32 %v475, %v540
      %v605 = vsub.f32 %v476, %v541
      %v606 = vsub.f32 %v477, %v542
      %v607 = vsub.f32 %v478, %v543
      %v608 = vsub.f32 %v479, %v544
      %v609 = vmul.f32 %v545, %v545
      %v610 = vmul.f32 %v546, %v546
      %v611 = vmul.f32 %v547, %v547
      %v612 = vmul.f32 %v548, %v548
      %v613 = vmul.f32 %v549, %v549
      %v614 = vmul.f32 %v550, %v550
      %v615 = vmul.f32 %v551, %v551
      %v616 = vmul.f32 %v552, %v552
      %v617 = vmul.f32 %v553, %v553
      %v618 = vmul.f32 %v554, %v554
      %v619 = vmul.f32 %v555, %v555
      %v620 = vmul.f32 %v556, %v556
      %v621 = vmul.f32 %v557, %v557
      %v622 = vmul.f32 %v558, %v558
      %v623 = vmul.f32 %v559, %v559
      %v624 = vmul.f32 %v560, %v560
      %v625 = vmul.f32 %v561, %v561
      %v626 = vmul.f32 %v562, %v562
      %v627 = vmul.f32 %v563, %v563
      %v628 = vmul.f32 %v564, %v564
      %v629 = vmul.f32 %v565, %v565
      %v630 = vmul.f32 %v566, %v566
      %v631 = vmul.f32 %v567, %v567
      %v632 = vmul.f32 %v568, %v568
      %v633 = vmul.f32 %v569, %v569
      %v634 = vmul.f32 %v570, %v570
      %v635 = vmul.f32 %v571, %v571
      %v636 = vmul.f32 %v572, %v572
      %v637 = vmul.f32 %v573, %v573
      %v638 = vmul.f32 %v574, %v574
      %v639 = vmul.f32 %v575, %v575
      %v640 = vmul.f32 %v576, %v576
      %v641 = vmul.f32 %v577, %v577
      %v642 = vmul.f32 %v578, %v578
      %v643 = vmul.f32 %v579, %v579
      %v644 = vmul.f32 %v580, %v580
      %v645 = vmul.f32 %v581, %v581
      %v646 = vmul.f32 %v582, %v582
      %v647 = vmul.f32 %v583, %v583
      %v648 = vmul.f32 %v584, %v584
      %v649 = vmul.f32 %v585, %v585
      %v650 = vmul.f32 %v586, %v586
      %v651 = vmul.f32 %v587, %v587
      %v652 = vmul.f32 %v588, %v588
      %v653 = vmul.f32 %v589, %v589
      %v654 = vmul.f32 %v590, %v590
      %v655 = vmul.f32 %v591, %v591
      %v656 = vmul.f32 %v592, %v592
      %v657 = vmul.f32 %v593, %v593
      %v658 = vmul.f32 %v594, %v594
      %v659 = vmul.f32 %v595, %v595
      %v660 = vmul.f32 %v596, %v596
      %v661 = vmul.f32 %v597, %v597
      %v662 = vmul.f32 %v598, %v598
      %v663 = vmul.f32 %v599, %v599
      %v664 = vmul.f32 %v600, %v600
      %v665 = vmul.f32 %v601, %v601
      %v666 = vmul.f32 %v602, %v602
      %v667 = vmul.f32 %v603, %v603
      %v668 = vmul.f32 %v604, %v604
      %v669 = vmul.f32 %v605, %v605
      %v670 = vmul.f32 %v606, %v606
      %v671 = vmul.f32 %v607, %v607
      %v672 = vmul.f32 %v608, %v608
      %v673 = vld [vmem:[#allocation7] sm:$0xff]
      %v674 = vld [vmem:[#allocation7 + $0x8] sm:$0xff]
      %v675 = vld [vmem:[#allocation7 + $0x10] sm:$0xff]
      %v676 = vld [vmem:[#allocation7 + $0x18] sm:$0xff]
      %v677 = vld [vmem:[#allocation7 + $0x20] sm:$0xff]
      %v678 = vld [vmem:[#allocation7 + $0x28] sm:$0xff]
      %v679 = vld [vmem:[#allocation7 + $0x30] sm:$0xff]
      %v680 = vld [vmem:[#allocation7 + $0x38] sm:$0xff]
      %v681 = vadd.f32 %v609, %v617
      %v682 = vadd.f32 %v681, %v625
      %v683 = vadd.f32 %v682, %v633
      %v684 = vadd.f32 %v683, %v641
      %v685 = vadd.f32 %v684, %v649
      %v686 = vadd.f32 %v685, %v657
      %v687 = vadd.f32 %v686, %v665
      %v688 = vadd.f32 %v610, %v618
      %v689 = vadd.f32 %v688, %v626
      %v690 = vadd.f32 %v689, %v634
      %v691 = vadd.f32 %v690, %v642
      %v692 = vadd.f32 %v691, %v650
      %v693 = vadd.f32 %v692, %v658
      %v694 = vadd.f32 %v693, %v666
      %v695 = vadd.f32 %v611, %v619
      %v696 = vadd.f32 %v695, %v627
      %v697 = vadd.f32 %v696, %v635
      %v698 = vadd.f32 %v697, %v643
      %v699 = vadd.f32 %v698, %v651
      %v700 = vadd.f32 %v699, %v659
      %v701 = vadd.f32 %v700, %v667
      %v702 = vadd.f32 %v612, %v620
      %v703 = vadd.f32 %v702, %v628
      %v704 = vadd.f32 %v703, %v636
      %v705 = vadd.f32 %v704, %v644
      %v706 = vadd.f32 %v705, %v652
      %v707 = vadd.f32 %v706, %v660
      %v708 = vadd.f32 %v707, %v668
      %v709 = vadd.f32 %v613, %v621
      %v710 = vadd.f32 %v709, %v629
      %v711 = vadd.f32 %v710, %v637
      %v712 = vadd.f32 %v711, %v645
      %v713 = vadd.f32 %v712, %v653
      %v714 = vadd.f32 %v713, %v661
      %v715 = vadd.f32 %v714, %v669
      %v716 = vadd.f32 %v614, %v622
      %v717 = vadd.f32 %v716, %v630
      %v718 = vadd.f32 %v717, %v638
      %v719 = vadd.f32 %v718, %v646
      %v720 = vadd.f32 %v719, %v654
      %v721 = vadd.f32 %v720, %v662
      %v722 = vadd.f32 %v721, %v670
      %v723 = vadd.f32 %v615, %v623
      %v724 = vadd.f32 %v723, %v631
      %v725 = vadd.f32 %v724, %v639
      %v726 = vadd.f32 %v725, %v647
      %v727 = vadd.f32 %v726, %v655
      %v728 = vadd.f32 %v727, %v663
      %v729 = vadd.f32 %v728, %v671
      %v730 = vadd.f32 %v616, %v624
      %v731 = vadd.f32 %v730, %v632
      %v732 = vadd.f32 %v731, %v640
      %v733 = vadd.f32 %v732, %v648
      %v734 = vadd.f32 %v733, %v656
      %v735 = vadd.f32 %v734, %v664
      %v736 = vadd.f32 %v735, %v672
      %v737 = vadd.f32 %v673, %v687
      %v738 = vadd.f32 %v674, %v694
      %v739 = vadd.f32 %v675, %v701
      %v740 = vadd.f32 %v676, %v708
      %v741 = vadd.f32 %v677, %v715
      %v742 = vadd.f32 %v678, %v722
      %v743 = vadd.f32 %v679, %v729
      %v744 = vadd.f32 %v680, %v736
      %745 = vst [vmem:[#allocation7] sm:$0xff] %v737
      %746 = vst [vmem:[#allocation7 + $0x8] sm:$0xff] %v738
      %747 = vst [vmem:[#allocation7 + $0x10] sm:$0xff] %v739
      %748 = vst [vmem:[#allocation7 + $0x18] sm:$0xff] %v740
      %749 = vst [vmem:[#allocation7 + $0x20] sm:$0xff] %v741
      %750 = vst [vmem:[#allocation7 + $0x28] sm:$0xff] %v742
      %751 = vst [vmem:[#allocation7 + $0x30] sm:$0xff] %v743
      %752 = vst [vmem:[#allocation7 + $0x38] sm:$0xff] %v744
      %s753 = scalar_lea.vmem [#allocation2], 1024
      %v754 = vld [vmem:[%s753] sm:$0xff]
      %v755 = vld [vmem:[%s753 + $0x8] sm:$0xff]
      %v756 = vld [vmem:[%s753 + $0x10] sm:$0xff]
      %v757 = vld [vmem:[%s753 + $0x18] sm:$0xff]
      %v758 = vld [vmem:[%s753 + $0x20] sm:$0xff]
      %v759 = vld [vmem:[%s753 + $0x28] sm:$0xff]
      %v760 = vld [vmem:[%s753 + $0x30] sm:$0xff]
      %v761 = vld [vmem:[%s753 + $0x38] sm:$0xff]
      %v762 = vld [vmem:[%s753 + $0x40] sm:$0xff]
      %v763 = vld [vmem:[%s753 + $0x48] sm:$0xff]
      %v764 = vld [vmem:[%s753 + $0x50] sm:$0xff]
      %v765 = vld [vmem:[%s753 + $0x58] sm:$0xff]
      %v766 = vld [vmem:[%s753 + $0x60] sm:$0xff]
      %v767 = vld [vmem:[%s753 + $0x68] sm:$0xff]
      %v768 = vld [vmem:[%s753 + $0x70] sm:$0xff]
      %v769 = vld [vmem:[%s753 + $0x78] sm:$0xff]
      %v770 = vld [vmem:[%s753 + $0x80] sm:$0xff]
      %v771 = vld [vmem:[%s753 + $0x88] sm:$0xff]
      %v772 = vld [vmem:[%s753 + $0x90] sm:$0xff]
      %v773 = vld [vmem:[%s753 + $0x98] sm:$0xff]
      %v774 = vld [vmem:[%s753 + $0xa0] sm:$0xff]
      %v775 = vld [vmem:[%s753 + $0xa8] sm:$0xff]
      %v776 = vld [vmem:[%s753 + $0xb0] sm:$0xff]
      %v777 = vld [vmem:[%s753 + $0xb8] sm:$0xff]
      %v778 = vld [vmem:[%s753 + $0xc0] sm:$0xff]
      %v779 = vld [vmem:[%s753 + $0xc8] sm:$0xff]
      %v780 = vld [vmem:[%s753 + $0xd0] sm:$0xff]
      %v781 = vld [vmem:[%s753 + $0xd8] sm:$0xff]
      %v782 = vld [vmem:[%s753 + $0xe0] sm:$0xff]
      %v783 = vld [vmem:[%s753 + $0xe8] sm:$0xff]
      %v784 = vld [vmem:[%s753 + $0xf0] sm:$0xff]
      %v785 = vld [vmem:[%s753 + $0xf8] sm:$0xff]
      %v786 = vld [vmem:[%s753 + $0x100] sm:$0xff]
      %v787 = vld [vmem:[%s753 + $0x108] sm:$0xff]
      %v788 = vld [vmem:[%s753 + $0x110] sm:$0xff]
      %v789 = vld [vmem:[%s753 + $0x118] sm:$0xff]
      %v790 = vld [vmem:[%s753 + $0x120] sm:$0xff]
      %v791 = vld [vmem:[%s753 + $0x128] sm:$0xff]
      %v792 = vld [vmem:[%s753 + $0x130] sm:$0xff]
      %v793 = vld [vmem:[%s753 + $0x138] sm:$0xff]
      %v794 = vld [vmem:[%s753 + $0x140] sm:$0xff]
      %v795 = vld [vmem:[%s753 + $0x148] sm:$0xff]
      %v796 = vld [vmem:[%s753 + $0x150] sm:$0xff]
      %v797 = vld [vmem:[%s753 + $0x158] sm:$0xff]
      %v798 = vld [vmem:[%s753 + $0x160] sm:$0xff]
      %v799 = vld [vmem:[%s753 + $0x168] sm:$0xff]
      %v800 = vld [vmem:[%s753 + $0x170] sm:$0xff]
      %v801 = vld [vmem:[%s753 + $0x178] sm:$0xff]
      %v802 = vld [vmem:[%s753 + $0x180] sm:$0xff]
      %v803 = vld [vmem:[%s753 + $0x188] sm:$0xff]
      %v804 = vld [vmem:[%s753 + $0x190] sm:$0xff]
      %v805 = vld [vmem:[%s753 + $0x198] sm:$0xff]
      %v806 = vld [vmem:[%s753 + $0x1a0] sm:$0xff]
      %v807 = vld [vmem:[%s753 + $0x1a8] sm:$0xff]
      %v808 = vld [vmem:[%s753 + $0x1b0] sm:$0xff]
      %v809 = vld [vmem:[%s753 + $0x1b8] sm:$0xff]
      %v810 = vld [vmem:[%s753 + $0x1c0] sm:$0xff]
      %v811 = vld [vmem:[%s753 + $0x1c8] sm:$0xff]
      %v812 = vld [vmem:[%s753 + $0x1d0] sm:$0xff]
      %v813 = vld [vmem:[%s753 + $0x1d8] sm:$0xff]
      %v814 = vld [vmem:[%s753 + $0x1e0] sm:$0xff]
      %v815 = vld [vmem:[%s753 + $0x1e8] sm:$0xff]
      %v816 = vld [vmem:[%s753 + $0x1f0] sm:$0xff]
      %v817 = vld [vmem:[%s753 + $0x1f8] sm:$0xff]
      %s818 = scalar_lea.vmem [#allocation5], 1024
      %v819 = vld [vmem:[%s818] sm:$0xff]
      %v820 = vld [vmem:[%s818 + $0x8] sm:$0xff]
      %v821 = vld [vmem:[%s818 + $0x10] sm:$0xff]
      %v822 = vld [vmem:[%s818 + $0x18] sm:$0xff]
      %v823 = vld [vmem:[%s818 + $0x20] sm:$0xff]
      %v824 = vld [vmem:[%s818 + $0x28] sm:$0xff]
      %v825 = vld [vmem:[%s818 + $0x30] sm:$0xff]
      %v826 = vld [vmem:[%s818 + $0x38] sm:$0xff]
      %v827 = vld [vmem:[%s818 + $0x40] sm:$0xff]
      %v828 = vld [vmem:[%s818 + $0x48] sm:$0xff]
      %v829 = vld [vmem:[%s818 + $0x50] sm:$0xff]
      %v830 = vld [vmem:[%s818 + $0x58] sm:$0xff]
      %v831 = vld [vmem:[%s818 + $0x60] sm:$0xff]
      %v832 = vld [vmem:[%s818 + $0x68] sm:$0xff]
      %v833 = vld [vmem:[%s818 + $0x70] sm:$0xff]
      %v834 = vld [vmem:[%s818 + $0x78] sm:$0xff]
      %v835 = vld [vmem:[%s818 + $0x80] sm:$0xff]
      %v836 = vld [vmem:[%s818 + $0x88] sm:$0xff]
      %v837 = vld [vmem:[%s818 + $0x90] sm:$0xff]
      %v838 = vld [vmem:[%s818 + $0x98] sm:$0xff]
      %v839 = vld [vmem:[%s818 + $0xa0] sm:$0xff]
      %v840 = vld [vmem:[%s818 + $0xa8] sm:$0xff]
      %v841 = vld [vmem:[%s818 + $0xb0] sm:$0xff]
      %v842 = vld [vmem:[%s818 + $0xb8] sm:$0xff]
      %v843 = vld [vmem:[%s818 + $0xc0] sm:$0xff]
      %v844 = vld [vmem:[%s818 + $0xc8] sm:$0xff]
      %v845 = vld [vmem:[%s818 + $0xd0] sm:$0xff]
      %v846 = vld [vmem:[%s818 + $0xd8] sm:$0xff]
      %v847 = vld [vmem:[%s818 + $0xe0] sm:$0xff]
      %v848 = vld [vmem:[%s818 + $0xe8] sm:$0xff]
      %v849 = vld [vmem:[%s818 + $0xf0] sm:$0xff]
      %v850 = vld [vmem:[%s818 + $0xf8] sm:$0xff]
      %v851 = vld [vmem:[%s818 + $0x100] sm:$0xff]
      %v852 = vld [vmem:[%s818 + $0x108] sm:$0xff]
      %v853 = vld [vmem:[%s818 + $0x110] sm:$0xff]
      %v854 = vld [vmem:[%s818 + $0x118] sm:$0xff]
      %v855 = vld [vmem:[%s818 + $0x120] sm:$0xff]
      %v856 = vld [vmem:[%s818 + $0x128] sm:$0xff]
      %v857 = vld [vmem:[%s818 + $0x130] sm:$0xff]
      %v858 = vld [vmem:[%s818 + $0x138] sm:$0xff]
      %v859 = vld [vmem:[%s818 + $0x140] sm:$0xff]
      %v860 = vld [vmem:[%s818 + $0x148] sm:$0xff]
      %v861 = vld [vmem:[%s818 + $0x150] sm:$0xff]
      %v862 = vld [vmem:[%s818 + $0x158] sm:$0xff]
      %v863 = vld [vmem:[%s818 + $0x160] sm:$0xff]
      %v864 = vld [vmem:[%s818 + $0x168] sm:$0xff]
      %v865 = vld [vmem:[%s818 + $0x170] sm:$0xff]
      %v866 = vld [vmem:[%s818 + $0x178] sm:$0xff]
      %v867 = vld [vmem:[%s818 + $0x180] sm:$0xff]
      %v868 = vld [vmem:[%s818 + $0x188] sm:$0xff]
      %v869 = vld [vmem:[%s818 + $0x190] sm:$0xff]
      %v870 = vld [vmem:[%s818 + $0x198] sm:$0xff]
      %v871 = vld [vmem:[%s818 + $0x1a0] sm:$0xff]
      %v872 = vld [vmem:[%s818 + $0x1a8] sm:$0xff]
      %v873 = vld [vmem:[%s818 + $0x1b0] sm:$0xff]
      %v874 = vld [vmem:[%s818 + $0x1b8] sm:$0xff]
      %v875 = vld [vmem:[%s818 + $0x1c0] sm:$0xff]
      %v876 = vld [vmem:[%s818 + $0x1c8] sm:$0xff]
      %v877 = vld [vmem:[%s818 + $0x1d0] sm:$0xff]
      %v878 = vld [vmem:[%s818 + $0x1d8] sm:$0xff]
      %v879 = vld [vmem:[%s818 + $0x1e0] sm:$0xff]
      %v880 = vld [vmem:[%s818 + $0x1e8] sm:$0xff]
      %v881 = vld [vmem:[%s818 + $0x1f0] sm:$0xff]
      %v882 = vld [vmem:[%s818 + $0x1f8] sm:$0xff]
      %v883 = vsub.f32 %v754, %v819
      %v884 = vsub.f32 %v755, %v820
      %v885 = vsub.f32 %v756, %v821
      %v886 = vsub.f32 %v757, %v822
      %v887 = vsub.f32 %v758, %v823
      %v888 = vsub.f32 %v759, %v824
      %v889 = vsub.f32 %v760, %v825
      %v890 = vsub.f32 %v761, %v826
      %v891 = vsub.f32 %v762, %v827
      %v892 = vsub.f32 %v763, %v828
      %v893 = vsub.f32 %v764, %v829
      %v894 = vsub.f32 %v765, %v830
      %v895 = vsub.f32 %v766, %v831
      %v896 = vsub.f32 %v767, %v832
      %v897 = vsub.f32 %v768, %v833
      %v898 = vsub.f32 %v769, %v834
      %v899 = vsub.f32 %v770, %v835
      %v900 = vsub.f32 %v771, %v836
      %v901 = vsub.f32 %v772, %v837
      %v902 = vsub.f32 %v773, %v838
      %v903 = vsub.f32 %v774, %v839
      %v904 = vsub.f32 %v775, %v840
      %v905 = vsub.f32 %v776, %v841
      %v906 = vsub.f32 %v777, %v842
      %v907 = vsub.f32 %v778, %v843
      %v908 = vsub.f32 %v779, %v844
      %v909 = vsub.f32 %v780, %v845
      %v910 = vsub.f32 %v781, %v846
      %v911 = vsub.f32 %v782, %v847
      %v912 = vsub.f32 %v783, %v848
      %v913 = vsub.f32 %v784, %v849
      %v914 = vsub.f32 %v785, %v850
      %v915 = vsub.f32 %v786, %v851
      %v916 = vsub.f32 %v787, %v852
      %v917 = vsub.f32 %v788, %v853
      %v918 = vsub.f32 %v789, %v854
      %v919 = vsub.f32 %v790, %v855
      %v920 = vsub.f32 %v791, %v856
      %v921 = vsub.f32 %v792, %v857
      %v922 = vsub.f32 %v793, %v858
      %v923 = vsub.f32 %v794, %v859
      %v924 = vsub.f32 %v795, %v860
      %v925 = vsub.f32 %v796, %v861
      %v926 = vsub.f32 %v797, %v862
      %v927 = vsub.f32 %v798, %v863
      %v928 = vsub.f32 %v799, %v864
      %v929 = vsub.f32 %v800, %v865
      %v930 = vsub.f32 %v801, %v866
      %v931 = vsub.f32 %v802, %v867
      %v932 = vsub.f32 %v803, %v868
      %v933 = vsub.f32 %v804, %v869
      %v934 = vsub.f32 %v805, %v870
      %v935 = vsub.f32 %v806, %v871
      %v936 = vsub.f32 %v807, %v872
      %v937 = vsub.f32 %v808, %v873
      %v938 = vsub.f32 %v809, %v874
      %v939 = vsub.f32 %v810, %v875
      %v940 = vsub.f32 %v811, %v876
      %v941 = vsub.f32 %v812, %v877
      %v942 = vsub.f32 %v813, %v878
      %v943 = vsub.f32 %v814, %v879
      %v944 = vsub.f32 %v815, %v880
      %v945 = vsub.f32 %v816, %v881
      %v946 = vsub.f32 %v817, %v882
      %v947 = vmul.f32 %v883, %v883
      %v948 = vmul.f32 %v884, %v884
      %v949 = vmul.f32 %v885, %v885
      %v950 = vmul.f32 %v886, %v886
      %v951 = vmul.f32 %v887, %v887
      %v952 = vmul.f32 %v888, %v888
      %v953 = vmul.f32 %v889, %v889
      %v954 = vmul.f32 %v890, %v890
      %v955 = vmul.f32 %v891, %v891
      %v956 = vmul.f32 %v892, %v892
      %v957 = vmul.f32 %v893, %v893
      %v958 = vmul.f32 %v894, %v894
      %v959 = vmul.f32 %v895, %v895
      %v960 = vmul.f32 %v896, %v896
      %v961 = vmul.f32 %v897, %v897
      %v962 = vmul.f32 %v898, %v898
      %v963 = vmul.f32 %v899, %v899
      %v964 = vmul.f32 %v900, %v900
      %v965 = vmul.f32 %v901, %v901
      %v966 = vmul.f32 %v902, %v902
      %v967 = vmul.f32 %v903, %v903
      %v968 = vmul.f32 %v904, %v904
      %v969 = vmul.f32 %v905, %v905
      %v970 = vmul.f32 %v906, %v906
      %v971 = vmul.f32 %v907, %v907
      %v972 = vmul.f32 %v908, %v908
      %v973 = vmul.f32 %v909, %v909
      %v974 = vmul.f32 %v910, %v910
      %v975 = vmul.f32 %v911, %v911
      %v976 = vmul.f32 %v912, %v912
      %v977 = vmul.f32 %v913, %v913
      %v978 = vmul.f32 %v914, %v914
      %v979 = vmul.f32 %v915, %v915
      %v980 = vmul.f32 %v916, %v916
      %v981 = vmul.f32 %v917, %v917
      %v982 = vmul.f32 %v918, %v918
      %v983 = vmul.f32 %v919, %v919
      %v984 = vmul.f32 %v920, %v920
      %v985 = vmul.f32 %v921, %v921
      %v986 = vmul.f32 %v922, %v922
      %v987 = vmul.f32 %v923, %v923
      %v988 = vmul.f32 %v924, %v924
      %v989 = vmul.f32 %v925, %v925
      %v990 = vmul.f32 %v926, %v926
      %v991 = vmul.f32 %v927, %v927
      %v992 = vmul.f32 %v928, %v928
      %v993 = vmul.f32 %v929, %v929
      %v994 = vmul.f32 %v930, %v930
      %v995 = vmul.f32 %v931, %v931
      %v996 = vmul.f32 %v932, %v932
      %v997 = vmul.f32 %v933, %v933
      %v998 = vmul.f32 %v934, %v934
      %v999 = vmul.f32 %v935, %v935
      %v1000 = vmul.f32 %v936, %v936
      %v1001 = vmul.f32 %v937, %v937
      %v1002 = vmul.f32 %v938, %v938
      %v1003 = vmul.f32 %v939, %v939
      %v1004 = vmul.f32 %v940, %v940
      %v1005 = vmul.f32 %v941, %v941
      %v1006 = vmul.f32 %v942, %v942
      %v1007 = vmul.f32 %v943, %v943
      %v1008 = vmul.f32 %v944, %v944
      %v1009 = vmul.f32 %v945, %v945
      %v1010 = vmul.f32 %v946, %v946
      %v1011 = vld [vmem:[#allocation7] sm:$0xff]
      %v1012 = vld [vmem:[#allocation7 + $0x8] sm:$0xff]
      %v1013 = vld [vmem:[#allocation7 + $0x10] sm:$0xff]
      %v1014 = vld [vmem:[#allocation7 + $0x18] sm:$0xff]
      %v1015 = vld [vmem:[#allocation7 + $0x20] sm:$0xff]
      %v1016 = vld [vmem:[#allocation7 + $0x28] sm:$0xff]
      %v1017 = vld [vmem:[#allocation7 + $0x30] sm:$0xff]
      %v1018 = vld [vmem:[#allocation7 + $0x38] sm:$0xff]
      %v1019 = vadd.f32 %v947, %v955
      %v1020 = vadd.f32 %v1019, %v963
      %v1021 = vadd.f32 %v1020, %v971
      %v1022 = vadd.f32 %v1021, %v979
      %v1023 = vadd.f32 %v1022, %v987
      %v1024 = vadd.f32 %v1023, %v995
      %v1025 = vadd.f32 %v1024, %v1003
      %v1026 = vadd.f32 %v948, %v956
      %v1027 = vadd.f32 %v1026, %v964
      %v1028 = vadd.f32 %v1027, %v972
      %v1029 = vadd.f32 %v1028, %v980
      %v1030 = vadd.f32 %v1029, %v988
      %v1031 = vadd.f32 %v1030, %v996
      %v1032 = vadd.f32 %v1031, %v1004
      %v1033 = vadd.f32 %v949, %v957
      %v1034 = vadd.f32 %v1033, %v965
      %v1035 = vadd.f32 %v1034, %v973
      %v1036 = vadd.f32 %v1035, %v981
      %v1037 = vadd.f32 %v1036, %v989
      %v1038 = vadd.f32 %v1037, %v997
      %v1039 = vadd.f32 %v1038, %v1005
      %v1040 = vadd.f32 %v950, %v958
      %v1041 = vadd.f32 %v1040, %v966
      %v1042 = vadd.f32 %v1041, %v974
      %v1043 = vadd.f32 %v1042, %v982
      %v1044 = vadd.f32 %v1043, %v990
      %v1045 = vadd.f32 %v1044, %v998
      %v1046 = vadd.f32 %v1045, %v1006
      %v1047 = vadd.f32 %v951, %v959
      %v1048 = vadd.f32 %v1047, %v967
      %v1049 = vadd.f32 %v1048, %v975
      %v1050 = vadd.f32 %v1049, %v983
      %v1051 = vadd.f32 %v1050, %v991
      %v1052 = vadd.f32 %v1051, %v999
      %v1053 = vadd.f32 %v1052, %v1007
      %v1054 = vadd.f32 %v952, %v960
      %v1055 = vadd.f32 %v1054, %v968
      %v1056 = vadd.f32 %v1055, %v976
      %v1057 = vadd.f32 %v1056, %v984
      %v1058 = vadd.f32 %v1057, %v992
      %v1059 = vadd.f32 %v1058, %v1000
      %v1060 = vadd.f32 %v1059, %v1008
      %v1061 = vadd.f32 %v953, %v961
      %v1062 = vadd.f32 %v1061, %v969
      %v1063 = vadd.f32 %v1062, %v977
      %v1064 = vadd.f32 %v1063, %v985
      %v1065 = vadd.f32 %v1064, %v993
      %v1066 = vadd.f32 %v1065, %v1001
      %v1067 = vadd.f32 %v1066, %v1009
      %v1068 = vadd.f32 %v954, %v962
      %v1069 = vadd.f32 %v1068, %v970
      %v1070 = vadd.f32 %v1069, %v978
      %v1071 = vadd.f32 %v1070, %v986
      %v1072 = vadd.f32 %v1071, %v994
      %v1073 = vadd.f32 %v1072, %v1002
      %v1074 = vadd.f32 %v1073, %v1010
      %v1075 = vadd.f32 %v1011, %v1025
      %v1076 = vadd.f32 %v1012, %v1032
      %v1077 = vadd.f32 %v1013, %v1039
      %v1078 = vadd.f32 %v1014, %v1046
      %v1079 = vadd.f32 %v1015, %v1053
      %v1080 = vadd.f32 %v1016, %v1060
      %v1081 = vadd.f32 %v1017, %v1067
      %v1082 = vadd.f32 %v1018, %v1074
      %1083 = vst [vmem:[#allocation7] sm:$0xff] %v1075
      %1084 = vst [vmem:[#allocation7 + $0x8] sm:$0xff] %v1076
      %1085 = vst [vmem:[#allocation7 + $0x10] sm:$0xff] %v1077
      %1086 = vst [vmem:[#allocation7 + $0x18] sm:$0xff] %v1078
      %1087 = vst [vmem:[#allocation7 + $0x20] sm:$0xff] %v1079
      %1088 = vst [vmem:[#allocation7 + $0x28] sm:$0xff] %v1080
      %1089 = vst [vmem:[#allocation7 + $0x30] sm:$0xff] %v1081
      %1090 = vst [vmem:[#allocation7 + $0x38] sm:$0xff] %v1082
      %s1091 = scalar_lea.vmem [#allocation2], 1536
      %v1092 = vld [vmem:[%s1091] sm:$0xff]
      %v1093 = vld [vmem:[%s1091 + $0x8] sm:$0xff]
      %v1094 = vld [vmem:[%s1091 + $0x10] sm:$0xff]
      %v1095 = vld [vmem:[%s1091 + $0x18] sm:$0xff]
      %v1096 = vld [vmem:[%s1091 + $0x20] sm:$0xff]
      %v1097 = vld [vmem:[%s1091 + $0x28] sm:$0xff]
      %v1098 = vld [vmem:[%s1091 + $0x30] sm:$0xff]
      %v1099 = vld [vmem:[%s1091 + $0x38] sm:$0xff]
      %v1100 = vld [vmem:[%s1091 + $0x40] sm:$0xff]
      %v1101 = vld [vmem:[%s1091 + $0x48] sm:$0xff]
      %v1102 = vld [vmem:[%s1091 + $0x50] sm:$0xff]
      %v1103 = vld [vmem:[%s1091 + $0x58] sm:$0xff]
      %v1104 = vld [vmem:[%s1091 + $0x60] sm:$0xff]
      %v1105 = vld [vmem:[%s1091 + $0x68] sm:$0xff]
      %v1106 = vld [vmem:[%s1091 + $0x70] sm:$0xff]
      %v1107 = vld [vmem:[%s1091 + $0x78] sm:$0xff]
      %v1108 = vld [vmem:[%s1091 + $0x80] sm:$0xff]
      %v1109 = vld [vmem:[%s1091 + $0x88] sm:$0xff]
      %v1110 = vld [vmem:[%s1091 + $0x90] sm:$0xff]
      %v1111 = vld [vmem:[%s1091 + $0x98] sm:$0xff]
      %v1112 = vld [vmem:[%s1091 + $0xa0] sm:$0xff]
      %v1113 = vld [vmem:[%s1091 + $0xa8] sm:$0xff]
      %v1114 = vld [vmem:[%s1091 + $0xb0] sm:$0xff]
      %v1115 = vld [vmem:[%s1091 + $0xb8] sm:$0xff]
      %v1116 = vld [vmem:[%s1091 + $0xc0] sm:$0xff]
      %v1117 = vld [vmem:[%s1091 + $0xc8] sm:$0xff]
      %v1118 = vld [vmem:[%s1091 + $0xd0] sm:$0xff]
      %v1119 = vld [vmem:[%s1091 + $0xd8] sm:$0xff]
      %v1120 = vld [vmem:[%s1091 + $0xe0] sm:$0xff]
      %v1121 = vld [vmem:[%s1091 + $0xe8] sm:$0xff]
      %v1122 = vld [vmem:[%s1091 + $0xf0] sm:$0xff]
      %v1123 = vld [vmem:[%s1091 + $0xf8] sm:$0xff]
      %v1124 = vld [vmem:[%s1091 + $0x100] sm:$0xff]
      %v1125 = vld [vmem:[%s1091 + $0x108] sm:$0xff]
      %v1126 = vld [vmem:[%s1091 + $0x110] sm:$0xff]
      %v1127 = vld [vmem:[%s1091 + $0x118] sm:$0xff]
      %v1128 = vld [vmem:[%s1091 + $0x120] sm:$0xff]
      %v1129 = vld [vmem:[%s1091 + $0x128] sm:$0xff]
      %v1130 = vld [vmem:[%s1091 + $0x130] sm:$0xff]
      %v1131 = vld [vmem:[%s1091 + $0x138] sm:$0xff]
      %v1132 = vld [vmem:[%s1091 + $0x140] sm:$0xff]
      %v1133 = vld [vmem:[%s1091 + $0x148] sm:$0xff]
      %v1134 = vld [vmem:[%s1091 + $0x150] sm:$0xff]
      %v1135 = vld [vmem:[%s1091 + $0x158] sm:$0xff]
      %v1136 = vld [vmem:[%s1091 + $0x160] sm:$0xff]
      %v1137 = vld [vmem:[%s1091 + $0x168] sm:$0xff]
      %v1138 = vld [vmem:[%s1091 + $0x170] sm:$0xff]
      %v1139 = vld [vmem:[%s1091 + $0x178] sm:$0xff]
      %v1140 = vld [vmem:[%s1091 + $0x180] sm:$0xff]
      %v1141 = vld [vmem:[%s1091 + $0x188] sm:$0xff]
      %v1142 = vld [vmem:[%s1091 + $0x190] sm:$0xff]
      %v1143 = vld [vmem:[%s1091 + $0x198] sm:$0xff]
      %v1144 = vld [vmem:[%s1091 + $0x1a0] sm:$0xff]
      %v1145 = vld [vmem:[%s1091 + $0x1a8] sm:$0xff]
      %v1146 = vld [vmem:[%s1091 + $0x1b0] sm:$0xff]
      %v1147 = vld [vmem:[%s1091 + $0x1b8] sm:$0xff]
      %v1148 = vld [vmem:[%s1091 + $0x1c0] sm:$0xff]
      %v1149 = vld [vmem:[%s1091 + $0x1c8] sm:$0xff]
      %v1150 = vld [vmem:[%s1091 + $0x1d0] sm:$0xff]
      %v1151 = vld [vmem:[%s1091 + $0x1d8] sm:$0xff]
      %v1152 = vld [vmem:[%s1091 + $0x1e0] sm:$0xff]
      %v1153 = vld [vmem:[%s1091 + $0x1e8] sm:$0xff]
      %v1154 = vld [vmem:[%s1091 + $0x1f0] sm:$0xff]
      %v1155 = vld [vmem:[%s1091 + $0x1f8] sm:$0xff]
      %s1156 = scalar_lea.vmem [#allocation5], 1536
      %v1157 = vld [vmem:[%s1156] sm:$0xff]
      %v1158 = vld [vmem:[%s1156 + $0x8] sm:$0xff]
      %v1159 = vld [vmem:[%s1156 + $0x10] sm:$0xff]
      %v1160 = vld [vmem:[%s1156 + $0x18] sm:$0xff]
      %v1161 = vld [vmem:[%s1156 + $0x20] sm:$0xff]
      %v1162 = vld [vmem:[%s1156 + $0x28] sm:$0xff]
      %v1163 = vld [vmem:[%s1156 + $0x30] sm:$0xff]
      %v1164 = vld [vmem:[%s1156 + $0x38] sm:$0xff]
      %v1165 = vld [vmem:[%s1156 + $0x40] sm:$0xff]
      %v1166 = vld [vmem:[%s1156 + $0x48] sm:$0xff]
      %v1167 = vld [vmem:[%s1156 + $0x50] sm:$0xff]
      %v1168 = vld [vmem:[%s1156 + $0x58] sm:$0xff]
      %v1169 = vld [vmem:[%s1156 + $0x60] sm:$0xff]
      %v1170 = vld [vmem:[%s1156 + $0x68] sm:$0xff]
      %v1171 = vld [vmem:[%s1156 + $0x70] sm:$0xff]
      %v1172 = vld [vmem:[%s1156 + $0x78] sm:$0xff]
      %v1173 = vld [vmem:[%s1156 + $0x80] sm:$0xff]
      %v1174 = vld [vmem:[%s1156 + $0x88] sm:$0xff]
      %v1175 = vld [vmem:[%s1156 + $0x90] sm:$0xff]
      %v1176 = vld [vmem:[%s1156 + $0x98] sm:$0xff]
      %v1177 = vld [vmem:[%s1156 + $0xa0] sm:$0xff]
      %v1178 = vld [vmem:[%s1156 + $0xa8] sm:$0xff]
      %v1179 = vld [vmem:[%s1156 + $0xb0] sm:$0xff]
      %v1180 = vld [vmem:[%s1156 + $0xb8] sm:$0xff]
      %v1181 = vld [vmem:[%s1156 + $0xc0] sm:$0xff]
      %v1182 = vld [vmem:[%s1156 + $0xc8] sm:$0xff]
      %v1183 = vld [vmem:[%s1156 + $0xd0] sm:$0xff]
      %v1184 = vld [vmem:[%s1156 + $0xd8] sm:$0xff]
      %v1185 = vld [vmem:[%s1156 + $0xe0] sm:$0xff]
      %v1186 = vld [vmem:[%s1156 + $0xe8] sm:$0xff]
      %v1187 = vld [vmem:[%s1156 + $0xf0] sm:$0xff]
      %v1188 = vld [vmem:[%s1156 + $0xf8] sm:$0xff]
      %v1189 = vld [vmem:[%s1156 + $0x100] sm:$0xff]
      %v1190 = vld [vmem:[%s1156 + $0x108] sm:$0xff]
      %v1191 = vld [vmem:[%s1156 + $0x110] sm:$0xff]
      %v1192 = vld [vmem:[%s1156 + $0x118] sm:$0xff]
      %v1193 = vld [vmem:[%s1156 + $0x120] sm:$0xff]
      %v1194 = vld [vmem:[%s1156 + $0x128] sm:$0xff]
      %v1195 = vld [vmem:[%s1156 + $0x130] sm:$0xff]
      %v1196 = vld [vmem:[%s1156 + $0x138] sm:$0xff]
      %v1197 = vld [vmem:[%s1156 + $0x140] sm:$0xff]
      %v1198 = vld [vmem:[%s1156 + $0x148] sm:$0xff]
      %v1199 = vld [vmem:[%s1156 + $0x150] sm:$0xff]
      %v1200 = vld [vmem:[%s1156 + $0x158] sm:$0xff]
      %v1201 = vld [vmem:[%s1156 + $0x160] sm:$0xff]
      %v1202 = vld [vmem:[%s1156 + $0x168] sm:$0xff]
      %v1203 = vld [vmem:[%s1156 + $0x170] sm:$0xff]
      %v1204 = vld [vmem:[%s1156 + $0x178] sm:$0xff]
      %v1205 = vld [vmem:[%s1156 + $0x180] sm:$0xff]
      %v1206 = vld [vmem:[%s1156 + $0x188] sm:$0xff]
      %v1207 = vld [vmem:[%s1156 + $0x190] sm:$0xff]
      %v1208 = vld [vmem:[%s1156 + $0x198] sm:$0xff]
      %v1209 = vld [vmem:[%s1156 + $0x1a0] sm:$0xff]
      %v1210 = vld [vmem:[%s1156 + $0x1a8] sm:$0xff]
      %v1211 = vld [vmem:[%s1156 + $0x1b0] sm:$0xff]
      %v1212 = vld [vmem:[%s1156 + $0x1b8] sm:$0xff]
      %v1213 = vld [vmem:[%s1156 + $0x1c0] sm:$0xff]
      %v1214 = vld [vmem:[%s1156 + $0x1c8] sm:$0xff]
      %v1215 = vld [vmem:[%s1156 + $0x1d0] sm:$0xff]
      %v1216 = vld [vmem:[%s1156 + $0x1d8] sm:$0xff]
      %v1217 = vld [vmem:[%s1156 + $0x1e0] sm:$0xff]
      %v1218 = vld [vmem:[%s1156 + $0x1e8] sm:$0xff]
      %v1219 = vld [vmem:[%s1156 + $0x1f0] sm:$0xff]
      %v1220 = vld [vmem:[%s1156 + $0x1f8] sm:$0xff]
      %v1221 = vsub.f32 %v1092, %v1157
      %v1222 = vsub.f32 %v1093, %v1158
      %v1223 = vsub.f32 %v1094, %v1159
      %v1224 = vsub.f32 %v1095, %v1160
      %v1225 = vsub.f32 %v1096, %v1161
      %v1226 = vsub.f32 %v1097, %v1162
      %v1227 = vsub.f32 %v1098, %v1163
      %v1228 = vsub.f32 %v1099, %v1164
      %v1229 = vsub.f32 %v1100, %v1165
      %v1230 = vsub.f32 %v1101, %v1166
      %v1231 = vsub.f32 %v1102, %v1167
      %v1232 = vsub.f32 %v1103, %v1168
      %v1233 = vsub.f32 %v1104, %v1169
      %v1234 = vsub.f32 %v1105, %v1170
      %v1235 = vsub.f32 %v1106, %v1171
      %v1236 = vsub.f32 %v1107, %v1172
      %v1237 = vsub.f32 %v1108, %v1173
      %v1238 = vsub.f32 %v1109, %v1174
      %v1239 = vsub.f32 %v1110, %v1175
      %v1240 = vsub.f32 %v1111, %v1176
      %v1241 = vsub.f32 %v1112, %v1177
      %v1242 = vsub.f32 %v1113, %v1178
      %v1243 = vsub.f32 %v1114, %v1179
      %v1244 = vsub.f32 %v1115, %v1180
      %v1245 = vsub.f32 %v1116, %v1181
      %v1246 = vsub.f32 %v1117, %v1182
      %v1247 = vsub.f32 %v1118, %v1183
      %v1248 = vsub.f32 %v1119, %v1184
      %v1249 = vsub.f32 %v1120, %v1185
      %v1250 = vsub.f32 %v1121, %v1186
      %v1251 = vsub.f32 %v1122, %v1187
      %v1252 = vsub.f32 %v1123, %v1188
      %v1253 = vsub.f32 %v1124, %v1189
      %v1254 = vsub.f32 %v1125, %v1190
      %v1255 = vsub.f32 %v1126, %v1191
      %v1256 = vsub.f32 %v1127, %v1192
      %v1257 = vsub.f32 %v1128, %v1193
      %v1258 = vsub.f32 %v1129, %v1194
      %v1259 = vsub.f32 %v1130, %v1195
      %v1260 = vsub.f32 %v1131, %v1196
      %v1261 = vsub.f32 %v1132, %v1197
      %v1262 = vsub.f32 %v1133, %v1198
      %v1263 = vsub.f32 %v1134, %v1199
      %v1264 = vsub.f32 %v1135, %v1200
      %v1265 = vsub.f32 %v1136, %v1201
      %v1266 = vsub.f32 %v1137, %v1202
      %v1267 = vsub.f32 %v1138, %v1203
      %v1268 = vsub.f32 %v1139, %v1204
      %v1269 = vsub.f32 %v1140, %v1205
      %v1270 = vsub.f32 %v1141, %v1206
      %v1271 = vsub.f32 %v1142, %v1207
      %v1272 = vsub.f32 %v1143, %v1208
      %v1273 = vsub.f32 %v1144, %v1209
      %v1274 = vsub.f32 %v1145, %v1210
      %v1275 = vsub.f32 %v1146, %v1211
      %v1276 = vsub.f32 %v1147, %v1212
      %v1277 = vsub.f32 %v1148, %v1213
      %v1278 = vsub.f32 %v1149, %v1214
      %v1279 = vsub.f32 %v1150, %v1215
      %v1280 = vsub.f32 %v1151, %v1216
      %v1281 = vsub.f32 %v1152, %v1217
      %v1282 = vsub.f32 %v1153, %v1218
      %v1283 = vsub.f32 %v1154, %v1219
      %v1284 = vsub.f32 %v1155, %v1220
      %v1285 = vmul.f32 %v1221, %v1221
      %v1286 = vmul.f32 %v1222, %v1222
      %v1287 = vmul.f32 %v1223, %v1223
      %v1288 = vmul.f32 %v1224, %v1224
      %v1289 = vmul.f32 %v1225, %v1225
      %v1290 = vmul.f32 %v1226, %v1226
      %v1291 = vmul.f32 %v1227, %v1227
      %v1292 = vmul.f32 %v1228, %v1228
      %v1293 = vmul.f32 %v1229, %v1229
      %v1294 = vmul.f32 %v1230, %v1230
      %v1295 = vmul.f32 %v1231, %v1231
      %v1296 = vmul.f32 %v1232, %v1232
      %v1297 = vmul.f32 %v1233, %v1233
      %v1298 = vmul.f32 %v1234, %v1234
      %v1299 = vmul.f32 %v1235, %v1235
      %v1300 = vmul.f32 %v1236, %v1236
      %v1301 = vmul.f32 %v1237, %v1237
      %v1302 = vmul.f32 %v1238, %v1238
      %v1303 = vmul.f32 %v1239, %v1239
      %v1304 = vmul.f32 %v1240, %v1240
      %v1305 = vmul.f32 %v1241, %v1241
      %v1306 = vmul.f32 %v1242, %v1242
      %v1307 = vmul.f32 %v1243, %v1243
      %v1308 = vmul.f32 %v1244, %v1244
      %v1309 = vmul.f32 %v1245, %v1245
      %v1310 = vmul.f32 %v1246, %v1246
      %v1311 = vmul.f32 %v1247, %v1247
      %v1312 = vmul.f32 %v1248, %v1248
      %v1313 = vmul.f32 %v1249, %v1249
      %v1314 = vmul.f32 %v1250, %v1250
      %v1315 = vmul.f32 %v1251, %v1251
      %v1316 = vmul.f32 %v1252, %v1252
      %v1317 = vmul.f32 %v1253, %v1253
      %v1318 = vmul.f32 %v1254, %v1254
      %v1319 = vmul.f32 %v1255, %v1255
      %v1320 = vmul.f32 %v1256, %v1256
      %v1321 = vmul.f32 %v1257, %v1257
      %v1322 = vmul.f32 %v1258, %v1258
      %v1323 = vmul.f32 %v1259, %v1259
      %v1324 = vmul.f32 %v1260, %v1260
      %v1325 = vmul.f32 %v1261, %v1261
      %v1326 = vmul.f32 %v1262, %v1262
      %v1327 = vmul.f32 %v1263, %v1263
      %v1328 = vmul.f32 %v1264, %v1264
      %v1329 = vmul.f32 %v1265, %v1265
      %v1330 = vmul.f32 %v1266, %v1266
      %v1331 = vmul.f32 %v1267, %v1267
      %v1332 = vmul.f32 %v1268, %v1268
      %v1333 = vmul.f32 %v1269, %v1269
      %v1334 = vmul.f32 %v1270, %v1270
      %v1335 = vmul.f32 %v1271, %v1271
      %v1336 = vmul.f32 %v1272, %v1272
      %v1337 = vmul.f32 %v1273, %v1273
      %v1338 = vmul.f32 %v1274, %v1274
      %v1339 = vmul.f32 %v1275, %v1275
      %v1340 = vmul.f32 %v1276, %v1276
      %v1341 = vmul.f32 %v1277, %v1277
      %v1342 = vmul.f32 %v1278, %v1278
      %v1343 = vmul.f32 %v1279, %v1279
      %v1344 = vmul.f32 %v1280, %v1280
      %v1345 = vmul.f32 %v1281, %v1281
      %v1346 = vmul.f32 %v1282, %v1282
      %v1347 = vmul.f32 %v1283, %v1283
      %v1348 = vmul.f32 %v1284, %v1284
      %v1349 = vld [vmem:[#allocation7] sm:$0xff]
      %v1350 = vld [vmem:[#allocation7 + $0x8] sm:$0xff]
      %v1351 = vld [vmem:[#allocation7 + $0x10] sm:$0xff]
      %v1352 = vld [vmem:[#allocation7 + $0x18] sm:$0xff]
      %v1353 = vld [vmem:[#allocation7 + $0x20] sm:$0xff]
      %v1354 = vld [vmem:[#allocation7 + $0x28] sm:$0xff]
      %v1355 = vld [vmem:[#allocation7 + $0x30] sm:$0xff]
      %v1356 = vld [vmem:[#allocation7 + $0x38] sm:$0xff]
      %v1357 = vadd.f32 %v1285, %v1293
      %v1358 = vadd.f32 %v1357, %v1301
      %v1359 = vadd.f32 %v1358, %v1309
      %v1360 = vadd.f32 %v1359, %v1317
      %v1361 = vadd.f32 %v1360, %v1325
      %v1362 = vadd.f32 %v1361, %v1333
      %v1363 = vadd.f32 %v1362, %v1341
      %v1364 = vadd.f32 %v1286, %v1294
      %v1365 = vadd.f32 %v1364, %v1302
      %v1366 = vadd.f32 %v1365, %v1310
      %v1367 = vadd.f32 %v1366, %v1318
      %v1368 = vadd.f32 %v1367, %v1326
      %v1369 = vadd.f32 %v1368, %v1334
      %v1370 = vadd.f32 %v1369, %v1342
      %v1371 = vadd.f32 %v1287, %v1295
      %v1372 = vadd.f32 %v1371, %v1303
      %v1373 = vadd.f32 %v1372, %v1311
      %v1374 = vadd.f32 %v1373, %v1319
      %v1375 = vadd.f32 %v1374, %v1327
      %v1376 = vadd.f32 %v1375, %v1335
      %v1377 = vadd.f32 %v1376, %v1343
      %v1378 = vadd.f32 %v1288, %v1296
      %v1379 = vadd.f32 %v1378, %v1304
      %v1380 = vadd.f32 %v1379, %v1312
      %v1381 = vadd.f32 %v1380, %v1320
      %v1382 = vadd.f32 %v1381, %v1328
      %v1383 = vadd.f32 %v1382, %v1336
      %v1384 = vadd.f32 %v1383, %v1344
      %v1385 = vadd.f32 %v1289, %v1297
      %v1386 = vadd.f32 %v1385, %v1305
      %v1387 = vadd.f32 %v1386, %v1313
      %v1388 = vadd.f32 %v1387, %v1321
      %v1389 = vadd.f32 %v1388, %v1329
      %v1390 = vadd.f32 %v1389, %v1337
      %v1391 = vadd.f32 %v1390, %v1345
      %v1392 = vadd.f32 %v1290, %v1298
      %v1393 = vadd.f32 %v1392, %v1306
      %v1394 = vadd.f32 %v1393, %v1314
      %v1395 = vadd.f32 %v1394, %v1322
      %v1396 = vadd.f32 %v1395, %v1330
      %v1397 = vadd.f32 %v1396, %v1338
      %v1398 = vadd.f32 %v1397, %v1346
      %v1399 = vadd.f32 %v1291, %v1299
      %v1400 = vadd.f32 %v1399, %v1307
      %v1401 = vadd.f32 %v1400, %v1315
      %v1402 = vadd.f32 %v1401, %v1323
      %v1403 = vadd.f32 %v1402, %v1331
      %v1404 = vadd.f32 %v1403, %v1339
      %v1405 = vadd.f32 %v1404, %v1347
      %v1406 = vadd.f32 %v1292, %v1300
      %v1407 = vadd.f32 %v1406, %v1308
      %v1408 = vadd.f32 %v1407, %v1316
      %v1409 = vadd.f32 %v1408, %v1324
      %v1410 = vadd.f32 %v1409, %v1332
      %v1411 = vadd.f32 %v1410, %v1340
      %v1412 = vadd.f32 %v1411, %v1348
      %v1413 = vadd.f32 %v1349, %v1363
      %v1414 = vadd.f32 %v1350, %v1370
      %v1415 = vadd.f32 %v1351, %v1377
      %v1416 = vadd.f32 %v1352, %v1384
      %v1417 = vadd.f32 %v1353, %v1391
      %v1418 = vadd.f32 %v1354, %v1398
      %v1419 = vadd.f32 %v1355, %v1405
      %v1420 = vadd.f32 %v1356, %v1412
      %1421 = vst [vmem:[#allocation7] sm:$0xff] %v1413
      %1422 = vst [vmem:[#allocation7 + $0x8] sm:$0xff] %v1414
      %1423 = vst [vmem:[#allocation7 + $0x10] sm:$0xff] %v1415
      %1424 = vst [vmem:[#allocation7 + $0x18] sm:$0xff] %v1416
      %1425 = vst [vmem:[#allocation7 + $0x20] sm:$0xff] %v1417
      %1426 = vst [vmem:[#allocation7 + $0x28] sm:$0xff] %v1418
      %1427 = vst [vmem:[#allocation7 + $0x30] sm:$0xff] %v1419
      %1428 = vst [vmem:[#allocation7 + $0x38] sm:$0xff] %v1420
      %s1429 = scalar_lea.vmem [#allocation2], 2048
      %v1430 = vld [vmem:[%s1429] sm:$0xff]
      %v1431 = vld [vmem:[%s1429 + $0x8] sm:$0xff]
      %v1432 = vld [vmem:[%s1429 + $0x10] sm:$0xff]
      %v1433 = vld [vmem:[%s1429 + $0x18] sm:$0xff]
      %v1434 = vld [vmem:[%s1429 + $0x20] sm:$0xff]
      %v1435 = vld [vmem:[%s1429 + $0x28] sm:$0xff]
      %v1436 = vld [vmem:[%s1429 + $0x30] sm:$0xff]
      %v1437 = vld [vmem:[%s1429 + $0x38] sm:$0xff]
      %v1438 = vld [vmem:[%s1429 + $0x40] sm:$0xff]
      %v1439 = vld [vmem:[%s1429 + $0x48] sm:$0xff]
      %v1440 = vld [vmem:[%s1429 + $0x50] sm:$0xff]
      %v1441 = vld [vmem:[%s1429 + $0x58] sm:$0xff]
      %v1442 = vld [vmem:[%s1429 + $0x60] sm:$0xff]
      %v1443 = vld [vmem:[%s1429 + $0x68] sm:$0xff]
      %v1444 = vld [vmem:[%s1429 + $0x70] sm:$0xff]
      %v1445 = vld [vmem:[%s1429 + $0x78] sm:$0xff]
      %v1446 = vld [vmem:[%s1429 + $0x80] sm:$0xff]
      %v1447 = vld [vmem:[%s1429 + $0x88] sm:$0xff]
      %v1448 = vld [vmem:[%s1429 + $0x90] sm:$0xff]
      %v1449 = vld [vmem:[%s1429 + $0x98] sm:$0xff]
      %v1450 = vld [vmem:[%s1429 + $0xa0] sm:$0xff]
      %v1451 = vld [vmem:[%s1429 + $0xa8] sm:$0xff]
      %v1452 = vld [vmem:[%s1429 + $0xb0] sm:$0xff]
      %v1453 = vld [vmem:[%s1429 + $0xb8] sm:$0xff]
      %v1454 = vld [vmem:[%s1429 + $0xc0] sm:$0xff]
      %v1455 = vld [vmem:[%s1429 + $0xc8] sm:$0xff]
      %v1456 = vld [vmem:[%s1429 + $0xd0] sm:$0xff]
      %v1457 = vld [vmem:[%s1429 + $0xd8] sm:$0xff]
      %v1458 = vld [vmem:[%s1429 + $0xe0] sm:$0xff]
      %v1459 = vld [vmem:[%s1429 + $0xe8] sm:$0xff]
      %v1460 = vld [vmem:[%s1429 + $0xf0] sm:$0xff]
      %v1461 = vld [vmem:[%s1429 + $0xf8] sm:$0xff]
      %v1462 = vld [vmem:[%s1429 + $0x100] sm:$0xff]
      %v1463 = vld [vmem:[%s1429 + $0x108] sm:$0xff]
      %v1464 = vld [vmem:[%s1429 + $0x110] sm:$0xff]
      %v1465 = vld [vmem:[%s1429 + $0x118] sm:$0xff]
      %v1466 = vld [vmem:[%s1429 + $0x120] sm:$0xff]
      %v1467 = vld [vmem:[%s1429 + $0x128] sm:$0xff]
      %v1468 = vld [vmem:[%s1429 + $0x130] sm:$0xff]
      %v1469 = vld [vmem:[%s1429 + $0x138] sm:$0xff]
      %v1470 = vld [vmem:[%s1429 + $0x140] sm:$0xff]
      %v1471 = vld [vmem:[%s1429 + $0x148] sm:$0xff]
      %v1472 = vld [vmem:[%s1429 + $0x150] sm:$0xff]
      %v1473 = vld [vmem:[%s1429 + $0x158] sm:$0xff]
      %v1474 = vld [vmem:[%s1429 + $0x160] sm:$0xff]
      %v1475 = vld [vmem:[%s1429 + $0x168] sm:$0xff]
      %v1476 = vld [vmem:[%s1429 + $0x170] sm:$0xff]
      %v1477 = vld [vmem:[%s1429 + $0x178] sm:$0xff]
      %v1478 = vld [vmem:[%s1429 + $0x180] sm:$0xff]
      %v1479 = vld [vmem:[%s1429 + $0x188] sm:$0xff]
      %v1480 = vld [vmem:[%s1429 + $0x190] sm:$0xff]
      %v1481 = vld [vmem:[%s1429 + $0x198] sm:$0xff]
      %v1482 = vld [vmem:[%s1429 + $0x1a0] sm:$0xff]
      %v1483 = vld [vmem:[%s1429 + $0x1a8] sm:$0xff]
      %v1484 = vld [vmem:[%s1429 + $0x1b0] sm:$0xff]
      %v1485 = vld [vmem:[%s1429 + $0x1b8] sm:$0xff]
      %v1486 = vld [vmem:[%s1429 + $0x1c0] sm:$0xff]
      %v1487 = vld [vmem:[%s1429 + $0x1c8] sm:$0xff]
      %v1488 = vld [vmem:[%s1429 + $0x1d0] sm:$0xff]
      %v1489 = vld [vmem:[%s1429 + $0x1d8] sm:$0xff]
      %v1490 = vld [vmem:[%s1429 + $0x1e0] sm:$0xff]
      %v1491 = vld [vmem:[%s1429 + $0x1e8] sm:$0xff]
      %v1492 = vld [vmem:[%s1429 + $0x1f0] sm:$0xff]
      %v1493 = vld [vmem:[%s1429 + $0x1f8] sm:$0xff]
      %s1494 = scalar_lea.vmem [#allocation5], 2048
      %v1495 = vld [vmem:[%s1494] sm:$0xff]
      %v1496 = vld [vmem:[%s1494 + $0x8] sm:$0xff]
      %v1497 = vld [vmem:[%s1494 + $0x10] sm:$0xff]
      %v1498 = vld [vmem:[%s1494 + $0x18] sm:$0xff]
      %v1499 = vld [vmem:[%s1494 + $0x20] sm:$0xff]
      %v1500 = vld [vmem:[%s1494 + $0x28] sm:$0xff]
      %v1501 = vld [vmem:[%s1494 + $0x30] sm:$0xff]
      %v1502 = vld [vmem:[%s1494 + $0x38] sm:$0xff]
      %v1503 = vld [vmem:[%s1494 + $0x40] sm:$0xff]
      %v1504 = vld [vmem:[%s1494 + $0x48] sm:$0xff]
      %v1505 = vld [vmem:[%s1494 + $0x50] sm:$0xff]
      %v1506 = vld [vmem:[%s1494 + $0x58] sm:$0xff]
      %v1507 = vld [vmem:[%s1494 + $0x60] sm:$0xff]
      %v1508 = vld [vmem:[%s1494 + $0x68] sm:$0xff]
      %v1509 = vld [vmem:[%s1494 + $0x70] sm:$0xff]
      %v1510 = vld [vmem:[%s1494 + $0x78] sm:$0xff]
      %v1511 = vld [vmem:[%s1494 + $0x80] sm:$0xff]
      %v1512 = vld [vmem:[%s1494 + $0x88] sm:$0xff]
      %v1513 = vld [vmem:[%s1494 + $0x90] sm:$0xff]
      %v1514 = vld [vmem:[%s1494 + $0x98] sm:$0xff]
      %v1515 = vld [vmem:[%s1494 + $0xa0] sm:$0xff]
      %v1516 = vld [vmem:[%s1494 + $0xa8] sm:$0xff]
      %v1517 = vld [vmem:[%s1494 + $0xb0] sm:$0xff]
      %v1518 = vld [vmem:[%s1494 + $0xb8] sm:$0xff]
      %v1519 = vld [vmem:[%s1494 + $0xc0] sm:$0xff]
      %v1520 = vld [vmem:[%s1494 + $0xc8] sm:$0xff]
      %v1521 = vld [vmem:[%s1494 + $0xd0] sm:$0xff]
      %v1522 = vld [vmem:[%s1494 + $0xd8] sm:$0xff]
      %v1523 = vld [vmem:[%s1494 + $0xe0] sm:$0xff]
      %v1524 = vld [vmem:[%s1494 + $0xe8] sm:$0xff]
      %v1525 = vld [vmem:[%s1494 + $0xf0] sm:$0xff]
      %v1526 = vld [vmem:[%s1494 + $0xf8] sm:$0xff]
      %v1527 = vld [vmem:[%s1494 + $0x100] sm:$0xff]
      %v1528 = vld [vmem:[%s1494 + $0x108] sm:$0xff]
      %v1529 = vld [vmem:[%s1494 + $0x110] sm:$0xff]
      %v1530 = vld [vmem:[%s1494 + $0x118] sm:$0xff]
      %v1531 = vld [vmem:[%s1494 + $0x120] sm:$0xff]
      %v1532 = vld [vmem:[%s1494 + $0x128] sm:$0xff]
      %v1533 = vld [vmem:[%s1494 + $0x130] sm:$0xff]
      %v1534 = vld [vmem:[%s1494 + $0x138] sm:$0xff]
      %v1535 = vld [vmem:[%s1494 + $0x140] sm:$0xff]
      %v1536 = vld [vmem:[%s1494 + $0x148] sm:$0xff]
      %v1537 = vld [vmem:[%s1494 + $0x150] sm:$0xff]
      %v1538 = vld [vmem:[%s1494 + $0x158] sm:$0xff]
      %v1539 = vld [vmem:[%s1494 + $0x160] sm:$0xff]
      %v1540 = vld [vmem:[%s1494 + $0x168] sm:$0xff]
      %v1541 = vld [vmem:[%s1494 + $0x170] sm:$0xff]
      %v1542 = vld [vmem:[%s1494 + $0x178] sm:$0xff]
      %v1543 = vld [vmem:[%s1494 + $0x180] sm:$0xff]
      %v1544 = vld [vmem:[%s1494 + $0x188] sm:$0xff]
      %v1545 = vld [vmem:[%s1494 + $0x190] sm:$0xff]
      %v1546 = vld [vmem:[%s1494 + $0x198] sm:$0xff]
      %v1547 = vld [vmem:[%s1494 + $0x1a0] sm:$0xff]
      %v1548 = vld [vmem:[%s1494 + $0x1a8] sm:$0xff]
      %v1549 = vld [vmem:[%s1494 + $0x1b0] sm:$0xff]
      %v1550 = vld [vmem:[%s1494 + $0x1b8] sm:$0xff]
      %v1551 = vld [vmem:[%s1494 + $0x1c0] sm:$0xff]
      %v1552 = vld [vmem:[%s1494 + $0x1c8] sm:$0xff]
      %v1553 = vld [vmem:[%s1494 + $0x1d0] sm:$0xff]
      %v1554 = vld [vmem:[%s1494 + $0x1d8] sm:$0xff]
      %v1555 = vld [vmem:[%s1494 + $0x1e0] sm:$0xff]
      %v1556 = vld [vmem:[%s1494 + $0x1e8] sm:$0xff]
      %v1557 = vld [vmem:[%s1494 + $0x1f0] sm:$0xff]
      %v1558 = vld [vmem:[%s1494 + $0x1f8] sm:$0xff]
      %v1559 = vsub.f32 %v1430, %v1495
      %v1560 = vsub.f32 %v1431, %v1496
      %v1561 = vsub.f32 %v1432, %v1497
      %v1562 = vsub.f32 %v1433, %v1498
      %v1563 = vsub.f32 %v1434, %v1499
      %v1564 = vsub.f32 %v1435, %v1500
      %v1565 = vsub.f32 %v1436, %v1501
      %v1566 = vsub.f32 %v1437, %v1502
      %v1567 = vsub.f32 %v1438, %v1503
      %v1568 = vsub.f32 %v1439, %v1504
      %v1569 = vsub.f32 %v1440, %v1505
      %v1570 = vsub.f32 %v1441, %v1506
      %v1571 = vsub.f32 %v1442, %v1507
      %v1572 = vsub.f32 %v1443, %v1508
      %v1573 = vsub.f32 %v1444, %v1509
      %v1574 = vsub.f32 %v1445, %v1510
      %v1575 = vsub.f32 %v1446, %v1511
      %v1576 = vsub.f32 %v1447, %v1512
      %v1577 = vsub.f32 %v1448, %v1513
      %v1578 = vsub.f32 %v1449, %v1514
      %v1579 = vsub.f32 %v1450, %v1515
      %v1580 = vsub.f32 %v1451, %v1516
      %v1581 = vsub.f32 %v1452, %v1517
      %v1582 = vsub.f32 %v1453, %v1518
      %v1583 = vsub.f32 %v1454, %v1519
      %v1584 = vsub.f32 %v1455, %v1520
      %v1585 = vsub.f32 %v1456, %v1521
      %v1586 = vsub.f32 %v1457, %v1522
      %v1587 = vsub.f32 %v1458, %v1523
      %v1588 = vsub.f32 %v1459, %v1524
      %v1589 = vsub.f32 %v1460, %v1525
      %v1590 = vsub.f32 %v1461, %v1526
      %v1591 = vsub.f32 %v1462, %v1527
      %v1592 = vsub.f32 %v1463, %v1528
      %v1593 = vsub.f32 %v1464, %v1529
      %v1594 = vsub.f32 %v1465, %v1530
      %v1595 = vsub.f32 %v1466, %v1531
      %v1596 = vsub.f32 %v1467, %v1532
      %v1597 = vsub.f32 %v1468, %v1533
      %v1598 = vsub.f32 %v1469, %v1534
      %v1599 = vsub.f32 %v1470, %v1535
      %v1600 = vsub.f32 %v1471, %v1536
      %v1601 = vsub.f32 %v1472, %v1537
      %v1602 = vsub.f32 %v1473, %v1538
      %v1603 = vsub.f32 %v1474, %v1539
      %v1604 = vsub.f32 %v1475, %v1540
      %v1605 = vsub.f32 %v1476, %v1541
      %v1606 = vsub.f32 %v1477, %v1542
      %v1607 = vsub.f32 %v1478, %v1543
      %v1608 = vsub.f32 %v1479, %v1544
      %v1609 = vsub.f32 %v1480, %v1545
      %v1610 = vsub.f32 %v1481, %v1546
      %v1611 = vsub.f32 %v1482, %v1547
      %v1612 = vsub.f32 %v1483, %v1548
      %v1613 = vsub.f32 %v1484, %v1549
      %v1614 = vsub.f32 %v1485, %v1550
      %v1615 = vsub.f32 %v1486, %v1551
      %v1616 = vsub.f32 %v1487, %v1552
      %v1617 = vsub.f32 %v1488, %v1553
      %v1618 = vsub.f32 %v1489, %v1554
      %v1619 = vsub.f32 %v1490, %v1555
      %v1620 = vsub.f32 %v1491, %v1556
      %v1621 = vsub.f32 %v1492, %v1557
      %v1622 = vsub.f32 %v1493, %v1558
      %v1623 = vmul.f32 %v1559, %v1559
      %v1624 = vmul.f32 %v1560, %v1560
      %v1625 = vmul.f32 %v1561, %v1561
      %v1626 = vmul.f32 %v1562, %v1562
      %v1627 = vmul.f32 %v1563, %v1563
      %v1628 = vmul.f32 %v1564, %v1564
      %v1629 = vmul.f32 %v1565, %v1565
      %v1630 = vmul.f32 %v1566, %v1566
      %v1631 = vmul.f32 %v1567, %v1567
      %v1632 = vmul.f32 %v1568, %v1568
      %v1633 = vmul.f32 %v1569, %v1569
      %v1634 = vmul.f32 %v1570, %v1570
      %v1635 = vmul.f32 %v1571, %v1571
      %v1636 = vmul.f32 %v1572, %v1572
      %v1637 = vmul.f32 %v1573, %v1573
      %v1638 = vmul.f32 %v1574, %v1574
      %v1639 = vmul.f32 %v1575, %v1575
      %v1640 = vmul.f32 %v1576, %v1576
      %v1641 = vmul.f32 %v1577, %v1577
      %v1642 = vmul.f32 %v1578, %v1578
      %v1643 = vmul.f32 %v1579, %v1579
      %v1644 = vmul.f32 %v1580, %v1580
      %v1645 = vmul.f32 %v1581, %v1581
      %v1646 = vmul.f32 %v1582, %v1582
      %v1647 = vmul.f32 %v1583, %v1583
      %v1648 = vmul.f32 %v1584, %v1584
      %v1649 = vmul.f32 %v1585, %v1585
      %v1650 = vmul.f32 %v1586, %v1586
      %v1651 = vmul.f32 %v1587, %v1587
      %v1652 = vmul.f32 %v1588, %v1588
      %v1653 = vmul.f32 %v1589, %v1589
      %v1654 = vmul.f32 %v1590, %v1590
      %v1655 = vmul.f32 %v1591, %v1591
      %v1656 = vmul.f32 %v1592, %v1592
      %v1657 = vmul.f32 %v1593, %v1593
      %v1658 = vmul.f32 %v1594, %v1594
      %v1659 = vmul.f32 %v1595, %v1595
      %v1660 = vmul.f32 %v1596, %v1596
      %v1661 = vmul.f32 %v1597, %v1597
      %v1662 = vmul.f32 %v1598, %v1598
      %v1663 = vmul.f32 %v1599, %v1599
      %v1664 = vmul.f32 %v1600, %v1600
      %v1665 = vmul.f32 %v1601, %v1601
      %v1666 = vmul.f32 %v1602, %v1602
      %v1667 = vmul.f32 %v1603, %v1603
      %v1668 = vmul.f32 %v1604, %v1604
      %v1669 = vmul.f32 %v1605, %v1605
      %v1670 = vmul.f32 %v1606, %v1606
      %v1671 = vmul.f32 %v1607, %v1607
      %v1672 = vmul.f32 %v1608, %v1608
      %v1673 = vmul.f32 %v1609, %v1609
      %v1674 = vmul.f32 %v1610, %v1610
      %v1675 = vmul.f32 %v1611, %v1611
      %v1676 = vmul.f32 %v1612, %v1612
      %v1677 = vmul.f32 %v1613, %v1613
      %v1678 = vmul.f32 %v1614, %v1614
      %v1679 = vmul.f32 %v1615, %v1615
      %v1680 = vmul.f32 %v1616, %v1616
      %v1681 = vmul.f32 %v1617, %v1617
      %v1682 = vmul.f32 %v1618, %v1618
      %v1683 = vmul.f32 %v1619, %v1619
      %v1684 = vmul.f32 %v1620, %v1620
      %v1685 = vmul.f32 %v1621, %v1621
      %v1686 = vmul.f32 %v1622, %v1622
      %v1687 = vld [vmem:[#allocation7] sm:$0xff]
      %v1688 = vld [vmem:[#allocation7 + $0x8] sm:$0xff]
      %v1689 = vld [vmem:[#allocation7 + $0x10] sm:$0xff]
      %v1690 = vld [vmem:[#allocation7 + $0x18] sm:$0xff]
      %v1691 = vld [vmem:[#allocation7 + $0x20] sm:$0xff]
      %v1692 = vld [vmem:[#allocation7 + $0x28] sm:$0xff]
      %v1693 = vld [vmem:[#allocation7 + $0x30] sm:$0xff]
      %v1694 = vld [vmem:[#allocation7 + $0x38] sm:$0xff]
      %v1695 = vadd.f32 %v1623, %v1631
      %v1696 = vadd.f32 %v1695, %v1639
      %v1697 = vadd.f32 %v1696, %v1647
      %v1698 = vadd.f32 %v1697, %v1655
      %v1699 = vadd.f32 %v1698, %v1663
      %v1700 = vadd.f32 %v1699, %v1671
      %v1701 = vadd.f32 %v1700, %v1679
      %v1702 = vadd.f32 %v1624, %v1632
      %v1703 = vadd.f32 %v1702, %v1640
      %v1704 = vadd.f32 %v1703, %v1648
      %v1705 = vadd.f32 %v1704, %v1656
      %v1706 = vadd.f32 %v1705, %v1664
      %v1707 = vadd.f32 %v1706, %v1672
      %v1708 = vadd.f32 %v1707, %v1680
      %v1709 = vadd.f32 %v1625, %v1633
      %v1710 = vadd.f32 %v1709, %v1641
      %v1711 = vadd.f32 %v1710, %v1649
      %v1712 = vadd.f32 %v1711, %v1657
      %v1713 = vadd.f32 %v1712, %v1665
      %v1714 = vadd.f32 %v1713, %v1673
      %v1715 = vadd.f32 %v1714, %v1681
      %v1716 = vadd.f32 %v1626, %v1634
      %v1717 = vadd.f32 %v1716, %v1642
      %v1718 = vadd.f32 %v1717, %v1650
      %v1719 = vadd.f32 %v1718, %v1658
      %v1720 = vadd.f32 %v1719, %v1666
      %v1721 = vadd.f32 %v1720, %v1674
      %v1722 = vadd.f32 %v1721, %v1682
      %v1723 = vadd.f32 %v1627, %v1635
      %v1724 = vadd.f32 %v1723, %v1643
      %v1725 = vadd.f32 %v1724, %v1651
      %v1726 = vadd.f32 %v1725, %v1659
      %v1727 = vadd.f32 %v1726, %v1667
      %v1728 = vadd.f32 %v1727, %v1675
      %v1729 = vadd.f32 %v1728, %v1683
      %v1730 = vadd.f32 %v1628, %v1636
      %v1731 = vadd.f32 %v1730, %v1644
      %v1732 = vadd.f32 %v1731, %v1652
      %v1733 = vadd.f32 %v1732, %v1660
      %v1734 = vadd.f32 %v1733, %v1668
      %v1735 = vadd.f32 %v1734, %v1676
      %v1736 = vadd.f32 %v1735, %v1684
      %v1737 = vadd.f32 %v1629, %v1637
      %v1738 = vadd.f32 %v1737, %v1645
      %v1739 = vadd.f32 %v1738, %v1653
      %v1740 = vadd.f32 %v1739, %v1661
      %v1741 = vadd.f32 %v1740, %v1669
      %v1742 = vadd.f32 %v1741, %v1677
      %v1743 = vadd.f32 %v1742, %v1685
      %v1744 = vadd.f32 %v1630, %v1638
      %v1745 = vadd.f32 %v1744, %v1646
      %v1746 = vadd.f32 %v1745, %v1654
      %v1747 = vadd.f32 %v1746, %v1662
      %v1748 = vadd.f32 %v1747, %v1670
      %v1749 = vadd.f32 %v1748, %v1678
      %v1750 = vadd.f32 %v1749, %v1686
      %v1751 = vadd.f32 %v1687, %v1701
      %v1752 = vadd.f32 %v1688, %v1708
      %v1753 = vadd.f32 %v1689, %v1715
      %v1754 = vadd.f32 %v1690, %v1722
      %v1755 = vadd.f32 %v1691, %v1729
      %v1756 = vadd.f32 %v1692, %v1736
      %v1757 = vadd.f32 %v1693, %v1743
      %v1758 = vadd.f32 %v1694, %v1750
      %1759 = vst [vmem:[#allocation7] sm:$0xff] %v1751
      %1760 = vst [vmem:[#allocation7 + $0x8] sm:$0xff] %v1752
      %1761 = vst [vmem:[#allocation7 + $0x10] sm:$0xff] %v1753
      %1762 = vst [vmem:[#allocation7 + $0x18] sm:$0xff] %v1754
      %1763 = vst [vmem:[#allocation7 + $0x20] sm:$0xff] %v1755
      %1764 = vst [vmem:[#allocation7 + $0x28] sm:$0xff] %v1756
      %1765 = vst [vmem:[#allocation7 + $0x30] sm:$0xff] %v1757
      %1766 = vst [vmem:[#allocation7 + $0x38] sm:$0xff] %v1758
      %s1767 = scalar_lea.vmem [#allocation2], 2560
      %v1768 = vld [vmem:[%s1767] sm:$0xff]
      %v1769 = vld [vmem:[%s1767 + $0x8] sm:$0xff]
      %v1770 = vld [vmem:[%s1767 + $0x10] sm:$0xff]
      %v1771 = vld [vmem:[%s1767 + $0x18] sm:$0xff]
      %v1772 = vld [vmem:[%s1767 + $0x20] sm:$0xff]
      %v1773 = vld [vmem:[%s1767 + $0x28] sm:$0xff]
      %v1774 = vld [vmem:[%s1767 + $0x30] sm:$0xff]
      %v1775 = vld [vmem:[%s1767 + $0x38] sm:$0xff]
      %v1776 = vld [vmem:[%s1767 + $0x40] sm:$0xff]
      %v1777 = vld [vmem:[%s1767 + $0x48] sm:$0xff]
      %v1778 = vld [vmem:[%s1767 + $0x50] sm:$0xff]
      %v1779 = vld [vmem:[%s1767 + $0x58] sm:$0xff]
      %v1780 = vld [vmem:[%s1767 + $0x60] sm:$0xff]
      %v1781 = vld [vmem:[%s1767 + $0x68] sm:$0xff]
      %v1782 = vld [vmem:[%s1767 + $0x70] sm:$0xff]
      %v1783 = vld [vmem:[%s1767 + $0x78] sm:$0xff]
      %v1784 = vld [vmem:[%s1767 + $0x80] sm:$0xff]
      %v1785 = vld [vmem:[%s1767 + $0x88] sm:$0xff]
      %v1786 = vld [vmem:[%s1767 + $0x90] sm:$0xff]
      %v1787 = vld [vmem:[%s1767 + $0x98] sm:$0xff]
      %v1788 = vld [vmem:[%s1767 + $0xa0] sm:$0xff]
      %v1789 = vld [vmem:[%s1767 + $0xa8] sm:$0xff]
      %v1790 = vld [vmem:[%s1767 + $0xb0] sm:$0xff]
      %v1791 = vld [vmem:[%s1767 + $0xb8] sm:$0xff]
      %v1792 = vld [vmem:[%s1767 + $0xc0] sm:$0xff]
      %v1793 = vld [vmem:[%s1767 + $0xc8] sm:$0xff]
      %v1794 = vld [vmem:[%s1767 + $0xd0] sm:$0xff]
      %v1795 = vld [vmem:[%s1767 + $0xd8] sm:$0xff]
      %v1796 = vld [vmem:[%s1767 + $0xe0] sm:$0xff]
      %v1797 = vld [vmem:[%s1767 + $0xe8] sm:$0xff]
      %v1798 = vld [vmem:[%s1767 + $0xf0] sm:$0xff]
      %v1799 = vld [vmem:[%s1767 + $0xf8] sm:$0xff]
      %v1800 = vld [vmem:[%s1767 + $0x100] sm:$0xff]
      %v1801 = vld [vmem:[%s1767 + $0x108] sm:$0xff]
      %v1802 = vld [vmem:[%s1767 + $0x110] sm:$0xff]
      %v1803 = vld [vmem:[%s1767 + $0x118] sm:$0xff]
      %v1804 = vld [vmem:[%s1767 + $0x120] sm:$0xff]
      %v1805 = vld [vmem:[%s1767 + $0x128] sm:$0xff]
      %v1806 = vld [vmem:[%s1767 + $0x130] sm:$0xff]
      %v1807 = vld [vmem:[%s1767 + $0x138] sm:$0xff]
      %v1808 = vld [vmem:[%s1767 + $0x140] sm:$0xff]
      %v1809 = vld [vmem:[%s1767 + $0x148] sm:$0xff]
      %v1810 = vld [vmem:[%s1767 + $0x150] sm:$0xff]
      %v1811 = vld [vmem:[%s1767 + $0x158] sm:$0xff]
      %v1812 = vld [vmem:[%s1767 + $0x160] sm:$0xff]
      %v1813 = vld [vmem:[%s1767 + $0x168] sm:$0xff]
      %v1814 = vld [vmem:[%s1767 + $0x170] sm:$0xff]
      %v1815 = vld [vmem:[%s1767 + $0x178] sm:$0xff]
      %v1816 = vld [vmem:[%s1767 + $0x180] sm:$0xff]
      %v1817 = vld [vmem:[%s1767 + $0x188] sm:$0xff]
      %v1818 = vld [vmem:[%s1767 + $0x190] sm:$0xff]
      %v1819 = vld [vmem:[%s1767 + $0x198] sm:$0xff]
      %v1820 = vld [vmem:[%s1767 + $0x1a0] sm:$0xff]
      %v1821 = vld [vmem:[%s1767 + $0x1a8] sm:$0xff]
      %v1822 = vld [vmem:[%s1767 + $0x1b0] sm:$0xff]
      %v1823 = vld [vmem:[%s1767 + $0x1b8] sm:$0xff]
      %v1824 = vld [vmem:[%s1767 + $0x1c0] sm:$0xff]
      %v1825 = vld [vmem:[%s1767 + $0x1c8] sm:$0xff]
      %v1826 = vld [vmem:[%s1767 + $0x1d0] sm:$0xff]
      %v1827 = vld [vmem:[%s1767 + $0x1d8] sm:$0xff]
      %v1828 = vld [vmem:[%s1767 + $0x1e0] sm:$0xff]
      %v1829 = vld [vmem:[%s1767 + $0x1e8] sm:$0xff]
      %v1830 = vld [vmem:[%s1767 + $0x1f0] sm:$0xff]
      %v1831 = vld [vmem:[%s1767 + $0x1f8] sm:$0xff]
      %s1832 = scalar_lea.vmem [#allocation5], 2560
      %v1833 = vld [vmem:[%s1832] sm:$0xff]
      %v1834 = vld [vmem:[%s1832 + $0x8] sm:$0xff]
      %v1835 = vld [vmem:[%s1832 + $0x10] sm:$0xff]
      %v1836 = vld [vmem:[%s1832 + $0x18] sm:$0xff]
      %v1837 = vld [vmem:[%s1832 + $0x20] sm:$0xff]
      %v1838 = vld [vmem:[%s1832 + $0x28] sm:$0xff]
      %v1839 = vld [vmem:[%s1832 + $0x30] sm:$0xff]
      %v1840 = vld [vmem:[%s1832 + $0x38] sm:$0xff]
      %v1841 = vld [vmem:[%s1832 + $0x40] sm:$0xff]
      %v1842 = vld [vmem:[%s1832 + $0x48] sm:$0xff]
      %v1843 = vld [vmem:[%s1832 + $0x50] sm:$0xff]
      %v1844 = vld [vmem:[%s1832 + $0x58] sm:$0xff]
      %v1845 = vld [vmem:[%s1832 + $0x60] sm:$0xff]
      %v1846 = vld [vmem:[%s1832 + $0x68] sm:$0xff]
      %v1847 = vld [vmem:[%s1832 + $0x70] sm:$0xff]
      %v1848 = vld [vmem:[%s1832 + $0x78] sm:$0xff]
      %v1849 = vld [vmem:[%s1832 + $0x80] sm:$0xff]
      %v1850 = vld [vmem:[%s1832 + $0x88] sm:$0xff]
      %v1851 = vld [vmem:[%s1832 + $0x90] sm:$0xff]
      %v1852 = vld [vmem:[%s1832 + $0x98] sm:$0xff]
      %v1853 = vld [vmem:[%s1832 + $0xa0] sm:$0xff]
      %v1854 = vld [vmem:[%s1832 + $0xa8] sm:$0xff]
      %v1855 = vld [vmem:[%s1832 + $0xb0] sm:$0xff]
      %v1856 = vld [vmem:[%s1832 + $0xb8] sm:$0xff]
      %v1857 = vld [vmem:[%s1832 + $0xc0] sm:$0xff]
      %v1858 = vld [vmem:[%s1832 + $0xc8] sm:$0xff]
      %v1859 = vld [vmem:[%s1832 + $0xd0] sm:$0xff]
      %v1860 = vld [vmem:[%s1832 + $0xd8] sm:$0xff]
      %v1861 = vld [vmem:[%s1832 + $0xe0] sm:$0xff]
      %v1862 = vld [vmem:[%s1832 + $0xe8] sm:$0xff]
      %v1863 = vld [vmem:[%s1832 + $0xf0] sm:$0xff]
      %v1864 = vld [vmem:[%s1832 + $0xf8] sm:$0xff]
      %v1865 = vld [vmem:[%s1832 + $0x100] sm:$0xff]
      %v1866 = vld [vmem:[%s1832 + $0x108] sm:$0xff]
      %v1867 = vld [vmem:[%s1832 + $0x110] sm:$0xff]
      %v1868 = vld [vmem:[%s1832 + $0x118] sm:$0xff]
      %v1869 = vld [vmem:[%s1832 + $0x120] sm:$0xff]
      %v1870 = vld [vmem:[%s1832 + $0x128] sm:$0xff]
      %v1871 = vld [vmem:[%s1832 + $0x130] sm:$0xff]
      %v1872 = vld [vmem:[%s1832 + $0x138] sm:$0xff]
      %v1873 = vld [vmem:[%s1832 + $0x140] sm:$0xff]
      %v1874 = vld [vmem:[%s1832 + $0x148] sm:$0xff]
      %v1875 = vld [vmem:[%s1832 + $0x150] sm:$0xff]
      %v1876 = vld [vmem:[%s1832 + $0x158] sm:$0xff]
      %v1877 = vld [vmem:[%s1832 + $0x160] sm:$0xff]
      %v1878 = vld [vmem:[%s1832 + $0x168] sm:$0xff]
      %v1879 = vld [vmem:[%s1832 + $0x170] sm:$0xff]
      %v1880 = vld [vmem:[%s1832 + $0x178] sm:$0xff]
      %v1881 = vld [vmem:[%s1832 + $0x180] sm:$0xff]
      %v1882 = vld [vmem:[%s1832 + $0x188] sm:$0xff]
      %v1883 = vld [vmem:[%s1832 + $0x190] sm:$0xff]
      %v1884 = vld [vmem:[%s1832 + $0x198] sm:$0xff]
      %v1885 = vld [vmem:[%s1832 + $0x1a0] sm:$0xff]
      %v1886 = vld [vmem:[%s1832 + $0x1a8] sm:$0xff]
      %v1887 = vld [vmem:[%s1832 + $0x1b0] sm:$0xff]
      %v1888 = vld [vmem:[%s1832 + $0x1b8] sm:$0xff]
      %v1889 = vld [vmem:[%s1832 + $0x1c0] sm:$0xff]
      %v1890 = vld [vmem:[%s1832 + $0x1c8] sm:$0xff]
      %v1891 = vld [vmem:[%s1832 + $0x1d0] sm:$0xff]
      %v1892 = vld [vmem:[%s1832 + $0x1d8] sm:$0xff]
      %v1893 = vld [vmem:[%s1832 + $0x1e0] sm:$0xff]
      %v1894 = vld [vmem:[%s1832 + $0x1e8] sm:$0xff]
      %v1895 = vld [vmem:[%s1832 + $0x1f0] sm:$0xff]
      %v1896 = vld [vmem:[%s1832 + $0x1f8] sm:$0xff]
      %v1897 = vsub.f32 %v1768, %v1833
      %v1898 = vsub.f32 %v1769, %v1834
      %v1899 = vsub.f32 %v1770, %v1835
      %v1900 = vsub.f32 %v1771, %v1836
      %v1901 = vsub.f32 %v1772, %v1837
      %v1902 = vsub.f32 %v1773, %v1838
      %v1903 = vsub.f32 %v1774, %v1839
      %v1904 = vsub.f32 %v1775, %v1840
      %v1905 = vsub.f32 %v1776, %v1841
      %v1906 = vsub.f32 %v1777, %v1842
      %v1907 = vsub.f32 %v1778, %v1843
      %v1908 = vsub.f32 %v1779, %v1844
      %v1909 = vsub.f32 %v1780, %v1845
      %v1910 = vsub.f32 %v1781, %v1846
      %v1911 = vsub.f32 %v1782, %v1847
      %v1912 = vsub.f32 %v1783, %v1848
      %v1913 = vsub.f32 %v1784, %v1849
      %v1914 = vsub.f32 %v1785, %v1850
      %v1915 = vsub.f32 %v1786, %v1851
      %v1916 = vsub.f32 %v1787, %v1852
      %v1917 = vsub.f32 %v1788, %v1853
      %v1918 = vsub.f32 %v1789, %v1854
      %v1919 = vsub.f32 %v1790, %v1855
      %v1920 = vsub.f32 %v1791, %v1856
      %v1921 = vsub.f32 %v1792, %v1857
      %v1922 = vsub.f32 %v1793, %v1858
      %v1923 = vsub.f32 %v1794, %v1859
      %v1924 = vsub.f32 %v1795, %v1860
      %v1925 = vsub.f32 %v1796, %v1861
      %v1926 = vsub.f32 %v1797, %v1862
      %v1927 = vsub.f32 %v1798, %v1863
      %v1928 = vsub.f32 %v1799, %v1864
      %v1929 = vsub.f32 %v1800, %v1865
      %v1930 = vsub.f32 %v1801, %v1866
      %v1931 = vsub.f32 %v1802, %v1867
      %v1932 = vsub.f32 %v1803, %v1868
      %v1933 = vsub.f32 %v1804, %v1869
      %v1934 = vsub.f32 %v1805, %v1870
      %v1935 = vsub.f32 %v1806, %v1871
      %v1936 = vsub.f32 %v1807, %v1872
      %v1937 = vsub.f32 %v1808, %v1873
      %v1938 = vsub.f32 %v1809, %v1874
      %v1939 = vsub.f32 %v1810, %v1875
      %v1940 = vsub.f32 %v1811, %v1876
      %v1941 = vsub.f32 %v1812, %v1877
      %v1942 = vsub.f32 %v1813, %v1878
      %v1943 = vsub.f32 %v1814, %v1879
      %v1944 = vsub.f32 %v1815, %v1880
      %v1945 = vsub.f32 %v1816, %v1881
      %v1946 = vsub.f32 %v1817, %v1882
      %v1947 = vsub.f32 %v1818, %v1883
      %v1948 = vsub.f32 %v1819, %v1884
      %v1949 = vsub.f32 %v1820, %v1885
      %v1950 = vsub.f32 %v1821, %v1886
      %v1951 = vsub.f32 %v1822, %v1887
      %v1952 = vsub.f32 %v1823, %v1888
      %v1953 = vsub.f32 %v1824, %v1889
      %v1954 = vsub.f32 %v1825, %v1890
      %v1955 = vsub.f32 %v1826, %v1891
      %v1956 = vsub.f32 %v1827, %v1892
      %v1957 = vsub.f32 %v1828, %v1893
      %v1958 = vsub.f32 %v1829, %v1894
      %v1959 = vsub.f32 %v1830, %v1895
      %v1960 = vsub.f32 %v1831, %v1896
      %v1961 = vmul.f32 %v1897, %v1897
      %v1962 = vmul.f32 %v1898, %v1898
      %v1963 = vmul.f32 %v1899, %v1899
      %v1964 = vmul.f32 %v1900, %v1900
      %v1965 = vmul.f32 %v1901, %v1901
      %v1966 = vmul.f32 %v1902, %v1902
      %v1967 = vmul.f32 %v1903, %v1903
      %v1968 = vmul.f32 %v1904, %v1904
      %v1969 = vmul.f32 %v1905, %v1905
      %v1970 = vmul.f32 %v1906, %v1906
      %v1971 = vmul.f32 %v1907, %v1907
      %v1972 = vmul.f32 %v1908, %v1908
      %v1973 = vmul.f32 %v1909, %v1909
      %v1974 = vmul.f32 %v1910, %v1910
      %v1975 = vmul.f32 %v1911, %v1911
      %v1976 = vmul.f32 %v1912, %v1912
      %v1977 = vmul.f32 %v1913, %v1913
      %v1978 = vmul.f32 %v1914, %v1914
      %v1979 = vmul.f32 %v1915, %v1915
      %v1980 = vmul.f32 %v1916, %v1916
      %v1981 = vmul.f32 %v1917, %v1917
      %v1982 = vmul.f32 %v1918, %v1918
      %v1983 = vmul.f32 %v1919, %v1919
      %v1984 = vmul.f32 %v1920, %v1920
      %v1985 = vmul.f32 %v1921, %v1921
      %v1986 = vmul.f32 %v1922, %v1922
      %v1987 = vmul.f32 %v1923, %v1923
      %v1988 = vmul.f32 %v1924, %v1924
      %v1989 = vmul.f32 %v1925, %v1925
      %v1990 = vmul.f32 %v1926, %v1926
      %v1991 = vmul.f32 %v1927, %v1927
      %v1992 = vmul.f32 %v1928, %v1928
      %v1993 = vmul.f32 %v1929, %v1929
      %v1994 = vmul.f32 %v1930, %v1930
      %v1995 = vmul.f32 %v1931, %v1931
      %v1996 = vmul.f32 %v1932, %v1932
      %v1997 = vmul.f32 %v1933, %v1933
      %v1998 = vmul.f32 %v1934, %v1934
      %v1999 = vmul.f32 %v1935, %v1935
      %v2000 = vmul.f32 %v1936, %v1936
      %v2001 = vmul.f32 %v1937, %v1937
      %v2002 = vmul.f32 %v1938, %v1938
      %v2003 = vmul.f32 %v1939, %v1939
      %v2004 = vmul.f32 %v1940, %v1940
      %v2005 = vmul.f32 %v1941, %v1941
      %v2006 = vmul.f32 %v1942, %v1942
      %v2007 = vmul.f32 %v1943, %v1943
      %v2008 = vmul.f32 %v1944, %v1944
      %v2009 = vmul.f32 %v1945, %v1945
      %v2010 = vmul.f32 %v1946, %v1946
      %v2011 = vmul.f32 %v1947, %v1947
      %v2012 = vmul.f32 %v1948, %v1948
      %v2013 = vmul.f32 %v1949, %v1949
      %v2014 = vmul.f32 %v1950, %v1950
      %v2015 = vmul.f32 %v1951, %v1951
      %v2016 = vmul.f32 %v1952, %v1952
      %v2017 = vmul.f32 %v1953, %v1953
      %v2018 = vmul.f32 %v1954, %v1954
      %v2019 = vmul.f32 %v1955, %v1955
      %v2020 = vmul.f32 %v1956, %v1956
      %v2021 = vmul.f32 %v1957, %v1957
      %v2022 = vmul.f32 %v1958, %v1958
      %v2023 = vmul.f32 %v1959, %v1959
      %v2024 = vmul.f32 %v1960, %v1960
      %v2025 = vld [vmem:[#allocation7] sm:$0xff]
      %v2026 = vld [vmem:[#allocation7 + $0x8] sm:$0xff]
      %v2027 = vld [vmem:[#allocation7 + $0x10] sm:$0xff]
      %v2028 = vld [vmem:[#allocation7 + $0x18] sm:$0xff]
      %v2029 = vld [vmem:[#allocation7 + $0x20] sm:$0xff]
      %v2030 = vld [vmem:[#allocation7 + $0x28] sm:$0xff]
      %v2031 = vld [vmem:[#allocation7 + $0x30] sm:$0xff]
      %v2032 = vld [vmem:[#allocation7 + $0x38] sm:$0xff]
      %v2033 = vadd.f32 %v1961, %v1969
      %v2034 = vadd.f32 %v2033, %v1977
      %v2035 = vadd.f32 %v2034, %v1985
      %v2036 = vadd.f32 %v2035, %v1993
      %v2037 = vadd.f32 %v2036, %v2001
      %v2038 = vadd.f32 %v2037, %v2009
      %v2039 = vadd.f32 %v2038, %v2017
      %v2040 = vadd.f32 %v1962, %v1970
      %v2041 = vadd.f32 %v2040, %v1978
      %v2042 = vadd.f32 %v2041, %v1986
      %v2043 = vadd.f32 %v2042, %v1994
      %v2044 = vadd.f32 %v2043, %v2002
      %v2045 = vadd.f32 %v2044, %v2010
      %v2046 = vadd.f32 %v2045, %v2018
      %v2047 = vadd.f32 %v1963, %v1971
      %v2048 = vadd.f32 %v2047, %v1979
      %v2049 = vadd.f32 %v2048, %v1987
      %v2050 = vadd.f32 %v2049, %v1995
      %v2051 = vadd.f32 %v2050, %v2003
      %v2052 = vadd.f32 %v2051, %v2011
      %v2053 = vadd.f32 %v2052, %v2019
      %v2054 = vadd.f32 %v1964, %v1972
      %v2055 = vadd.f32 %v2054, %v1980
      %v2056 = vadd.f32 %v2055, %v1988
      %v2057 = vadd.f32 %v2056, %v1996
      %v2058 = vadd.f32 %v2057, %v2004
      %v2059 = vadd.f32 %v2058, %v2012
      %v2060 = vadd.f32 %v2059, %v2020
      %v2061 = vadd.f32 %v1965, %v1973
      %v2062 = vadd.f32 %v2061, %v1981
      %v2063 = vadd.f32 %v2062, %v1989
      %v2064 = vadd.f32 %v2063, %v1997
      %v2065 = vadd.f32 %v2064, %v2005
      %v2066 = vadd.f32 %v2065, %v2013
      %v2067 = vadd.f32 %v2066, %v2021
      %v2068 = vadd.f32 %v1966, %v1974
      %v2069 = vadd.f32 %v2068, %v1982
      %v2070 = vadd.f32 %v2069, %v1990
      %v2071 = vadd.f32 %v2070, %v1998
      %v2072 = vadd.f32 %v2071, %v2006
      %v2073 = vadd.f32 %v2072, %v2014
      %v2074 = vadd.f32 %v2073, %v2022
      %v2075 = vadd.f32 %v1967, %v1975
      %v2076 = vadd.f32 %v2075, %v1983
      %v2077 = vadd.f32 %v2076, %v1991
      %v2078 = vadd.f32 %v2077, %v1999
      %v2079 = vadd.f32 %v2078, %v2007
      %v2080 = vadd.f32 %v2079, %v2015
      %v2081 = vadd.f32 %v2080, %v2023
      %v2082 = vadd.f32 %v1968, %v1976
      %v2083 = vadd.f32 %v2082, %v1984
      %v2084 = vadd.f32 %v2083, %v1992
      %v2085 = vadd.f32 %v2084, %v2000
      %v2086 = vadd.f32 %v2085, %v2008
      %v2087 = vadd.f32 %v2086, %v2016
      %v2088 = vadd.f32 %v2087, %v2024
      %v2089 = vadd.f32 %v2025, %v2039
      %v2090 = vadd.f32 %v2026, %v2046
      %v2091 = vadd.f32 %v2027, %v2053
      %v2092 = vadd.f32 %v2028, %v2060
      %v2093 = vadd.f32 %v2029, %v2067
      %v2094 = vadd.f32 %v2030, %v2074
      %v2095 = vadd.f32 %v2031, %v2081
      %v2096 = vadd.f32 %v2032, %v2088
      %2097 = vst [vmem:[#allocation7] sm:$0xff] %v2089
      %2098 = vst [vmem:[#allocation7 + $0x8] sm:$0xff] %v2090
      %2099 = vst [vmem:[#allocation7 + $0x10] sm:$0xff] %v2091
      %2100 = vst [vmem:[#allocation7 + $0x18] sm:$0xff] %v2092
      %2101 = vst [vmem:[#allocation7 + $0x20] sm:$0xff] %v2093
      %2102 = vst [vmem:[#allocation7 + $0x28] sm:$0xff] %v2094
      %2103 = vst [vmem:[#allocation7 + $0x30] sm:$0xff] %v2095
      %2104 = vst [vmem:[#allocation7 + $0x38] sm:$0xff] %v2096
      %s2105 = scalar_lea.vmem [#allocation2], 3072
      %v2106 = vld [vmem:[%s2105] sm:$0xff]
      %v2107 = vld [vmem:[%s2105 + $0x8] sm:$0xff]
      %v2108 = vld [vmem:[%s2105 + $0x10] sm:$0xff]
      %v2109 = vld [vmem:[%s2105 + $0x18] sm:$0xff]
      %v2110 = vld [vmem:[%s2105 + $0x20] sm:$0xff]
      %v2111 = vld [vmem:[%s2105 + $0x28] sm:$0xff]
      %v2112 = vld [vmem:[%s2105 + $0x30] sm:$0xff]
      %v2113 = vld [vmem:[%s2105 + $0x38] sm:$0xff]
      %v2114 = vld [vmem:[%s2105 + $0x40] sm:$0xff]
      %v2115 = vld [vmem:[%s2105 + $0x48] sm:$0xff]
      %v2116 = vld [vmem:[%s2105 + $0x50] sm:$0xff]
      %v2117 = vld [vmem:[%s2105 + $0x58] sm:$0xff]
      %v2118 = vld [vmem:[%s2105 + $0x60] sm:$0xff]
      %v2119 = vld [vmem:[%s2105 + $0x68] sm:$0xff]
      %v2120 = vld [vmem:[%s2105 + $0x70] sm:$0xff]
      %v2121 = vld [vmem:[%s2105 + $0x78] sm:$0xff]
      %v2122 = vld [vmem:[%s2105 + $0x80] sm:$0xff]
      %v2123 = vld [vmem:[%s2105 + $0x88] sm:$0xff]
      %v2124 = vld [vmem:[%s2105 + $0x90] sm:$0xff]
      %v2125 = vld [vmem:[%s2105 + $0x98] sm:$0xff]
      %v2126 = vld [vmem:[%s2105 + $0xa0] sm:$0xff]
      %v2127 = vld [vmem:[%s2105 + $0xa8] sm:$0xff]
      %v2128 = vld [vmem:[%s2105 + $0xb0] sm:$0xff]
      %v2129 = vld [vmem:[%s2105 + $0xb8] sm:$0xff]
      %v2130 = vld [vmem:[%s2105 + $0xc0] sm:$0xff]
      %v2131 = vld [vmem:[%s2105 + $0xc8] sm:$0xff]
      %v2132 = vld [vmem:[%s2105 + $0xd0] sm:$0xff]
      %v2133 = vld [vmem:[%s2105 + $0xd8] sm:$0xff]
      %v2134 = vld [vmem:[%s2105 + $0xe0] sm:$0xff]
      %v2135 = vld [vmem:[%s2105 + $0xe8] sm:$0xff]
      %v2136 = vld [vmem:[%s2105 + $0xf0] sm:$0xff]
      %v2137 = vld [vmem:[%s2105 + $0xf8] sm:$0xff]
      %v2138 = vld [vmem:[%s2105 + $0x100] sm:$0xff]
      %v2139 = vld [vmem:[%s2105 + $0x108] sm:$0xff]
      %v2140 = vld [vmem:[%s2105 + $0x110] sm:$0xff]
      %v2141 = vld [vmem:[%s2105 + $0x118] sm:$0xff]
      %v2142 = vld [vmem:[%s2105 + $0x120] sm:$0xff]
      %v2143 = vld [vmem:[%s2105 + $0x128] sm:$0xff]
      %v2144 = vld [vmem:[%s2105 + $0x130] sm:$0xff]
      %v2145 = vld [vmem:[%s2105 + $0x138] sm:$0xff]
      %v2146 = vld [vmem:[%s2105 + $0x140] sm:$0xff]
      %v2147 = vld [vmem:[%s2105 + $0x148] sm:$0xff]
      %v2148 = vld [vmem:[%s2105 + $0x150] sm:$0xff]
      %v2149 = vld [vmem:[%s2105 + $0x158] sm:$0xff]
      %v2150 = vld [vmem:[%s2105 + $0x160] sm:$0xff]
      %v2151 = vld [vmem:[%s2105 + $0x168] sm:$0xff]
      %v2152 = vld [vmem:[%s2105 + $0x170] sm:$0xff]
      %v2153 = vld [vmem:[%s2105 + $0x178] sm:$0xff]
      %v2154 = vld [vmem:[%s2105 + $0x180] sm:$0xff]
      %v2155 = vld [vmem:[%s2105 + $0x188] sm:$0xff]
      %v2156 = vld [vmem:[%s2105 + $0x190] sm:$0xff]
      %v2157 = vld [vmem:[%s2105 + $0x198] sm:$0xff]
      %v2158 = vld [vmem:[%s2105 + $0x1a0] sm:$0xff]
      %v2159 = vld [vmem:[%s2105 + $0x1a8] sm:$0xff]
      %v2160 = vld [vmem:[%s2105 + $0x1b0] sm:$0xff]
      %v2161 = vld [vmem:[%s2105 + $0x1b8] sm:$0xff]
      %v2162 = vld [vmem:[%s2105 + $0x1c0] sm:$0xff]
      %v2163 = vld [vmem:[%s2105 + $0x1c8] sm:$0xff]
      %v2164 = vld [vmem:[%s2105 + $0x1d0] sm:$0xff]
      %v2165 = vld [vmem:[%s2105 + $0x1d8] sm:$0xff]
      %v2166 = vld [vmem:[%s2105 + $0x1e0] sm:$0xff]
      %v2167 = vld [vmem:[%s2105 + $0x1e8] sm:$0xff]
      %v2168 = vld [vmem:[%s2105 + $0x1f0] sm:$0xff]
      %v2169 = vld [vmem:[%s2105 + $0x1f8] sm:$0xff]
      %s2170 = scalar_lea.vmem [#allocation5], 3072
      %v2171 = vld [vmem:[%s2170] sm:$0xff]
      %v2172 = vld [vmem:[%s2170 + $0x8] sm:$0xff]
      %v2173 = vld [vmem:[%s2170 + $0x10] sm:$0xff]
      %v2174 = vld [vmem:[%s2170 + $0x18] sm:$0xff]
      %v2175 = vld [vmem:[%s2170 + $0x20] sm:$0xff]
      %v2176 = vld [vmem:[%s2170 + $0x28] sm:$0xff]
      %v2177 = vld [vmem:[%s2170 + $0x30] sm:$0xff]
      %v2178 = vld [vmem:[%s2170 + $0x38] sm:$0xff]
      %v2179 = vld [vmem:[%s2170 + $0x40] sm:$0xff]
      %v2180 = vld [vmem:[%s2170 + $0x48] sm:$0xff]
      %v2181 = vld [vmem:[%s2170 + $0x50] sm:$0xff]
      %v2182 = vld [vmem:[%s2170 + $0x58] sm:$0xff]
      %v2183 = vld [vmem:[%s2170 + $0x60] sm:$0xff]
      %v2184 = vld [vmem:[%s2170 + $0x68] sm:$0xff]
      %v2185 = vld [vmem:[%s2170 + $0x70] sm:$0xff]
      %v2186 = vld [vmem:[%s2170 + $0x78] sm:$0xff]
      %v2187 = vld [vmem:[%s2170 + $0x80] sm:$0xff]
      %v2188 = vld [vmem:[%s2170 + $0x88] sm:$0xff]
      %v2189 = vld [vmem:[%s2170 + $0x90] sm:$0xff]
      %v2190 = vld [vmem:[%s2170 + $0x98] sm:$0xff]
      %v2191 = vld [vmem:[%s2170 + $0xa0] sm:$0xff]
      %v2192 = vld [vmem:[%s2170 + $0xa8] sm:$0xff]
      %v2193 = vld [vmem:[%s2170 + $0xb0] sm:$0xff]
      %v2194 = vld [vmem:[%s2170 + $0xb8] sm:$0xff]
      %v2195 = vld [vmem:[%s2170 + $0xc0] sm:$0xff]
      %v2196 = vld [vmem:[%s2170 + $0xc8] sm:$0xff]
      %v2197 = vld [vmem:[%s2170 + $0xd0] sm:$0xff]
      %v2198 = vld [vmem:[%s2170 + $0xd8] sm:$0xff]
      %v2199 = vld [vmem:[%s2170 + $0xe0] sm:$0xff]
      %v2200 = vld [vmem:[%s2170 + $0xe8] sm:$0xff]
      %v2201 = vld [vmem:[%s2170 + $0xf0] sm:$0xff]
      %v2202 = vld [vmem:[%s2170 + $0xf8] sm:$0xff]
      %v2203 = vld [vmem:[%s2170 + $0x100] sm:$0xff]
      %v2204 = vld [vmem:[%s2170 + $0x108] sm:$0xff]
      %v2205 = vld [vmem:[%s2170 + $0x110] sm:$0xff]
      %v2206 = vld [vmem:[%s2170 + $0x118] sm:$0xff]
      %v2207 = vld [vmem:[%s2170 + $0x120] sm:$0xff]
      %v2208 = vld [vmem:[%s2170 + $0x128] sm:$0xff]
      %v2209 = vld [vmem:[%s2170 + $0x130] sm:$0xff]
      %v2210 = vld [vmem:[%s2170 + $0x138] sm:$0xff]
      %v2211 = vld [vmem:[%s2170 + $0x140] sm:$0xff]
      %v2212 = vld [vmem:[%s2170 + $0x148] sm:$0xff]
      %v2213 = vld [vmem:[%s2170 + $0x150] sm:$0xff]
      %v2214 = vld [vmem:[%s2170 + $0x158] sm:$0xff]
      %v2215 = vld [vmem:[%s2170 + $0x160] sm:$0xff]
      %v2216 = vld [vmem:[%s2170 + $0x168] sm:$0xff]
      %v2217 = vld [vmem:[%s2170 + $0x170] sm:$0xff]
      %v2218 = vld [vmem:[%s2170 + $0x178] sm:$0xff]
      %v2219 = vld [vmem:[%s2170 + $0x180] sm:$0xff]
      %v2220 = vld [vmem:[%s2170 + $0x188] sm:$0xff]
      %v2221 = vld [vmem:[%s2170 + $0x190] sm:$0xff]
      %v2222 = vld [vmem:[%s2170 + $0x198] sm:$0xff]
      %v2223 = vld [vmem:[%s2170 + $0x1a0] sm:$0xff]
      %v2224 = vld [vmem:[%s2170 + $0x1a8] sm:$0xff]
      %v2225 = vld [vmem:[%s2170 + $0x1b0] sm:$0xff]
      %v2226 = vld [vmem:[%s2170 + $0x1b8] sm:$0xff]
      %v2227 = vld [vmem:[%s2170 + $0x1c0] sm:$0xff]
      %v2228 = vld [vmem:[%s2170 + $0x1c8] sm:$0xff]
      %v2229 = vld [vmem:[%s2170 + $0x1d0] sm:$0xff]
      %v2230 = vld [vmem:[%s2170 + $0x1d8] sm:$0xff]
      %v2231 = vld [vmem:[%s2170 + $0x1e0] sm:$0xff]
      %v2232 = vld [vmem:[%s2170 + $0x1e8] sm:$0xff]
      %v2233 = vld [vmem:[%s2170 + $0x1f0] sm:$0xff]
      %v2234 = vld [vmem:[%s2170 + $0x1f8] sm:$0xff]
      %v2235 = vsub.f32 %v2106, %v2171
      %v2236 = vsub.f32 %v2107, %v2172
      %v2237 = vsub.f32 %v2108, %v2173
      %v2238 = vsub.f32 %v2109, %v2174
      %v2239 = vsub.f32 %v2110, %v2175
      %v2240 = vsub.f32 %v2111, %v2176
      %v2241 = vsub.f32 %v2112, %v2177
      %v2242 = vsub.f32 %v2113, %v2178
      %v2243 = vsub.f32 %v2114, %v2179
      %v2244 = vsub.f32 %v2115, %v2180
      %v2245 = vsub.f32 %v2116, %v2181
      %v2246 = vsub.f32 %v2117, %v2182
      %v2247 = vsub.f32 %v2118, %v2183
      %v2248 = vsub.f32 %v2119, %v2184
      %v2249 = vsub.f32 %v2120, %v2185
      %v2250 = vsub.f32 %v2121, %v2186
      %v2251 = vsub.f32 %v2122, %v2187
      %v2252 = vsub.f32 %v2123, %v2188
      %v2253 = vsub.f32 %v2124, %v2189
      %v2254 = vsub.f32 %v2125, %v2190
      %v2255 = vsub.f32 %v2126, %v2191
      %v2256 = vsub.f32 %v2127, %v2192
      %v2257 = vsub.f32 %v2128, %v2193
      %v2258 = vsub.f32 %v2129, %v2194
      %v2259 = vsub.f32 %v2130, %v2195
      %v2260 = vsub.f32 %v2131, %v2196
      %v2261 = vsub.f32 %v2132, %v2197
      %v2262 = vsub.f32 %v2133, %v2198
      %v2263 = vsub.f32 %v2134, %v2199
      %v2264 = vsub.f32 %v2135, %v2200
      %v2265 = vsub.f32 %v2136, %v2201
      %v2266 = vsub.f32 %v2137, %v2202
      %v2267 = vsub.f32 %v2138, %v2203
      %v2268 = vsub.f32 %v2139, %v2204
      %v2269 = vsub.f32 %v2140, %v2205
      %v2270 = vsub.f32 %v2141, %v2206
      %v2271 = vsub.f32 %v2142, %v2207
      %v2272 = vsub.f32 %v2143, %v2208
      %v2273 = vsub.f32 %v2144, %v2209
      %v2274 = vsub.f32 %v2145, %v2210
      %v2275 = vsub.f32 %v2146, %v2211
      %v2276 = vsub.f32 %v2147, %v2212
      %v2277 = vsub.f32 %v2148, %v2213
      %v2278 = vsub.f32 %v2149, %v2214
      %v2279 = vsub.f32 %v2150, %v2215
      %v2280 = vsub.f32 %v2151, %v2216
      %v2281 = vsub.f32 %v2152, %v2217
      %v2282 = vsub.f32 %v2153, %v2218
      %v2283 = vsub.f32 %v2154, %v2219
      %v2284 = vsub.f32 %v2155, %v2220
      %v2285 = vsub.f32 %v2156, %v2221
      %v2286 = vsub.f32 %v2157, %v2222
      %v2287 = vsub.f32 %v2158, %v2223
      %v2288 = vsub.f32 %v2159, %v2224
      %v2289 = vsub.f32 %v2160, %v2225
      %v2290 = vsub.f32 %v2161, %v2226
      %v2291 = vsub.f32 %v2162, %v2227
      %v2292 = vsub.f32 %v2163, %v2228
      %v2293 = vsub.f32 %v2164, %v2229
      %v2294 = vsub.f32 %v2165, %v2230
      %v2295 = vsub.f32 %v2166, %v2231
      %v2296 = vsub.f32 %v2167, %v2232
      %v2297 = vsub.f32 %v2168, %v2233
      %v2298 = vsub.f32 %v2169, %v2234
      %v2299 = vmul.f32 %v2235, %v2235
      %v2300 = vmul.f32 %v2236, %v2236
      %v2301 = vmul.f32 %v2237, %v2237
      %v2302 = vmul.f32 %v2238, %v2238
      %v2303 = vmul.f32 %v2239, %v2239
      %v2304 = vmul.f32 %v2240, %v2240
      %v2305 = vmul.f32 %v2241, %v2241
      %v2306 = vmul.f32 %v2242, %v2242
      %v2307 = vmul.f32 %v2243, %v2243
      %v2308 = vmul.f32 %v2244, %v2244
      %v2309 = vmul.f32 %v2245, %v2245
      %v2310 = vmul.f32 %v2246, %v2246
      %v2311 = vmul.f32 %v2247, %v2247
      %v2312 = vmul.f32 %v2248, %v2248
      %v2313 = vmul.f32 %v2249, %v2249
      %v2314 = vmul.f32 %v2250, %v2250
      %v2315 = vmul.f32 %v2251, %v2251
      %v2316 = vmul.f32 %v2252, %v2252
      %v2317 = vmul.f32 %v2253, %v2253
      %v2318 = vmul.f32 %v2254, %v2254
      %v2319 = vmul.f32 %v2255, %v2255
      %v2320 = vmul.f32 %v2256, %v2256
      %v2321 = vmul.f32 %v2257, %v2257
      %v2322 = vmul.f32 %v2258, %v2258
      %v2323 = vmul.f32 %v2259, %v2259
      %v2324 = vmul.f32 %v2260, %v2260
      %v2325 = vmul.f32 %v2261, %v2261
      %v2326 = vmul.f32 %v2262, %v2262
      %v2327 = vmul.f32 %v2263, %v2263
      %v2328 = vmul.f32 %v2264, %v2264
      %v2329 = vmul.f32 %v2265, %v2265
      %v2330 = vmul.f32 %v2266, %v2266
      %v2331 = vmul.f32 %v2267, %v2267
      %v2332 = vmul.f32 %v2268, %v2268
      %v2333 = vmul.f32 %v2269, %v2269
      %v2334 = vmul.f32 %v2270, %v2270
      %v2335 = vmul.f32 %v2271, %v2271
      %v2336 = vmul.f32 %v2272, %v2272
      %v2337 = vmul.f32 %v2273, %v2273
      %v2338 = vmul.f32 %v2274, %v2274
      %v2339 = vmul.f32 %v2275, %v2275
      %v2340 = vmul.f32 %v2276, %v2276
      %v2341 = vmul.f32 %v2277, %v2277
      %v2342 = vmul.f32 %v2278, %v2278
      %v2343 = vmul.f32 %v2279, %v2279
      %v2344 = vmul.f32 %v2280, %v2280
      %v2345 = vmul.f32 %v2281, %v2281
      %v2346 = vmul.f32 %v2282, %v2282
      %v2347 = vmul.f32 %v2283, %v2283
      %v2348 = vmul.f32 %v2284, %v2284
      %v2349 = vmul.f32 %v2285, %v2285
      %v2350 = vmul.f32 %v2286, %v2286
      %v2351 = vmul.f32 %v2287, %v2287
      %v2352 = vmul.f32 %v2288, %v2288
      %v2353 = vmul.f32 %v2289, %v2289
      %v2354 = vmul.f32 %v2290, %v2290
      %v2355 = vmul.f32 %v2291, %v2291
      %v2356 = vmul.f32 %v2292, %v2292
      %v2357 = vmul.f32 %v2293, %v2293
      %v2358 = vmul.f32 %v2294, %v2294
      %v2359 = vmul.f32 %v2295, %v2295
      %v2360 = vmul.f32 %v2296, %v2296
      %v2361 = vmul.f32 %v2297, %v2297
      %v2362 = vmul.f32 %v2298, %v2298
      %v2363 = vld [vmem:[#allocation7] sm:$0xff]
      %v2364 = vld [vmem:[#allocation7 + $0x8] sm:$0xff]
      %v2365 = vld [vmem:[#allocation7 + $0x10] sm:$0xff]
      %v2366 = vld [vmem:[#allocation7 + $0x18] sm:$0xff]
      %v2367 = vld [vmem:[#allocation7 + $0x20] sm:$0xff]
      %v2368 = vld [vmem:[#allocation7 + $0x28] sm:$0xff]
      %v2369 = vld [vmem:[#allocation7 + $0x30] sm:$0xff]
      %v2370 = vld [vmem:[#allocation7 + $0x38] sm:$0xff]
      %v2371 = vadd.f32 %v2299, %v2307
      %v2372 = vadd.f32 %v2371, %v2315
      %v2373 = vadd.f32 %v2372, %v2323
      %v2374 = vadd.f32 %v2373, %v2331
      %v2375 = vadd.f32 %v2374, %v2339
      %v2376 = vadd.f32 %v2375, %v2347
      %v2377 = vadd.f32 %v2376, %v2355
      %v2378 = vadd.f32 %v2300, %v2308
      %v2379 = vadd.f32 %v2378, %v2316
      %v2380 = vadd.f32 %v2379, %v2324
      %v2381 = vadd.f32 %v2380, %v2332
      %v2382 = vadd.f32 %v2381, %v2340
      %v2383 = vadd.f32 %v2382, %v2348
      %v2384 = vadd.f32 %v2383, %v2356
      %v2385 = vadd.f32 %v2301, %v2309
      %v2386 = vadd.f32 %v2385, %v2317
      %v2387 = vadd.f32 %v2386, %v2325
      %v2388 = vadd.f32 %v2387, %v2333
      %v2389 = vadd.f32 %v2388, %v2341
      %v2390 = vadd.f32 %v2389, %v2349
      %v2391 = vadd.f32 %v2390, %v2357
      %v2392 = vadd.f32 %v2302, %v2310
      %v2393 = vadd.f32 %v2392, %v2318
      %v2394 = vadd.f32 %v2393, %v2326
      %v2395 = vadd.f32 %v2394, %v2334
      %v2396 = vadd.f32 %v2395, %v2342
      %v2397 = vadd.f32 %v2396, %v2350
      %v2398 = vadd.f32 %v2397, %v2358
      %v2399 = vadd.f32 %v2303, %v2311
      %v2400 = vadd.f32 %v2399, %v2319
      %v2401 = vadd.f32 %v2400, %v2327
      %v2402 = vadd.f32 %v2401, %v2335
      %v2403 = vadd.f32 %v2402, %v2343
      %v2404 = vadd.f32 %v2403, %v2351
      %v2405 = vadd.f32 %v2404, %v2359
      %v2406 = vadd.f32 %v2304, %v2312
      %v2407 = vadd.f32 %v2406, %v2320
      %v2408 = vadd.f32 %v2407, %v2328
      %v2409 = vadd.f32 %v2408, %v2336
      %v2410 = vadd.f32 %v2409, %v2344
      %v2411 = vadd.f32 %v2410, %v2352
      %v2412 = vadd.f32 %v2411, %v2360
      %v2413 = vadd.f32 %v2305, %v2313
      %v2414 = vadd.f32 %v2413, %v2321
      %v2415 = vadd.f32 %v2414, %v2329
      %v2416 = vadd.f32 %v2415, %v2337
      %v2417 = vadd.f32 %v2416, %v2345
      %v2418 = vadd.f32 %v2417, %v2353
      %v2419 = vadd.f32 %v2418, %v2361
      %v2420 = vadd.f32 %v2306, %v2314
      %v2421 = vadd.f32 %v2420, %v2322
      %v2422 = vadd.f32 %v2421, %v2330
      %v2423 = vadd.f32 %v2422, %v2338
      %v2424 = vadd.f32 %v2423, %v2346
      %v2425 = vadd.f32 %v2424, %v2354
      %v2426 = vadd.f32 %v2425, %v2362
      %v2427 = vadd.f32 %v2363, %v2377
      %v2428 = vadd.f32 %v2364, %v2384
      %v2429 = vadd.f32 %v2365, %v2391
      %v2430 = vadd.f32 %v2366, %v2398
      %v2431 = vadd.f32 %v2367, %v2405
      %v2432 = vadd.f32 %v2368, %v2412
      %v2433 = vadd.f32 %v2369, %v2419
      %v2434 = vadd.f32 %v2370, %v2426
      %2435 = vst [vmem:[#allocation7] sm:$0xff] %v2427
      %2436 = vst [vmem:[#allocation7 + $0x8] sm:$0xff] %v2428
      %2437 = vst [vmem:[#allocation7 + $0x10] sm:$0xff] %v2429
      %2438 = vst [vmem:[#allocation7 + $0x18] sm:$0xff] %v2430
      %2439 = vst [vmem:[#allocation7 + $0x20] sm:$0xff] %v2431
      %2440 = vst [vmem:[#allocation7 + $0x28] sm:$0xff] %v2432
      %2441 = vst [vmem:[#allocation7 + $0x30] sm:$0xff] %v2433
      %2442 = vst [vmem:[#allocation7 + $0x38] sm:$0xff] %v2434
      %s2443 = scalar_lea.vmem [#allocation2], 3584
      %v2444 = vld [vmem:[%s2443] sm:$0xff]
      %v2445 = vld [vmem:[%s2443 + $0x8] sm:$0xff]
      %v2446 = vld [vmem:[%s2443 + $0x10] sm:$0xff]
      %v2447 = vld [vmem:[%s2443 + $0x18] sm:$0xff]
      %v2448 = vld [vmem:[%s2443 + $0x20] sm:$0xff]
      %v2449 = vld [vmem:[%s2443 + $0x28] sm:$0xff]
      %v2450 = vld [vmem:[%s2443 + $0x30] sm:$0xff]
      %v2451 = vld [vmem:[%s2443 + $0x38] sm:$0xff]
      %v2452 = vld [vmem:[%s2443 + $0x40] sm:$0xff]
      %v2453 = vld [vmem:[%s2443 + $0x48] sm:$0xff]
      %v2454 = vld [vmem:[%s2443 + $0x50] sm:$0xff]
      %v2455 = vld [vmem:[%s2443 + $0x58] sm:$0xff]
      %v2456 = vld [vmem:[%s2443 + $0x60] sm:$0xff]
      %v2457 = vld [vmem:[%s2443 + $0x68] sm:$0xff]
      %v2458 = vld [vmem:[%s2443 + $0x70] sm:$0xff]
      %v2459 = vld [vmem:[%s2443 + $0x78] sm:$0xff]
      %v2460 = vld [vmem:[%s2443 + $0x80] sm:$0xff]
      %v2461 = vld [vmem:[%s2443 + $0x88] sm:$0xff]
      %v2462 = vld [vmem:[%s2443 + $0x90] sm:$0xff]
      %v2463 = vld [vmem:[%s2443 + $0x98] sm:$0xff]
      %v2464 = vld [vmem:[%s2443 + $0xa0] sm:$0xff]
      %v2465 = vld [vmem:[%s2443 + $0xa8] sm:$0xff]
      %v2466 = vld [vmem:[%s2443 + $0xb0] sm:$0xff]
      %v2467 = vld [vmem:[%s2443 + $0xb8] sm:$0xff]
      %v2468 = vld [vmem:[%s2443 + $0xc0] sm:$0xff]
      %v2469 = vld [vmem:[%s2443 + $0xc8] sm:$0xff]
      %v2470 = vld [vmem:[%s2443 + $0xd0] sm:$0xff]
      %v2471 = vld [vmem:[%s2443 + $0xd8] sm:$0xff]
      %v2472 = vld [vmem:[%s2443 + $0xe0] sm:$0xff]
      %v2473 = vld [vmem:[%s2443 + $0xe8] sm:$0xff]
      %v2474 = vld [vmem:[%s2443 + $0xf0] sm:$0xff]
      %v2475 = vld [vmem:[%s2443 + $0xf8] sm:$0xff]
      %v2476 = vld [vmem:[%s2443 + $0x100] sm:$0xff]
      %v2477 = vld [vmem:[%s2443 + $0x108] sm:$0xff]
      %v2478 = vld [vmem:[%s2443 + $0x110] sm:$0xff]
      %v2479 = vld [vmem:[%s2443 + $0x118] sm:$0xff]
      %v2480 = vld [vmem:[%s2443 + $0x120] sm:$0xff]
      %v2481 = vld [vmem:[%s2443 + $0x128] sm:$0xff]
      %v2482 = vld [vmem:[%s2443 + $0x130] sm:$0xff]
      %v2483 = vld [vmem:[%s2443 + $0x138] sm:$0xff]
      %v2484 = vld [vmem:[%s2443 + $0x140] sm:$0xff]
      %v2485 = vld [vmem:[%s2443 + $0x148] sm:$0xff]
      %v2486 = vld [vmem:[%s2443 + $0x150] sm:$0xff]
      %v2487 = vld [vmem:[%s2443 + $0x158] sm:$0xff]
      %v2488 = vld [vmem:[%s2443 + $0x160] sm:$0xff]
      %v2489 = vld [vmem:[%s2443 + $0x168] sm:$0xff]
      %v2490 = vld [vmem:[%s2443 + $0x170] sm:$0xff]
      %v2491 = vld [vmem:[%s2443 + $0x178] sm:$0xff]
      %v2492 = vld [vmem:[%s2443 + $0x180] sm:$0xff]
      %v2493 = vld [vmem:[%s2443 + $0x188] sm:$0xff]
      %v2494 = vld [vmem:[%s2443 + $0x190] sm:$0xff]
      %v2495 = vld [vmem:[%s2443 + $0x198] sm:$0xff]
      %v2496 = vld [vmem:[%s2443 + $0x1a0] sm:$0xff]
      %v2497 = vld [vmem:[%s2443 + $0x1a8] sm:$0xff]
      %v2498 = vld [vmem:[%s2443 + $0x1b0] sm:$0xff]
      %v2499 = vld [vmem:[%s2443 + $0x1b8] sm:$0xff]
      %v2500 = vld [vmem:[%s2443 + $0x1c0] sm:$0xff]
      %v2501 = vld [vmem:[%s2443 + $0x1c8] sm:$0xff]
      %v2502 = vld [vmem:[%s2443 + $0x1d0] sm:$0xff]
      %v2503 = vld [vmem:[%s2443 + $0x1d8] sm:$0xff]
      %v2504 = vld [vmem:[%s2443 + $0x1e0] sm:$0xff]
      %v2505 = vld [vmem:[%s2443 + $0x1e8] sm:$0xff]
      %v2506 = vld [vmem:[%s2443 + $0x1f0] sm:$0xff]
      %v2507 = vld [vmem:[%s2443 + $0x1f8] sm:$0xff]
      %s2508 = scalar_lea.vmem [#allocation5], 3584
      %v2509 = vld [vmem:[%s2508] sm:$0xff]
      %v2510 = vld [vmem:[%s2508 + $0x8] sm:$0xff]
      %v2511 = vld [vmem:[%s2508 + $0x10] sm:$0xff]
      %v2512 = vld [vmem:[%s2508 + $0x18] sm:$0xff]
      %v2513 = vld [vmem:[%s2508 + $0x20] sm:$0xff]
      %v2514 = vld [vmem:[%s2508 + $0x28] sm:$0xff]
      %v2515 = vld [vmem:[%s2508 + $0x30] sm:$0xff]
      %v2516 = vld [vmem:[%s2508 + $0x38] sm:$0xff]
      %v2517 = vld [vmem:[%s2508 + $0x40] sm:$0xff]
      %v2518 = vld [vmem:[%s2508 + $0x48] sm:$0xff]
      %v2519 = vld [vmem:[%s2508 + $0x50] sm:$0xff]
      %v2520 = vld [vmem:[%s2508 + $0x58] sm:$0xff]
      %v2521 = vld [vmem:[%s2508 + $0x60] sm:$0xff]
      %v2522 = vld [vmem:[%s2508 + $0x68] sm:$0xff]
      %v2523 = vld [vmem:[%s2508 + $0x70] sm:$0xff]
      %v2524 = vld [vmem:[%s2508 + $0x78] sm:$0xff]
      %v2525 = vld [vmem:[%s2508 + $0x80] sm:$0xff]
      %v2526 = vld [vmem:[%s2508 + $0x88] sm:$0xff]
      %v2527 = vld [vmem:[%s2508 + $0x90] sm:$0xff]
      %v2528 = vld [vmem:[%s2508 + $0x98] sm:$0xff]
      %v2529 = vld [vmem:[%s2508 + $0xa0] sm:$0xff]
      %v2530 = vld [vmem:[%s2508 + $0xa8] sm:$0xff]
      %v2531 = vld [vmem:[%s2508 + $0xb0] sm:$0xff]
      %v2532 = vld [vmem:[%s2508 + $0xb8] sm:$0xff]
      %v2533 = vld [vmem:[%s2508 + $0xc0] sm:$0xff]
      %v2534 = vld [vmem:[%s2508 + $0xc8] sm:$0xff]
      %v2535 = vld [vmem:[%s2508 + $0xd0] sm:$0xff]
      %v2536 = vld [vmem:[%s2508 + $0xd8] sm:$0xff]
      %v2537 = vld [vmem:[%s2508 + $0xe0] sm:$0xff]
      %v2538 = vld [vmem:[%s2508 + $0xe8] sm:$0xff]
      %v2539 = vld [vmem:[%s2508 + $0xf0] sm:$0xff]
      %v2540 = vld [vmem:[%s2508 + $0xf8] sm:$0xff]
      %v2541 = vld [vmem:[%s2508 + $0x100] sm:$0xff]
      %v2542 = vld [vmem:[%s2508 + $0x108] sm:$0xff]
      %v2543 = vld [vmem:[%s2508 + $0x110] sm:$0xff]
      %v2544 = vld [vmem:[%s2508 + $0x118] sm:$0xff]
      %v2545 = vld [vmem:[%s2508 + $0x120] sm:$0xff]
      %v2546 = vld [vmem:[%s2508 + $0x128] sm:$0xff]
      %v2547 = vld [vmem:[%s2508 + $0x130] sm:$0xff]
      %v2548 = vld [vmem:[%s2508 + $0x138] sm:$0xff]
      %v2549 = vld [vmem:[%s2508 + $0x140] sm:$0xff]
      %v2550 = vld [vmem:[%s2508 + $0x148] sm:$0xff]
      %v2551 = vld [vmem:[%s2508 + $0x150] sm:$0xff]
      %v2552 = vld [vmem:[%s2508 + $0x158] sm:$0xff]
      %v2553 = vld [vmem:[%s2508 + $0x160] sm:$0xff]
      %v2554 = vld [vmem:[%s2508 + $0x168] sm:$0xff]
      %v2555 = vld [vmem:[%s2508 + $0x170] sm:$0xff]
      %v2556 = vld [vmem:[%s2508 + $0x178] sm:$0xff]
      %v2557 = vld [vmem:[%s2508 + $0x180] sm:$0xff]
      %v2558 = vld [vmem:[%s2508 + $0x188] sm:$0xff]
      %v2559 = vld [vmem:[%s2508 + $0x190] sm:$0xff]
      %v2560 = vld [vmem:[%s2508 + $0x198] sm:$0xff]
      %v2561 = vld [vmem:[%s2508 + $0x1a0] sm:$0xff]
      %v2562 = vld [vmem:[%s2508 + $0x1a8] sm:$0xff]
      %v2563 = vld [vmem:[%s2508 + $0x1b0] sm:$0xff]
      %v2564 = vld [vmem:[%s2508 + $0x1b8] sm:$0xff]
      %v2565 = vld [vmem:[%s2508 + $0x1c0] sm:$0xff]
      %v2566 = vld [vmem:[%s2508 + $0x1c8] sm:$0xff]
      %v2567 = vld [vmem:[%s2508 + $0x1d0] sm:$0xff]
      %v2568 = vld [vmem:[%s2508 + $0x1d8] sm:$0xff]
      %v2569 = vld [vmem:[%s2508 + $0x1e0] sm:$0xff]
      %v2570 = vld [vmem:[%s2508 + $0x1e8] sm:$0xff]
      %v2571 = vld [vmem:[%s2508 + $0x1f0] sm:$0xff]
      %v2572 = vld [vmem:[%s2508 + $0x1f8] sm:$0xff]
      %v2573 = vsub.f32 %v2444, %v2509
      %v2574 = vsub.f32 %v2445, %v2510
      %v2575 = vsub.f32 %v2446, %v2511
      %v2576 = vsub.f32 %v2447, %v2512
      %v2577 = vsub.f32 %v2448, %v2513
      %v2578 = vsub.f32 %v2449, %v2514
      %v2579 = vsub.f32 %v2450, %v2515
      %v2580 = vsub.f32 %v2451, %v2516
      %v2581 = vsub.f32 %v2452, %v2517
      %v2582 = vsub.f32 %v2453, %v2518
      %v2583 = vsub.f32 %v2454, %v2519
      %v2584 = vsub.f32 %v2455, %v2520
      %v2585 = vsub.f32 %v2456, %v2521
      %v2586 = vsub.f32 %v2457, %v2522
      %v2587 = vsub.f32 %v2458, %v2523
      %v2588 = vsub.f32 %v2459, %v2524
      %v2589 = vsub.f32 %v2460, %v2525
      %v2590 = vsub.f32 %v2461, %v2526
      %v2591 = vsub.f32 %v2462, %v2527
      %v2592 = vsub.f32 %v2463, %v2528
      %v2593 = vsub.f32 %v2464, %v2529
      %v2594 = vsub.f32 %v2465, %v2530
      %v2595 = vsub.f32 %v2466, %v2531
      %v2596 = vsub.f32 %v2467, %v2532
      %v2597 = vsub.f32 %v2468, %v2533
      %v2598 = vsub.f32 %v2469, %v2534
      %v2599 = vsub.f32 %v2470, %v2535
      %v2600 = vsub.f32 %v2471, %v2536
      %v2601 = vsub.f32 %v2472, %v2537
      %v2602 = vsub.f32 %v2473, %v2538
      %v2603 = vsub.f32 %v2474, %v2539
      %v2604 = vsub.f32 %v2475, %v2540
      %v2605 = vsub.f32 %v2476, %v2541
      %v2606 = vsub.f32 %v2477, %v2542
      %v2607 = vsub.f32 %v2478, %v2543
      %v2608 = vsub.f32 %v2479, %v2544
      %v2609 = vsub.f32 %v2480, %v2545
      %v2610 = vsub.f32 %v2481, %v2546
      %v2611 = vsub.f32 %v2482, %v2547
      %v2612 = vsub.f32 %v2483, %v2548
      %v2613 = vsub.f32 %v2484, %v2549
      %v2614 = vsub.f32 %v2485, %v2550
      %v2615 = vsub.f32 %v2486, %v2551
      %v2616 = vsub.f32 %v2487, %v2552
      %v2617 = vsub.f32 %v2488, %v2553
      %v2618 = vsub.f32 %v2489, %v2554
      %v2619 = vsub.f32 %v2490, %v2555
      %v2620 = vsub.f32 %v2491, %v2556
      %v2621 = vsub.f32 %v2492, %v2557
      %v2622 = vsub.f32 %v2493, %v2558
      %v2623 = vsub.f32 %v2494, %v2559
      %v2624 = vsub.f32 %v2495, %v2560
      %v2625 = vsub.f32 %v2496, %v2561
      %v2626 = vsub.f32 %v2497, %v2562
      %v2627 = vsub.f32 %v2498, %v2563
      %v2628 = vsub.f32 %v2499, %v2564
      %v2629 = vsub.f32 %v2500, %v2565
      %v2630 = vsub.f32 %v2501, %v2566
      %v2631 = vsub.f32 %v2502, %v2567
      %v2632 = vsub.f32 %v2503, %v2568
      %v2633 = vsub.f32 %v2504, %v2569
      %v2634 = vsub.f32 %v2505, %v2570
      %v2635 = vsub.f32 %v2506, %v2571
      %v2636 = vsub.f32 %v2507, %v2572
      %v2637 = vmul.f32 %v2573, %v2573
      %v2638 = vmul.f32 %v2574, %v2574
      %v2639 = vmul.f32 %v2575, %v2575
      %v2640 = vmul.f32 %v2576, %v2576
      %v2641 = vmul.f32 %v2577, %v2577
      %v2642 = vmul.f32 %v2578, %v2578
      %v2643 = vmul.f32 %v2579, %v2579
      %v2644 = vmul.f32 %v2580, %v2580
      %v2645 = vmul.f32 %v2581, %v2581
      %v2646 = vmul.f32 %v2582, %v2582
      %v2647 = vmul.f32 %v2583, %v2583
      %v2648 = vmul.f32 %v2584, %v2584
      %v2649 = vmul.f32 %v2585, %v2585
      %v2650 = vmul.f32 %v2586, %v2586
      %v2651 = vmul.f32 %v2587, %v2587
      %v2652 = vmul.f32 %v2588, %v2588
      %v2653 = vmul.f32 %v2589, %v2589
      %v2654 = vmul.f32 %v2590, %v2590
      %v2655 = vmul.f32 %v2591, %v2591
      %v2656 = vmul.f32 %v2592, %v2592
      %v2657 = vmul.f32 %v2593, %v2593
      %v2658 = vmul.f32 %v2594, %v2594
      %v2659 = vmul.f32 %v2595, %v2595
      %v2660 = vmul.f32 %v2596, %v2596
      %v2661 = vmul.f32 %v2597, %v2597
      %v2662 = vmul.f32 %v2598, %v2598
      %v2663 = vmul.f32 %v2599, %v2599
      %v2664 = vmul.f32 %v2600, %v2600
      %v2665 = vmul.f32 %v2601, %v2601
      %v2666 = vmul.f32 %v2602, %v2602
      %v2667 = vmul.f32 %v2603, %v2603
      %v2668 = vmul.f32 %v2604, %v2604
      %v2669 = vmul.f32 %v2605, %v2605
      %v2670 = vmul.f32 %v2606, %v2606
      %v2671 = vmul.f32 %v2607, %v2607
      %v2672 = vmul.f32 %v2608, %v2608
      %v2673 = vmul.f32 %v2609, %v2609
      %v2674 = vmul.f32 %v2610, %v2610
      %v2675 = vmul.f32 %v2611, %v2611
      %v2676 = vmul.f32 %v2612, %v2612
      %v2677 = vmul.f32 %v2613, %v2613
      %v2678 = vmul.f32 %v2614, %v2614
      %v2679 = vmul.f32 %v2615, %v2615
      %v2680 = vmul.f32 %v2616, %v2616
      %v2681 = vmul.f32 %v2617, %v2617
      %v2682 = vmul.f32 %v2618, %v2618
      %v2683 = vmul.f32 %v2619, %v2619
      %v2684 = vmul.f32 %v2620, %v2620
      %v2685 = vmul.f32 %v2621, %v2621
      %v2686 = vmul.f32 %v2622, %v2622
      %v2687 = vmul.f32 %v2623, %v2623
      %v2688 = vmul.f32 %v2624, %v2624
      %v2689 = vmul.f32 %v2625, %v2625
      %v2690 = vmul.f32 %v2626, %v2626
      %v2691 = vmul.f32 %v2627, %v2627
      %v2692 = vmul.f32 %v2628, %v2628
      %v2693 = vmul.f32 %v2629, %v2629
      %v2694 = vmul.f32 %v2630, %v2630
      %v2695 = vmul.f32 %v2631, %v2631
      %v2696 = vmul.f32 %v2632, %v2632
      %v2697 = vmul.f32 %v2633, %v2633
      %v2698 = vmul.f32 %v2634, %v2634
      %v2699 = vmul.f32 %v2635, %v2635
      %v2700 = vmul.f32 %v2636, %v2636
      %v2701 = vld [vmem:[#allocation7] sm:$0xff]
      %v2702 = vld [vmem:[#allocation7 + $0x8] sm:$0xff]
      %v2703 = vld [vmem:[#allocation7 + $0x10] sm:$0xff]
      %v2704 = vld [vmem:[#allocation7 + $0x18] sm:$0xff]
      %v2705 = vld [vmem:[#allocation7 + $0x20] sm:$0xff]
      %v2706 = vld [vmem:[#allocation7 + $0x28] sm:$0xff]
      %v2707 = vld [vmem:[#allocation7 + $0x30] sm:$0xff]
      %v2708 = vld [vmem:[#allocation7 + $0x38] sm:$0xff]
      %v2709 = vadd.f32 %v2637, %v2645
      %v2710 = vadd.f32 %v2709, %v2653
      %v2711 = vadd.f32 %v2710, %v2661
      %v2712 = vadd.f32 %v2711, %v2669
      %v2713 = vadd.f32 %v2712, %v2677
      %v2714 = vadd.f32 %v2713, %v2685
      %v2715 = vadd.f32 %v2714, %v2693
      %v2716 = vadd.f32 %v2638, %v2646
      %v2717 = vadd.f32 %v2716, %v2654
      %v2718 = vadd.f32 %v2717, %v2662
      %v2719 = vadd.f32 %v2718, %v2670
      %v2720 = vadd.f32 %v2719, %v2678
      %v2721 = vadd.f32 %v2720, %v2686
      %v2722 = vadd.f32 %v2721, %v2694
      %v2723 = vadd.f32 %v2639, %v2647
      %v2724 = vadd.f32 %v2723, %v2655
      %v2725 = vadd.f32 %v2724, %v2663
      %v2726 = vadd.f32 %v2725, %v2671
      %v2727 = vadd.f32 %v2726, %v2679
      %v2728 = vadd.f32 %v2727, %v2687
      %v2729 = vadd.f32 %v2728, %v2695
      %v2730 = vadd.f32 %v2640, %v2648
      %v2731 = vadd.f32 %v2730, %v2656
      %v2732 = vadd.f32 %v2731, %v2664
      %v2733 = vadd.f32 %v2732, %v2672
      %v2734 = vadd.f32 %v2733, %v2680
      %v2735 = vadd.f32 %v2734, %v2688
      %v2736 = vadd.f32 %v2735, %v2696
      %v2737 = vadd.f32 %v2641, %v2649
      %v2738 = vadd.f32 %v2737, %v2657
      %v2739 = vadd.f32 %v2738, %v2665
      %v2740 = vadd.f32 %v2739, %v2673
      %v2741 = vadd.f32 %v2740, %v2681
      %v2742 = vadd.f32 %v2741, %v2689
      %v2743 = vadd.f32 %v2742, %v2697
      %v2744 = vadd.f32 %v2642, %v2650
      %v2745 = vadd.f32 %v2744, %v2658
      %v2746 = vadd.f32 %v2745, %v2666
      %v2747 = vadd.f32 %v2746, %v2674
      %v2748 = vadd.f32 %v2747, %v2682
      %v2749 = vadd.f32 %v2748, %v2690
      %v2750 = vadd.f32 %v2749, %v2698
      %v2751 = vadd.f32 %v2643, %v2651
      %v2752 = vadd.f32 %v2751, %v2659
      %v2753 = vadd.f32 %v2752, %v2667
      %v2754 = vadd.f32 %v2753, %v2675
      %v2755 = vadd.f32 %v2754, %v2683
      %v2756 = vadd.f32 %v2755, %v2691
      %v2757 = vadd.f32 %v2756, %v2699
      %v2758 = vadd.f32 %v2644, %v2652
      %v2759 = vadd.f32 %v2758, %v2660
      %v2760 = vadd.f32 %v2759, %v2668
      %v2761 = vadd.f32 %v2760, %v2676
      %v2762 = vadd.f32 %v2761, %v2684
      %v2763 = vadd.f32 %v2762, %v2692
      %v2764 = vadd.f32 %v2763, %v2700
      %v2765 = vadd.f32 %v2701, %v2715
      %v2766 = vadd.f32 %v2702, %v2722
      %v2767 = vadd.f32 %v2703, %v2729
      %v2768 = vadd.f32 %v2704, %v2736
      %v2769 = vadd.f32 %v2705, %v2743
      %v2770 = vadd.f32 %v2706, %v2750
      %v2771 = vadd.f32 %v2707, %v2757
      %v2772 = vadd.f32 %v2708, %v2764
      %2773 = vst [vmem:[#allocation7] sm:$0xff] %v2765
      %2774 = vst [vmem:[#allocation7 + $0x8] sm:$0xff] %v2766
      %2775 = vst [vmem:[#allocation7 + $0x10] sm:$0xff] %v2767
      %2776 = vst [vmem:[#allocation7 + $0x18] sm:$0xff] %v2768
      %2777 = vst [vmem:[#allocation7 + $0x20] sm:$0xff] %v2769
      %2778 = vst [vmem:[#allocation7 + $0x28] sm:$0xff] %v2770
      %2779 = vst [vmem:[#allocation7 + $0x30] sm:$0xff] %v2771
      %2780 = vst [vmem:[#allocation7 + $0x38] sm:$0xff] %v2772
    $region25: #{tpu_custom_call.1} parent=1 // pred_fallthru
      _
    %p2781 = scmp.gt.s32.totalorder %s74, 4096
    // Predicated region
    $region26: #{tpu_custom_call.1} parent=1 // pred_check
      %p2782 = pneg %p2781
    $region27: #{tpu_custom_call.1} parent=1 // pred_check_branch
      %2784 = sbr.rel (%p2782) target = $region29
    $region28: #{tpu_custom_call.1} parent=1 // pred_region
      %v2785 = vld [vmem:[#allocation2] sm:$0xff]
      %v2786 = vld [vmem:[#allocation2 + $0x8] sm:$0xff]
      %v2787 = vld [vmem:[#allocation2 + $0x10] sm:$0xff]
      %v2788 = vld [vmem:[#allocation2 + $0x18] sm:$0xff]
      %v2789 = vld [vmem:[#allocation2 + $0x20] sm:$0xff]
      %v2790 = vld [vmem:[#allocation2 + $0x28] sm:$0xff]
      %v2791 = vld [vmem:[#allocation2 + $0x30] sm:$0xff]
      %v2792 = vld [vmem:[#allocation2 + $0x38] sm:$0xff]
      %v2793 = vld [vmem:[#allocation2 + $0x40] sm:$0xff]
      %v2794 = vld [vmem:[#allocation2 + $0x48] sm:$0xff]
      %v2795 = vld [vmem:[#allocation2 + $0x50] sm:$0xff]
      %v2796 = vld [vmem:[#allocation2 + $0x58] sm:$0xff]
      %v2797 = vld [vmem:[#allocation2 + $0x60] sm:$0xff]
      %v2798 = vld [vmem:[#allocation2 + $0x68] sm:$0xff]
      %v2799 = vld [vmem:[#allocation2 + $0x70] sm:$0xff]
      %v2800 = vld [vmem:[#allocation2 + $0x78] sm:$0xff]
      %v2801 = vld [vmem:[#allocation2 + $0x80] sm:$0xff]
      %v2802 = vld [vmem:[#allocation2 + $0x88] sm:$0xff]
      %v2803 = vld [vmem:[#allocation2 + $0x90] sm:$0xff]
      %v2804 = vld [vmem:[#allocation2 + $0x98] sm:$0xff]
      %v2805 = vld [vmem:[#allocation2 + $0xa0] sm:$0xff]
      %v2806 = vld [vmem:[#allocation2 + $0xa8] sm:$0xff]
      %v2807 = vld [vmem:[#allocation2 + $0xb0] sm:$0xff]
      %v2808 = vld [vmem:[#allocation2 + $0xb8] sm:$0xff]
      %v2809 = vld [vmem:[#allocation2 + $0xc0] sm:$0xff]
      %v2810 = vld [vmem:[#allocation2 + $0xc8] sm:$0xff]
      %v2811 = vld [vmem:[#allocation2 + $0xd0] sm:$0xff]
      %v2812 = vld [vmem:[#allocation2 + $0xd8] sm:$0xff]
      %v2813 = vld [vmem:[#allocation2 + $0xe0] sm:$0xff]
      %v2814 = vld [vmem:[#allocation2 + $0xe8] sm:$0xff]
      %v2815 = vld [vmem:[#allocation2 + $0xf0] sm:$0xff]
      %v2816 = vld [vmem:[#allocation2 + $0xf8] sm:$0xff]
      %v2817 = vld [vmem:[#allocation2 + $0x100] sm:$0xff]
      %v2818 = vld [vmem:[#allocation2 + $0x108] sm:$0xff]
      %v2819 = vld [vmem:[#allocation2 + $0x110] sm:$0xff]
      %v2820 = vld [vmem:[#allocation2 + $0x118] sm:$0xff]
      %v2821 = vld [vmem:[#allocation2 + $0x120] sm:$0xff]
      %v2822 = vld [vmem:[#allocation2 + $0x128] sm:$0xff]
      %v2823 = vld [vmem:[#allocation2 + $0x130] sm:$0xff]
      %v2824 = vld [vmem:[#allocation2 + $0x138] sm:$0xff]
      %v2825 = vld [vmem:[#allocation2 + $0x140] sm:$0xff]
      %v2826 = vld [vmem:[#allocation2 + $0x148] sm:$0xff]
      %v2827 = vld [vmem:[#allocation2 + $0x150] sm:$0xff]
      %v2828 = vld [vmem:[#allocation2 + $0x158] sm:$0xff]
      %v2829 = vld [vmem:[#allocation2 + $0x160] sm:$0xff]
      %v2830 = vld [vmem:[#allocation2 + $0x168] sm:$0xff]
      %v2831 = vld [vmem:[#allocation2 + $0x170] sm:$0xff]
      %v2832 = vld [vmem:[#allocation2 + $0x178] sm:$0xff]
      %v2833 = vld [vmem:[#allocation2 + $0x180] sm:$0xff]
      %v2834 = vld [vmem:[#allocation2 + $0x188] sm:$0xff]
      %v2835 = vld [vmem:[#allocation2 + $0x190] sm:$0xff]
      %v2836 = vld [vmem:[#allocation2 + $0x198] sm:$0xff]
      %v2837 = vld [vmem:[#allocation2 + $0x1a0] sm:$0xff]
      %v2838 = vld [vmem:[#allocation2 + $0x1a8] sm:$0xff]
      %v2839 = vld [vmem:[#allocation2 + $0x1b0] sm:$0xff]
      %v2840 = vld [vmem:[#allocation2 + $0x1b8] sm:$0xff]
      %v2841 = vld [vmem:[#allocation2 + $0x1c0] sm:$0xff]
      %v2842 = vld [vmem:[#allocation2 + $0x1c8] sm:$0xff]
      %v2843 = vld [vmem:[#allocation2 + $0x1d0] sm:$0xff]
      %v2844 = vld [vmem:[#allocation2 + $0x1d8] sm:$0xff]
      %v2845 = vld [vmem:[#allocation2 + $0x1e0] sm:$0xff]
      %v2846 = vld [vmem:[#allocation2 + $0x1e8] sm:$0xff]
      %v2847 = vld [vmem:[#allocation2 + $0x1f0] sm:$0xff]
      %v2848 = vld [vmem:[#allocation2 + $0x1f8] sm:$0xff]
      %v2849 = vld [vmem:[#allocation5] sm:$0xff]
      %v2850 = vld [vmem:[#allocation5 + $0x8] sm:$0xff]
      %v2851 = vld [vmem:[#allocation5 + $0x10] sm:$0xff]
      %v2852 = vld [vmem:[#allocation5 + $0x18] sm:$0xff]
      %v2853 = vld [vmem:[#allocation5 + $0x20] sm:$0xff]
      %v2854 = vld [vmem:[#allocation5 + $0x28] sm:$0xff]
      %v2855 = vld [vmem:[#allocation5 + $0x30] sm:$0xff]
      %v2856 = vld [vmem:[#allocation5 + $0x38] sm:$0xff]
      %v2857 = vld [vmem:[#allocation5 + $0x40] sm:$0xff]
      %v2858 = vld [vmem:[#allocation5 + $0x48] sm:$0xff]
      %v2859 = vld [vmem:[#allocation5 + $0x50] sm:$0xff]
      %v2860 = vld [vmem:[#allocation5 + $0x58] sm:$0xff]
      %v2861 = vld [vmem:[#allocation5 + $0x60] sm:$0xff]
      %v2862 = vld [vmem:[#allocation5 + $0x68] sm:$0xff]
      %v2863 = vld [vmem:[#allocation5 + $0x70] sm:$0xff]
      %v2864 = vld [vmem:[#allocation5 + $0x78] sm:$0xff]
      %v2865 = vld [vmem:[#allocation5 + $0x80] sm:$0xff]
      %v2866 = vld [vmem:[#allocation5 + $0x88] sm:$0xff]
      %v2867 = vld [vmem:[#allocation5 + $0x90] sm:$0xff]
      %v2868 = vld [vmem:[#allocation5 + $0x98] sm:$0xff]
      %v2869 = vld [vmem:[#allocation5 + $0xa0] sm:$0xff]
      %v2870 = vld [vmem:[#allocation5 + $0xa8] sm:$0xff]
      %v2871 = vld [vmem:[#allocation5 + $0xb0] sm:$0xff]
      %v2872 = vld [vmem:[#allocation5 + $0xb8] sm:$0xff]
      %v2873 = vld [vmem:[#allocation5 + $0xc0] sm:$0xff]
      %v2874 = vld [vmem:[#allocation5 + $0xc8] sm:$0xff]
      %v2875 = vld [vmem:[#allocation5 + $0xd0] sm:$0xff]
      %v2876 = vld [vmem:[#allocation5 + $0xd8] sm:$0xff]
      %v2877 = vld [vmem:[#allocation5 + $0xe0] sm:$0xff]
      %v2878 = vld [vmem:[#allocation5 + $0xe8] sm:$0xff]
      %v2879 = vld [vmem:[#allocation5 + $0xf0] sm:$0xff]
      %v2880 = vld [vmem:[#allocation5 + $0xf8] sm:$0xff]
      %v2881 = vld [vmem:[#allocation5 + $0x100] sm:$0xff]
      %v2882 = vld [vmem:[#allocation5 + $0x108] sm:$0xff]
      %v2883 = vld [vmem:[#allocation5 + $0x110] sm:$0xff]
      %v2884 = vld [vmem:[#allocation5 + $0x118] sm:$0xff]
      %v2885 = vld [vmem:[#allocation5 + $0x120] sm:$0xff]
      %v2886 = vld [vmem:[#allocation5 + $0x128] sm:$0xff]
      %v2887 = vld [vmem:[#allocation5 + $0x130] sm:$0xff]
      %v2888 = vld [vmem:[#allocation5 + $0x138] sm:$0xff]
      %v2889 = vld [vmem:[#allocation5 + $0x140] sm:$0xff]
      %v2890 = vld [vmem:[#allocation5 + $0x148] sm:$0xff]
      %v2891 = vld [vmem:[#allocation5 + $0x150] sm:$0xff]
      %v2892 = vld [vmem:[#allocation5 + $0x158] sm:$0xff]
      %v2893 = vld [vmem:[#allocation5 + $0x160] sm:$0xff]
      %v2894 = vld [vmem:[#allocation5 + $0x168] sm:$0xff]
      %v2895 = vld [vmem:[#allocation5 + $0x170] sm:$0xff]
      %v2896 = vld [vmem:[#allocation5 + $0x178] sm:$0xff]
      %v2897 = vld [vmem:[#allocation5 + $0x180] sm:$0xff]
      %v2898 = vld [vmem:[#allocation5 + $0x188] sm:$0xff]
      %v2899 = vld [vmem:[#allocation5 + $0x190] sm:$0xff]
      %v2900 = vld [vmem:[#allocation5 + $0x198] sm:$0xff]
      %v2901 = vld [vmem:[#allocation5 + $0x1a0] sm:$0xff]
      %v2902 = vld [vmem:[#allocation5 + $0x1a8] sm:$0xff]
      %v2903 = vld [vmem:[#allocation5 + $0x1b0] sm:$0xff]
      %v2904 = vld [vmem:[#allocation5 + $0x1b8] sm:$0xff]
      %v2905 = vld [vmem:[#allocation5 + $0x1c0] sm:$0xff]
      %v2906 = vld [vmem:[#allocation5 + $0x1c8] sm:$0xff]
      %v2907 = vld [vmem:[#allocation5 + $0x1d0] sm:$0xff]
      %v2908 = vld [vmem:[#allocation5 + $0x1d8] sm:$0xff]
      %v2909 = vld [vmem:[#allocation5 + $0x1e0] sm:$0xff]
      %v2910 = vld [vmem:[#allocation5 + $0x1e8] sm:$0xff]
      %v2911 = vld [vmem:[#allocation5 + $0x1f0] sm:$0xff]
      %v2912 = vld [vmem:[#allocation5 + $0x1f8] sm:$0xff]
      %v2913 = vsub.f32 %v2785, %v2849
      %v2914 = vsub.f32 %v2786, %v2850
      %v2915 = vsub.f32 %v2787, %v2851
      %v2916 = vsub.f32 %v2788, %v2852
      %v2917 = vsub.f32 %v2789, %v2853
      %v2918 = vsub.f32 %v2790, %v2854
      %v2919 = vsub.f32 %v2791, %v2855
      %v2920 = vsub.f32 %v2792, %v2856
      %v2921 = vsub.f32 %v2793, %v2857
      %v2922 = vsub.f32 %v2794, %v2858
      %v2923 = vsub.f32 %v2795, %v2859
      %v2924 = vsub.f32 %v2796, %v2860
      %v2925 = vsub.f32 %v2797, %v2861
      %v2926 = vsub.f32 %v2798, %v2862
      %v2927 = vsub.f32 %v2799, %v2863
      %v2928 = vsub.f32 %v2800, %v2864
      %v2929 = vsub.f32 %v2801, %v2865
      %v2930 = vsub.f32 %v2802, %v2866
      %v2931 = vsub.f32 %v2803, %v2867
      %v2932 = vsub.f32 %v2804, %v2868
      %v2933 = vsub.f32 %v2805, %v2869
      %v2934 = vsub.f32 %v2806, %v2870
      %v2935 = vsub.f32 %v2807, %v2871
      %v2936 = vsub.f32 %v2808, %v2872
      %v2937 = vsub.f32 %v2809, %v2873
      %v2938 = vsub.f32 %v2810, %v2874
      %v2939 = vsub.f32 %v2811, %v2875
      %v2940 = vsub.f32 %v2812, %v2876
      %v2941 = vsub.f32 %v2813, %v2877
      %v2942 = vsub.f32 %v2814, %v2878
      %v2943 = vsub.f32 %v2815, %v2879
      %v2944 = vsub.f32 %v2816, %v2880
      %v2945 = vsub.f32 %v2817, %v2881
      %v2946 = vsub.f32 %v2818, %v2882
      %v2947 = vsub.f32 %v2819, %v2883
      %v2948 = vsub.f32 %v2820, %v2884
      %v2949 = vsub.f32 %v2821, %v2885
      %v2950 = vsub.f32 %v2822, %v2886
      %v2951 = vsub.f32 %v2823, %v2887
      %v2952 = vsub.f32 %v2824, %v2888
      %v2953 = vsub.f32 %v2825, %v2889
      %v2954 = vsub.f32 %v2826, %v2890
      %v2955 = vsub.f32 %v2827, %v2891
      %v2956 = vsub.f32 %v2828, %v2892
      %v2957 = vsub.f32 %v2829, %v2893
      %v2958 = vsub.f32 %v2830, %v2894
      %v2959 = vsub.f32 %v2831, %v2895
      %v2960 = vsub.f32 %v2832, %v2896
      %v2961 = vsub.f32 %v2833, %v2897
      %v2962 = vsub.f32 %v2834, %v2898
      %v2963 = vsub.f32 %v2835, %v2899
      %v2964 = vsub.f32 %v2836, %v2900
      %v2965 = vsub.f32 %v2837, %v2901
      %v2966 = vsub.f32 %v2838, %v2902
      %v2967 = vsub.f32 %v2839, %v2903
      %v2968 = vsub.f32 %v2840, %v2904
      %v2969 = vsub.f32 %v2841, %v2905
      %v2970 = vsub.f32 %v2842, %v2906
      %v2971 = vsub.f32 %v2843, %v2907
      %v2972 = vsub.f32 %v2844, %v2908
      %v2973 = vsub.f32 %v2845, %v2909
      %v2974 = vsub.f32 %v2846, %v2910
      %v2975 = vsub.f32 %v2847, %v2911
      %v2976 = vsub.f32 %v2848, %v2912
      %v2977 = vmul.f32 %v2913, %v2913
      %v2978 = vmul.f32 %v2914, %v2914
      %v2979 = vmul.f32 %v2915, %v2915
      %v2980 = vmul.f32 %v2916, %v2916
      %v2981 = vmul.f32 %v2917, %v2917
      %v2982 = vmul.f32 %v2918, %v2918
      %v2983 = vmul.f32 %v2919, %v2919
      %v2984 = vmul.f32 %v2920, %v2920
      %v2985 = vmul.f32 %v2921, %v2921
      %v2986 = vmul.f32 %v2922, %v2922
      %v2987 = vmul.f32 %v2923, %v2923
      %v2988 = vmul.f32 %v2924, %v2924
      %v2989 = vmul.f32 %v2925, %v2925
      %v2990 = vmul.f32 %v2926, %v2926
      %v2991 = vmul.f32 %v2927, %v2927
      %v2992 = vmul.f32 %v2928, %v2928
      %v2993 = vmul.f32 %v2929, %v2929
      %v2994 = vmul.f32 %v2930, %v2930
      %v2995 = vmul.f32 %v2931, %v2931
      %v2996 = vmul.f32 %v2932, %v2932
      %v2997 = vmul.f32 %v2933, %v2933
      %v2998 = vmul.f32 %v2934, %v2934
      %v2999 = vmul.f32 %v2935, %v2935
      %v3000 = vmul.f32 %v2936, %v2936
      %v3001 = vmul.f32 %v2937, %v2937
      %v3002 = vmul.f32 %v2938, %v2938
      %v3003 = vmul.f32 %v2939, %v2939
      %v3004 = vmul.f32 %v2940, %v2940
      %v3005 = vmul.f32 %v2941, %v2941
      %v3006 = vmul.f32 %v2942, %v2942
      %v3007 = vmul.f32 %v2943, %v2943
      %v3008 = vmul.f32 %v2944, %v2944
      %v3009 = vmul.f32 %v2945, %v2945
      %v3010 = vmul.f32 %v2946, %v2946
      %v3011 = vmul.f32 %v2947, %v2947
      %v3012 = vmul.f32 %v2948, %v2948
      %v3013 = vmul.f32 %v2949, %v2949
      %v3014 = vmul.f32 %v2950, %v2950
      %v3015 = vmul.f32 %v2951, %v2951
      %v3016 = vmul.f32 %v2952, %v2952
      %v3017 = vmul.f32 %v2953, %v2953
      %v3018 = vmul.f32 %v2954, %v2954
      %v3019 = vmul.f32 %v2955, %v2955
      %v3020 = vmul.f32 %v2956, %v2956
      %v3021 = vmul.f32 %v2957, %v2957
      %v3022 = vmul.f32 %v2958, %v2958
      %v3023 = vmul.f32 %v2959, %v2959
      %v3024 = vmul.f32 %v2960, %v2960
      %v3025 = vmul.f32 %v2961, %v2961
      %v3026 = vmul.f32 %v2962, %v2962
      %v3027 = vmul.f32 %v2963, %v2963
      %v3028 = vmul.f32 %v2964, %v2964
      %v3029 = vmul.f32 %v2965, %v2965
      %v3030 = vmul.f32 %v2966, %v2966
      %v3031 = vmul.f32 %v2967, %v2967
      %v3032 = vmul.f32 %v2968, %v2968
      %v3033 = vmul.f32 %v2969, %v2969
      %v3034 = vmul.f32 %v2970, %v2970
      %v3035 = vmul.f32 %v2971, %v2971
      %v3036 = vmul.f32 %v2972, %v2972
      %v3037 = vmul.f32 %v2973, %v2973
      %v3038 = vmul.f32 %v2974, %v2974
      %v3039 = vmul.f32 %v2975, %v2975
      %v3040 = vmul.f32 %v2976, %v2976
      %s3041 = sadd.s32 %s73, 0
      %v3042 = vlaneseq
      %v3043 = vshrl.u32 %v3042, 7
      %v3044 = vadd.s32 %v3043, 8
      %v3045 = vadd.s32 %v3043, 16
      %v3046 = vadd.s32 %v3043, 24
      %v3047 = vadd.s32 %v3043, 32
      %v3048 = vadd.s32 %v3043, 40
      %v3049 = vadd.s32 %v3043, 48
      %v3050 = vadd.s32 %v3043, 56
      %v3051 = vadd.s32 %v3043, 64
      %v3052 = vadd.s32 %v3043, 72
      %v3053 = vadd.s32 %v3043, 80
      %v3054 = vadd.s32 %v3043, 88
      %v3055 = vadd.s32 %v3043, 96
      %v3056 = vadd.s32 %v3043, 104
      %v3057 = vadd.s32 %v3043, 112
      %v3058 = vadd.s32 %v3043, 120
      %v3059 = vadd.s32 %v3043, 128
      %v3060 = vadd.s32 %v3043, 136
      %v3061 = vadd.s32 %v3043, 144
      %v3062 = vadd.s32 %v3043, 152
      %v3063 = vadd.s32 %v3043, 160
      %v3064 = vadd.s32 %v3043, 168
      %v3065 = vadd.s32 %v3043, 176
      %v3066 = vadd.s32 %v3043, 184
      %v3067 = vadd.s32 %v3043, 192
      %v3068 = vadd.s32 %v3043, 200
      %v3069 = vadd.s32 %v3043, 208
      %v3070 = vadd.s32 %v3043, 216
      %v3071 = vadd.s32 %v3043, 224
      %v3072 = vadd.s32 %v3043, 232
      %v3073 = vadd.s32 %v3043, 240
      %v3074 = vadd.s32 %v3043, 248
      %v3075 = vadd.s32 %v3043, 256
      %v3076 = vadd.s32 %v3043, 264
      %v3077 = vadd.s32 %v3043, 272
      %v3078 = vadd.s32 %v3043, 280
      %v3079 = vadd.s32 %v3043, 288
      %v3080 = vadd.s32 %v3043, 296
      %v3081 = vadd.s32 %v3043, 304
      %v3082 = vadd.s32 %v3043, 312
      %v3083 = vadd.s32 %v3043, 320
      %v3084 = vadd.s32 %v3043, 328
      %v3085 = vadd.s32 %v3043, 336
      %v3086 = vadd.s32 %v3043, 344
      %v3087 = vadd.s32 %v3043, 352
      %v3088 = vadd.s32 %v3043, 360
      %v3089 = vadd.s32 %v3043, 368
      %v3090 = vadd.s32 %v3043, 376
      %v3091 = vadd.s32 %v3043, 384
      %v3092 = vadd.s32 %v3043, 392
      %v3093 = vadd.s32 %v3043, 400
      %v3094 = vadd.s32 %v3043, 408
      %v3095 = vadd.s32 %v3043, 416
      %v3096 = vadd.s32 %v3043, 424
      %v3097 = vadd.s32 %v3043, 432
      %v3098 = vadd.s32 %v3043, 440
      %v3099 = vadd.s32 %v3043, 448
      %v3100 = vadd.s32 %v3043, 456
      %v3101 = vadd.s32 %v3043, 464
      %v3102 = vadd.s32 %v3043, 472
      %v3103 = vadd.s32 %v3043, 480
      %v3104 = vadd.s32 %v3043, 488
      %v3105 = vadd.s32 %v3043, 496
      %v3106 = vadd.s32 %v3043, 504
      %v3107 = vstv %s3041
      %v3108 = vadd.s32 %v3107, %v3043
      %v3109 = vadd.s32 %v3107, %v3044
      %v3110 = vadd.s32 %v3107, %v3045
      %v3111 = vadd.s32 %v3107, %v3046
      %v3112 = vadd.s32 %v3107, %v3047
      %v3113 = vadd.s32 %v3107, %v3048
      %v3114 = vadd.s32 %v3107, %v3049
      %v3115 = vadd.s32 %v3107, %v3050
      %v3116 = vadd.s32 %v3107, %v3051
      %v3117 = vadd.s32 %v3107, %v3052
      %v3118 = vadd.s32 %v3107, %v3053
      %v3119 = vadd.s32 %v3107, %v3054
      %v3120 = vadd.s32 %v3107, %v3055
      %v3121 = vadd.s32 %v3107, %v3056
      %v3122 = vadd.s32 %v3107, %v3057
      %v3123 = vadd.s32 %v3107, %v3058
      %v3124 = vadd.s32 %v3107, %v3059
      %v3125 = vadd.s32 %v3107, %v3060
      %v3126 = vadd.s32 %v3107, %v3061
      %v3127 = vadd.s32 %v3107, %v3062
      %v3128 = vadd.s32 %v3107, %v3063
      %v3129 = vadd.s32 %v3107, %v3064
      %v3130 = vadd.s32 %v3107, %v3065
      %v3131 = vadd.s32 %v3107, %v3066
      %v3132 = vadd.s32 %v3107, %v3067
      %v3133 = vadd.s32 %v3107, %v3068
      %v3134 = vadd.s32 %v3107, %v3069
      %v3135 = vadd.s32 %v3107, %v3070
      %v3136 = vadd.s32 %v3107, %v3071
      %v3137 = vadd.s32 %v3107, %v3072
      %v3138 = vadd.s32 %v3107, %v3073
      %v3139 = vadd.s32 %v3107, %v3074
      %v3140 = vadd.s32 %v3107, %v3075
      %v3141 = vadd.s32 %v3107, %v3076
      %v3142 = vadd.s32 %v3107, %v3077
      %v3143 = vadd.s32 %v3107, %v3078
      %v3144 = vadd.s32 %v3107, %v3079
      %v3145 = vadd.s32 %v3107, %v3080
      %v3146 = vadd.s32 %v3107, %v3081
      %v3147 = vadd.s32 %v3107, %v3082
      %v3148 = vadd.s32 %v3107, %v3083
      %v3149 = vadd.s32 %v3107, %v3084
      %v3150 = vadd.s32 %v3107, %v3085
      %v3151 = vadd.s32 %v3107, %v3086
      %v3152 = vadd.s32 %v3107, %v3087
      %v3153 = vadd.s32 %v3107, %v3088
      %v3154 = vadd.s32 %v3107, %v3089
      %v3155 = vadd.s32 %v3107, %v3090
      %v3156 = vadd.s32 %v3107, %v3091
      %v3157 = vadd.s32 %v3107, %v3092
      %v3158 = vadd.s32 %v3107, %v3093
      %v3159 = vadd.s32 %v3107, %v3094
      %v3160 = vadd.s32 %v3107, %v3095
      %v3161 = vadd.s32 %v3107, %v3096
      %v3162 = vadd.s32 %v3107, %v3097
      %v3163 = vadd.s32 %v3107, %v3098
      %v3164 = vadd.s32 %v3107, %v3099
      %v3165 = vadd.s32 %v3107, %v3100
      %v3166 = vadd.s32 %v3107, %v3101
      %v3167 = vadd.s32 %v3107, %v3102
      %v3168 = vadd.s32 %v3107, %v3103
      %v3169 = vadd.s32 %v3107, %v3104
      %v3170 = vadd.s32 %v3107, %v3105
      %v3171 = vadd.s32 %v3107, %v3106
      %vm3172 = vcmp.lt.s32.totalorder %v3108, 4096
      %vm3173 = vcmp.lt.s32.totalorder %v3109, 4096
      %vm3174 = vcmp.lt.s32.totalorder %v3110, 4096
      %vm3175 = vcmp.lt.s32.totalorder %v3111, 4096
      %vm3176 = vcmp.lt.s32.totalorder %v3112, 4096
      %vm3177 = vcmp.lt.s32.totalorder %v3113, 4096
      %vm3178 = vcmp.lt.s32.totalorder %v3114, 4096
      %vm3179 = vcmp.lt.s32.totalorder %v3115, 4096
      %vm3180 = vcmp.lt.s32.totalorder %v3116, 4096
      %vm3181 = vcmp.lt.s32.totalorder %v3117, 4096
      %vm3182 = vcmp.lt.s32.totalorder %v3118, 4096
      %vm3183 = vcmp.lt.s32.totalorder %v3119, 4096
      %vm3184 = vcmp.lt.s32.totalorder %v3120, 4096
      %vm3185 = vcmp.lt.s32.totalorder %v3121, 4096
      %vm3186 = vcmp.lt.s32.totalorder %v3122, 4096
      %vm3187 = vcmp.lt.s32.totalorder %v3123, 4096
      %vm3188 = vcmp.lt.s32.totalorder %v3124, 4096
      %vm3189 = vcmp.lt.s32.totalorder %v3125, 4096
      %vm3190 = vcmp.lt.s32.totalorder %v3126, 4096
      %vm3191 = vcmp.lt.s32.totalorder %v3127, 4096
      %vm3192 = vcmp.lt.s32.totalorder %v3128, 4096
      %vm3193 = vcmp.lt.s32.totalorder %v3129, 4096
      %vm3194 = vcmp.lt.s32.totalorder %v3130, 4096
      %vm3195 = vcmp.lt.s32.totalorder %v3131, 4096
      %vm3196 = vcmp.lt.s32.totalorder %v3132, 4096
      %vm3197 = vcmp.lt.s32.totalorder %v3133, 4096
      %vm3198 = vcmp.lt.s32.totalorder %v3134, 4096
      %vm3199 = vcmp.lt.s32.totalorder %v3135, 4096
      %vm3200 = vcmp.lt.s32.totalorder %v3136, 4096
      %vm3201 = vcmp.lt.s32.totalorder %v3137, 4096
      %vm3202 = vcmp.lt.s32.totalorder %v3138, 4096
      %vm3203 = vcmp.lt.s32.totalorder %v3139, 4096
      %vm3204 = vcmp.lt.s32.totalorder %v3140, 4096
      %vm3205 = vcmp.lt.s32.totalorder %v3141, 4096
      %vm3206 = vcmp.lt.s32.totalorder %v3142, 4096
      %vm3207 = vcmp.lt.s32.totalorder %v3143, 4096
      %vm3208 = vcmp.lt.s32.totalorder %v3144, 4096
      %vm3209 = vcmp.lt.s32.totalorder %v3145, 4096
      %vm3210 = vcmp.lt.s32.totalorder %v3146, 4096
      %vm3211 = vcmp.lt.s32.totalorder %v3147, 4096
      %vm3212 = vcmp.lt.s32.totalorder %v3148, 4096
      %vm3213 = vcmp.lt.s32.totalorder %v3149, 4096
      %vm3214 = vcmp.lt.s32.totalorder %v3150, 4096
      %vm3215 = vcmp.lt.s32.totalorder %v3151, 4096
      %vm3216 = vcmp.lt.s32.totalorder %v3152, 4096
      %vm3217 = vcmp.lt.s32.totalorder %v3153, 4096
      %vm3218 = vcmp.lt.s32.totalorder %v3154, 4096
      %vm3219 = vcmp.lt.s32.totalorder %v3155, 4096
      %vm3220 = vcmp.lt.s32.totalorder %v3156, 4096
      %vm3221 = vcmp.lt.s32.totalorder %v3157, 4096
      %vm3222 = vcmp.lt.s32.totalorder %v3158, 4096
      %vm3223 = vcmp.lt.s32.totalorder %v3159, 4096
      %vm3224 = vcmp.lt.s32.totalorder %v3160, 4096
      %vm3225 = vcmp.lt.s32.totalorder %v3161, 4096
      %vm3226 = vcmp.lt.s32.totalorder %v3162, 4096
      %vm3227 = vcmp.lt.s32.totalorder %v3163, 4096
      %vm3228 = vcmp.lt.s32.totalorder %v3164, 4096
      %vm3229 = vcmp.lt.s32.totalorder %v3165, 4096
      %vm3230 = vcmp.lt.s32.totalorder %v3166, 4096
      %vm3231 = vcmp.lt.s32.totalorder %v3167, 4096
      %vm3232 = vcmp.lt.s32.totalorder %v3168, 4096
      %vm3233 = vcmp.lt.s32.totalorder %v3169, 4096
      %vm3234 = vcmp.lt.s32.totalorder %v3170, 4096
      %vm3235 = vcmp.lt.s32.totalorder %v3171, 4096
      %v3236 = vsel %vm3172, %v2977, 0.0
      %v3237 = vsel %vm3173, %v2978, 0.0
      %v3238 = vsel %vm3174, %v2979, 0.0
      %v3239 = vsel %vm3175, %v2980, 0.0
      %v3240 = vsel %vm3176, %v2981, 0.0
      %v3241 = vsel %vm3177, %v2982, 0.0
      %v3242 = vsel %vm3178, %v2983, 0.0
      %v3243 = vsel %vm3179, %v2984, 0.0
      %v3244 = vsel %vm3180, %v2985, 0.0
      %v3245 = vsel %vm3181, %v2986, 0.0
      %v3246 = vsel %vm3182, %v2987, 0.0
      %v3247 = vsel %vm3183, %v2988, 0.0
      %v3248 = vsel %vm3184, %v2989, 0.0
      %v3249 = vsel %vm3185, %v2990, 0.0
      %v3250 = vsel %vm3186, %v2991, 0.0
      %v3251 = vsel %vm3187, %v2992, 0.0
      %v3252 = vsel %vm3188, %v2993, 0.0
      %v3253 = vsel %vm3189, %v2994, 0.0
      %v3254 = vsel %vm3190, %v2995, 0.0
      %v3255 = vsel %vm3191, %v2996, 0.0
      %v3256 = vsel %vm3192, %v2997, 0.0
      %v3257 = vsel %vm3193, %v2998, 0.0
      %v3258 = vsel %vm3194, %v2999, 0.0
      %v3259 = vsel %vm3195, %v3000, 0.0
      %v3260 = vsel %vm3196, %v3001, 0.0
      %v3261 = vsel %vm3197, %v3002, 0.0
      %v3262 = vsel %vm3198, %v3003, 0.0
      %v3263 = vsel %vm3199, %v3004, 0.0
      %v3264 = vsel %vm3200, %v3005, 0.0
      %v3265 = vsel %vm3201, %v3006, 0.0
      %v3266 = vsel %vm3202, %v3007, 0.0
      %v3267 = vsel %vm3203, %v3008, 0.0
      %v3268 = vsel %vm3204, %v3009, 0.0
      %v3269 = vsel %vm3205, %v3010, 0.0
      %v3270 = vsel %vm3206, %v3011, 0.0
      %v3271 = vsel %vm3207, %v3012, 0.0
      %v3272 = vsel %vm3208, %v3013, 0.0
      %v3273 = vsel %vm3209, %v3014, 0.0
      %v3274 = vsel %vm3210, %v3015, 0.0
      %v3275 = vsel %vm3211, %v3016, 0.0
      %v3276 = vsel %vm3212, %v3017, 0.0
      %v3277 = vsel %vm3213, %v3018, 0.0
      %v3278 = vsel %vm3214, %v3019, 0.0
      %v3279 = vsel %vm3215, %v3020, 0.0
      %v3280 = vsel %vm3216, %v3021, 0.0
      %v3281 = vsel %vm3217, %v3022, 0.0
      %v3282 = vsel %vm3218, %v3023, 0.0
      %v3283 = vsel %vm3219, %v3024, 0.0
      %v3284 = vsel %vm3220, %v3025, 0.0
      %v3285 = vsel %vm3221, %v3026, 0.0
      %v3286 = vsel %vm3222, %v3027, 0.0
      %v3287 = vsel %vm3223, %v3028, 0.0
      %v3288 = vsel %vm3224, %v3029, 0.0
      %v3289 = vsel %vm3225, %v3030, 0.0
      %v3290 = vsel %vm3226, %v3031, 0.0
      %v3291 = vsel %vm3227, %v3032, 0.0
      %v3292 = vsel %vm3228, %v3033, 0.0
      %v3293 = vsel %vm3229, %v3034, 0.0
      %v3294 = vsel %vm3230, %v3035, 0.0
      %v3295 = vsel %vm3231, %v3036, 0.0
      %v3296 = vsel %vm3232, %v3037, 0.0
      %v3297 = vsel %vm3233, %v3038, 0.0
      %v3298 = vsel %vm3234, %v3039, 0.0
      %v3299 = vsel %vm3235, %v3040, 0.0
      %v3300 = vld [vmem:[#allocation7] sm:$0xff]
      %v3301 = vld [vmem:[#allocation7 + $0x8] sm:$0xff]
      %v3302 = vld [vmem:[#allocation7 + $0x10] sm:$0xff]
      %v3303 = vld [vmem:[#allocation7 + $0x18] sm:$0xff]
      %v3304 = vld [vmem:[#allocation7 + $0x20] sm:$0xff]
      %v3305 = vld [vmem:[#allocation7 + $0x28] sm:$0xff]
      %v3306 = vld [vmem:[#allocation7 + $0x30] sm:$0xff]
      %v3307 = vld [vmem:[#allocation7 + $0x38] sm:$0xff]
      %v3308 = vadd.f32 %v3236, %v3244
      %v3309 = vadd.f32 %v3308, %v3252
      %v3310 = vadd.f32 %v3309, %v3260
      %v3311 = vadd.f32 %v3310, %v3268
      %v3312 = vadd.f32 %v3311, %v3276
      %v3313 = vadd.f32 %v3312, %v3284
      %v3314 = vadd.f32 %v3313, %v3292
      %v3315 = vadd.f32 %v3237, %v3245
      %v3316 = vadd.f32 %v3315, %v3253
      %v3317 = vadd.f32 %v3316, %v3261
      %v3318 = vadd.f32 %v3317, %v3269
      %v3319 = vadd.f32 %v3318, %v3277
      %v3320 = vadd.f32 %v3319, %v3285
      %v3321 = vadd.f32 %v3320, %v3293
      %v3322 = vadd.f32 %v3238, %v3246
      %v3323 = vadd.f32 %v3322, %v3254
      %v3324 = vadd.f32 %v3323, %v3262
      %v3325 = vadd.f32 %v3324, %v3270
      %v3326 = vadd.f32 %v3325, %v3278
      %v3327 = vadd.f32 %v3326, %v3286
      %v3328 = vadd.f32 %v3327, %v3294
      %v3329 = vadd.f32 %v3239, %v3247
      %v3330 = vadd.f32 %v3329, %v3255
      %v3331 = vadd.f32 %v3330, %v3263
      %v3332 = vadd.f32 %v3331, %v3271
      %v3333 = vadd.f32 %v3332, %v3279
      %v3334 = vadd.f32 %v3333, %v3287
      %v3335 = vadd.f32 %v3334, %v3295
      %v3336 = vadd.f32 %v3240, %v3248
      %v3337 = vadd.f32 %v3336, %v3256
      %v3338 = vadd.f32 %v3337, %v3264
      %v3339 = vadd.f32 %v3338, %v3272
      %v3340 = vadd.f32 %v3339, %v3280
      %v3341 = vadd.f32 %v3340, %v3288
      %v3342 = vadd.f32 %v3341, %v3296
      %v3343 = vadd.f32 %v3241, %v3249
      %v3344 = vadd.f32 %v3343, %v3257
      %v3345 = vadd.f32 %v3344, %v3265
      %v3346 = vadd.f32 %v3345, %v3273
      %v3347 = vadd.f32 %v3346, %v3281
      %v3348 = vadd.f32 %v3347, %v3289
      %v3349 = vadd.f32 %v3348, %v3297
      %v3350 = vadd.f32 %v3242, %v3250
      %v3351 = vadd.f32 %v3350, %v3258
      %v3352 = vadd.f32 %v3351, %v3266
      %v3353 = vadd.f32 %v3352, %v3274
      %v3354 = vadd.f32 %v3353, %v3282
      %v3355 = vadd.f32 %v3354, %v3290
      %v3356 = vadd.f32 %v3355, %v3298
      %v3357 = vadd.f32 %v3243, %v3251
      %v3358 = vadd.f32 %v3357, %v3259
      %v3359 = vadd.f32 %v3358, %v3267
      %v3360 = vadd.f32 %v3359, %v3275
      %v3361 = vadd.f32 %v3360, %v3283
      %v3362 = vadd.f32 %v3361, %v3291
      %v3363 = vadd.f32 %v3362, %v3299
      %v3364 = vadd.f32 %v3300, %v3314
      %v3365 = vadd.f32 %v3301, %v3321
      %v3366 = vadd.f32 %v3302, %v3328
      %v3367 = vadd.f32 %v3303, %v3335
      %v3368 = vadd.f32 %v3304, %v3342
      %v3369 = vadd.f32 %v3305, %v3349
      %v3370 = vadd.f32 %v3306, %v3356
      %v3371 = vadd.f32 %v3307, %v3363
      %3372 = vst [vmem:[#allocation7] sm:$0xff] %v3364
      %3373 = vst [vmem:[#allocation7 + $0x8] sm:$0xff] %v3365
      %3374 = vst [vmem:[#allocation7 + $0x10] sm:$0xff] %v3366
      %3375 = vst [vmem:[#allocation7 + $0x18] sm:$0xff] %v3367
      %3376 = vst [vmem:[#allocation7 + $0x20] sm:$0xff] %v3368
      %3377 = vst [vmem:[#allocation7 + $0x28] sm:$0xff] %v3369
      %3378 = vst [vmem:[#allocation7 + $0x30] sm:$0xff] %v3370
      %3379 = vst [vmem:[#allocation7 + $0x38] sm:$0xff] %v3371
      %s3380 = scalar_lea.vmem [#allocation2], 512
      %v3381 = vld [vmem:[%s3380] sm:$0xff]
      %v3382 = vld [vmem:[%s3380 + $0x8] sm:$0xff]
      %v3383 = vld [vmem:[%s3380 + $0x10] sm:$0xff]
      %v3384 = vld [vmem:[%s3380 + $0x18] sm:$0xff]
      %v3385 = vld [vmem:[%s3380 + $0x20] sm:$0xff]
      %v3386 = vld [vmem:[%s3380 + $0x28] sm:$0xff]
      %v3387 = vld [vmem:[%s3380 + $0x30] sm:$0xff]
      %v3388 = vld [vmem:[%s3380 + $0x38] sm:$0xff]
      %v3389 = vld [vmem:[%s3380 + $0x40] sm:$0xff]
      %v3390 = vld [vmem:[%s3380 + $0x48] sm:$0xff]
      %v3391 = vld [vmem:[%s3380 + $0x50] sm:$0xff]
      %v3392 = vld [vmem:[%s3380 + $0x58] sm:$0xff]
      %v3393 = vld [vmem:[%s3380 + $0x60] sm:$0xff]
      %v3394 = vld [vmem:[%s3380 + $0x68] sm:$0xff]
      %v3395 = vld [vmem:[%s3380 + $0x70] sm:$0xff]
      %v3396 = vld [vmem:[%s3380 + $0x78] sm:$0xff]
      %v3397 = vld [vmem:[%s3380 + $0x80] sm:$0xff]
      %v3398 = vld [vmem:[%s3380 + $0x88] sm:$0xff]
      %v3399 = vld [vmem:[%s3380 + $0x90] sm:$0xff]
      %v3400 = vld [vmem:[%s3380 + $0x98] sm:$0xff]
      %v3401 = vld [vmem:[%s3380 + $0xa0] sm:$0xff]
      %v3402 = vld [vmem:[%s3380 + $0xa8] sm:$0xff]
      %v3403 = vld [vmem:[%s3380 + $0xb0] sm:$0xff]
      %v3404 = vld [vmem:[%s3380 + $0xb8] sm:$0xff]
      %v3405 = vld [vmem:[%s3380 + $0xc0] sm:$0xff]
      %v3406 = vld [vmem:[%s3380 + $0xc8] sm:$0xff]
      %v3407 = vld [vmem:[%s3380 + $0xd0] sm:$0xff]
      %v3408 = vld [vmem:[%s3380 + $0xd8] sm:$0xff]
      %v3409 = vld [vmem:[%s3380 + $0xe0] sm:$0xff]
      %v3410 = vld [vmem:[%s3380 + $0xe8] sm:$0xff]
      %v3411 = vld [vmem:[%s3380 + $0xf0] sm:$0xff]
      %v3412 = vld [vmem:[%s3380 + $0xf8] sm:$0xff]
      %v3413 = vld [vmem:[%s3380 + $0x100] sm:$0xff]
      %v3414 = vld [vmem:[%s3380 + $0x108] sm:$0xff]
      %v3415 = vld [vmem:[%s3380 + $0x110] sm:$0xff]
      %v3416 = vld [vmem:[%s3380 + $0x118] sm:$0xff]
      %v3417 = vld [vmem:[%s3380 + $0x120] sm:$0xff]
      %v3418 = vld [vmem:[%s3380 + $0x128] sm:$0xff]
      %v3419 = vld [vmem:[%s3380 + $0x130] sm:$0xff]
      %v3420 = vld [vmem:[%s3380 + $0x138] sm:$0xff]
      %v3421 = vld [vmem:[%s3380 + $0x140] sm:$0xff]
      %v3422 = vld [vmem:[%s3380 + $0x148] sm:$0xff]
      %v3423 = vld [vmem:[%s3380 + $0x150] sm:$0xff]
      %v3424 = vld [vmem:[%s3380 + $0x158] sm:$0xff]
      %v3425 = vld [vmem:[%s3380 + $0x160] sm:$0xff]
      %v3426 = vld [vmem:[%s3380 + $0x168] sm:$0xff]
      %v3427 = vld [vmem:[%s3380 + $0x170] sm:$0xff]
      %v3428 = vld [vmem:[%s3380 + $0x178] sm:$0xff]
      %v3429 = vld [vmem:[%s3380 + $0x180] sm:$0xff]
      %v3430 = vld [vmem:[%s3380 + $0x188] sm:$0xff]
      %v3431 = vld [vmem:[%s3380 + $0x190] sm:$0xff]
      %v3432 = vld [vmem:[%s3380 + $0x198] sm:$0xff]
      %v3433 = vld [vmem:[%s3380 + $0x1a0] sm:$0xff]
      %v3434 = vld [vmem:[%s3380 + $0x1a8] sm:$0xff]
      %v3435 = vld [vmem:[%s3380 + $0x1b0] sm:$0xff]
      %v3436 = vld [vmem:[%s3380 + $0x1b8] sm:$0xff]
      %v3437 = vld [vmem:[%s3380 + $0x1c0] sm:$0xff]
      %v3438 = vld [vmem:[%s3380 + $0x1c8] sm:$0xff]
      %v3439 = vld [vmem:[%s3380 + $0x1d0] sm:$0xff]
      %v3440 = vld [vmem:[%s3380 + $0x1d8] sm:$0xff]
      %v3441 = vld [vmem:[%s3380 + $0x1e0] sm:$0xff]
      %v3442 = vld [vmem:[%s3380 + $0x1e8] sm:$0xff]
      %v3443 = vld [vmem:[%s3380 + $0x1f0] sm:$0xff]
      %v3444 = vld [vmem:[%s3380 + $0x1f8] sm:$0xff]
      %s3445 = scalar_lea.vmem [#allocation5], 512
      %v3446 = vld [vmem:[%s3445] sm:$0xff]
      %v3447 = vld [vmem:[%s3445 + $0x8] sm:$0xff]
      %v3448 = vld [vmem:[%s3445 + $0x10] sm:$0xff]
      %v3449 = vld [vmem:[%s3445 + $0x18] sm:$0xff]
      %v3450 = vld [vmem:[%s3445 + $0x20] sm:$0xff]
      %v3451 = vld [vmem:[%s3445 + $0x28] sm:$0xff]
      %v3452 = vld [vmem:[%s3445 + $0x30] sm:$0xff]
      %v3453 = vld [vmem:[%s3445 + $0x38] sm:$0xff]
      %v3454 = vld [vmem:[%s3445 + $0x40] sm:$0xff]
      %v3455 = vld [vmem:[%s3445 + $0x48] sm:$0xff]
      %v3456 = vld [vmem:[%s3445 + $0x50] sm:$0xff]
      %v3457 = vld [vmem:[%s3445 + $0x58] sm:$0xff]
      %v3458 = vld [vmem:[%s3445 + $0x60] sm:$0xff]
      %v3459 = vld [vmem:[%s3445 + $0x68] sm:$0xff]
      %v3460 = vld [vmem:[%s3445 + $0x70] sm:$0xff]
      %v3461 = vld [vmem:[%s3445 + $0x78] sm:$0xff]
      %v3462 = vld [vmem:[%s3445 + $0x80] sm:$0xff]
      %v3463 = vld [vmem:[%s3445 + $0x88] sm:$0xff]
      %v3464 = vld [vmem:[%s3445 + $0x90] sm:$0xff]
      %v3465 = vld [vmem:[%s3445 + $0x98] sm:$0xff]
      %v3466 = vld [vmem:[%s3445 + $0xa0] sm:$0xff]
      %v3467 = vld [vmem:[%s3445 + $0xa8] sm:$0xff]
      %v3468 = vld [vmem:[%s3445 + $0xb0] sm:$0xff]
      %v3469 = vld [vmem:[%s3445 + $0xb8] sm:$0xff]
      %v3470 = vld [vmem:[%s3445 + $0xc0] sm:$0xff]
      %v3471 = vld [vmem:[%s3445 + $0xc8] sm:$0xff]
      %v3472 = vld [vmem:[%s3445 + $0xd0] sm:$0xff]
      %v3473 = vld [vmem:[%s3445 + $0xd8] sm:$0xff]
      %v3474 = vld [vmem:[%s3445 + $0xe0] sm:$0xff]
      %v3475 = vld [vmem:[%s3445 + $0xe8] sm:$0xff]
      %v3476 = vld [vmem:[%s3445 + $0xf0] sm:$0xff]
      %v3477 = vld [vmem:[%s3445 + $0xf8] sm:$0xff]
      %v3478 = vld [vmem:[%s3445 + $0x100] sm:$0xff]
      %v3479 = vld [vmem:[%s3445 + $0x108] sm:$0xff]
      %v3480 = vld [vmem:[%s3445 + $0x110] sm:$0xff]
      %v3481 = vld [vmem:[%s3445 + $0x118] sm:$0xff]
      %v3482 = vld [vmem:[%s3445 + $0x120] sm:$0xff]
      %v3483 = vld [vmem:[%s3445 + $0x128] sm:$0xff]
      %v3484 = vld [vmem:[%s3445 + $0x130] sm:$0xff]
      %v3485 = vld [vmem:[%s3445 + $0x138] sm:$0xff]
      %v3486 = vld [vmem:[%s3445 + $0x140] sm:$0xff]
      %v3487 = vld [vmem:[%s3445 + $0x148] sm:$0xff]
      %v3488 = vld [vmem:[%s3445 + $0x150] sm:$0xff]
      %v3489 = vld [vmem:[%s3445 + $0x158] sm:$0xff]
      %v3490 = vld [vmem:[%s3445 + $0x160] sm:$0xff]
      %v3491 = vld [vmem:[%s3445 + $0x168] sm:$0xff]
      %v3492 = vld [vmem:[%s3445 + $0x170] sm:$0xff]
      %v3493 = vld [vmem:[%s3445 + $0x178] sm:$0xff]
      %v3494 = vld [vmem:[%s3445 + $0x180] sm:$0xff]
      %v3495 = vld [vmem:[%s3445 + $0x188] sm:$0xff]
      %v3496 = vld [vmem:[%s3445 + $0x190] sm:$0xff]
      %v3497 = vld [vmem:[%s3445 + $0x198] sm:$0xff]
      %v3498 = vld [vmem:[%s3445 + $0x1a0] sm:$0xff]
      %v3499 = vld [vmem:[%s3445 + $0x1a8] sm:$0xff]
      %v3500 = vld [vmem:[%s3445 + $0x1b0] sm:$0xff]
      %v3501 = vld [vmem:[%s3445 + $0x1b8] sm:$0xff]
      %v3502 = vld [vmem:[%s3445 + $0x1c0] sm:$0xff]
      %v3503 = vld [vmem:[%s3445 + $0x1c8] sm:$0xff]
      %v3504 = vld [vmem:[%s3445 + $0x1d0] sm:$0xff]
      %v3505 = vld [vmem:[%s3445 + $0x1d8] sm:$0xff]
      %v3506 = vld [vmem:[%s3445 + $0x1e0] sm:$0xff]
      %v3507 = vld [vmem:[%s3445 + $0x1e8] sm:$0xff]
      %v3508 = vld [vmem:[%s3445 + $0x1f0] sm:$0xff]
      %v3509 = vld [vmem:[%s3445 + $0x1f8] sm:$0xff]
      %v3510 = vsub.f32 %v3381, %v3446
      %v3511 = vsub.f32 %v3382, %v3447
      %v3512 = vsub.f32 %v3383, %v3448
      %v3513 = vsub.f32 %v3384, %v3449
      %v3514 = vsub.f32 %v3385, %v3450
      %v3515 = vsub.f32 %v3386, %v3451
      %v3516 = vsub.f32 %v3387, %v3452
      %v3517 = vsub.f32 %v3388, %v3453
      %v3518 = vsub.f32 %v3389, %v3454
      %v3519 = vsub.f32 %v3390, %v3455
      %v3520 = vsub.f32 %v3391, %v3456
      %v3521 = vsub.f32 %v3392, %v3457
      %v3522 = vsub.f32 %v3393, %v3458
      %v3523 = vsub.f32 %v3394, %v3459
      %v3524 = vsub.f32 %v3395, %v3460
      %v3525 = vsub.f32 %v3396, %v3461
      %v3526 = vsub.f32 %v3397, %v3462
      %v3527 = vsub.f32 %v3398, %v3463
      %v3528 = vsub.f32 %v3399, %v3464
      %v3529 = vsub.f32 %v3400, %v3465
      %v3530 = vsub.f32 %v3401, %v3466
      %v3531 = vsub.f32 %v3402, %v3467
      %v3532 = vsub.f32 %v3403, %v3468
      %v3533 = vsub.f32 %v3404, %v3469
      %v3534 = vsub.f32 %v3405, %v3470
      %v3535 = vsub.f32 %v3406, %v3471
      %v3536 = vsub.f32 %v3407, %v3472
      %v3537 = vsub.f32 %v3408, %v3473
      %v3538 = vsub.f32 %v3409, %v3474
      %v3539 = vsub.f32 %v3410, %v3475
      %v3540 = vsub.f32 %v3411, %v3476
      %v3541 = vsub.f32 %v3412, %v3477
      %v3542 = vsub.f32 %v3413, %v3478
      %v3543 = vsub.f32 %v3414, %v3479
      %v3544 = vsub.f32 %v3415, %v3480
      %v3545 = vsub.f32 %v3416, %v3481
      %v3546 = vsub.f32 %v3417, %v3482
      %v3547 = vsub.f32 %v3418, %v3483
      %v3548 = vsub.f32 %v3419, %v3484
      %v3549 = vsub.f32 %v3420, %v3485
      %v3550 = vsub.f32 %v3421, %v3486
      %v3551 = vsub.f32 %v3422, %v3487
      %v3552 = vsub.f32 %v3423, %v3488
      %v3553 = vsub.f32 %v3424, %v3489
      %v3554 = vsub.f32 %v3425, %v3490
      %v3555 = vsub.f32 %v3426, %v3491
      %v3556 = vsub.f32 %v3427, %v3492
      %v3557 = vsub.f32 %v3428, %v3493
      %v3558 = vsub.f32 %v3429, %v3494
      %v3559 = vsub.f32 %v3430, %v3495
      %v3560 = vsub.f32 %v3431, %v3496
      %v3561 = vsub.f32 %v3432, %v3497
      %v3562 = vsub.f32 %v3433, %v3498
      %v3563 = vsub.f32 %v3434, %v3499
      %v3564 = vsub.f32 %v3435, %v3500
      %v3565 = vsub.f32 %v3436, %v3501
      %v3566 = vsub.f32 %v3437, %v3502
      %v3567 = vsub.f32 %v3438, %v3503
      %v3568 = vsub.f32 %v3439, %v3504
      %v3569 = vsub.f32 %v3440, %v3505
      %v3570 = vsub.f32 %v3441, %v3506
      %v3571 = vsub.f32 %v3442, %v3507
      %v3572 = vsub.f32 %v3443, %v3508
      %v3573 = vsub.f32 %v3444, %v3509
      %v3574 = vmul.f32 %v3510, %v3510
      %v3575 = vmul.f32 %v3511, %v3511
      %v3576 = vmul.f32 %v3512, %v3512
      %v3577 = vmul.f32 %v3513, %v3513
      %v3578 = vmul.f32 %v3514, %v3514
      %v3579 = vmul.f32 %v3515, %v3515
      %v3580 = vmul.f32 %v3516, %v3516
      %v3581 = vmul.f32 %v3517, %v3517
      %v3582 = vmul.f32 %v3518, %v3518
      %v3583 = vmul.f32 %v3519, %v3519
      %v3584 = vmul.f32 %v3520, %v3520
      %v3585 = vmul.f32 %v3521, %v3521
      %v3586 = vmul.f32 %v3522, %v3522
      %v3587 = vmul.f32 %v3523, %v3523
      %v3588 = vmul.f32 %v3524, %v3524
      %v3589 = vmul.f32 %v3525, %v3525
      %v3590 = vmul.f32 %v3526, %v3526
      %v3591 = vmul.f32 %v3527, %v3527
      %v3592 = vmul.f32 %v3528, %v3528
      %v3593 = vmul.f32 %v3529, %v3529
      %v3594 = vmul.f32 %v3530, %v3530
      %v3595 = vmul.f32 %v3531, %v3531
      %v3596 = vmul.f32 %v3532, %v3532
      %v3597 = vmul.f32 %v3533, %v3533
      %v3598 = vmul.f32 %v3534, %v3534
      %v3599 = vmul.f32 %v3535, %v3535
      %v3600 = vmul.f32 %v3536, %v3536
      %v3601 = vmul.f32 %v3537, %v3537
      %v3602 = vmul.f32 %v3538, %v3538
      %v3603 = vmul.f32 %v3539, %v3539
      %v3604 = vmul.f32 %v3540, %v3540
      %v3605 = vmul.f32 %v3541, %v3541
      %v3606 = vmul.f32 %v3542, %v3542
      %v3607 = vmul.f32 %v3543, %v3543
      %v3608 = vmul.f32 %v3544, %v3544
      %v3609 = vmul.f32 %v3545, %v3545
      %v3610 = vmul.f32 %v3546, %v3546
      %v3611 = vmul.f32 %v3547, %v3547
      %v3612 = vmul.f32 %v3548, %v3548
      %v3613 = vmul.f32 %v3549, %v3549
      %v3614 = vmul.f32 %v3550, %v3550
      %v3615 = vmul.f32 %v3551, %v3551
      %v3616 = vmul.f32 %v3552, %v3552
      %v3617 = vmul.f32 %v3553, %v3553
      %v3618 = vmul.f32 %v3554, %v3554
      %v3619 = vmul.f32 %v3555, %v3555
      %v3620 = vmul.f32 %v3556, %v3556
      %v3621 = vmul.f32 %v3557, %v3557
      %v3622 = vmul.f32 %v3558, %v3558
      %v3623 = vmul.f32 %v3559, %v3559
      %v3624 = vmul.f32 %v3560, %v3560
      %v3625 = vmul.f32 %v3561, %v3561
      %v3626 = vmul.f32 %v3562, %v3562
      %v3627 = vmul.f32 %v3563, %v3563
      %v3628 = vmul.f32 %v3564, %v3564
      %v3629 = vmul.f32 %v3565, %v3565
      %v3630 = vmul.f32 %v3566, %v3566
      %v3631 = vmul.f32 %v3567, %v3567
      %v3632 = vmul.f32 %v3568, %v3568
      %v3633 = vmul.f32 %v3569, %v3569
      %v3634 = vmul.f32 %v3570, %v3570
      %v3635 = vmul.f32 %v3571, %v3571
      %v3636 = vmul.f32 %v3572, %v3572
      %v3637 = vmul.f32 %v3573, %v3573
      %s3638 = sadd.s32 %s73, 512
      %v3639 = vstv %s3638
      %v3640 = vadd.s32 %v3639, %v3043
      %v3641 = vadd.s32 %v3639, %v3044
      %v3642 = vadd.s32 %v3639, %v3045
      %v3643 = vadd.s32 %v3639, %v3046
      %v3644 = vadd.s32 %v3639, %v3047
      %v3645 = vadd.s32 %v3639, %v3048
      %v3646 = vadd.s32 %v3639, %v3049
      %v3647 = vadd.s32 %v3639, %v3050
      %v3648 = vadd.s32 %v3639, %v3051
      %v3649 = vadd.s32 %v3639, %v3052
      %v3650 = vadd.s32 %v3639, %v3053
      %v3651 = vadd.s32 %v3639, %v3054
      %v3652 = vadd.s32 %v3639, %v3055
      %v3653 = vadd.s32 %v3639, %v3056
      %v3654 = vadd.s32 %v3639, %v3057
      %v3655 = vadd.s32 %v3639, %v3058
      %v3656 = vadd.s32 %v3639, %v3059
      %v3657 = vadd.s32 %v3639, %v3060
      %v3658 = vadd.s32 %v3639, %v3061
      %v3659 = vadd.s32 %v3639, %v3062
      %v3660 = vadd.s32 %v3639, %v3063
      %v3661 = vadd.s32 %v3639, %v3064
      %v3662 = vadd.s32 %v3639, %v3065
      %v3663 = vadd.s32 %v3639, %v3066
      %v3664 = vadd.s32 %v3639, %v3067
      %v3665 = vadd.s32 %v3639, %v3068
      %v3666 = vadd.s32 %v3639, %v3069
      %v3667 = vadd.s32 %v3639, %v3070
      %v3668 = vadd.s32 %v3639, %v3071
      %v3669 = vadd.s32 %v3639, %v3072
      %v3670 = vadd.s32 %v3639, %v3073
      %v3671 = vadd.s32 %v3639, %v3074
      %v3672 = vadd.s32 %v3639, %v3075
      %v3673 = vadd.s32 %v3639, %v3076
      %v3674 = vadd.s32 %v3639, %v3077
      %v3675 = vadd.s32 %v3639, %v3078
      %v3676 = vadd.s32 %v3639, %v3079
      %v3677 = vadd.s32 %v3639, %v3080
      %v3678 = vadd.s32 %v3639, %v3081
      %v3679 = vadd.s32 %v3639, %v3082
      %v3680 = vadd.s32 %v3639, %v3083
      %v3681 = vadd.s32 %v3639, %v3084
      %v3682 = vadd.s32 %v3639, %v3085
      %v3683 = vadd.s32 %v3639, %v3086
      %v3684 = vadd.s32 %v3639, %v3087
      %v3685 = vadd.s32 %v3639, %v3088
      %v3686 = vadd.s32 %v3639, %v3089
      %v3687 = vadd.s32 %v3639, %v3090
      %v3688 = vadd.s32 %v3639, %v3091
      %v3689 = vadd.s32 %v3639, %v3092
      %v3690 = vadd.s32 %v3639, %v3093
      %v3691 = vadd.s32 %v3639, %v3094
      %v3692 = vadd.s32 %v3639, %v3095
      %v3693 = vadd.s32 %v3639, %v3096
      %v3694 = vadd.s32 %v3639, %v3097
      %v3695 = vadd.s32 %v3639, %v3098
      %v3696 = vadd.s32 %v3639, %v3099
      %v3697 = vadd.s32 %v3639, %v3100
      %v3698 = vadd.s32 %v3639, %v3101
      %v3699 = vadd.s32 %v3639, %v3102
      %v3700 = vadd.s32 %v3639, %v3103
      %v3701 = vadd.s32 %v3639, %v3104
      %v3702 = vadd.s32 %v3639, %v3105
      %v3703 = vadd.s32 %v3639, %v3106
      %vm3704 = vcmp.lt.s32.totalorder %v3640, 4096
      %vm3705 = vcmp.lt.s32.totalorder %v3641, 4096
      %vm3706 = vcmp.lt.s32.totalorder %v3642, 4096
      %vm3707 = vcmp.lt.s32.totalorder %v3643, 4096
      %vm3708 = vcmp.lt.s32.totalorder %v3644, 4096
      %vm3709 = vcmp.lt.s32.totalorder %v3645, 4096
      %vm3710 = vcmp.lt.s32.totalorder %v3646, 4096
      %vm3711 = vcmp.lt.s32.totalorder %v3647, 4096
      %vm3712 = vcmp.lt.s32.totalorder %v3648, 4096
      %vm3713 = vcmp.lt.s32.totalorder %v3649, 4096
      %vm3714 = vcmp.lt.s32.totalorder %v3650, 4096
      %vm3715 = vcmp.lt.s32.totalorder %v3651, 4096
      %vm3716 = vcmp.lt.s32.totalorder %v3652, 4096
      %vm3717 = vcmp.lt.s32.totalorder %v3653, 4096
      %vm3718 = vcmp.lt.s32.totalorder %v3654, 4096
      %vm3719 = vcmp.lt.s32.totalorder %v3655, 4096
      %vm3720 = vcmp.lt.s32.totalorder %v3656, 4096
      %vm3721 = vcmp.lt.s32.totalorder %v3657, 4096
      %vm3722 = vcmp.lt.s32.totalorder %v3658, 4096
      %vm3723 = vcmp.lt.s32.totalorder %v3659, 4096
      %vm3724 = vcmp.lt.s32.totalorder %v3660, 4096
      %vm3725 = vcmp.lt.s32.totalorder %v3661, 4096
      %vm3726 = vcmp.lt.s32.totalorder %v3662, 4096
      %vm3727 = vcmp.lt.s32.totalorder %v3663, 4096
      %vm3728 = vcmp.lt.s32.totalorder %v3664, 4096
      %vm3729 = vcmp.lt.s32.totalorder %v3665, 4096
      %vm3730 = vcmp.lt.s32.totalorder %v3666, 4096
      %vm3731 = vcmp.lt.s32.totalorder %v3667, 4096
      %vm3732 = vcmp.lt.s32.totalorder %v3668, 4096
      %vm3733 = vcmp.lt.s32.totalorder %v3669, 4096
      %vm3734 = vcmp.lt.s32.totalorder %v3670, 4096
      %vm3735 = vcmp.lt.s32.totalorder %v3671, 4096
      %vm3736 = vcmp.lt.s32.totalorder %v3672, 4096
      %vm3737 = vcmp.lt.s32.totalorder %v3673, 4096
      %vm3738 = vcmp.lt.s32.totalorder %v3674, 4096
      %vm3739 = vcmp.lt.s32.totalorder %v3675, 4096
      %vm3740 = vcmp.lt.s32.totalorder %v3676, 4096
      %vm3741 = vcmp.lt.s32.totalorder %v3677, 4096
      %vm3742 = vcmp.lt.s32.totalorder %v3678, 4096
      %vm3743 = vcmp.lt.s32.totalorder %v3679, 4096
      %vm3744 = vcmp.lt.s32.totalorder %v3680, 4096
      %vm3745 = vcmp.lt.s32.totalorder %v3681, 4096
      %vm3746 = vcmp.lt.s32.totalorder %v3682, 4096
      %vm3747 = vcmp.lt.s32.totalorder %v3683, 4096
      %vm3748 = vcmp.lt.s32.totalorder %v3684, 4096
      %vm3749 = vcmp.lt.s32.totalorder %v3685, 4096
      %vm3750 = vcmp.lt.s32.totalorder %v3686, 4096
      %vm3751 = vcmp.lt.s32.totalorder %v3687, 4096
      %vm3752 = vcmp.lt.s32.totalorder %v3688, 4096
      %vm3753 = vcmp.lt.s32.totalorder %v3689, 4096
      %vm3754 = vcmp.lt.s32.totalorder %v3690, 4096
      %vm3755 = vcmp.lt.s32.totalorder %v3691, 4096
      %vm3756 = vcmp.lt.s32.totalorder %v3692, 4096
      %vm3757 = vcmp.lt.s32.totalorder %v3693, 4096
      %vm3758 = vcmp.lt.s32.totalorder %v3694, 4096
      %vm3759 = vcmp.lt.s32.totalorder %v3695, 4096
      %vm3760 = vcmp.lt.s32.totalorder %v3696, 4096
      %vm3761 = vcmp.lt.s32.totalorder %v3697, 4096
      %vm3762 = vcmp.lt.s32.totalorder %v3698, 4096
      %vm3763 = vcmp.lt.s32.totalorder %v3699, 4096
      %vm3764 = vcmp.lt.s32.totalorder %v3700, 4096
      %vm3765 = vcmp.lt.s32.totalorder %v3701, 4096
      %vm3766 = vcmp.lt.s32.totalorder %v3702, 4096
      %vm3767 = vcmp.lt.s32.totalorder %v3703, 4096
      %v3768 = vsel %vm3704, %v3574, 0.0
      %v3769 = vsel %vm3705, %v3575, 0.0
      %v3770 = vsel %vm3706, %v3576, 0.0
      %v3771 = vsel %vm3707, %v3577, 0.0
      %v3772 = vsel %vm3708, %v3578, 0.0
      %v3773 = vsel %vm3709, %v3579, 0.0
      %v3774 = vsel %vm3710, %v3580, 0.0
      %v3775 = vsel %vm3711, %v3581, 0.0
      %v3776 = vsel %vm3712, %v3582, 0.0
      %v3777 = vsel %vm3713, %v3583, 0.0
      %v3778 = vsel %vm3714, %v3584, 0.0
      %v3779 = vsel %vm3715, %v3585, 0.0
      %v3780 = vsel %vm3716, %v3586, 0.0
      %v3781 = vsel %vm3717, %v3587, 0.0
      %v3782 = vsel %vm3718, %v3588, 0.0
      %v3783 = vsel %vm3719, %v3589, 0.0
      %v3784 = vsel %vm3720, %v3590, 0.0
      %v3785 = vsel %vm3721, %v3591, 0.0
      %v3786 = vsel %vm3722, %v3592, 0.0
      %v3787 = vsel %vm3723, %v3593, 0.0
      %v3788 = vsel %vm3724, %v3594, 0.0
      %v3789 = vsel %vm3725, %v3595, 0.0
      %v3790 = vsel %vm3726, %v3596, 0.0
      %v3791 = vsel %vm3727, %v3597, 0.0
      %v3792 = vsel %vm3728, %v3598, 0.0
      %v3793 = vsel %vm3729, %v3599, 0.0
      %v3794 = vsel %vm3730, %v3600, 0.0
      %v3795 = vsel %vm3731, %v3601, 0.0
      %v3796 = vsel %vm3732, %v3602, 0.0
      %v3797 = vsel %vm3733, %v3603, 0.0
      %v3798 = vsel %vm3734, %v3604, 0.0
      %v3799 = vsel %vm3735, %v3605, 0.0
      %v3800 = vsel %vm3736, %v3606, 0.0
      %v3801 = vsel %vm3737, %v3607, 0.0
      %v3802 = vsel %vm3738, %v3608, 0.0
      %v3803 = vsel %vm3739, %v3609, 0.0
      %v3804 = vsel %vm3740, %v3610, 0.0
      %v3805 = vsel %vm3741, %v3611, 0.0
      %v3806 = vsel %vm3742, %v3612, 0.0
      %v3807 = vsel %vm3743, %v3613, 0.0
      %v3808 = vsel %vm3744, %v3614, 0.0
      %v3809 = vsel %vm3745, %v3615, 0.0
      %v3810 = vsel %vm3746, %v3616, 0.0
      %v3811 = vsel %vm3747, %v3617, 0.0
      %v3812 = vsel %vm3748, %v3618, 0.0
      %v3813 = vsel %vm3749, %v3619, 0.0
      %v3814 = vsel %vm3750, %v3620, 0.0
      %v3815 = vsel %vm3751, %v3621, 0.0
      %v3816 = vsel %vm3752, %v3622, 0.0
      %v3817 = vsel %vm3753, %v3623, 0.0
      %v3818 = vsel %vm3754, %v3624, 0.0
      %v3819 = vsel %vm3755, %v3625, 0.0
      %v3820 = vsel %vm3756, %v3626, 0.0
      %v3821 = vsel %vm3757, %v3627, 0.0
      %v3822 = vsel %vm3758, %v3628, 0.0
      %v3823 = vsel %vm3759, %v3629, 0.0
      %v3824 = vsel %vm3760, %v3630, 0.0
      %v3825 = vsel %vm3761, %v3631, 0.0
      %v3826 = vsel %vm3762, %v3632, 0.0
      %v3827 = vsel %vm3763, %v3633, 0.0
      %v3828 = vsel %vm3764, %v3634, 0.0
      %v3829 = vsel %vm3765, %v3635, 0.0
      %v3830 = vsel %vm3766, %v3636, 0.0
      %v3831 = vsel %vm3767, %v3637, 0.0
      %v3832 = vld [vmem:[#allocation7] sm:$0xff]
      %v3833 = vld [vmem:[#allocation7 + $0x8] sm:$0xff]
      %v3834 = vld [vmem:[#allocation7 + $0x10] sm:$0xff]
      %v3835 = vld [vmem:[#allocation7 + $0x18] sm:$0xff]
      %v3836 = vld [vmem:[#allocation7 + $0x20] sm:$0xff]
      %v3837 = vld [vmem:[#allocation7 + $0x28] sm:$0xff]
      %v3838 = vld [vmem:[#allocation7 + $0x30] sm:$0xff]
      %v3839 = vld [vmem:[#allocation7 + $0x38] sm:$0xff]
      %v3840 = vadd.f32 %v3768, %v3776
      %v3841 = vadd.f32 %v3840, %v3784
      %v3842 = vadd.f32 %v3841, %v3792
      %v3843 = vadd.f32 %v3842, %v3800
      %v3844 = vadd.f32 %v3843, %v3808
      %v3845 = vadd.f32 %v3844, %v3816
      %v3846 = vadd.f32 %v3845, %v3824
      %v3847 = vadd.f32 %v3769, %v3777
      %v3848 = vadd.f32 %v3847, %v3785
      %v3849 = vadd.f32 %v3848, %v3793
      %v3850 = vadd.f32 %v3849, %v3801
      %v3851 = vadd.f32 %v3850, %v3809
      %v3852 = vadd.f32 %v3851, %v3817
      %v3853 = vadd.f32 %v3852, %v3825
      %v3854 = vadd.f32 %v3770, %v3778
      %v3855 = vadd.f32 %v3854, %v3786
      %v3856 = vadd.f32 %v3855, %v3794
      %v3857 = vadd.f32 %v3856, %v3802
      %v3858 = vadd.f32 %v3857, %v3810
      %v3859 = vadd.f32 %v3858, %v3818
      %v3860 = vadd.f32 %v3859, %v3826
      %v3861 = vadd.f32 %v3771, %v3779
      %v3862 = vadd.f32 %v3861, %v3787
      %v3863 = vadd.f32 %v3862, %v3795
      %v3864 = vadd.f32 %v3863, %v3803
      %v3865 = vadd.f32 %v3864, %v3811
      %v3866 = vadd.f32 %v3865, %v3819
      %v3867 = vadd.f32 %v3866, %v3827
      %v3868 = vadd.f32 %v3772, %v3780
      %v3869 = vadd.f32 %v3868, %v3788
      %v3870 = vadd.f32 %v3869, %v3796
      %v3871 = vadd.f32 %v3870, %v3804
      %v3872 = vadd.f32 %v3871, %v3812
      %v3873 = vadd.f32 %v3872, %v3820
      %v3874 = vadd.f32 %v3873, %v3828
      %v3875 = vadd.f32 %v3773, %v3781
      %v3876 = vadd.f32 %v3875, %v3789
      %v3877 = vadd.f32 %v3876, %v3797
      %v3878 = vadd.f32 %v3877, %v3805
      %v3879 = vadd.f32 %v3878, %v3813
      %v3880 = vadd.f32 %v3879, %v3821
      %v3881 = vadd.f32 %v3880, %v3829
      %v3882 = vadd.f32 %v3774, %v3782
      %v3883 = vadd.f32 %v3882, %v3790
      %v3884 = vadd.f32 %v3883, %v3798
      %v3885 = vadd.f32 %v3884, %v3806
      %v3886 = vadd.f32 %v3885, %v3814
      %v3887 = vadd.f32 %v3886, %v3822
      %v3888 = vadd.f32 %v3887, %v3830
      %v3889 = vadd.f32 %v3775, %v3783
      %v3890 = vadd.f32 %v3889, %v3791
      %v3891 = vadd.f32 %v3890, %v3799
      %v3892 = vadd.f32 %v3891, %v3807
      %v3893 = vadd.f32 %v3892, %v3815
      %v3894 = vadd.f32 %v3893, %v3823
      %v3895 = vadd.f32 %v3894, %v3831
      %v3896 = vadd.f32 %v3832, %v3846
      %v3897 = vadd.f32 %v3833, %v3853
      %v3898 = vadd.f32 %v3834, %v3860
      %v3899 = vadd.f32 %v3835, %v3867
      %v3900 = vadd.f32 %v3836, %v3874
      %v3901 = vadd.f32 %v3837, %v3881
      %v3902 = vadd.f32 %v3838, %v3888
      %v3903 = vadd.f32 %v3839, %v3895
      %3904 = vst [vmem:[#allocation7] sm:$0xff] %v3896
      %3905 = vst [vmem:[#allocation7 + $0x8] sm:$0xff] %v3897
      %3906 = vst [vmem:[#allocation7 + $0x10] sm:$0xff] %v3898
      %3907 = vst [vmem:[#allocation7 + $0x18] sm:$0xff] %v3899
      %3908 = vst [vmem:[#allocation7 + $0x20] sm:$0xff] %v3900
      %3909 = vst [vmem:[#allocation7 + $0x28] sm:$0xff] %v3901
      %3910 = vst [vmem:[#allocation7 + $0x30] sm:$0xff] %v3902
      %3911 = vst [vmem:[#allocation7 + $0x38] sm:$0xff] %v3903
      %s3912 = scalar_lea.vmem [#allocation2], 1024
      %v3913 = vld [vmem:[%s3912] sm:$0xff]
      %v3914 = vld [vmem:[%s3912 + $0x8] sm:$0xff]
      %v3915 = vld [vmem:[%s3912 + $0x10] sm:$0xff]
      %v3916 = vld [vmem:[%s3912 + $0x18] sm:$0xff]
      %v3917 = vld [vmem:[%s3912 + $0x20] sm:$0xff]
      %v3918 = vld [vmem:[%s3912 + $0x28] sm:$0xff]
      %v3919 = vld [vmem:[%s3912 + $0x30] sm:$0xff]
      %v3920 = vld [vmem:[%s3912 + $0x38] sm:$0xff]
      %v3921 = vld [vmem:[%s3912 + $0x40] sm:$0xff]
      %v3922 = vld [vmem:[%s3912 + $0x48] sm:$0xff]
      %v3923 = vld [vmem:[%s3912 + $0x50] sm:$0xff]
      %v3924 = vld [vmem:[%s3912 + $0x58] sm:$0xff]
      %v3925 = vld [vmem:[%s3912 + $0x60] sm:$0xff]
      %v3926 = vld [vmem:[%s3912 + $0x68] sm:$0xff]
      %v3927 = vld [vmem:[%s3912 + $0x70] sm:$0xff]
      %v3928 = vld [vmem:[%s3912 + $0x78] sm:$0xff]
      %v3929 = vld [vmem:[%s3912 + $0x80] sm:$0xff]
      %v3930 = vld [vmem:[%s3912 + $0x88] sm:$0xff]
      %v3931 = vld [vmem:[%s3912 + $0x90] sm:$0xff]
      %v3932 = vld [vmem:[%s3912 + $0x98] sm:$0xff]
      %v3933 = vld [vmem:[%s3912 + $0xa0] sm:$0xff]
      %v3934 = vld [vmem:[%s3912 + $0xa8] sm:$0xff]
      %v3935 = vld [vmem:[%s3912 + $0xb0] sm:$0xff]
      %v3936 = vld [vmem:[%s3912 + $0xb8] sm:$0xff]
      %v3937 = vld [vmem:[%s3912 + $0xc0] sm:$0xff]
      %v3938 = vld [vmem:[%s3912 + $0xc8] sm:$0xff]
      %v3939 = vld [vmem:[%s3912 + $0xd0] sm:$0xff]
      %v3940 = vld [vmem:[%s3912 + $0xd8] sm:$0xff]
      %v3941 = vld [vmem:[%s3912 + $0xe0] sm:$0xff]
      %v3942 = vld [vmem:[%s3912 + $0xe8] sm:$0xff]
      %v3943 = vld [vmem:[%s3912 + $0xf0] sm:$0xff]
      %v3944 = vld [vmem:[%s3912 + $0xf8] sm:$0xff]
      %v3945 = vld [vmem:[%s3912 + $0x100] sm:$0xff]
      %v3946 = vld [vmem:[%s3912 + $0x108] sm:$0xff]
      %v3947 = vld [vmem:[%s3912 + $0x110] sm:$0xff]
      %v3948 = vld [vmem:[%s3912 + $0x118] sm:$0xff]
      %v3949 = vld [vmem:[%s3912 + $0x120] sm:$0xff]
      %v3950 = vld [vmem:[%s3912 + $0x128] sm:$0xff]
      %v3951 = vld [vmem:[%s3912 + $0x130] sm:$0xff]
      %v3952 = vld [vmem:[%s3912 + $0x138] sm:$0xff]
      %v3953 = vld [vmem:[%s3912 + $0x140] sm:$0xff]
      %v3954 = vld [vmem:[%s3912 + $0x148] sm:$0xff]
      %v3955 = vld [vmem:[%s3912 + $0x150] sm:$0xff]
      %v3956 = vld [vmem:[%s3912 + $0x158] sm:$0xff]
      %v3957 = vld [vmem:[%s3912 + $0x160] sm:$0xff]
      %v3958 = vld [vmem:[%s3912 + $0x168] sm:$0xff]
      %v3959 = vld [vmem:[%s3912 + $0x170] sm:$0xff]
      %v3960 = vld [vmem:[%s3912 + $0x178] sm:$0xff]
      %v3961 = vld [vmem:[%s3912 + $0x180] sm:$0xff]
      %v3962 = vld [vmem:[%s3912 + $0x188] sm:$0xff]
      %v3963 = vld [vmem:[%s3912 + $0x190] sm:$0xff]
      %v3964 = vld [vmem:[%s3912 + $0x198] sm:$0xff]
      %v3965 = vld [vmem:[%s3912 + $0x1a0] sm:$0xff]
      %v3966 = vld [vmem:[%s3912 + $0x1a8] sm:$0xff]
      %v3967 = vld [vmem:[%s3912 + $0x1b0] sm:$0xff]
      %v3968 = vld [vmem:[%s3912 + $0x1b8] sm:$0xff]
      %v3969 = vld [vmem:[%s3912 + $0x1c0] sm:$0xff]
      %v3970 = vld [vmem:[%s3912 + $0x1c8] sm:$0xff]
      %v3971 = vld [vmem:[%s3912 + $0x1d0] sm:$0xff]
      %v3972 = vld [vmem:[%s3912 + $0x1d8] sm:$0xff]
      %v3973 = vld [vmem:[%s3912 + $0x1e0] sm:$0xff]
      %v3974 = vld [vmem:[%s3912 + $0x1e8] sm:$0xff]
      %v3975 = vld [vmem:[%s3912 + $0x1f0] sm:$0xff]
      %v3976 = vld [vmem:[%s3912 + $0x1f8] sm:$0xff]
      %s3977 = scalar_lea.vmem [#allocation5], 1024
      %v3978 = vld [vmem:[%s3977] sm:$0xff]
      %v3979 = vld [vmem:[%s3977 + $0x8] sm:$0xff]
      %v3980 = vld [vmem:[%s3977 + $0x10] sm:$0xff]
      %v3981 = vld [vmem:[%s3977 + $0x18] sm:$0xff]
      %v3982 = vld [vmem:[%s3977 + $0x20] sm:$0xff]
      %v3983 = vld [vmem:[%s3977 + $0x28] sm:$0xff]
      %v3984 = vld [vmem:[%s3977 + $0x30] sm:$0xff]
      %v3985 = vld [vmem:[%s3977 + $0x38] sm:$0xff]
      %v3986 = vld [vmem:[%s3977 + $0x40] sm:$0xff]
      %v3987 = vld [vmem:[%s3977 + $0x48] sm:$0xff]
      %v3988 = vld [vmem:[%s3977 + $0x50] sm:$0xff]
      %v3989 = vld [vmem:[%s3977 + $0x58] sm:$0xff]
      %v3990 = vld [vmem:[%s3977 + $0x60] sm:$0xff]
      %v3991 = vld [vmem:[%s3977 + $0x68] sm:$0xff]
      %v3992 = vld [vmem:[%s3977 + $0x70] sm:$0xff]
      %v3993 = vld [vmem:[%s3977 + $0x78] sm:$0xff]
      %v3994 = vld [vmem:[%s3977 + $0x80] sm:$0xff]
      %v3995 = vld [vmem:[%s3977 + $0x88] sm:$0xff]
      %v3996 = vld [vmem:[%s3977 + $0x90] sm:$0xff]
      %v3997 = vld [vmem:[%s3977 + $0x98] sm:$0xff]
      %v3998 = vld [vmem:[%s3977 + $0xa0] sm:$0xff]
      %v3999 = vld [vmem:[%s3977 + $0xa8] sm:$0xff]
      %v4000 = vld [vmem:[%s3977 + $0xb0] sm:$0xff]
      %v4001 = vld [vmem:[%s3977 + $0xb8] sm:$0xff]
      %v4002 = vld [vmem:[%s3977 + $0xc0] sm:$0xff]
      %v4003 = vld [vmem:[%s3977 + $0xc8] sm:$0xff]
      %v4004 = vld [vmem:[%s3977 + $0xd0] sm:$0xff]
      %v4005 = vld [vmem:[%s3977 + $0xd8] sm:$0xff]
      %v4006 = vld [vmem:[%s3977 + $0xe0] sm:$0xff]
      %v4007 = vld [vmem:[%s3977 + $0xe8] sm:$0xff]
      %v4008 = vld [vmem:[%s3977 + $0xf0] sm:$0xff]
      %v4009 = vld [vmem:[%s3977 + $0xf8] sm:$0xff]
      %v4010 = vld [vmem:[%s3977 + $0x100] sm:$0xff]
      %v4011 = vld [vmem:[%s3977 + $0x108] sm:$0xff]
      %v4012 = vld [vmem:[%s3977 + $0x110] sm:$0xff]
      %v4013 = vld [vmem:[%s3977 + $0x118] sm:$0xff]
      %v4014 = vld [vmem:[%s3977 + $0x120] sm:$0xff]
      %v4015 = vld [vmem:[%s3977 + $0x128] sm:$0xff]
      %v4016 = vld [vmem:[%s3977 + $0x130] sm:$0xff]
      %v4017 = vld [vmem:[%s3977 + $0x138] sm:$0xff]
      %v4018 = vld [vmem:[%s3977 + $0x140] sm:$0xff]
      %v4019 = vld [vmem:[%s3977 + $0x148] sm:$0xff]
      %v4020 = vld [vmem:[%s3977 + $0x150] sm:$0xff]
      %v4021 = vld [vmem:[%s3977 + $0x158] sm:$0xff]
      %v4022 = vld [vmem:[%s3977 + $0x160] sm:$0xff]
      %v4023 = vld [vmem:[%s3977 + $0x168] sm:$0xff]
      %v4024 = vld [vmem:[%s3977 + $0x170] sm:$0xff]
      %v4025 = vld [vmem:[%s3977 + $0x178] sm:$0xff]
      %v4026 = vld [vmem:[%s3977 + $0x180] sm:$0xff]
      %v4027 = vld [vmem:[%s3977 + $0x188] sm:$0xff]
      %v4028 = vld [vmem:[%s3977 + $0x190] sm:$0xff]
      %v4029 = vld [vmem:[%s3977 + $0x198] sm:$0xff]
      %v4030 = vld [vmem:[%s3977 + $0x1a0] sm:$0xff]
      %v4031 = vld [vmem:[%s3977 + $0x1a8] sm:$0xff]
      %v4032 = vld [vmem:[%s3977 + $0x1b0] sm:$0xff]
      %v4033 = vld [vmem:[%s3977 + $0x1b8] sm:$0xff]
      %v4034 = vld [vmem:[%s3977 + $0x1c0] sm:$0xff]
      %v4035 = vld [vmem:[%s3977 + $0x1c8] sm:$0xff]
      %v4036 = vld [vmem:[%s3977 + $0x1d0] sm:$0xff]
      %v4037 = vld [vmem:[%s3977 + $0x1d8] sm:$0xff]
      %v4038 = vld [vmem:[%s3977 + $0x1e0] sm:$0xff]
      %v4039 = vld [vmem:[%s3977 + $0x1e8] sm:$0xff]
      %v4040 = vld [vmem:[%s3977 + $0x1f0] sm:$0xff]
      %v4041 = vld [vmem:[%s3977 + $0x1f8] sm:$0xff]
      %v4042 = vsub.f32 %v3913, %v3978
      %v4043 = vsub.f32 %v3914, %v3979
      %v4044 = vsub.f32 %v3915, %v3980
      %v4045 = vsub.f32 %v3916, %v3981
      %v4046 = vsub.f32 %v3917, %v3982
      %v4047 = vsub.f32 %v3918, %v3983
      %v4048 = vsub.f32 %v3919, %v3984
      %v4049 = vsub.f32 %v3920, %v3985
      %v4050 = vsub.f32 %v3921, %v3986
      %v4051 = vsub.f32 %v3922, %v3987
      %v4052 = vsub.f32 %v3923, %v3988
      %v4053 = vsub.f32 %v3924, %v3989
      %v4054 = vsub.f32 %v3925, %v3990
      %v4055 = vsub.f32 %v3926, %v3991
      %v4056 = vsub.f32 %v3927, %v3992
      %v4057 = vsub.f32 %v3928, %v3993
      %v4058 = vsub.f32 %v3929, %v3994
      %v4059 = vsub.f32 %v3930, %v3995
      %v4060 = vsub.f32 %v3931, %v3996
      %v4061 = vsub.f32 %v3932, %v3997
      %v4062 = vsub.f32 %v3933, %v3998
      %v4063 = vsub.f32 %v3934, %v3999
      %v4064 = vsub.f32 %v3935, %v4000
      %v4065 = vsub.f32 %v3936, %v4001
      %v4066 = vsub.f32 %v3937, %v4002
      %v4067 = vsub.f32 %v3938, %v4003
      %v4068 = vsub.f32 %v3939, %v4004
      %v4069 = vsub.f32 %v3940, %v4005
      %v4070 = vsub.f32 %v3941, %v4006
      %v4071 = vsub.f32 %v3942, %v4007
      %v4072 = vsub.f32 %v3943, %v4008
      %v4073 = vsub.f32 %v3944, %v4009
      %v4074 = vsub.f32 %v3945, %v4010
      %v4075 = vsub.f32 %v3946, %v4011
      %v4076 = vsub.f32 %v3947, %v4012
      %v4077 = vsub.f32 %v3948, %v4013
      %v4078 = vsub.f32 %v3949, %v4014
      %v4079 = vsub.f32 %v3950, %v4015
      %v4080 = vsub.f32 %v3951, %v4016
      %v4081 = vsub.f32 %v3952, %v4017
      %v4082 = vsub.f32 %v3953, %v4018
      %v4083 = vsub.f32 %v3954, %v4019
      %v4084 = vsub.f32 %v3955, %v4020
      %v4085 = vsub.f32 %v3956, %v4021
      %v4086 = vsub.f32 %v3957, %v4022
      %v4087 = vsub.f32 %v3958, %v4023
      %v4088 = vsub.f32 %v3959, %v4024
      %v4089 = vsub.f32 %v3960, %v4025
      %v4090 = vsub.f32 %v3961, %v4026
      %v4091 = vsub.f32 %v3962, %v4027
      %v4092 = vsub.f32 %v3963, %v4028
      %v4093 = vsub.f32 %v3964, %v4029
      %v4094 = vsub.f32 %v3965, %v4030
      %v4095 = vsub.f32 %v3966, %v4031
      %v4096 = vsub.f32 %v3967, %v4032
      %v4097 = vsub.f32 %v3968, %v4033
      %v4098 = vsub.f32 %v3969, %v4034
      %v4099 = vsub.f32 %v3970, %v4035
      %v4100 = vsub.f32 %v3971, %v4036
      %v4101 = vsub.f32 %v3972, %v4037
      %v4102 = vsub.f32 %v3973, %v4038
      %v4103 = vsub.f32 %v3974, %v4039
      %v4104 = vsub.f32 %v3975, %v4040
      %v4105 = vsub.f32 %v3976, %v4041
      %v4106 = vmul.f32 %v4042, %v4042
      %v4107 = vmul.f32 %v4043, %v4043
      %v4108 = vmul.f32 %v4044, %v4044
      %v4109 = vmul.f32 %v4045, %v4045
      %v4110 = vmul.f32 %v4046, %v4046
      %v4111 = vmul.f32 %v4047, %v4047
      %v4112 = vmul.f32 %v4048, %v4048
      %v4113 = vmul.f32 %v4049, %v4049
      %v4114 = vmul.f32 %v4050, %v4050
      %v4115 = vmul.f32 %v4051, %v4051
      %v4116 = vmul.f32 %v4052, %v4052
      %v4117 = vmul.f32 %v4053, %v4053
      %v4118 = vmul.f32 %v4054, %v4054
      %v4119 = vmul.f32 %v4055, %v4055
      %v4120 = vmul.f32 %v4056, %v4056
      %v4121 = vmul.f32 %v4057, %v4057
      %v4122 = vmul.f32 %v4058, %v4058
      %v4123 = vmul.f32 %v4059, %v4059
      %v4124 = vmul.f32 %v4060, %v4060
      %v4125 = vmul.f32 %v4061, %v4061
      %v4126 = vmul.f32 %v4062, %v4062
      %v4127 = vmul.f32 %v4063, %v4063
      %v4128 = vmul.f32 %v4064, %v4064
      %v4129 = vmul.f32 %v4065, %v4065
      %v4130 = vmul.f32 %v4066, %v4066
      %v4131 = vmul.f32 %v4067, %v4067
      %v4132 = vmul.f32 %v4068, %v4068
      %v4133 = vmul.f32 %v4069, %v4069
      %v4134 = vmul.f32 %v4070, %v4070
      %v4135 = vmul.f32 %v4071, %v4071
      %v4136 = vmul.f32 %v4072, %v4072
      %v4137 = vmul.f32 %v4073, %v4073
      %v4138 = vmul.f32 %v4074, %v4074
      %v4139 = vmul.f32 %v4075, %v4075
      %v4140 = vmul.f32 %v4076, %v4076
      %v4141 = vmul.f32 %v4077, %v4077
      %v4142 = vmul.f32 %v4078, %v4078
      %v4143 = vmul.f32 %v4079, %v4079
      %v4144 = vmul.f32 %v4080, %v4080
      %v4145 = vmul.f32 %v4081, %v4081
      %v4146 = vmul.f32 %v4082, %v4082
      %v4147 = vmul.f32 %v4083, %v4083
      %v4148 = vmul.f32 %v4084, %v4084
      %v4149 = vmul.f32 %v4085, %v4085
      %v4150 = vmul.f32 %v4086, %v4086
      %v4151 = vmul.f32 %v4087, %v4087
      %v4152 = vmul.f32 %v4088, %v4088
      %v4153 = vmul.f32 %v4089, %v4089
      %v4154 = vmul.f32 %v4090, %v4090
      %v4155 = vmul.f32 %v4091, %v4091
      %v4156 = vmul.f32 %v4092, %v4092
      %v4157 = vmul.f32 %v4093, %v4093
      %v4158 = vmul.f32 %v4094, %v4094
      %v4159 = vmul.f32 %v4095, %v4095
      %v4160 = vmul.f32 %v4096, %v4096
      %v4161 = vmul.f32 %v4097, %v4097
      %v4162 = vmul.f32 %v4098, %v4098
      %v4163 = vmul.f32 %v4099, %v4099
      %v4164 = vmul.f32 %v4100, %v4100
      %v4165 = vmul.f32 %v4101, %v4101
      %v4166 = vmul.f32 %v4102, %v4102
      %v4167 = vmul.f32 %v4103, %v4103
      %v4168 = vmul.f32 %v4104, %v4104
      %v4169 = vmul.f32 %v4105, %v4105
      %s4170 = sadd.s32 %s73, 1024
      %v4171 = vstv %s4170
      %v4172 = vadd.s32 %v4171, %v3043
      %v4173 = vadd.s32 %v4171, %v3044
      %v4174 = vadd.s32 %v4171, %v3045
      %v4175 = vadd.s32 %v4171, %v3046
      %v4176 = vadd.s32 %v4171, %v3047
      %v4177 = vadd.s32 %v4171, %v3048
      %v4178 = vadd.s32 %v4171, %v3049
      %v4179 = vadd.s32 %v4171, %v3050
      %v4180 = vadd.s32 %v4171, %v3051
      %v4181 = vadd.s32 %v4171, %v3052
      %v4182 = vadd.s32 %v4171, %v3053
      %v4183 = vadd.s32 %v4171, %v3054
      %v4184 = vadd.s32 %v4171, %v3055
      %v4185 = vadd.s32 %v4171, %v3056
      %v4186 = vadd.s32 %v4171, %v3057
      %v4187 = vadd.s32 %v4171, %v3058
      %v4188 = vadd.s32 %v4171, %v3059
      %v4189 = vadd.s32 %v4171, %v3060
      %v4190 = vadd.s32 %v4171, %v3061
      %v4191 = vadd.s32 %v4171, %v3062
      %v4192 = vadd.s32 %v4171, %v3063
      %v4193 = vadd.s32 %v4171, %v3064
      %v4194 = vadd.s32 %v4171, %v3065
      %v4195 = vadd.s32 %v4171, %v3066
      %v4196 = vadd.s32 %v4171, %v3067
      %v4197 = vadd.s32 %v4171, %v3068
      %v4198 = vadd.s32 %v4171, %v3069
      %v4199 = vadd.s32 %v4171, %v3070
      %v4200 = vadd.s32 %v4171, %v3071
      %v4201 = vadd.s32 %v4171, %v3072
      %v4202 = vadd.s32 %v4171, %v3073
      %v4203 = vadd.s32 %v4171, %v3074
      %v4204 = vadd.s32 %v4171, %v3075
      %v4205 = vadd.s32 %v4171, %v3076
      %v4206 = vadd.s32 %v4171, %v3077
      %v4207 = vadd.s32 %v4171, %v3078
      %v4208 = vadd.s32 %v4171, %v3079
      %v4209 = vadd.s32 %v4171, %v3080
      %v4210 = vadd.s32 %v4171, %v3081
      %v4211 = vadd.s32 %v4171, %v3082
      %v4212 = vadd.s32 %v4171, %v3083
      %v4213 = vadd.s32 %v4171, %v3084
      %v4214 = vadd.s32 %v4171, %v3085
      %v4215 = vadd.s32 %v4171, %v3086
      %v4216 = vadd.s32 %v4171, %v3087
      %v4217 = vadd.s32 %v4171, %v3088
      %v4218 = vadd.s32 %v4171, %v3089
      %v4219 = vadd.s32 %v4171, %v3090
      %v4220 = vadd.s32 %v4171, %v3091
      %v4221 = vadd.s32 %v4171, %v3092
      %v4222 = vadd.s32 %v4171, %v3093
      %v4223 = vadd.s32 %v4171, %v3094
      %v4224 = vadd.s32 %v4171, %v3095
      %v4225 = vadd.s32 %v4171, %v3096
      %v4226 = vadd.s32 %v4171, %v3097
      %v4227 = vadd.s32 %v4171, %v3098
      %v4228 = vadd.s32 %v4171, %v3099
      %v4229 = vadd.s32 %v4171, %v3100
      %v4230 = vadd.s32 %v4171, %v3101
      %v4231 = vadd.s32 %v4171, %v3102
      %v4232 = vadd.s32 %v4171, %v3103
      %v4233 = vadd.s32 %v4171, %v3104
      %v4234 = vadd.s32 %v4171, %v3105
      %v4235 = vadd.s32 %v4171, %v3106
      %vm4236 = vcmp.lt.s32.totalorder %v4172, 4096
      %vm4237 = vcmp.lt.s32.totalorder %v4173, 4096
      %vm4238 = vcmp.lt.s32.totalorder %v4174, 4096
      %vm4239 = vcmp.lt.s32.totalorder %v4175, 4096
      %vm4240 = vcmp.lt.s32.totalorder %v4176, 4096
      %vm4241 = vcmp.lt.s32.totalorder %v4177, 4096
      %vm4242 = vcmp.lt.s32.totalorder %v4178, 4096
      %vm4243 = vcmp.lt.s32.totalorder %v4179, 4096
      %vm4244 = vcmp.lt.s32.totalorder %v4180, 4096
      %vm4245 = vcmp.lt.s32.totalorder %v4181, 4096
      %vm4246 = vcmp.lt.s32.totalorder %v4182, 4096
      %vm4247 = vcmp.lt.s32.totalorder %v4183, 4096
      %vm4248 = vcmp.lt.s32.totalorder %v4184, 4096
      %vm4249 = vcmp.lt.s32.totalorder %v4185, 4096
      %vm4250 = vcmp.lt.s32.totalorder %v4186, 4096
      %vm4251 = vcmp.lt.s32.totalorder %v4187, 4096
      %vm4252 = vcmp.lt.s32.totalorder %v4188, 4096
      %vm4253 = vcmp.lt.s32.totalorder %v4189, 4096
      %vm4254 = vcmp.lt.s32.totalorder %v4190, 4096
      %vm4255 = vcmp.lt.s32.totalorder %v4191, 4096
      %vm4256 = vcmp.lt.s32.totalorder %v4192, 4096
      %vm4257 = vcmp.lt.s32.totalorder %v4193, 4096
      %vm4258 = vcmp.lt.s32.totalorder %v4194, 4096
      %vm4259 = vcmp.lt.s32.totalorder %v4195, 4096
      %vm4260 = vcmp.lt.s32.totalorder %v4196, 4096
      %vm4261 = vcmp.lt.s32.totalorder %v4197, 4096
      %vm4262 = vcmp.lt.s32.totalorder %v4198, 4096
      %vm4263 = vcmp.lt.s32.totalorder %v4199, 4096
      %vm4264 = vcmp.lt.s32.totalorder %v4200, 4096
      %vm4265 = vcmp.lt.s32.totalorder %v4201, 4096
      %vm4266 = vcmp.lt.s32.totalorder %v4202, 4096
      %vm4267 = vcmp.lt.s32.totalorder %v4203, 4096
      %vm4268 = vcmp.lt.s32.totalorder %v4204, 4096
      %vm4269 = vcmp.lt.s32.totalorder %v4205, 4096
      %vm4270 = vcmp.lt.s32.totalorder %v4206, 4096
      %vm4271 = vcmp.lt.s32.totalorder %v4207, 4096
      %vm4272 = vcmp.lt.s32.totalorder %v4208, 4096
      %vm4273 = vcmp.lt.s32.totalorder %v4209, 4096
      %vm4274 = vcmp.lt.s32.totalorder %v4210, 4096
      %vm4275 = vcmp.lt.s32.totalorder %v4211, 4096
      %vm4276 = vcmp.lt.s32.totalorder %v4212, 4096
      %vm4277 = vcmp.lt.s32.totalorder %v4213, 4096
      %vm4278 = vcmp.lt.s32.totalorder %v4214, 4096
      %vm4279 = vcmp.lt.s32.totalorder %v4215, 4096
      %vm4280 = vcmp.lt.s32.totalorder %v4216, 4096
      %vm4281 = vcmp.lt.s32.totalorder %v4217, 4096
      %vm4282 = vcmp.lt.s32.totalorder %v4218, 4096
      %vm4283 = vcmp.lt.s32.totalorder %v4219, 4096
      %vm4284 = vcmp.lt.s32.totalorder %v4220, 4096
      %vm4285 = vcmp.lt.s32.totalorder %v4221, 4096
      %vm4286 = vcmp.lt.s32.totalorder %v4222, 4096
      %vm4287 = vcmp.lt.s32.totalorder %v4223, 4096
      %vm4288 = vcmp.lt.s32.totalorder %v4224, 4096
      %vm4289 = vcmp.lt.s32.totalorder %v4225, 4096
      %vm4290 = vcmp.lt.s32.totalorder %v4226, 4096
      %vm4291 = vcmp.lt.s32.totalorder %v4227, 4096
      %vm4292 = vcmp.lt.s32.totalorder %v4228, 4096
      %vm4293 = vcmp.lt.s32.totalorder %v4229, 4096
      %vm4294 = vcmp.lt.s32.totalorder %v4230, 4096
      %vm4295 = vcmp.lt.s32.totalorder %v4231, 4096
      %vm4296 = vcmp.lt.s32.totalorder %v4232, 4096
      %vm4297 = vcmp.lt.s32.totalorder %v4233, 4096
      %vm4298 = vcmp.lt.s32.totalorder %v4234, 4096
      %vm4299 = vcmp.lt.s32.totalorder %v4235, 4096
      %v4300 = vsel %vm4236, %v4106, 0.0
      %v4301 = vsel %vm4237, %v4107, 0.0
      %v4302 = vsel %vm4238, %v4108, 0.0
      %v4303 = vsel %vm4239, %v4109, 0.0
      %v4304 = vsel %vm4240, %v4110, 0.0
      %v4305 = vsel %vm4241, %v4111, 0.0
      %v4306 = vsel %vm4242, %v4112, 0.0
      %v4307 = vsel %vm4243, %v4113, 0.0
      %v4308 = vsel %vm4244, %v4114, 0.0
      %v4309 = vsel %vm4245, %v4115, 0.0
      %v4310 = vsel %vm4246, %v4116, 0.0
      %v4311 = vsel %vm4247, %v4117, 0.0
      %v4312 = vsel %vm4248, %v4118, 0.0
      %v4313 = vsel %vm4249, %v4119, 0.0
      %v4314 = vsel %vm4250, %v4120, 0.0
      %v4315 = vsel %vm4251, %v4121, 0.0
      %v4316 = vsel %vm4252, %v4122, 0.0
      %v4317 = vsel %vm4253, %v4123, 0.0
      %v4318 = vsel %vm4254, %v4124, 0.0
      %v4319 = vsel %vm4255, %v4125, 0.0
      %v4320 = vsel %vm4256, %v4126, 0.0
      %v4321 = vsel %vm4257, %v4127, 0.0
      %v4322 = vsel %vm4258, %v4128, 0.0
      %v4323 = vsel %vm4259, %v4129, 0.0
      %v4324 = vsel %vm4260, %v4130, 0.0
      %v4325 = vsel %vm4261, %v4131, 0.0
      %v4326 = vsel %vm4262, %v4132, 0.0
      %v4327 = vsel %vm4263, %v4133, 0.0
      %v4328 = vsel %vm4264, %v4134, 0.0
      %v4329 = vsel %vm4265, %v4135, 0.0
      %v4330 = vsel %vm4266, %v4136, 0.0
      %v4331 = vsel %vm4267, %v4137, 0.0
      %v4332 = vsel %vm4268, %v4138, 0.0
      %v4333 = vsel %vm4269, %v4139, 0.0
      %v4334 = vsel %vm4270, %v4140, 0.0
      %v4335 = vsel %vm4271, %v4141, 0.0
      %v4336 = vsel %vm4272, %v4142, 0.0
      %v4337 = vsel %vm4273, %v4143, 0.0
      %v4338 = vsel %vm4274, %v4144, 0.0
      %v4339 = vsel %vm4275, %v4145, 0.0
      %v4340 = vsel %vm4276, %v4146, 0.0
      %v4341 = vsel %vm4277, %v4147, 0.0
      %v4342 = vsel %vm4278, %v4148, 0.0
      %v4343 = vsel %vm4279, %v4149, 0.0
      %v4344 = vsel %vm4280, %v4150, 0.0
      %v4345 = vsel %vm4281, %v4151, 0.0
      %v4346 = vsel %vm4282, %v4152, 0.0
      %v4347 = vsel %vm4283, %v4153, 0.0
      %v4348 = vsel %vm4284, %v4154, 0.0
      %v4349 = vsel %vm4285, %v4155, 0.0
      %v4350 = vsel %vm4286, %v4156, 0.0
      %v4351 = vsel %vm4287, %v4157, 0.0
      %v4352 = vsel %vm4288, %v4158, 0.0
      %v4353 = vsel %vm4289, %v4159, 0.0
      %v4354 = vsel %vm4290, %v4160, 0.0
      %v4355 = vsel %vm4291, %v4161, 0.0
      %v4356 = vsel %vm4292, %v4162, 0.0
      %v4357 = vsel %vm4293, %v4163, 0.0
      %v4358 = vsel %vm4294, %v4164, 0.0
      %v4359 = vsel %vm4295, %v4165, 0.0
      %v4360 = vsel %vm4296, %v4166, 0.0
      %v4361 = vsel %vm4297, %v4167, 0.0
      %v4362 = vsel %vm4298, %v4168, 0.0
      %v4363 = vsel %vm4299, %v4169, 0.0
      %v4364 = vld [vmem:[#allocation7] sm:$0xff]
      %v4365 = vld [vmem:[#allocation7 + $0x8] sm:$0xff]
      %v4366 = vld [vmem:[#allocation7 + $0x10] sm:$0xff]
      %v4367 = vld [vmem:[#allocation7 + $0x18] sm:$0xff]
      %v4368 = vld [vmem:[#allocation7 + $0x20] sm:$0xff]
      %v4369 = vld [vmem:[#allocation7 + $0x28] sm:$0xff]
      %v4370 = vld [vmem:[#allocation7 + $0x30] sm:$0xff]
      %v4371 = vld [vmem:[#allocation7 + $0x38] sm:$0xff]
      %v4372 = vadd.f32 %v4300, %v4308
      %v4373 = vadd.f32 %v4372, %v4316
      %v4374 = vadd.f32 %v4373, %v4324
      %v4375 = vadd.f32 %v4374, %v4332
      %v4376 = vadd.f32 %v4375, %v4340
      %v4377 = vadd.f32 %v4376, %v4348
      %v4378 = vadd.f32 %v4377, %v4356
      %v4379 = vadd.f32 %v4301, %v4309
      %v4380 = vadd.f32 %v4379, %v4317
      %v4381 = vadd.f32 %v4380, %v4325
      %v4382 = vadd.f32 %v4381, %v4333
      %v4383 = vadd.f32 %v4382, %v4341
      %v4384 = vadd.f32 %v4383, %v4349
      %v4385 = vadd.f32 %v4384, %v4357
      %v4386 = vadd.f32 %v4302, %v4310
      %v4387 = vadd.f32 %v4386, %v4318
      %v4388 = vadd.f32 %v4387, %v4326
      %v4389 = vadd.f32 %v4388, %v4334
      %v4390 = vadd.f32 %v4389, %v4342
      %v4391 = vadd.f32 %v4390, %v4350
      %v4392 = vadd.f32 %v4391, %v4358
      %v4393 = vadd.f32 %v4303, %v4311
      %v4394 = vadd.f32 %v4393, %v4319
      %v4395 = vadd.f32 %v4394, %v4327
      %v4396 = vadd.f32 %v4395, %v4335
      %v4397 = vadd.f32 %v4396, %v4343
      %v4398 = vadd.f32 %v4397, %v4351
      %v4399 = vadd.f32 %v4398, %v4359
      %v4400 = vadd.f32 %v4304, %v4312
      %v4401 = vadd.f32 %v4400, %v4320
      %v4402 = vadd.f32 %v4401, %v4328
      %v4403 = vadd.f32 %v4402, %v4336
      %v4404 = vadd.f32 %v4403, %v4344
      %v4405 = vadd.f32 %v4404, %v4352
      %v4406 = vadd.f32 %v4405, %v4360
      %v4407 = vadd.f32 %v4305, %v4313
      %v4408 = vadd.f32 %v4407, %v4321
      %v4409 = vadd.f32 %v4408, %v4329
      %v4410 = vadd.f32 %v4409, %v4337
      %v4411 = vadd.f32 %v4410, %v4345
      %v4412 = vadd.f32 %v4411, %v4353
      %v4413 = vadd.f32 %v4412, %v4361
      %v4414 = vadd.f32 %v4306, %v4314
      %v4415 = vadd.f32 %v4414, %v4322
      %v4416 = vadd.f32 %v4415, %v4330
      %v4417 = vadd.f32 %v4416, %v4338
      %v4418 = vadd.f32 %v4417, %v4346
      %v4419 = vadd.f32 %v4418, %v4354
      %v4420 = vadd.f32 %v4419, %v4362
      %v4421 = vadd.f32 %v4307, %v4315
      %v4422 = vadd.f32 %v4421, %v4323
      %v4423 = vadd.f32 %v4422, %v4331
      %v4424 = vadd.f32 %v4423, %v4339
      %v4425 = vadd.f32 %v4424, %v4347
      %v4426 = vadd.f32 %v4425, %v4355
      %v4427 = vadd.f32 %v4426, %v4363
      %v4428 = vadd.f32 %v4364, %v4378
      %v4429 = vadd.f32 %v4365, %v4385
      %v4430 = vadd.f32 %v4366, %v4392
      %v4431 = vadd.f32 %v4367, %v4399
      %v4432 = vadd.f32 %v4368, %v4406
      %v4433 = vadd.f32 %v4369, %v4413
      %v4434 = vadd.f32 %v4370, %v4420
      %v4435 = vadd.f32 %v4371, %v4427
      %4436 = vst [vmem:[#allocation7] sm:$0xff] %v4428
      %4437 = vst [vmem:[#allocation7 + $0x8] sm:$0xff] %v4429
      %4438 = vst [vmem:[#allocation7 + $0x10] sm:$0xff] %v4430
      %4439 = vst [vmem:[#allocation7 + $0x18] sm:$0xff] %v4431
      %4440 = vst [vmem:[#allocation7 + $0x20] sm:$0xff] %v4432
      %4441 = vst [vmem:[#allocation7 + $0x28] sm:$0xff] %v4433
      %4442 = vst [vmem:[#allocation7 + $0x30] sm:$0xff] %v4434
      %4443 = vst [vmem:[#allocation7 + $0x38] sm:$0xff] %v4435
      %s4444 = scalar_lea.vmem [#allocation2], 1536
      %v4445 = vld [vmem:[%s4444] sm:$0xff]
      %v4446 = vld [vmem:[%s4444 + $0x8] sm:$0xff]
      %v4447 = vld [vmem:[%s4444 + $0x10] sm:$0xff]
      %v4448 = vld [vmem:[%s4444 + $0x18] sm:$0xff]
      %v4449 = vld [vmem:[%s4444 + $0x20] sm:$0xff]
      %v4450 = vld [vmem:[%s4444 + $0x28] sm:$0xff]
      %v4451 = vld [vmem:[%s4444 + $0x30] sm:$0xff]
      %v4452 = vld [vmem:[%s4444 + $0x38] sm:$0xff]
      %v4453 = vld [vmem:[%s4444 + $0x40] sm:$0xff]
      %v4454 = vld [vmem:[%s4444 + $0x48] sm:$0xff]
      %v4455 = vld [vmem:[%s4444 + $0x50] sm:$0xff]
      %v4456 = vld [vmem:[%s4444 + $0x58] sm:$0xff]
      %v4457 = vld [vmem:[%s4444 + $0x60] sm:$0xff]
      %v4458 = vld [vmem:[%s4444 + $0x68] sm:$0xff]
      %v4459 = vld [vmem:[%s4444 + $0x70] sm:$0xff]
      %v4460 = vld [vmem:[%s4444 + $0x78] sm:$0xff]
      %v4461 = vld [vmem:[%s4444 + $0x80] sm:$0xff]
      %v4462 = vld [vmem:[%s4444 + $0x88] sm:$0xff]
      %v4463 = vld [vmem:[%s4444 + $0x90] sm:$0xff]
      %v4464 = vld [vmem:[%s4444 + $0x98] sm:$0xff]
      %v4465 = vld [vmem:[%s4444 + $0xa0] sm:$0xff]
      %v4466 = vld [vmem:[%s4444 + $0xa8] sm:$0xff]
      %v4467 = vld [vmem:[%s4444 + $0xb0] sm:$0xff]
      %v4468 = vld [vmem:[%s4444 + $0xb8] sm:$0xff]
      %v4469 = vld [vmem:[%s4444 + $0xc0] sm:$0xff]
      %v4470 = vld [vmem:[%s4444 + $0xc8] sm:$0xff]
      %v4471 = vld [vmem:[%s4444 + $0xd0] sm:$0xff]
      %v4472 = vld [vmem:[%s4444 + $0xd8] sm:$0xff]
      %v4473 = vld [vmem:[%s4444 + $0xe0] sm:$0xff]
      %v4474 = vld [vmem:[%s4444 + $0xe8] sm:$0xff]
      %v4475 = vld [vmem:[%s4444 + $0xf0] sm:$0xff]
      %v4476 = vld [vmem:[%s4444 + $0xf8] sm:$0xff]
      %v4477 = vld [vmem:[%s4444 + $0x100] sm:$0xff]
      %v4478 = vld [vmem:[%s4444 + $0x108] sm:$0xff]
      %v4479 = vld [vmem:[%s4444 + $0x110] sm:$0xff]
      %v4480 = vld [vmem:[%s4444 + $0x118] sm:$0xff]
      %v4481 = vld [vmem:[%s4444 + $0x120] sm:$0xff]
      %v4482 = vld [vmem:[%s4444 + $0x128] sm:$0xff]
      %v4483 = vld [vmem:[%s4444 + $0x130] sm:$0xff]
      %v4484 = vld [vmem:[%s4444 + $0x138] sm:$0xff]
      %v4485 = vld [vmem:[%s4444 + $0x140] sm:$0xff]
      %v4486 = vld [vmem:[%s4444 + $0x148] sm:$0xff]
      %v4487 = vld [vmem:[%s4444 + $0x150] sm:$0xff]
      %v4488 = vld [vmem:[%s4444 + $0x158] sm:$0xff]
      %v4489 = vld [vmem:[%s4444 + $0x160] sm:$0xff]
      %v4490 = vld [vmem:[%s4444 + $0x168] sm:$0xff]
      %v4491 = vld [vmem:[%s4444 + $0x170] sm:$0xff]
      %v4492 = vld [vmem:[%s4444 + $0x178] sm:$0xff]
      %v4493 = vld [vmem:[%s4444 + $0x180] sm:$0xff]
      %v4494 = vld [vmem:[%s4444 + $0x188] sm:$0xff]
      %v4495 = vld [vmem:[%s4444 + $0x190] sm:$0xff]
      %v4496 = vld [vmem:[%s4444 + $0x198] sm:$0xff]
      %v4497 = vld [vmem:[%s4444 + $0x1a0] sm:$0xff]
      %v4498 = vld [vmem:[%s4444 + $0x1a8] sm:$0xff]
      %v4499 = vld [vmem:[%s4444 + $0x1b0] sm:$0xff]
      %v4500 = vld [vmem:[%s4444 + $0x1b8] sm:$0xff]
      %v4501 = vld [vmem:[%s4444 + $0x1c0] sm:$0xff]
      %v4502 = vld [vmem:[%s4444 + $0x1c8] sm:$0xff]
      %v4503 = vld [vmem:[%s4444 + $0x1d0] sm:$0xff]
      %v4504 = vld [vmem:[%s4444 + $0x1d8] sm:$0xff]
      %v4505 = vld [vmem:[%s4444 + $0x1e0] sm:$0xff]
      %v4506 = vld [vmem:[%s4444 + $0x1e8] sm:$0xff]
      %v4507 = vld [vmem:[%s4444 + $0x1f0] sm:$0xff]
      %v4508 = vld [vmem:[%s4444 + $0x1f8] sm:$0xff]
      %s4509 = scalar_lea.vmem [#allocation5], 1536
      %v4510 = vld [vmem:[%s4509] sm:$0xff]
      %v4511 = vld [vmem:[%s4509 + $0x8] sm:$0xff]
      %v4512 = vld [vmem:[%s4509 + $0x10] sm:$0xff]
      %v4513 = vld [vmem:[%s4509 + $0x18] sm:$0xff]
      %v4514 = vld [vmem:[%s4509 + $0x20] sm:$0xff]
      %v4515 = vld [vmem:[%s4509 + $0x28] sm:$0xff]
      %v4516 = vld [vmem:[%s4509 + $0x30] sm:$0xff]
      %v4517 = vld [vmem:[%s4509 + $0x38] sm:$0xff]
      %v4518 = vld [vmem:[%s4509 + $0x40] sm:$0xff]
      %v4519 = vld [vmem:[%s4509 + $0x48] sm:$0xff]
      %v4520 = vld [vmem:[%s4509 + $0x50] sm:$0xff]
      %v4521 = vld [vmem:[%s4509 + $0x58] sm:$0xff]
      %v4522 = vld [vmem:[%s4509 + $0x60] sm:$0xff]
      %v4523 = vld [vmem:[%s4509 + $0x68] sm:$0xff]
      %v4524 = vld [vmem:[%s4509 + $0x70] sm:$0xff]
      %v4525 = vld [vmem:[%s4509 + $0x78] sm:$0xff]
      %v4526 = vld [vmem:[%s4509 + $0x80] sm:$0xff]
      %v4527 = vld [vmem:[%s4509 + $0x88] sm:$0xff]
      %v4528 = vld [vmem:[%s4509 + $0x90] sm:$0xff]
      %v4529 = vld [vmem:[%s4509 + $0x98] sm:$0xff]
      %v4530 = vld [vmem:[%s4509 + $0xa0] sm:$0xff]
      %v4531 = vld [vmem:[%s4509 + $0xa8] sm:$0xff]
      %v4532 = vld [vmem:[%s4509 + $0xb0] sm:$0xff]
      %v4533 = vld [vmem:[%s4509 + $0xb8] sm:$0xff]
      %v4534 = vld [vmem:[%s4509 + $0xc0] sm:$0xff]
      %v4535 = vld [vmem:[%s4509 + $0xc8] sm:$0xff]
      %v4536 = vld [vmem:[%s4509 + $0xd0] sm:$0xff]
      %v4537 = vld [vmem:[%s4509 + $0xd8] sm:$0xff]
      %v4538 = vld [vmem:[%s4509 + $0xe0] sm:$0xff]
      %v4539 = vld [vmem:[%s4509 + $0xe8] sm:$0xff]
      %v4540 = vld [vmem:[%s4509 + $0xf0] sm:$0xff]
      %v4541 = vld [vmem:[%s4509 + $0xf8] sm:$0xff]
      %v4542 = vld [vmem:[%s4509 + $0x100] sm:$0xff]
      %v4543 = vld [vmem:[%s4509 + $0x108] sm:$0xff]
      %v4544 = vld [vmem:[%s4509 + $0x110] sm:$0xff]
      %v4545 = vld [vmem:[%s4509 + $0x118] sm:$0xff]
      %v4546 = vld [vmem:[%s4509 + $0x120] sm:$0xff]
      %v4547 = vld [vmem:[%s4509 + $0x128] sm:$0xff]
      %v4548 = vld [vmem:[%s4509 + $0x130] sm:$0xff]
      %v4549 = vld [vmem:[%s4509 + $0x138] sm:$0xff]
      %v4550 = vld [vmem:[%s4509 + $0x140] sm:$0xff]
      %v4551 = vld [vmem:[%s4509 + $0x148] sm:$0xff]
      %v4552 = vld [vmem:[%s4509 + $0x150] sm:$0xff]
      %v4553 = vld [vmem:[%s4509 + $0x158] sm:$0xff]
      %v4554 = vld [vmem:[%s4509 + $0x160] sm:$0xff]
      %v4555 = vld [vmem:[%s4509 + $0x168] sm:$0xff]
      %v4556 = vld [vmem:[%s4509 + $0x170] sm:$0xff]
      %v4557 = vld [vmem:[%s4509 + $0x178] sm:$0xff]
      %v4558 = vld [vmem:[%s4509 + $0x180] sm:$0xff]
      %v4559 = vld [vmem:[%s4509 + $0x188] sm:$0xff]
      %v4560 = vld [vmem:[%s4509 + $0x190] sm:$0xff]
      %v4561 = vld [vmem:[%s4509 + $0x198] sm:$0xff]
      %v4562 = vld [vmem:[%s4509 + $0x1a0] sm:$0xff]
      %v4563 = vld [vmem:[%s4509 + $0x1a8] sm:$0xff]
      %v4564 = vld [vmem:[%s4509 + $0x1b0] sm:$0xff]
      %v4565 = vld [vmem:[%s4509 + $0x1b8] sm:$0xff]
      %v4566 = vld [vmem:[%s4509 + $0x1c0] sm:$0xff]
      %v4567 = vld [vmem:[%s4509 + $0x1c8] sm:$0xff]
      %v4568 = vld [vmem:[%s4509 + $0x1d0] sm:$0xff]
      %v4569 = vld [vmem:[%s4509 + $0x1d8] sm:$0xff]
      %v4570 = vld [vmem:[%s4509 + $0x1e0] sm:$0xff]
      %v4571 = vld [vmem:[%s4509 + $0x1e8] sm:$0xff]
      %v4572 = vld [vmem:[%s4509 + $0x1f0] sm:$0xff]
      %v4573 = vld [vmem:[%s4509 + $0x1f8] sm:$0xff]
      %v4574 = vsub.f32 %v4445, %v4510
      %v4575 = vsub.f32 %v4446, %v4511
      %v4576 = vsub.f32 %v4447, %v4512
      %v4577 = vsub.f32 %v4448, %v4513
      %v4578 = vsub.f32 %v4449, %v4514
      %v4579 = vsub.f32 %v4450, %v4515
      %v4580 = vsub.f32 %v4451, %v4516
      %v4581 = vsub.f32 %v4452, %v4517
      %v4582 = vsub.f32 %v4453, %v4518
      %v4583 = vsub.f32 %v4454, %v4519
      %v4584 = vsub.f32 %v4455, %v4520
      %v4585 = vsub.f32 %v4456, %v4521
      %v4586 = vsub.f32 %v4457, %v4522
      %v4587 = vsub.f32 %v4458, %v4523
      %v4588 = vsub.f32 %v4459, %v4524
      %v4589 = vsub.f32 %v4460, %v4525
      %v4590 = vsub.f32 %v4461, %v4526
      %v4591 = vsub.f32 %v4462, %v4527
      %v4592 = vsub.f32 %v4463, %v4528
      %v4593 = vsub.f32 %v4464, %v4529
      %v4594 = vsub.f32 %v4465, %v4530
      %v4595 = vsub.f32 %v4466, %v4531
      %v4596 = vsub.f32 %v4467, %v4532
      %v4597 = vsub.f32 %v4468, %v4533
      %v4598 = vsub.f32 %v4469, %v4534
      %v4599 = vsub.f32 %v4470, %v4535
      %v4600 = vsub.f32 %v4471, %v4536
      %v4601 = vsub.f32 %v4472, %v4537
      %v4602 = vsub.f32 %v4473, %v4538
      %v4603 = vsub.f32 %v4474, %v4539
      %v4604 = vsub.f32 %v4475, %v4540
      %v4605 = vsub.f32 %v4476, %v4541
      %v4606 = vsub.f32 %v4477, %v4542
      %v4607 = vsub.f32 %v4478, %v4543
      %v4608 = vsub.f32 %v4479, %v4544
      %v4609 = vsub.f32 %v4480, %v4545
      %v4610 = vsub.f32 %v4481, %v4546
      %v4611 = vsub.f32 %v4482, %v4547
      %v4612 = vsub.f32 %v4483, %v4548
      %v4613 = vsub.f32 %v4484, %v4549
      %v4614 = vsub.f32 %v4485, %v4550
      %v4615 = vsub.f32 %v4486, %v4551
      %v4616 = vsub.f32 %v4487, %v4552
      %v4617 = vsub.f32 %v4488, %v4553
      %v4618 = vsub.f32 %v4489, %v4554
      %v4619 = vsub.f32 %v4490, %v4555
      %v4620 = vsub.f32 %v4491, %v4556
      %v4621 = vsub.f32 %v4492, %v4557
      %v4622 = vsub.f32 %v4493, %v4558
      %v4623 = vsub.f32 %v4494, %v4559
      %v4624 = vsub.f32 %v4495, %v4560
      %v4625 = vsub.f32 %v4496, %v4561
      %v4626 = vsub.f32 %v4497, %v4562
      %v4627 = vsub.f32 %v4498, %v4563
      %v4628 = vsub.f32 %v4499, %v4564
      %v4629 = vsub.f32 %v4500, %v4565
      %v4630 = vsub.f32 %v4501, %v4566
      %v4631 = vsub.f32 %v4502, %v4567
      %v4632 = vsub.f32 %v4503, %v4568
      %v4633 = vsub.f32 %v4504, %v4569
      %v4634 = vsub.f32 %v4505, %v4570
      %v4635 = vsub.f32 %v4506, %v4571
      %v4636 = vsub.f32 %v4507, %v4572
      %v4637 = vsub.f32 %v4508, %v4573
      %v4638 = vmul.f32 %v4574, %v4574
      %v4639 = vmul.f32 %v4575, %v4575
      %v4640 = vmul.f32 %v4576, %v4576
      %v4641 = vmul.f32 %v4577, %v4577
      %v4642 = vmul.f32 %v4578, %v4578
      %v4643 = vmul.f32 %v4579, %v4579
      %v4644 = vmul.f32 %v4580, %v4580
      %v4645 = vmul.f32 %v4581, %v4581
      %v4646 = vmul.f32 %v4582, %v4582
      %v4647 = vmul.f32 %v4583, %v4583
      %v4648 = vmul.f32 %v4584, %v4584
      %v4649 = vmul.f32 %v4585, %v4585
      %v4650 = vmul.f32 %v4586, %v4586
      %v4651 = vmul.f32 %v4587, %v4587
      %v4652 = vmul.f32 %v4588, %v4588
      %v4653 = vmul.f32 %v4589, %v4589
      %v4654 = vmul.f32 %v4590, %v4590
      %v4655 = vmul.f32 %v4591, %v4591
      %v4656 = vmul.f32 %v4592, %v4592
      %v4657 = vmul.f32 %v4593, %v4593
      %v4658 = vmul.f32 %v4594, %v4594
      %v4659 = vmul.f32 %v4595, %v4595
      %v4660 = vmul.f32 %v4596, %v4596
      %v4661 = vmul.f32 %v4597, %v4597
      %v4662 = vmul.f32 %v4598, %v4598
      %v4663 = vmul.f32 %v4599, %v4599
      %v4664 = vmul.f32 %v4600, %v4600
      %v4665 = vmul.f32 %v4601, %v4601
      %v4666 = vmul.f32 %v4602, %v4602
      %v4667 = vmul.f32 %v4603, %v4603
      %v4668 = vmul.f32 %v4604, %v4604
      %v4669 = vmul.f32 %v4605, %v4605
      %v4670 = vmul.f32 %v4606, %v4606
      %v4671 = vmul.f32 %v4607, %v4607
      %v4672 = vmul.f32 %v4608, %v4608
      %v4673 = vmul.f32 %v4609, %v4609
      %v4674 = vmul.f32 %v4610, %v4610
      %v4675 = vmul.f32 %v4611, %v4611
      %v4676 = vmul.f32 %v4612, %v4612
      %v4677 = vmul.f32 %v4613, %v4613
      %v4678 = vmul.f32 %v4614, %v4614
      %v4679 = vmul.f32 %v4615, %v4615
      %v4680 = vmul.f32 %v4616, %v4616
      %v4681 = vmul.f32 %v4617, %v4617
      %v4682 = vmul.f32 %v4618, %v4618
      %v4683 = vmul.f32 %v4619, %v4619
      %v4684 = vmul.f32 %v4620, %v4620
      %v4685 = vmul.f32 %v4621, %v4621
      %v4686 = vmul.f32 %v4622, %v4622
      %v4687 = vmul.f32 %v4623, %v4623
      %v4688 = vmul.f32 %v4624, %v4624
      %v4689 = vmul.f32 %v4625, %v4625
      %v4690 = vmul.f32 %v4626, %v4626
      %v4691 = vmul.f32 %v4627, %v4627
      %v4692 = vmul.f32 %v4628, %v4628
      %v4693 = vmul.f32 %v4629, %v4629
      %v4694 = vmul.f32 %v4630, %v4630
      %v4695 = vmul.f32 %v4631, %v4631
      %v4696 = vmul.f32 %v4632, %v4632
      %v4697 = vmul.f32 %v4633, %v4633
      %v4698 = vmul.f32 %v4634, %v4634
      %v4699 = vmul.f32 %v4635, %v4635
      %v4700 = vmul.f32 %v4636, %v4636
      %v4701 = vmul.f32 %v4637, %v4637
      %s4702 = sadd.s32 %s73, 1536
      %v4703 = vstv %s4702
      %v4704 = vadd.s32 %v4703, %v3043
      %v4705 = vadd.s32 %v4703, %v3044
      %v4706 = vadd.s32 %v4703, %v3045
      %v4707 = vadd.s32 %v4703, %v3046
      %v4708 = vadd.s32 %v4703, %v3047
      %v4709 = vadd.s32 %v4703, %v3048
      %v4710 = vadd.s32 %v4703, %v3049
      %v4711 = vadd.s32 %v4703, %v3050
      %v4712 = vadd.s32 %v4703, %v3051
      %v4713 = vadd.s32 %v4703, %v3052
      %v4714 = vadd.s32 %v4703, %v3053
      %v4715 = vadd.s32 %v4703, %v3054
      %v4716 = vadd.s32 %v4703, %v3055
      %v4717 = vadd.s32 %v4703, %v3056
      %v4718 = vadd.s32 %v4703, %v3057
      %v4719 = vadd.s32 %v4703, %v3058
      %v4720 = vadd.s32 %v4703, %v3059
      %v4721 = vadd.s32 %v4703, %v3060
      %v4722 = vadd.s32 %v4703, %v3061
      %v4723 = vadd.s32 %v4703, %v3062
      %v4724 = vadd.s32 %v4703, %v3063
      %v4725 = vadd.s32 %v4703, %v3064
      %v4726 = vadd.s32 %v4703, %v3065
      %v4727 = vadd.s32 %v4703, %v3066
      %v4728 = vadd.s32 %v4703, %v3067
      %v4729 = vadd.s32 %v4703, %v3068
      %v4730 = vadd.s32 %v4703, %v3069
      %v4731 = vadd.s32 %v4703, %v3070
      %v4732 = vadd.s32 %v4703, %v3071
      %v4733 = vadd.s32 %v4703, %v3072
      %v4734 = vadd.s32 %v4703, %v3073
      %v4735 = vadd.s32 %v4703, %v3074
      %v4736 = vadd.s32 %v4703, %v3075
      %v4737 = vadd.s32 %v4703, %v3076
      %v4738 = vadd.s32 %v4703, %v3077
      %v4739 = vadd.s32 %v4703, %v3078
      %v4740 = vadd.s32 %v4703, %v3079
      %v4741 = vadd.s32 %v4703, %v3080
      %v4742 = vadd.s32 %v4703, %v3081
      %v4743 = vadd.s32 %v4703, %v3082
      %v4744 = vadd.s32 %v4703, %v3083
      %v4745 = vadd.s32 %v4703, %v3084
      %v4746 = vadd.s32 %v4703, %v3085
      %v4747 = vadd.s32 %v4703, %v3086
      %v4748 = vadd.s32 %v4703, %v3087
      %v4749 = vadd.s32 %v4703, %v3088
      %v4750 = vadd.s32 %v4703, %v3089
      %v4751 = vadd.s32 %v4703, %v3090
      %v4752 = vadd.s32 %v4703, %v3091
      %v4753 = vadd.s32 %v4703, %v3092
      %v4754 = vadd.s32 %v4703, %v3093
      %v4755 = vadd.s32 %v4703, %v3094
      %v4756 = vadd.s32 %v4703, %v3095
      %v4757 = vadd.s32 %v4703, %v3096
      %v4758 = vadd.s32 %v4703, %v3097
      %v4759 = vadd.s32 %v4703, %v3098
      %v4760 = vadd.s32 %v4703, %v3099
      %v4761 = vadd.s32 %v4703, %v3100
      %v4762 = vadd.s32 %v4703, %v3101
      %v4763 = vadd.s32 %v4703, %v3102
      %v4764 = vadd.s32 %v4703, %v3103
      %v4765 = vadd.s32 %v4703, %v3104
      %v4766 = vadd.s32 %v4703, %v3105
      %v4767 = vadd.s32 %v4703, %v3106
      %vm4768 = vcmp.lt.s32.totalorder %v4704, 4096
      %vm4769 = vcmp.lt.s32.totalorder %v4705, 4096
      %vm4770 = vcmp.lt.s32.totalorder %v4706, 4096
      %vm4771 = vcmp.lt.s32.totalorder %v4707, 4096
      %vm4772 = vcmp.lt.s32.totalorder %v4708, 4096
      %vm4773 = vcmp.lt.s32.totalorder %v4709, 4096
      %vm4774 = vcmp.lt.s32.totalorder %v4710, 4096
      %vm4775 = vcmp.lt.s32.totalorder %v4711, 4096
      %vm4776 = vcmp.lt.s32.totalorder %v4712, 4096
      %vm4777 = vcmp.lt.s32.totalorder %v4713, 4096
      %vm4778 = vcmp.lt.s32.totalorder %v4714, 4096
      %vm4779 = vcmp.lt.s32.totalorder %v4715, 4096
      %vm4780 = vcmp.lt.s32.totalorder %v4716, 4096
      %vm4781 = vcmp.lt.s32.totalorder %v4717, 4096
      %vm4782 = vcmp.lt.s32.totalorder %v4718, 4096
      %vm4783 = vcmp.lt.s32.totalorder %v4719, 4096
      %vm4784 = vcmp.lt.s32.totalorder %v4720, 4096
      %vm4785 = vcmp.lt.s32.totalorder %v4721, 4096
      %vm4786 = vcmp.lt.s32.totalorder %v4722, 4096
      %vm4787 = vcmp.lt.s32.totalorder %v4723, 4096
      %vm4788 = vcmp.lt.s32.totalorder %v4724, 4096
      %vm4789 = vcmp.lt.s32.totalorder %v4725, 4096
      %vm4790 = vcmp.lt.s32.totalorder %v4726, 4096
      %vm4791 = vcmp.lt.s32.totalorder %v4727, 4096
      %vm4792 = vcmp.lt.s32.totalorder %v4728, 4096
      %vm4793 = vcmp.lt.s32.totalorder %v4729, 4096
      %vm4794 = vcmp.lt.s32.totalorder %v4730, 4096
      %vm4795 = vcmp.lt.s32.totalorder %v4731, 4096
      %vm4796 = vcmp.lt.s32.totalorder %v4732, 4096
      %vm4797 = vcmp.lt.s32.totalorder %v4733, 4096
      %vm4798 = vcmp.lt.s32.totalorder %v4734, 4096
      %vm4799 = vcmp.lt.s32.totalorder %v4735, 4096
      %vm4800 = vcmp.lt.s32.totalorder %v4736, 4096
      %vm4801 = vcmp.lt.s32.totalorder %v4737, 4096
      %vm4802 = vcmp.lt.s32.totalorder %v4738, 4096
      %vm4803 = vcmp.lt.s32.totalorder %v4739, 4096
      %vm4804 = vcmp.lt.s32.totalorder %v4740, 4096
      %vm4805 = vcmp.lt.s32.totalorder %v4741, 4096
      %vm4806 = vcmp.lt.s32.totalorder %v4742, 4096
      %vm4807 = vcmp.lt.s32.totalorder %v4743, 4096
      %vm4808 = vcmp.lt.s32.totalorder %v4744, 4096
      %vm4809 = vcmp.lt.s32.totalorder %v4745, 4096
      %vm4810 = vcmp.lt.s32.totalorder %v4746, 4096
      %vm4811 = vcmp.lt.s32.totalorder %v4747, 4096
      %vm4812 = vcmp.lt.s32.totalorder %v4748, 4096
      %vm4813 = vcmp.lt.s32.totalorder %v4749, 4096
      %vm4814 = vcmp.lt.s32.totalorder %v4750, 4096
      %vm4815 = vcmp.lt.s32.totalorder %v4751, 4096
      %vm4816 = vcmp.lt.s32.totalorder %v4752, 4096
      %vm4817 = vcmp.lt.s32.totalorder %v4753, 4096
      %vm4818 = vcmp.lt.s32.totalorder %v4754, 4096
      %vm4819 = vcmp.lt.s32.totalorder %v4755, 4096
      %vm4820 = vcmp.lt.s32.totalorder %v4756, 4096
      %vm4821 = vcmp.lt.s32.totalorder %v4757, 4096
      %vm4822 = vcmp.lt.s32.totalorder %v4758, 4096
      %vm4823 = vcmp.lt.s32.totalorder %v4759, 4096
      %vm4824 = vcmp.lt.s32.totalorder %v4760, 4096
      %vm4825 = vcmp.lt.s32.totalorder %v4761, 4096
      %vm4826 = vcmp.lt.s32.totalorder %v4762, 4096
      %vm4827 = vcmp.lt.s32.totalorder %v4763, 4096
      %vm4828 = vcmp.lt.s32.totalorder %v4764, 4096
      %vm4829 = vcmp.lt.s32.totalorder %v4765, 4096
      %vm4830 = vcmp.lt.s32.totalorder %v4766, 4096
      %vm4831 = vcmp.lt.s32.totalorder %v4767, 4096
      %v4832 = vsel %vm4768, %v4638, 0.0
      %v4833 = vsel %vm4769, %v4639, 0.0
      %v4834 = vsel %vm4770, %v4640, 0.0
      %v4835 = vsel %vm4771, %v4641, 0.0
      %v4836 = vsel %vm4772, %v4642, 0.0
      %v4837 = vsel %vm4773, %v4643, 0.0
      %v4838 = vsel %vm4774, %v4644, 0.0
      %v4839 = vsel %vm4775, %v4645, 0.0
      %v4840 = vsel %vm4776, %v4646, 0.0
      %v4841 = vsel %vm4777, %v4647, 0.0
      %v4842 = vsel %vm4778, %v4648, 0.0
      %v4843 = vsel %vm4779, %v4649, 0.0
      %v4844 = vsel %vm4780, %v4650, 0.0
      %v4845 = vsel %vm4781, %v4651, 0.0
      %v4846 = vsel %vm4782, %v4652, 0.0
      %v4847 = vsel %vm4783, %v4653, 0.0
      %v4848 = vsel %vm4784, %v4654, 0.0
      %v4849 = vsel %vm4785, %v4655, 0.0
      %v4850 = vsel %vm4786, %v4656, 0.0
      %v4851 = vsel %vm4787, %v4657, 0.0
      %v4852 = vsel %vm4788, %v4658, 0.0
      %v4853 = vsel %vm4789, %v4659, 0.0
      %v4854 = vsel %vm4790, %v4660, 0.0
      %v4855 = vsel %vm4791, %v4661, 0.0
      %v4856 = vsel %vm4792, %v4662, 0.0
      %v4857 = vsel %vm4793, %v4663, 0.0
      %v4858 = vsel %vm4794, %v4664, 0.0
      %v4859 = vsel %vm4795, %v4665, 0.0
      %v4860 = vsel %vm4796, %v4666, 0.0
      %v4861 = vsel %vm4797, %v4667, 0.0
      %v4862 = vsel %vm4798, %v4668, 0.0
      %v4863 = vsel %vm4799, %v4669, 0.0
      %v4864 = vsel %vm4800, %v4670, 0.0
      %v4865 = vsel %vm4801, %v4671, 0.0
      %v4866 = vsel %vm4802, %v4672, 0.0
      %v4867 = vsel %vm4803, %v4673, 0.0
      %v4868 = vsel %vm4804, %v4674, 0.0
      %v4869 = vsel %vm4805, %v4675, 0.0
      %v4870 = vsel %vm4806, %v4676, 0.0
      %v4871 = vsel %vm4807, %v4677, 0.0
      %v4872 = vsel %vm4808, %v4678, 0.0
      %v4873 = vsel %vm4809, %v4679, 0.0
      %v4874 = vsel %vm4810, %v4680, 0.0
      %v4875 = vsel %vm4811, %v4681, 0.0
      %v4876 = vsel %vm4812, %v4682, 0.0
      %v4877 = vsel %vm4813, %v4683, 0.0
      %v4878 = vsel %vm4814, %v4684, 0.0
      %v4879 = vsel %vm4815, %v4685, 0.0
      %v4880 = vsel %vm4816, %v4686, 0.0
      %v4881 = vsel %vm4817, %v4687, 0.0
      %v4882 = vsel %vm4818, %v4688, 0.0
      %v4883 = vsel %vm4819, %v4689, 0.0
      %v4884 = vsel %vm4820, %v4690, 0.0
      %v4885 = vsel %vm4821, %v4691, 0.0
      %v4886 = vsel %vm4822, %v4692, 0.0
      %v4887 = vsel %vm4823, %v4693, 0.0
      %v4888 = vsel %vm4824, %v4694, 0.0
      %v4889 = vsel %vm4825, %v4695, 0.0
      %v4890 = vsel %vm4826, %v4696, 0.0
      %v4891 = vsel %vm4827, %v4697, 0.0
      %v4892 = vsel %vm4828, %v4698, 0.0
      %v4893 = vsel %vm4829, %v4699, 0.0
      %v4894 = vsel %vm4830, %v4700, 0.0
      %v4895 = vsel %vm4831, %v4701, 0.0
      %v4896 = vld [vmem:[#allocation7] sm:$0xff]
      %v4897 = vld [vmem:[#allocation7 + $0x8] sm:$0xff]
      %v4898 = vld [vmem:[#allocation7 + $0x10] sm:$0xff]
      %v4899 = vld [vmem:[#allocation7 + $0x18] sm:$0xff]
      %v4900 = vld [vmem:[#allocation7 + $0x20] sm:$0xff]
      %v4901 = vld [vmem:[#allocation7 + $0x28] sm:$0xff]
      %v4902 = vld [vmem:[#allocation7 + $0x30] sm:$0xff]
      %v4903 = vld [vmem:[#allocation7 + $0x38] sm:$0xff]
      %v4904 = vadd.f32 %v4832, %v4840
      %v4905 = vadd.f32 %v4904, %v4848
      %v4906 = vadd.f32 %v4905, %v4856
      %v4907 = vadd.f32 %v4906, %v4864
      %v4908 = vadd.f32 %v4907, %v4872
      %v4909 = vadd.f32 %v4908, %v4880
      %v4910 = vadd.f32 %v4909, %v4888
      %v4911 = vadd.f32 %v4833, %v4841
      %v4912 = vadd.f32 %v4911, %v4849
      %v4913 = vadd.f32 %v4912, %v4857
      %v4914 = vadd.f32 %v4913, %v4865
      %v4915 = vadd.f32 %v4914, %v4873
      %v4916 = vadd.f32 %v4915, %v4881
      %v4917 = vadd.f32 %v4916, %v4889
      %v4918 = vadd.f32 %v4834, %v4842
      %v4919 = vadd.f32 %v4918, %v4850
      %v4920 = vadd.f32 %v4919, %v4858
      %v4921 = vadd.f32 %v4920, %v4866
      %v4922 = vadd.f32 %v4921, %v4874
      %v4923 = vadd.f32 %v4922, %v4882
      %v4924 = vadd.f32 %v4923, %v4890
      %v4925 = vadd.f32 %v4835, %v4843
      %v4926 = vadd.f32 %v4925, %v4851
      %v4927 = vadd.f32 %v4926, %v4859
      %v4928 = vadd.f32 %v4927, %v4867
      %v4929 = vadd.f32 %v4928, %v4875
      %v4930 = vadd.f32 %v4929, %v4883
      %v4931 = vadd.f32 %v4930, %v4891
      %v4932 = vadd.f32 %v4836, %v4844
      %v4933 = vadd.f32 %v4932, %v4852
      %v4934 = vadd.f32 %v4933, %v4860
      %v4935 = vadd.f32 %v4934, %v4868
      %v4936 = vadd.f32 %v4935, %v4876
      %v4937 = vadd.f32 %v4936, %v4884
      %v4938 = vadd.f32 %v4937, %v4892
      %v4939 = vadd.f32 %v4837, %v4845
      %v4940 = vadd.f32 %v4939, %v4853
      %v4941 = vadd.f32 %v4940, %v4861
      %v4942 = vadd.f32 %v4941, %v4869
      %v4943 = vadd.f32 %v4942, %v4877
      %v4944 = vadd.f32 %v4943, %v4885
      %v4945 = vadd.f32 %v4944, %v4893
      %v4946 = vadd.f32 %v4838, %v4846
      %v4947 = vadd.f32 %v4946, %v4854
      %v4948 = vadd.f32 %v4947, %v4862
      %v4949 = vadd.f32 %v4948, %v4870
      %v4950 = vadd.f32 %v4949, %v4878
      %v4951 = vadd.f32 %v4950, %v4886
      %v4952 = vadd.f32 %v4951, %v4894
      %v4953 = vadd.f32 %v4839, %v4847
      %v4954 = vadd.f32 %v4953, %v4855
      %v4955 = vadd.f32 %v4954, %v4863
      %v4956 = vadd.f32 %v4955, %v4871
      %v4957 = vadd.f32 %v4956, %v4879
      %v4958 = vadd.f32 %v4957, %v4887
      %v4959 = vadd.f32 %v4958, %v4895
      %v4960 = vadd.f32 %v4896, %v4910
      %v4961 = vadd.f32 %v4897, %v4917
      %v4962 = vadd.f32 %v4898, %v4924
      %v4963 = vadd.f32 %v4899, %v4931
      %v4964 = vadd.f32 %v4900, %v4938
      %v4965 = vadd.f32 %v4901, %v4945
      %v4966 = vadd.f32 %v4902, %v4952
      %v4967 = vadd.f32 %v4903, %v4959
      %4968 = vst [vmem:[#allocation7] sm:$0xff] %v4960
      %4969 = vst [vmem:[#allocation7 + $0x8] sm:$0xff] %v4961
      %4970 = vst [vmem:[#allocation7 + $0x10] sm:$0xff] %v4962
      %4971 = vst [vmem:[#allocation7 + $0x18] sm:$0xff] %v4963
      %4972 = vst [vmem:[#allocation7 + $0x20] sm:$0xff] %v4964
      %4973 = vst [vmem:[#allocation7 + $0x28] sm:$0xff] %v4965
      %4974 = vst [vmem:[#allocation7 + $0x30] sm:$0xff] %v4966
      %4975 = vst [vmem:[#allocation7 + $0x38] sm:$0xff] %v4967
      %s4976 = scalar_lea.vmem [#allocation2], 2048
      %v4977 = vld [vmem:[%s4976] sm:$0xff]
      %v4978 = vld [vmem:[%s4976 + $0x8] sm:$0xff]
      %v4979 = vld [vmem:[%s4976 + $0x10] sm:$0xff]
      %v4980 = vld [vmem:[%s4976 + $0x18] sm:$0xff]
      %v4981 = vld [vmem:[%s4976 + $0x20] sm:$0xff]
      %v4982 = vld [vmem:[%s4976 + $0x28] sm:$0xff]
      %v4983 = vld [vmem:[%s4976 + $0x30] sm:$0xff]
      %v4984 = vld [vmem:[%s4976 + $0x38] sm:$0xff]
      %v4985 = vld [vmem:[%s4976 + $0x40] sm:$0xff]
      %v4986 = vld [vmem:[%s4976 + $0x48] sm:$0xff]
      %v4987 = vld [vmem:[%s4976 + $0x50] sm:$0xff]
      %v4988 = vld [vmem:[%s4976 + $0x58] sm:$0xff]
      %v4989 = vld [vmem:[%s4976 + $0x60] sm:$0xff]
      %v4990 = vld [vmem:[%s4976 + $0x68] sm:$0xff]
      %v4991 = vld [vmem:[%s4976 + $0x70] sm:$0xff]
      %v4992 = vld [vmem:[%s4976 + $0x78] sm:$0xff]
      %v4993 = vld [vmem:[%s4976 + $0x80] sm:$0xff]
      %v4994 = vld [vmem:[%s4976 + $0x88] sm:$0xff]
      %v4995 = vld [vmem:[%s4976 + $0x90] sm:$0xff]
      %v4996 = vld [vmem:[%s4976 + $0x98] sm:$0xff]
      %v4997 = vld [vmem:[%s4976 + $0xa0] sm:$0xff]
      %v4998 = vld [vmem:[%s4976 + $0xa8] sm:$0xff]
      %v4999 = vld [vmem:[%s4976 + $0xb0] sm:$0xff]
      %v5000 = vld [vmem:[%s4976 + $0xb8] sm:$0xff]
      %v5001 = vld [vmem:[%s4976 + $0xc0] sm:$0xff]
      %v5002 = vld [vmem:[%s4976 + $0xc8] sm:$0xff]
      %v5003 = vld [vmem:[%s4976 + $0xd0] sm:$0xff]
      %v5004 = vld [vmem:[%s4976 + $0xd8] sm:$0xff]
      %v5005 = vld [vmem:[%s4976 + $0xe0] sm:$0xff]
      %v5006 = vld [vmem:[%s4976 + $0xe8] sm:$0xff]
      %v5007 = vld [vmem:[%s4976 + $0xf0] sm:$0xff]
      %v5008 = vld [vmem:[%s4976 + $0xf8] sm:$0xff]
      %v5009 = vld [vmem:[%s4976 + $0x100] sm:$0xff]
      %v5010 = vld [vmem:[%s4976 + $0x108] sm:$0xff]
      %v5011 = vld [vmem:[%s4976 + $0x110] sm:$0xff]
      %v5012 = vld [vmem:[%s4976 + $0x118] sm:$0xff]
      %v5013 = vld [vmem:[%s4976 + $0x120] sm:$0xff]
      %v5014 = vld [vmem:[%s4976 + $0x128] sm:$0xff]
      %v5015 = vld [vmem:[%s4976 + $0x130] sm:$0xff]
      %v5016 = vld [vmem:[%s4976 + $0x138] sm:$0xff]
      %v5017 = vld [vmem:[%s4976 + $0x140] sm:$0xff]
      %v5018 = vld [vmem:[%s4976 + $0x148] sm:$0xff]
      %v5019 = vld [vmem:[%s4976 + $0x150] sm:$0xff]
      %v5020 = vld [vmem:[%s4976 + $0x158] sm:$0xff]
      %v5021 = vld [vmem:[%s4976 + $0x160] sm:$0xff]
      %v5022 = vld [vmem:[%s4976 + $0x168] sm:$0xff]
      %v5023 = vld [vmem:[%s4976 + $0x170] sm:$0xff]
      %v5024 = vld [vmem:[%s4976 + $0x178] sm:$0xff]
      %v5025 = vld [vmem:[%s4976 + $0x180] sm:$0xff]
      %v5026 = vld [vmem:[%s4976 + $0x188] sm:$0xff]
      %v5027 = vld [vmem:[%s4976 + $0x190] sm:$0xff]
      %v5028 = vld [vmem:[%s4976 + $0x198] sm:$0xff]
      %v5029 = vld [vmem:[%s4976 + $0x1a0] sm:$0xff]
      %v5030 = vld [vmem:[%s4976 + $0x1a8] sm:$0xff]
      %v5031 = vld [vmem:[%s4976 + $0x1b0] sm:$0xff]
      %v5032 = vld [vmem:[%s4976 + $0x1b8] sm:$0xff]
      %v5033 = vld [vmem:[%s4976 + $0x1c0] sm:$0xff]
      %v5034 = vld [vmem:[%s4976 + $0x1c8] sm:$0xff]
      %v5035 = vld [vmem:[%s4976 + $0x1d0] sm:$0xff]
      %v5036 = vld [vmem:[%s4976 + $0x1d8] sm:$0xff]
      %v5037 = vld [vmem:[%s4976 + $0x1e0] sm:$0xff]
      %v5038 = vld [vmem:[%s4976 + $0x1e8] sm:$0xff]
      %v5039 = vld [vmem:[%s4976 + $0x1f0] sm:$0xff]
      %v5040 = vld [vmem:[%s4976 + $0x1f8] sm:$0xff]
      %s5041 = scalar_lea.vmem [#allocation5], 2048
      %v5042 = vld [vmem:[%s5041] sm:$0xff]
      %v5043 = vld [vmem:[%s5041 + $0x8] sm:$0xff]
      %v5044 = vld [vmem:[%s5041 + $0x10] sm:$0xff]
      %v5045 = vld [vmem:[%s5041 + $0x18] sm:$0xff]
      %v5046 = vld [vmem:[%s5041 + $0x20] sm:$0xff]
      %v5047 = vld [vmem:[%s5041 + $0x28] sm:$0xff]
      %v5048 = vld [vmem:[%s5041 + $0x30] sm:$0xff]
      %v5049 = vld [vmem:[%s5041 + $0x38] sm:$0xff]
      %v5050 = vld [vmem:[%s5041 + $0x40] sm:$0xff]
      %v5051 = vld [vmem:[%s5041 + $0x48] sm:$0xff]
      %v5052 = vld [vmem:[%s5041 + $0x50] sm:$0xff]
      %v5053 = vld [vmem:[%s5041 + $0x58] sm:$0xff]
      %v5054 = vld [vmem:[%s5041 + $0x60] sm:$0xff]
      %v5055 = vld [vmem:[%s5041 + $0x68] sm:$0xff]
      %v5056 = vld [vmem:[%s5041 + $0x70] sm:$0xff]
      %v5057 = vld [vmem:[%s5041 + $0x78] sm:$0xff]
      %v5058 = vld [vmem:[%s5041 + $0x80] sm:$0xff]
      %v5059 = vld [vmem:[%s5041 + $0x88] sm:$0xff]
      %v5060 = vld [vmem:[%s5041 + $0x90] sm:$0xff]
      %v5061 = vld [vmem:[%s5041 + $0x98] sm:$0xff]
      %v5062 = vld [vmem:[%s5041 + $0xa0] sm:$0xff]
      %v5063 = vld [vmem:[%s5041 + $0xa8] sm:$0xff]
      %v5064 = vld [vmem:[%s5041 + $0xb0] sm:$0xff]
      %v5065 = vld [vmem:[%s5041 + $0xb8] sm:$0xff]
      %v5066 = vld [vmem:[%s5041 + $0xc0] sm:$0xff]
      %v5067 = vld [vmem:[%s5041 + $0xc8] sm:$0xff]
      %v5068 = vld [vmem:[%s5041 + $0xd0] sm:$0xff]
      %v5069 = vld [vmem:[%s5041 + $0xd8] sm:$0xff]
      %v5070 = vld [vmem:[%s5041 + $0xe0] sm:$0xff]
      %v5071 = vld [vmem:[%s5041 + $0xe8] sm:$0xff]
      %v5072 = vld [vmem:[%s5041 + $0xf0] sm:$0xff]
      %v5073 = vld [vmem:[%s5041 + $0xf8] sm:$0xff]
      %v5074 = vld [vmem:[%s5041 + $0x100] sm:$0xff]
      %v5075 = vld [vmem:[%s5041 + $0x108] sm:$0xff]
      %v5076 = vld [vmem:[%s5041 + $0x110] sm:$0xff]
      %v5077 = vld [vmem:[%s5041 + $0x118] sm:$0xff]
      %v5078 = vld [vmem:[%s5041 + $0x120] sm:$0xff]
      %v5079 = vld [vmem:[%s5041 + $0x128] sm:$0xff]
      %v5080 = vld [vmem:[%s5041 + $0x130] sm:$0xff]
      %v5081 = vld [vmem:[%s5041 + $0x138] sm:$0xff]
      %v5082 = vld [vmem:[%s5041 + $0x140] sm:$0xff]
      %v5083 = vld [vmem:[%s5041 + $0x148] sm:$0xff]
      %v5084 = vld [vmem:[%s5041 + $0x150] sm:$0xff]
      %v5085 = vld [vmem:[%s5041 + $0x158] sm:$0xff]
      %v5086 = vld [vmem:[%s5041 + $0x160] sm:$0xff]
      %v5087 = vld [vmem:[%s5041 + $0x168] sm:$0xff]
      %v5088 = vld [vmem:[%s5041 + $0x170] sm:$0xff]
      %v5089 = vld [vmem:[%s5041 + $0x178] sm:$0xff]
      %v5090 = vld [vmem:[%s5041 + $0x180] sm:$0xff]
      %v5091 = vld [vmem:[%s5041 + $0x188] sm:$0xff]
      %v5092 = vld [vmem:[%s5041 + $0x190] sm:$0xff]
      %v5093 = vld [vmem:[%s5041 + $0x198] sm:$0xff]
      %v5094 = vld [vmem:[%s5041 + $0x1a0] sm:$0xff]
      %v5095 = vld [vmem:[%s5041 + $0x1a8] sm:$0xff]
      %v5096 = vld [vmem:[%s5041 + $0x1b0] sm:$0xff]
      %v5097 = vld [vmem:[%s5041 + $0x1b8] sm:$0xff]
      %v5098 = vld [vmem:[%s5041 + $0x1c0] sm:$0xff]
      %v5099 = vld [vmem:[%s5041 + $0x1c8] sm:$0xff]
      %v5100 = vld [vmem:[%s5041 + $0x1d0] sm:$0xff]
      %v5101 = vld [vmem:[%s5041 + $0x1d8] sm:$0xff]
      %v5102 = vld [vmem:[%s5041 + $0x1e0] sm:$0xff]
      %v5103 = vld [vmem:[%s5041 + $0x1e8] sm:$0xff]
      %v5104 = vld [vmem:[%s5041 + $0x1f0] sm:$0xff]
      %v5105 = vld [vmem:[%s5041 + $0x1f8] sm:$0xff]
      %v5106 = vsub.f32 %v4977, %v5042
      %v5107 = vsub.f32 %v4978, %v5043
      %v5108 = vsub.f32 %v4979, %v5044
      %v5109 = vsub.f32 %v4980, %v5045
      %v5110 = vsub.f32 %v4981, %v5046
      %v5111 = vsub.f32 %v4982, %v5047
      %v5112 = vsub.f32 %v4983, %v5048
      %v5113 = vsub.f32 %v4984, %v5049
      %v5114 = vsub.f32 %v4985, %v5050
      %v5115 = vsub.f32 %v4986, %v5051
      %v5116 = vsub.f32 %v4987, %v5052
      %v5117 = vsub.f32 %v4988, %v5053
      %v5118 = vsub.f32 %v4989, %v5054
      %v5119 = vsub.f32 %v4990, %v5055
      %v5120 = vsub.f32 %v4991, %v5056
      %v5121 = vsub.f32 %v4992, %v5057
      %v5122 = vsub.f32 %v4993, %v5058
      %v5123 = vsub.f32 %v4994, %v5059
      %v5124 = vsub.f32 %v4995, %v5060
      %v5125 = vsub.f32 %v4996, %v5061
      %v5126 = vsub.f32 %v4997, %v5062
      %v5127 = vsub.f32 %v4998, %v5063
      %v5128 = vsub.f32 %v4999, %v5064
      %v5129 = vsub.f32 %v5000, %v5065
      %v5130 = vsub.f32 %v5001, %v5066
      %v5131 = vsub.f32 %v5002, %v5067
      %v5132 = vsub.f32 %v5003, %v5068
      %v5133 = vsub.f32 %v5004, %v5069
      %v5134 = vsub.f32 %v5005, %v5070
      %v5135 = vsub.f32 %v5006, %v5071
      %v5136 = vsub.f32 %v5007, %v5072
      %v5137 = vsub.f32 %v5008, %v5073
      %v5138 = vsub.f32 %v5009, %v5074
      %v5139 = vsub.f32 %v5010, %v5075
      %v5140 = vsub.f32 %v5011, %v5076
      %v5141 = vsub.f32 %v5012, %v5077
      %v5142 = vsub.f32 %v5013, %v5078
      %v5143 = vsub.f32 %v5014, %v5079
      %v5144 = vsub.f32 %v5015, %v5080
      %v5145 = vsub.f32 %v5016, %v5081
      %v5146 = vsub.f32 %v5017, %v5082
      %v5147 = vsub.f32 %v5018, %v5083
      %v5148 = vsub.f32 %v5019, %v5084
      %v5149 = vsub.f32 %v5020, %v5085
      %v5150 = vsub.f32 %v5021, %v5086
      %v5151 = vsub.f32 %v5022, %v5087
      %v5152 = vsub.f32 %v5023, %v5088
      %v5153 = vsub.f32 %v5024, %v5089
      %v5154 = vsub.f32 %v5025, %v5090
      %v5155 = vsub.f32 %v5026, %v5091
      %v5156 = vsub.f32 %v5027, %v5092
      %v5157 = vsub.f32 %v5028, %v5093
      %v5158 = vsub.f32 %v5029, %v5094
      %v5159 = vsub.f32 %v5030, %v5095
      %v5160 = vsub.f32 %v5031, %v5096
      %v5161 = vsub.f32 %v5032, %v5097
      %v5162 = vsub.f32 %v5033, %v5098
      %v5163 = vsub.f32 %v5034, %v5099
      %v5164 = vsub.f32 %v5035, %v5100
      %v5165 = vsub.f32 %v5036, %v5101
      %v5166 = vsub.f32 %v5037, %v5102
      %v5167 = vsub.f32 %v5038, %v5103
      %v5168 = vsub.f32 %v5039, %v5104
      %v5169 = vsub.f32 %v5040, %v5105
      %v5170 = vmul.f32 %v5106, %v5106
      %v5171 = vmul.f32 %v5107, %v5107
      %v5172 = vmul.f32 %v5108, %v5108
      %v5173 = vmul.f32 %v5109, %v5109
      %v5174 = vmul.f32 %v5110, %v5110
      %v5175 = vmul.f32 %v5111, %v5111
      %v5176 = vmul.f32 %v5112, %v5112
      %v5177 = vmul.f32 %v5113, %v5113
      %v5178 = vmul.f32 %v5114, %v5114
      %v5179 = vmul.f32 %v5115, %v5115
      %v5180 = vmul.f32 %v5116, %v5116
      %v5181 = vmul.f32 %v5117, %v5117
      %v5182 = vmul.f32 %v5118, %v5118
      %v5183 = vmul.f32 %v5119, %v5119
      %v5184 = vmul.f32 %v5120, %v5120
      %v5185 = vmul.f32 %v5121, %v5121
      %v5186 = vmul.f32 %v5122, %v5122
      %v5187 = vmul.f32 %v5123, %v5123
      %v5188 = vmul.f32 %v5124, %v5124
      %v5189 = vmul.f32 %v5125, %v5125
      %v5190 = vmul.f32 %v5126, %v5126
      %v5191 = vmul.f32 %v5127, %v5127
      %v5192 = vmul.f32 %v5128, %v5128
      %v5193 = vmul.f32 %v5129, %v5129
      %v5194 = vmul.f32 %v5130, %v5130
      %v5195 = vmul.f32 %v5131, %v5131
      %v5196 = vmul.f32 %v5132, %v5132
      %v5197 = vmul.f32 %v5133, %v5133
      %v5198 = vmul.f32 %v5134, %v5134
      %v5199 = vmul.f32 %v5135, %v5135
      %v5200 = vmul.f32 %v5136, %v5136
      %v5201 = vmul.f32 %v5137, %v5137
      %v5202 = vmul.f32 %v5138, %v5138
      %v5203 = vmul.f32 %v5139, %v5139
      %v5204 = vmul.f32 %v5140, %v5140
      %v5205 = vmul.f32 %v5141, %v5141
      %v5206 = vmul.f32 %v5142, %v5142
      %v5207 = vmul.f32 %v5143, %v5143
      %v5208 = vmul.f32 %v5144, %v5144
      %v5209 = vmul.f32 %v5145, %v5145
      %v5210 = vmul.f32 %v5146, %v5146
      %v5211 = vmul.f32 %v5147, %v5147
      %v5212 = vmul.f32 %v5148, %v5148
      %v5213 = vmul.f32 %v5149, %v5149
      %v5214 = vmul.f32 %v5150, %v5150
      %v5215 = vmul.f32 %v5151, %v5151
      %v5216 = vmul.f32 %v5152, %v5152
      %v5217 = vmul.f32 %v5153, %v5153
      %v5218 = vmul.f32 %v5154, %v5154
      %v5219 = vmul.f32 %v5155, %v5155
      %v5220 = vmul.f32 %v5156, %v5156
      %v5221 = vmul.f32 %v5157, %v5157
      %v5222 = vmul.f32 %v5158, %v5158
      %v5223 = vmul.f32 %v5159, %v5159
      %v5224 = vmul.f32 %v5160, %v5160
      %v5225 = vmul.f32 %v5161, %v5161
      %v5226 = vmul.f32 %v5162, %v5162
      %v5227 = vmul.f32 %v5163, %v5163
      %v5228 = vmul.f32 %v5164, %v5164
      %v5229 = vmul.f32 %v5165, %v5165
      %v5230 = vmul.f32 %v5166, %v5166
      %v5231 = vmul.f32 %v5167, %v5167
      %v5232 = vmul.f32 %v5168, %v5168
      %v5233 = vmul.f32 %v5169, %v5169
      %s5234 = sadd.s32 %s73, 2048
      %v5235 = vstv %s5234
      %v5236 = vadd.s32 %v5235, %v3043
      %v5237 = vadd.s32 %v5235, %v3044
      %v5238 = vadd.s32 %v5235, %v3045
      %v5239 = vadd.s32 %v5235, %v3046
      %v5240 = vadd.s32 %v5235, %v3047
      %v5241 = vadd.s32 %v5235, %v3048
      %v5242 = vadd.s32 %v5235, %v3049
      %v5243 = vadd.s32 %v5235, %v3050
      %v5244 = vadd.s32 %v5235, %v3051
      %v5245 = vadd.s32 %v5235, %v3052
      %v5246 = vadd.s32 %v5235, %v3053
      %v5247 = vadd.s32 %v5235, %v3054
      %v5248 = vadd.s32 %v5235, %v3055
      %v5249 = vadd.s32 %v5235, %v3056
      %v5250 = vadd.s32 %v5235, %v3057
      %v5251 = vadd.s32 %v5235, %v3058
      %v5252 = vadd.s32 %v5235, %v3059
      %v5253 = vadd.s32 %v5235, %v3060
      %v5254 = vadd.s32 %v5235, %v3061
      %v5255 = vadd.s32 %v5235, %v3062
      %v5256 = vadd.s32 %v5235, %v3063
      %v5257 = vadd.s32 %v5235, %v3064
      %v5258 = vadd.s32 %v5235, %v3065
      %v5259 = vadd.s32 %v5235, %v3066
      %v5260 = vadd.s32 %v5235, %v3067
      %v5261 = vadd.s32 %v5235, %v3068
      %v5262 = vadd.s32 %v5235, %v3069
      %v5263 = vadd.s32 %v5235, %v3070
      %v5264 = vadd.s32 %v5235, %v3071
      %v5265 = vadd.s32 %v5235, %v3072
      %v5266 = vadd.s32 %v5235, %v3073
      %v5267 = vadd.s32 %v5235, %v3074
      %v5268 = vadd.s32 %v5235, %v3075
      %v5269 = vadd.s32 %v5235, %v3076
      %v5270 = vadd.s32 %v5235, %v3077
      %v5271 = vadd.s32 %v5235, %v3078
      %v5272 = vadd.s32 %v5235, %v3079
      %v5273 = vadd.s32 %v5235, %v3080
      %v5274 = vadd.s32 %v5235, %v3081
      %v5275 = vadd.s32 %v5235, %v3082
      %v5276 = vadd.s32 %v5235, %v3083
      %v5277 = vadd.s32 %v5235, %v3084
      %v5278 = vadd.s32 %v5235, %v3085
      %v5279 = vadd.s32 %v5235, %v3086
      %v5280 = vadd.s32 %v5235, %v3087
      %v5281 = vadd.s32 %v5235, %v3088
      %v5282 = vadd.s32 %v5235, %v3089
      %v5283 = vadd.s32 %v5235, %v3090
      %v5284 = vadd.s32 %v5235, %v3091
      %v5285 = vadd.s32 %v5235, %v3092
      %v5286 = vadd.s32 %v5235, %v3093
      %v5287 = vadd.s32 %v5235, %v3094
      %v5288 = vadd.s32 %v5235, %v3095
      %v5289 = vadd.s32 %v5235, %v3096
      %v5290 = vadd.s32 %v5235, %v3097
      %v5291 = vadd.s32 %v5235, %v3098
      %v5292 = vadd.s32 %v5235, %v3099
      %v5293 = vadd.s32 %v5235, %v3100
      %v5294 = vadd.s32 %v5235, %v3101
      %v5295 = vadd.s32 %v5235, %v3102
      %v5296 = vadd.s32 %v5235, %v3103
      %v5297 = vadd.s32 %v5235, %v3104
      %v5298 = vadd.s32 %v5235, %v3105
      %v5299 = vadd.s32 %v5235, %v3106
      %vm5300 = vcmp.lt.s32.totalorder %v5236, 4096
      %vm5301 = vcmp.lt.s32.totalorder %v5237, 4096
      %vm5302 = vcmp.lt.s32.totalorder %v5238, 4096
      %vm5303 = vcmp.lt.s32.totalorder %v5239, 4096
      %vm5304 = vcmp.lt.s32.totalorder %v5240, 4096
      %vm5305 = vcmp.lt.s32.totalorder %v5241, 4096
      %vm5306 = vcmp.lt.s32.totalorder %v5242, 4096
      %vm5307 = vcmp.lt.s32.totalorder %v5243, 4096
      %vm5308 = vcmp.lt.s32.totalorder %v5244, 4096
      %vm5309 = vcmp.lt.s32.totalorder %v5245, 4096
      %vm5310 = vcmp.lt.s32.totalorder %v5246, 4096
      %vm5311 = vcmp.lt.s32.totalorder %v5247, 4096
      %vm5312 = vcmp.lt.s32.totalorder %v5248, 4096
      %vm5313 = vcmp.lt.s32.totalorder %v5249, 4096
      %vm5314 = vcmp.lt.s32.totalorder %v5250, 4096
      %vm5315 = vcmp.lt.s32.totalorder %v5251, 4096
      %vm5316 = vcmp.lt.s32.totalorder %v5252, 4096
      %vm5317 = vcmp.lt.s32.totalorder %v5253, 4096
      %vm5318 = vcmp.lt.s32.totalorder %v5254, 4096
      %vm5319 = vcmp.lt.s32.totalorder %v5255, 4096
      %vm5320 = vcmp.lt.s32.totalorder %v5256, 4096
      %vm5321 = vcmp.lt.s32.totalorder %v5257, 4096
      %vm5322 = vcmp.lt.s32.totalorder %v5258, 4096
      %vm5323 = vcmp.lt.s32.totalorder %v5259, 4096
      %vm5324 = vcmp.lt.s32.totalorder %v5260, 4096
      %vm5325 = vcmp.lt.s32.totalorder %v5261, 4096
      %vm5326 = vcmp.lt.s32.totalorder %v5262, 4096
      %vm5327 = vcmp.lt.s32.totalorder %v5263, 4096
      %vm5328 = vcmp.lt.s32.totalorder %v5264, 4096
      %vm5329 = vcmp.lt.s32.totalorder %v5265, 4096
      %vm5330 = vcmp.lt.s32.totalorder %v5266, 4096
      %vm5331 = vcmp.lt.s32.totalorder %v5267, 4096
      %vm5332 = vcmp.lt.s32.totalorder %v5268, 4096
      %vm5333 = vcmp.lt.s32.totalorder %v5269, 4096
      %vm5334 = vcmp.lt.s32.totalorder %v5270, 4096
      %vm5335 = vcmp.lt.s32.totalorder %v5271, 4096
      %vm5336 = vcmp.lt.s32.totalorder %v5272, 4096
      %vm5337 = vcmp.lt.s32.totalorder %v5273, 4096
      %vm5338 = vcmp.lt.s32.totalorder %v5274, 4096
      %vm5339 = vcmp.lt.s32.totalorder %v5275, 4096
      %vm5340 = vcmp.lt.s32.totalorder %v5276, 4096
      %vm5341 = vcmp.lt.s32.totalorder %v5277, 4096
      %vm5342 = vcmp.lt.s32.totalorder %v5278, 4096
      %vm5343 = vcmp.lt.s32.totalorder %v5279, 4096
      %vm5344 = vcmp.lt.s32.totalorder %v5280, 4096
      %vm5345 = vcmp.lt.s32.totalorder %v5281, 4096
      %vm5346 = vcmp.lt.s32.totalorder %v5282, 4096
      %vm5347 = vcmp.lt.s32.totalorder %v5283, 4096
      %vm5348 = vcmp.lt.s32.totalorder %v5284, 4096
      %vm5349 = vcmp.lt.s32.totalorder %v5285, 4096
      %vm5350 = vcmp.lt.s32.totalorder %v5286, 4096
      %vm5351 = vcmp.lt.s32.totalorder %v5287, 4096
      %vm5352 = vcmp.lt.s32.totalorder %v5288, 4096
      %vm5353 = vcmp.lt.s32.totalorder %v5289, 4096
      %vm5354 = vcmp.lt.s32.totalorder %v5290, 4096
      %vm5355 = vcmp.lt.s32.totalorder %v5291, 4096
      %vm5356 = vcmp.lt.s32.totalorder %v5292, 4096
      %vm5357 = vcmp.lt.s32.totalorder %v5293, 4096
      %vm5358 = vcmp.lt.s32.totalorder %v5294, 4096
      %vm5359 = vcmp.lt.s32.totalorder %v5295, 4096
      %vm5360 = vcmp.lt.s32.totalorder %v5296, 4096
      %vm5361 = vcmp.lt.s32.totalorder %v5297, 4096
      %vm5362 = vcmp.lt.s32.totalorder %v5298, 4096
      %vm5363 = vcmp.lt.s32.totalorder %v5299, 4096
      %v5364 = vsel %vm5300, %v5170, 0.0
      %v5365 = vsel %vm5301, %v5171, 0.0
      %v5366 = vsel %vm5302, %v5172, 0.0
      %v5367 = vsel %vm5303, %v5173, 0.0
      %v5368 = vsel %vm5304, %v5174, 0.0
      %v5369 = vsel %vm5305, %v5175, 0.0
      %v5370 = vsel %vm5306, %v5176, 0.0
      %v5371 = vsel %vm5307, %v5177, 0.0
      %v5372 = vsel %vm5308, %v5178, 0.0
      %v5373 = vsel %vm5309, %v5179, 0.0
      %v5374 = vsel %vm5310, %v5180, 0.0
      %v5375 = vsel %vm5311, %v5181, 0.0
      %v5376 = vsel %vm5312, %v5182, 0.0
      %v5377 = vsel %vm5313, %v5183, 0.0
      %v5378 = vsel %vm5314, %v5184, 0.0
      %v5379 = vsel %vm5315, %v5185, 0.0
      %v5380 = vsel %vm5316, %v5186, 0.0
      %v5381 = vsel %vm5317, %v5187, 0.0
      %v5382 = vsel %vm5318, %v5188, 0.0
      %v5383 = vsel %vm5319, %v5189, 0.0
      %v5384 = vsel %vm5320, %v5190, 0.0
      %v5385 = vsel %vm5321, %v5191, 0.0
      %v5386 = vsel %vm5322, %v5192, 0.0
      %v5387 = vsel %vm5323, %v5193, 0.0
      %v5388 = vsel %vm5324, %v5194, 0.0
      %v5389 = vsel %vm5325, %v5195, 0.0
      %v5390 = vsel %vm5326, %v5196, 0.0
      %v5391 = vsel %vm5327, %v5197, 0.0
      %v5392 = vsel %vm5328, %v5198, 0.0
      %v5393 = vsel %vm5329, %v5199, 0.0
      %v5394 = vsel %vm5330, %v5200, 0.0
      %v5395 = vsel %vm5331, %v5201, 0.0
      %v5396 = vsel %vm5332, %v5202, 0.0
      %v5397 = vsel %vm5333, %v5203, 0.0
      %v5398 = vsel %vm5334, %v5204, 0.0
      %v5399 = vsel %vm5335, %v5205, 0.0
      %v5400 = vsel %vm5336, %v5206, 0.0
      %v5401 = vsel %vm5337, %v5207, 0.0
      %v5402 = vsel %vm5338, %v5208, 0.0
      %v5403 = vsel %vm5339, %v5209, 0.0
      %v5404 = vsel %vm5340, %v5210, 0.0
      %v5405 = vsel %vm5341, %v5211, 0.0
      %v5406 = vsel %vm5342, %v5212, 0.0
      %v5407 = vsel %vm5343, %v5213, 0.0
      %v5408 = vsel %vm5344, %v5214, 0.0
      %v5409 = vsel %vm5345, %v5215, 0.0
      %v5410 = vsel %vm5346, %v5216, 0.0
      %v5411 = vsel %vm5347, %v5217, 0.0
      %v5412 = vsel %vm5348, %v5218, 0.0
      %v5413 = vsel %vm5349, %v5219, 0.0
      %v5414 = vsel %vm5350, %v5220, 0.0
      %v5415 = vsel %vm5351, %v5221, 0.0
      %v5416 = vsel %vm5352, %v5222, 0.0
      %v5417 = vsel %vm5353, %v5223, 0.0
      %v5418 = vsel %vm5354, %v5224, 0.0
      %v5419 = vsel %vm5355, %v5225, 0.0
      %v5420 = vsel %vm5356, %v5226, 0.0
      %v5421 = vsel %vm5357, %v5227, 0.0
      %v5422 = vsel %vm5358, %v5228, 0.0
      %v5423 = vsel %vm5359, %v5229, 0.0
      %v5424 = vsel %vm5360, %v5230, 0.0
      %v5425 = vsel %vm5361, %v5231, 0.0
      %v5426 = vsel %vm5362, %v5232, 0.0
      %v5427 = vsel %vm5363, %v5233, 0.0
      %v5428 = vld [vmem:[#allocation7] sm:$0xff]
      %v5429 = vld [vmem:[#allocation7 + $0x8] sm:$0xff]
      %v5430 = vld [vmem:[#allocation7 + $0x10] sm:$0xff]
      %v5431 = vld [vmem:[#allocation7 + $0x18] sm:$0xff]
      %v5432 = vld [vmem:[#allocation7 + $0x20] sm:$0xff]
      %v5433 = vld [vmem:[#allocation7 + $0x28] sm:$0xff]
      %v5434 = vld [vmem:[#allocation7 + $0x30] sm:$0xff]
      %v5435 = vld [vmem:[#allocation7 + $0x38] sm:$0xff]
      %v5436 = vadd.f32 %v5364, %v5372
      %v5437 = vadd.f32 %v5436, %v5380
      %v5438 = vadd.f32 %v5437, %v5388
      %v5439 = vadd.f32 %v5438, %v5396
      %v5440 = vadd.f32 %v5439, %v5404
      %v5441 = vadd.f32 %v5440, %v5412
      %v5442 = vadd.f32 %v5441, %v5420
      %v5443 = vadd.f32 %v5365, %v5373
      %v5444 = vadd.f32 %v5443, %v5381
      %v5445 = vadd.f32 %v5444, %v5389
      %v5446 = vadd.f32 %v5445, %v5397
      %v5447 = vadd.f32 %v5446, %v5405
      %v5448 = vadd.f32 %v5447, %v5413
      %v5449 = vadd.f32 %v5448, %v5421
      %v5450 = vadd.f32 %v5366, %v5374
      %v5451 = vadd.f32 %v5450, %v5382
      %v5452 = vadd.f32 %v5451, %v5390
      %v5453 = vadd.f32 %v5452, %v5398
      %v5454 = vadd.f32 %v5453, %v5406
      %v5455 = vadd.f32 %v5454, %v5414
      %v5456 = vadd.f32 %v5455, %v5422
      %v5457 = vadd.f32 %v5367, %v5375
      %v5458 = vadd.f32 %v5457, %v5383
      %v5459 = vadd.f32 %v5458, %v5391
      %v5460 = vadd.f32 %v5459, %v5399
      %v5461 = vadd.f32 %v5460, %v5407
      %v5462 = vadd.f32 %v5461, %v5415
      %v5463 = vadd.f32 %v5462, %v5423
      %v5464 = vadd.f32 %v5368, %v5376
      %v5465 = vadd.f32 %v5464, %v5384
      %v5466 = vadd.f32 %v5465, %v5392
      %v5467 = vadd.f32 %v5466, %v5400
      %v5468 = vadd.f32 %v5467, %v5408
      %v5469 = vadd.f32 %v5468, %v5416
      %v5470 = vadd.f32 %v5469, %v5424
      %v5471 = vadd.f32 %v5369, %v5377
      %v5472 = vadd.f32 %v5471, %v5385
      %v5473 = vadd.f32 %v5472, %v5393
      %v5474 = vadd.f32 %v5473, %v5401
      %v5475 = vadd.f32 %v5474, %v5409
      %v5476 = vadd.f32 %v5475, %v5417
      %v5477 = vadd.f32 %v5476, %v5425
      %v5478 = vadd.f32 %v5370, %v5378
      %v5479 = vadd.f32 %v5478, %v5386
      %v5480 = vadd.f32 %v5479, %v5394
      %v5481 = vadd.f32 %v5480, %v5402
      %v5482 = vadd.f32 %v5481, %v5410
      %v5483 = vadd.f32 %v5482, %v5418
      %v5484 = vadd.f32 %v5483, %v5426
      %v5485 = vadd.f32 %v5371, %v5379
      %v5486 = vadd.f32 %v5485, %v5387
      %v5487 = vadd.f32 %v5486, %v5395
      %v5488 = vadd.f32 %v5487, %v5403
      %v5489 = vadd.f32 %v5488, %v5411
      %v5490 = vadd.f32 %v5489, %v5419
      %v5491 = vadd.f32 %v5490, %v5427
      %v5492 = vadd.f32 %v5428, %v5442
      %v5493 = vadd.f32 %v5429, %v5449
      %v5494 = vadd.f32 %v5430, %v5456
      %v5495 = vadd.f32 %v5431, %v5463
      %v5496 = vadd.f32 %v5432, %v5470
      %v5497 = vadd.f32 %v5433, %v5477
      %v5498 = vadd.f32 %v5434, %v5484
      %v5499 = vadd.f32 %v5435, %v5491
      %5500 = vst [vmem:[#allocation7] sm:$0xff] %v5492
      %5501 = vst [vmem:[#allocation7 + $0x8] sm:$0xff] %v5493
      %5502 = vst [vmem:[#allocation7 + $0x10] sm:$0xff] %v5494
      %5503 = vst [vmem:[#allocation7 + $0x18] sm:$0xff] %v5495
      %5504 = vst [vmem:[#allocation7 + $0x20] sm:$0xff] %v5496
      %5505 = vst [vmem:[#allocation7 + $0x28] sm:$0xff] %v5497
      %5506 = vst [vmem:[#allocation7 + $0x30] sm:$0xff] %v5498
      %5507 = vst [vmem:[#allocation7 + $0x38] sm:$0xff] %v5499
      %s5508 = scalar_lea.vmem [#allocation2], 2560
      %v5509 = vld [vmem:[%s5508] sm:$0xff]
      %v5510 = vld [vmem:[%s5508 + $0x8] sm:$0xff]
      %v5511 = vld [vmem:[%s5508 + $0x10] sm:$0xff]
      %v5512 = vld [vmem:[%s5508 + $0x18] sm:$0xff]
      %v5513 = vld [vmem:[%s5508 + $0x20] sm:$0xff]
      %v5514 = vld [vmem:[%s5508 + $0x28] sm:$0xff]
      %v5515 = vld [vmem:[%s5508 + $0x30] sm:$0xff]
      %v5516 = vld [vmem:[%s5508 + $0x38] sm:$0xff]
      %v5517 = vld [vmem:[%s5508 + $0x40] sm:$0xff]
      %v5518 = vld [vmem:[%s5508 + $0x48] sm:$0xff]
      %v5519 = vld [vmem:[%s5508 + $0x50] sm:$0xff]
      %v5520 = vld [vmem:[%s5508 + $0x58] sm:$0xff]
      %v5521 = vld [vmem:[%s5508 + $0x60] sm:$0xff]
      %v5522 = vld [vmem:[%s5508 + $0x68] sm:$0xff]
      %v5523 = vld [vmem:[%s5508 + $0x70] sm:$0xff]
      %v5524 = vld [vmem:[%s5508 + $0x78] sm:$0xff]
      %v5525 = vld [vmem:[%s5508 + $0x80] sm:$0xff]
      %v5526 = vld [vmem:[%s5508 + $0x88] sm:$0xff]
      %v5527 = vld [vmem:[%s5508 + $0x90] sm:$0xff]
      %v5528 = vld [vmem:[%s5508 + $0x98] sm:$0xff]
      %v5529 = vld [vmem:[%s5508 + $0xa0] sm:$0xff]
      %v5530 = vld [vmem:[%s5508 + $0xa8] sm:$0xff]
      %v5531 = vld [vmem:[%s5508 + $0xb0] sm:$0xff]
      %v5532 = vld [vmem:[%s5508 + $0xb8] sm:$0xff]
      %v5533 = vld [vmem:[%s5508 + $0xc0] sm:$0xff]
      %v5534 = vld [vmem:[%s5508 + $0xc8] sm:$0xff]
      %v5535 = vld [vmem:[%s5508 + $0xd0] sm:$0xff]
      %v5536 = vld [vmem:[%s5508 + $0xd8] sm:$0xff]
      %v5537 = vld [vmem:[%s5508 + $0xe0] sm:$0xff]
      %v5538 = vld [vmem:[%s5508 + $0xe8] sm:$0xff]
      %v5539 = vld [vmem:[%s5508 + $0xf0] sm:$0xff]
      %v5540 = vld [vmem:[%s5508 + $0xf8] sm:$0xff]
      %v5541 = vld [vmem:[%s5508 + $0x100] sm:$0xff]
      %v5542 = vld [vmem:[%s5508 + $0x108] sm:$0xff]
      %v5543 = vld [vmem:[%s5508 + $0x110] sm:$0xff]
      %v5544 = vld [vmem:[%s5508 + $0x118] sm:$0xff]
      %v5545 = vld [vmem:[%s5508 + $0x120] sm:$0xff]
      %v5546 = vld [vmem:[%s5508 + $0x128] sm:$0xff]
      %v5547 = vld [vmem:[%s5508 + $0x130] sm:$0xff]
      %v5548 = vld [vmem:[%s5508 + $0x138] sm:$0xff]
      %v5549 = vld [vmem:[%s5508 + $0x140] sm:$0xff]
      %v5550 = vld [vmem:[%s5508 + $0x148] sm:$0xff]
      %v5551 = vld [vmem:[%s5508 + $0x150] sm:$0xff]
      %v5552 = vld [vmem:[%s5508 + $0x158] sm:$0xff]
      %v5553 = vld [vmem:[%s5508 + $0x160] sm:$0xff]
      %v5554 = vld [vmem:[%s5508 + $0x168] sm:$0xff]
      %v5555 = vld [vmem:[%s5508 + $0x170] sm:$0xff]
      %v5556 = vld [vmem:[%s5508 + $0x178] sm:$0xff]
      %v5557 = vld [vmem:[%s5508 + $0x180] sm:$0xff]
      %v5558 = vld [vmem:[%s5508 + $0x188] sm:$0xff]
      %v5559 = vld [vmem:[%s5508 + $0x190] sm:$0xff]
      %v5560 = vld [vmem:[%s5508 + $0x198] sm:$0xff]
      %v5561 = vld [vmem:[%s5508 + $0x1a0] sm:$0xff]
      %v5562 = vld [vmem:[%s5508 + $0x1a8] sm:$0xff]
      %v5563 = vld [vmem:[%s5508 + $0x1b0] sm:$0xff]
      %v5564 = vld [vmem:[%s5508 + $0x1b8] sm:$0xff]
      %v5565 = vld [vmem:[%s5508 + $0x1c0] sm:$0xff]
      %v5566 = vld [vmem:[%s5508 + $0x1c8] sm:$0xff]
      %v5567 = vld [vmem:[%s5508 + $0x1d0] sm:$0xff]
      %v5568 = vld [vmem:[%s5508 + $0x1d8] sm:$0xff]
      %v5569 = vld [vmem:[%s5508 + $0x1e0] sm:$0xff]
      %v5570 = vld [vmem:[%s5508 + $0x1e8] sm:$0xff]
      %v5571 = vld [vmem:[%s5508 + $0x1f0] sm:$0xff]
      %v5572 = vld [vmem:[%s5508 + $0x1f8] sm:$0xff]
      %s5573 = scalar_lea.vmem [#allocation5], 2560
      %v5574 = vld [vmem:[%s5573] sm:$0xff]
      %v5575 = vld [vmem:[%s5573 + $0x8] sm:$0xff]
      %v5576 = vld [vmem:[%s5573 + $0x10] sm:$0xff]
      %v5577 = vld [vmem:[%s5573 + $0x18] sm:$0xff]
      %v5578 = vld [vmem:[%s5573 + $0x20] sm:$0xff]
      %v5579 = vld [vmem:[%s5573 + $0x28] sm:$0xff]
      %v5580 = vld [vmem:[%s5573 + $0x30] sm:$0xff]
      %v5581 = vld [vmem:[%s5573 + $0x38] sm:$0xff]
      %v5582 = vld [vmem:[%s5573 + $0x40] sm:$0xff]
      %v5583 = vld [vmem:[%s5573 + $0x48] sm:$0xff]
      %v5584 = vld [vmem:[%s5573 + $0x50] sm:$0xff]
      %v5585 = vld [vmem:[%s5573 + $0x58] sm:$0xff]
      %v5586 = vld [vmem:[%s5573 + $0x60] sm:$0xff]
      %v5587 = vld [vmem:[%s5573 + $0x68] sm:$0xff]
      %v5588 = vld [vmem:[%s5573 + $0x70] sm:$0xff]
      %v5589 = vld [vmem:[%s5573 + $0x78] sm:$0xff]
      %v5590 = vld [vmem:[%s5573 + $0x80] sm:$0xff]
      %v5591 = vld [vmem:[%s5573 + $0x88] sm:$0xff]
      %v5592 = vld [vmem:[%s5573 + $0x90] sm:$0xff]
      %v5593 = vld [vmem:[%s5573 + $0x98] sm:$0xff]
      %v5594 = vld [vmem:[%s5573 + $0xa0] sm:$0xff]
      %v5595 = vld [vmem:[%s5573 + $0xa8] sm:$0xff]
      %v5596 = vld [vmem:[%s5573 + $0xb0] sm:$0xff]
      %v5597 = vld [vmem:[%s5573 + $0xb8] sm:$0xff]
      %v5598 = vld [vmem:[%s5573 + $0xc0] sm:$0xff]
      %v5599 = vld [vmem:[%s5573 + $0xc8] sm:$0xff]
      %v5600 = vld [vmem:[%s5573 + $0xd0] sm:$0xff]
      %v5601 = vld [vmem:[%s5573 + $0xd8] sm:$0xff]
      %v5602 = vld [vmem:[%s5573 + $0xe0] sm:$0xff]
      %v5603 = vld [vmem:[%s5573 + $0xe8] sm:$0xff]
      %v5604 = vld [vmem:[%s5573 + $0xf0] sm:$0xff]
      %v5605 = vld [vmem:[%s5573 + $0xf8] sm:$0xff]
      %v5606 = vld [vmem:[%s5573 + $0x100] sm:$0xff]
      %v5607 = vld [vmem:[%s5573 + $0x108] sm:$0xff]
      %v5608 = vld [vmem:[%s5573 + $0x110] sm:$0xff]
      %v5609 = vld [vmem:[%s5573 + $0x118] sm:$0xff]
      %v5610 = vld [vmem:[%s5573 + $0x120] sm:$0xff]
      %v5611 = vld [vmem:[%s5573 + $0x128] sm:$0xff]
      %v5612 = vld [vmem:[%s5573 + $0x130] sm:$0xff]
      %v5613 = vld [vmem:[%s5573 + $0x138] sm:$0xff]
      %v5614 = vld [vmem:[%s5573 + $0x140] sm:$0xff]
      %v5615 = vld [vmem:[%s5573 + $0x148] sm:$0xff]
      %v5616 = vld [vmem:[%s5573 + $0x150] sm:$0xff]
      %v5617 = vld [vmem:[%s5573 + $0x158] sm:$0xff]
      %v5618 = vld [vmem:[%s5573 + $0x160] sm:$0xff]
      %v5619 = vld [vmem:[%s5573 + $0x168] sm:$0xff]
      %v5620 = vld [vmem:[%s5573 + $0x170] sm:$0xff]
      %v5621 = vld [vmem:[%s5573 + $0x178] sm:$0xff]
      %v5622 = vld [vmem:[%s5573 + $0x180] sm:$0xff]
      %v5623 = vld [vmem:[%s5573 + $0x188] sm:$0xff]
      %v5624 = vld [vmem:[%s5573 + $0x190] sm:$0xff]
      %v5625 = vld [vmem:[%s5573 + $0x198] sm:$0xff]
      %v5626 = vld [vmem:[%s5573 + $0x1a0] sm:$0xff]
      %v5627 = vld [vmem:[%s5573 + $0x1a8] sm:$0xff]
      %v5628 = vld [vmem:[%s5573 + $0x1b0] sm:$0xff]
      %v5629 = vld [vmem:[%s5573 + $0x1b8] sm:$0xff]
      %v5630 = vld [vmem:[%s5573 + $0x1c0] sm:$0xff]
      %v5631 = vld [vmem:[%s5573 + $0x1c8] sm:$0xff]
      %v5632 = vld [vmem:[%s5573 + $0x1d0] sm:$0xff]
      %v5633 = vld [vmem:[%s5573 + $0x1d8] sm:$0xff]
      %v5634 = vld [vmem:[%s5573 + $0x1e0] sm:$0xff]
      %v5635 = vld [vmem:[%s5573 + $0x1e8] sm:$0xff]
      %v5636 = vld [vmem:[%s5573 + $0x1f0] sm:$0xff]
      %v5637 = vld [vmem:[%s5573 + $0x1f8] sm:$0xff]
      %v5638 = vsub.f32 %v5509, %v5574
      %v5639 = vsub.f32 %v5510, %v5575
      %v5640 = vsub.f32 %v5511, %v5576
      %v5641 = vsub.f32 %v5512, %v5577
      %v5642 = vsub.f32 %v5513, %v5578
      %v5643 = vsub.f32 %v5514, %v5579
      %v5644 = vsub.f32 %v5515, %v5580
      %v5645 = vsub.f32 %v5516, %v5581
      %v5646 = vsub.f32 %v5517, %v5582
      %v5647 = vsub.f32 %v5518, %v5583
      %v5648 = vsub.f32 %v5519, %v5584
      %v5649 = vsub.f32 %v5520, %v5585
      %v5650 = vsub.f32 %v5521, %v5586
      %v5651 = vsub.f32 %v5522, %v5587
      %v5652 = vsub.f32 %v5523, %v5588
      %v5653 = vsub.f32 %v5524, %v5589
      %v5654 = vsub.f32 %v5525, %v5590
      %v5655 = vsub.f32 %v5526, %v5591
      %v5656 = vsub.f32 %v5527, %v5592
      %v5657 = vsub.f32 %v5528, %v5593
      %v5658 = vsub.f32 %v5529, %v5594
      %v5659 = vsub.f32 %v5530, %v5595
      %v5660 = vsub.f32 %v5531, %v5596
      %v5661 = vsub.f32 %v5532, %v5597
      %v5662 = vsub.f32 %v5533, %v5598
      %v5663 = vsub.f32 %v5534, %v5599
      %v5664 = vsub.f32 %v5535, %v5600
      %v5665 = vsub.f32 %v5536, %v5601
      %v5666 = vsub.f32 %v5537, %v5602
      %v5667 = vsub.f32 %v5538, %v5603
      %v5668 = vsub.f32 %v5539, %v5604
      %v5669 = vsub.f32 %v5540, %v5605
      %v5670 = vsub.f32 %v5541, %v5606
      %v5671 = vsub.f32 %v5542, %v5607
      %v5672 = vsub.f32 %v5543, %v5608
      %v5673 = vsub.f32 %v5544, %v5609
      %v5674 = vsub.f32 %v5545, %v5610
      %v5675 = vsub.f32 %v5546, %v5611
      %v5676 = vsub.f32 %v5547, %v5612
      %v5677 = vsub.f32 %v5548, %v5613
      %v5678 = vsub.f32 %v5549, %v5614
      %v5679 = vsub.f32 %v5550, %v5615
      %v5680 = vsub.f32 %v5551, %v5616
      %v5681 = vsub.f32 %v5552, %v5617
      %v5682 = vsub.f32 %v5553, %v5618
      %v5683 = vsub.f32 %v5554, %v5619
      %v5684 = vsub.f32 %v5555, %v5620
      %v5685 = vsub.f32 %v5556, %v5621
      %v5686 = vsub.f32 %v5557, %v5622
      %v5687 = vsub.f32 %v5558, %v5623
      %v5688 = vsub.f32 %v5559, %v5624
      %v5689 = vsub.f32 %v5560, %v5625
      %v5690 = vsub.f32 %v5561, %v5626
      %v5691 = vsub.f32 %v5562, %v5627
      %v5692 = vsub.f32 %v5563, %v5628
      %v5693 = vsub.f32 %v5564, %v5629
      %v5694 = vsub.f32 %v5565, %v5630
      %v5695 = vsub.f32 %v5566, %v5631
      %v5696 = vsub.f32 %v5567, %v5632
      %v5697 = vsub.f32 %v5568, %v5633
      %v5698 = vsub.f32 %v5569, %v5634
      %v5699 = vsub.f32 %v5570, %v5635
      %v5700 = vsub.f32 %v5571, %v5636
      %v5701 = vsub.f32 %v5572, %v5637
      %v5702 = vmul.f32 %v5638, %v5638
      %v5703 = vmul.f32 %v5639, %v5639
      %v5704 = vmul.f32 %v5640, %v5640
      %v5705 = vmul.f32 %v5641, %v5641
      %v5706 = vmul.f32 %v5642, %v5642
      %v5707 = vmul.f32 %v5643, %v5643
      %v5708 = vmul.f32 %v5644, %v5644
      %v5709 = vmul.f32 %v5645, %v5645
      %v5710 = vmul.f32 %v5646, %v5646
      %v5711 = vmul.f32 %v5647, %v5647
      %v5712 = vmul.f32 %v5648, %v5648
      %v5713 = vmul.f32 %v5649, %v5649
      %v5714 = vmul.f32 %v5650, %v5650
      %v5715 = vmul.f32 %v5651, %v5651
      %v5716 = vmul.f32 %v5652, %v5652
      %v5717 = vmul.f32 %v5653, %v5653
      %v5718 = vmul.f32 %v5654, %v5654
      %v5719 = vmul.f32 %v5655, %v5655
      %v5720 = vmul.f32 %v5656, %v5656
      %v5721 = vmul.f32 %v5657, %v5657
      %v5722 = vmul.f32 %v5658, %v5658
      %v5723 = vmul.f32 %v5659, %v5659
      %v5724 = vmul.f32 %v5660, %v5660
      %v5725 = vmul.f32 %v5661, %v5661
      %v5726 = vmul.f32 %v5662, %v5662
      %v5727 = vmul.f32 %v5663, %v5663
      %v5728 = vmul.f32 %v5664, %v5664
      %v5729 = vmul.f32 %v5665, %v5665
      %v5730 = vmul.f32 %v5666, %v5666
      %v5731 = vmul.f32 %v5667, %v5667
      %v5732 = vmul.f32 %v5668, %v5668
      %v5733 = vmul.f32 %v5669, %v5669
      %v5734 = vmul.f32 %v5670, %v5670
      %v5735 = vmul.f32 %v5671, %v5671
      %v5736 = vmul.f32 %v5672, %v5672
      %v5737 = vmul.f32 %v5673, %v5673
      %v5738 = vmul.f32 %v5674, %v5674
      %v5739 = vmul.f32 %v5675, %v5675
      %v5740 = vmul.f32 %v5676, %v5676
      %v5741 = vmul.f32 %v5677, %v5677
      %v5742 = vmul.f32 %v5678, %v5678
      %v5743 = vmul.f32 %v5679, %v5679
      %v5744 = vmul.f32 %v5680, %v5680
      %v5745 = vmul.f32 %v5681, %v5681
      %v5746 = vmul.f32 %v5682, %v5682
      %v5747 = vmul.f32 %v5683, %v5683
      %v5748 = vmul.f32 %v5684, %v5684
      %v5749 = vmul.f32 %v5685, %v5685
      %v5750 = vmul.f32 %v5686, %v5686
      %v5751 = vmul.f32 %v5687, %v5687
      %v5752 = vmul.f32 %v5688, %v5688
      %v5753 = vmul.f32 %v5689, %v5689
      %v5754 = vmul.f32 %v5690, %v5690
      %v5755 = vmul.f32 %v5691, %v5691
      %v5756 = vmul.f32 %v5692, %v5692
      %v5757 = vmul.f32 %v5693, %v5693
      %v5758 = vmul.f32 %v5694, %v5694
      %v5759 = vmul.f32 %v5695, %v5695
      %v5760 = vmul.f32 %v5696, %v5696
      %v5761 = vmul.f32 %v5697, %v5697
      %v5762 = vmul.f32 %v5698, %v5698
      %v5763 = vmul.f32 %v5699, %v5699
      %v5764 = vmul.f32 %v5700, %v5700
      %v5765 = vmul.f32 %v5701, %v5701
      %s5766 = sadd.s32 %s73, 2560
      %v5767 = vstv %s5766
      %v5768 = vadd.s32 %v5767, %v3043
      %v5769 = vadd.s32 %v5767, %v3044
      %v5770 = vadd.s32 %v5767, %v3045
      %v5771 = vadd.s32 %v5767, %v3046
      %v5772 = vadd.s32 %v5767, %v3047
      %v5773 = vadd.s32 %v5767, %v3048
      %v5774 = vadd.s32 %v5767, %v3049
      %v5775 = vadd.s32 %v5767, %v3050
      %v5776 = vadd.s32 %v5767, %v3051
      %v5777 = vadd.s32 %v5767, %v3052
      %v5778 = vadd.s32 %v5767, %v3053
      %v5779 = vadd.s32 %v5767, %v3054
      %v5780 = vadd.s32 %v5767, %v3055
      %v5781 = vadd.s32 %v5767, %v3056
      %v5782 = vadd.s32 %v5767, %v3057
      %v5783 = vadd.s32 %v5767, %v3058
      %v5784 = vadd.s32 %v5767, %v3059
      %v5785 = vadd.s32 %v5767, %v3060
      %v5786 = vadd.s32 %v5767, %v3061
      %v5787 = vadd.s32 %v5767, %v3062
      %v5788 = vadd.s32 %v5767, %v3063
      %v5789 = vadd.s32 %v5767, %v3064
      %v5790 = vadd.s32 %v5767, %v3065
      %v5791 = vadd.s32 %v5767, %v3066
      %v5792 = vadd.s32 %v5767, %v3067
      %v5793 = vadd.s32 %v5767, %v3068
      %v5794 = vadd.s32 %v5767, %v3069
      %v5795 = vadd.s32 %v5767, %v3070
      %v5796 = vadd.s32 %v5767, %v3071
      %v5797 = vadd.s32 %v5767, %v3072
      %v5798 = vadd.s32 %v5767, %v3073
      %v5799 = vadd.s32 %v5767, %v3074
      %v5800 = vadd.s32 %v5767, %v3075
      %v5801 = vadd.s32 %v5767, %v3076
      %v5802 = vadd.s32 %v5767, %v3077
      %v5803 = vadd.s32 %v5767, %v3078
      %v5804 = vadd.s32 %v5767, %v3079
      %v5805 = vadd.s32 %v5767, %v3080
      %v5806 = vadd.s32 %v5767, %v3081
      %v5807 = vadd.s32 %v5767, %v3082
      %v5808 = vadd.s32 %v5767, %v3083
      %v5809 = vadd.s32 %v5767, %v3084
      %v5810 = vadd.s32 %v5767, %v3085
      %v5811 = vadd.s32 %v5767, %v3086
      %v5812 = vadd.s32 %v5767, %v3087
      %v5813 = vadd.s32 %v5767, %v3088
      %v5814 = vadd.s32 %v5767, %v3089
      %v5815 = vadd.s32 %v5767, %v3090
      %v5816 = vadd.s32 %v5767, %v3091
      %v5817 = vadd.s32 %v5767, %v3092
      %v5818 = vadd.s32 %v5767, %v3093
      %v5819 = vadd.s32 %v5767, %v3094
      %v5820 = vadd.s32 %v5767, %v3095
      %v5821 = vadd.s32 %v5767, %v3096
      %v5822 = vadd.s32 %v5767, %v3097
      %v5823 = vadd.s32 %v5767, %v3098
      %v5824 = vadd.s32 %v5767, %v3099
      %v5825 = vadd.s32 %v5767, %v3100
      %v5826 = vadd.s32 %v5767, %v3101
      %v5827 = vadd.s32 %v5767, %v3102
      %v5828 = vadd.s32 %v5767, %v3103
      %v5829 = vadd.s32 %v5767, %v3104
      %v5830 = vadd.s32 %v5767, %v3105
      %v5831 = vadd.s32 %v5767, %v3106
      %vm5832 = vcmp.lt.s32.totalorder %v5768, 4096
      %vm5833 = vcmp.lt.s32.totalorder %v5769, 4096
      %vm5834 = vcmp.lt.s32.totalorder %v5770, 4096
      %vm5835 = vcmp.lt.s32.totalorder %v5771, 4096
      %vm5836 = vcmp.lt.s32.totalorder %v5772, 4096
      %vm5837 = vcmp.lt.s32.totalorder %v5773, 4096
      %vm5838 = vcmp.lt.s32.totalorder %v5774, 4096
      %vm5839 = vcmp.lt.s32.totalorder %v5775, 4096
      %vm5840 = vcmp.lt.s32.totalorder %v5776, 4096
      %vm5841 = vcmp.lt.s32.totalorder %v5777, 4096
      %vm5842 = vcmp.lt.s32.totalorder %v5778, 4096
      %vm5843 = vcmp.lt.s32.totalorder %v5779, 4096
      %vm5844 = vcmp.lt.s32.totalorder %v5780, 4096
      %vm5845 = vcmp.lt.s32.totalorder %v5781, 4096
      %vm5846 = vcmp.lt.s32.totalorder %v5782, 4096
      %vm5847 = vcmp.lt.s32.totalorder %v5783, 4096
      %vm5848 = vcmp.lt.s32.totalorder %v5784, 4096
      %vm5849 = vcmp.lt.s32.totalorder %v5785, 4096
      %vm5850 = vcmp.lt.s32.totalorder %v5786, 4096
      %vm5851 = vcmp.lt.s32.totalorder %v5787, 4096
      %vm5852 = vcmp.lt.s32.totalorder %v5788, 4096
      %vm5853 = vcmp.lt.s32.totalorder %v5789, 4096
      %vm5854 = vcmp.lt.s32.totalorder %v5790, 4096
      %vm5855 = vcmp.lt.s32.totalorder %v5791, 4096
      %vm5856 = vcmp.lt.s32.totalorder %v5792, 4096
      %vm5857 = vcmp.lt.s32.totalorder %v5793, 4096
      %vm5858 = vcmp.lt.s32.totalorder %v5794, 4096
      %vm5859 = vcmp.lt.s32.totalorder %v5795, 4096
      %vm5860 = vcmp.lt.s32.totalorder %v5796, 4096
      %vm5861 = vcmp.lt.s32.totalorder %v5797, 4096
      %vm5862 = vcmp.lt.s32.totalorder %v5798, 4096
      %vm5863 = vcmp.lt.s32.totalorder %v5799, 4096
      %vm5864 = vcmp.lt.s32.totalorder %v5800, 4096
      %vm5865 = vcmp.lt.s32.totalorder %v5801, 4096
      %vm5866 = vcmp.lt.s32.totalorder %v5802, 4096
      %vm5867 = vcmp.lt.s32.totalorder %v5803, 4096
      %vm5868 = vcmp.lt.s32.totalorder %v5804, 4096
      %vm5869 = vcmp.lt.s32.totalorder %v5805, 4096
      %vm5870 = vcmp.lt.s32.totalorder %v5806, 4096
      %vm5871 = vcmp.lt.s32.totalorder %v5807, 4096
      %vm5872 = vcmp.lt.s32.totalorder %v5808, 4096
      %vm5873 = vcmp.lt.s32.totalorder %v5809, 4096
      %vm5874 = vcmp.lt.s32.totalorder %v5810, 4096
      %vm5875 = vcmp.lt.s32.totalorder %v5811, 4096
      %vm5876 = vcmp.lt.s32.totalorder %v5812, 4096
      %vm5877 = vcmp.lt.s32.totalorder %v5813, 4096
      %vm5878 = vcmp.lt.s32.totalorder %v5814, 4096
      %vm5879 = vcmp.lt.s32.totalorder %v5815, 4096
      %vm5880 = vcmp.lt.s32.totalorder %v5816, 4096
      %vm5881 = vcmp.lt.s32.totalorder %v5817, 4096
      %vm5882 = vcmp.lt.s32.totalorder %v5818, 4096
      %vm5883 = vcmp.lt.s32.totalorder %v5819, 4096
      %vm5884 = vcmp.lt.s32.totalorder %v5820, 4096
      %vm5885 = vcmp.lt.s32.totalorder %v5821, 4096
      %vm5886 = vcmp.lt.s32.totalorder %v5822, 4096
      %vm5887 = vcmp.lt.s32.totalorder %v5823, 4096
      %vm5888 = vcmp.lt.s32.totalorder %v5824, 4096
      %vm5889 = vcmp.lt.s32.totalorder %v5825, 4096
      %vm5890 = vcmp.lt.s32.totalorder %v5826, 4096
      %vm5891 = vcmp.lt.s32.totalorder %v5827, 4096
      %vm5892 = vcmp.lt.s32.totalorder %v5828, 4096
      %vm5893 = vcmp.lt.s32.totalorder %v5829, 4096
      %vm5894 = vcmp.lt.s32.totalorder %v5830, 4096
      %vm5895 = vcmp.lt.s32.totalorder %v5831, 4096
      %v5896 = vsel %vm5832, %v5702, 0.0
      %v5897 = vsel %vm5833, %v5703, 0.0
      %v5898 = vsel %vm5834, %v5704, 0.0
      %v5899 = vsel %vm5835, %v5705, 0.0
      %v5900 = vsel %vm5836, %v5706, 0.0
      %v5901 = vsel %vm5837, %v5707, 0.0
      %v5902 = vsel %vm5838, %v5708, 0.0
      %v5903 = vsel %vm5839, %v5709, 0.0
      %v5904 = vsel %vm5840, %v5710, 0.0
      %v5905 = vsel %vm5841, %v5711, 0.0
      %v5906 = vsel %vm5842, %v5712, 0.0
      %v5907 = vsel %vm5843, %v5713, 0.0
      %v5908 = vsel %vm5844, %v5714, 0.0
      %v5909 = vsel %vm5845, %v5715, 0.0
      %v5910 = vsel %vm5846, %v5716, 0.0
      %v5911 = vsel %vm5847, %v5717, 0.0
      %v5912 = vsel %vm5848, %v5718, 0.0
      %v5913 = vsel %vm5849, %v5719, 0.0
      %v5914 = vsel %vm5850, %v5720, 0.0
      %v5915 = vsel %vm5851, %v5721, 0.0
      %v5916 = vsel %vm5852, %v5722, 0.0
      %v5917 = vsel %vm5853, %v5723, 0.0
      %v5918 = vsel %vm5854, %v5724, 0.0
      %v5919 = vsel %vm5855, %v5725, 0.0
      %v5920 = vsel %vm5856, %v5726, 0.0
      %v5921 = vsel %vm5857, %v5727, 0.0
      %v5922 = vsel %vm5858, %v5728, 0.0
      %v5923 = vsel %vm5859, %v5729, 0.0
      %v5924 = vsel %vm5860, %v5730, 0.0
      %v5925 = vsel %vm5861, %v5731, 0.0
      %v5926 = vsel %vm5862, %v5732, 0.0
      %v5927 = vsel %vm5863, %v5733, 0.0
      %v5928 = vsel %vm5864, %v5734, 0.0
      %v5929 = vsel %vm5865, %v5735, 0.0
      %v5930 = vsel %vm5866, %v5736, 0.0
      %v5931 = vsel %vm5867, %v5737, 0.0
      %v5932 = vsel %vm5868, %v5738, 0.0
      %v5933 = vsel %vm5869, %v5739, 0.0
      %v5934 = vsel %vm5870, %v5740, 0.0
      %v5935 = vsel %vm5871, %v5741, 0.0
      %v5936 = vsel %vm5872, %v5742, 0.0
      %v5937 = vsel %vm5873, %v5743, 0.0
      %v5938 = vsel %vm5874, %v5744, 0.0
      %v5939 = vsel %vm5875, %v5745, 0.0
      %v5940 = vsel %vm5876, %v5746, 0.0
      %v5941 = vsel %vm5877, %v5747, 0.0
      %v5942 = vsel %vm5878, %v5748, 0.0
      %v5943 = vsel %vm5879, %v5749, 0.0
      %v5944 = vsel %vm5880, %v5750, 0.0
      %v5945 = vsel %vm5881, %v5751, 0.0
      %v5946 = vsel %vm5882, %v5752, 0.0
      %v5947 = vsel %vm5883, %v5753, 0.0
      %v5948 = vsel %vm5884, %v5754, 0.0
      %v5949 = vsel %vm5885, %v5755, 0.0
      %v5950 = vsel %vm5886, %v5756, 0.0
      %v5951 = vsel %vm5887, %v5757, 0.0
      %v5952 = vsel %vm5888, %v5758, 0.0
      %v5953 = vsel %vm5889, %v5759, 0.0
      %v5954 = vsel %vm5890, %v5760, 0.0
      %v5955 = vsel %vm5891, %v5761, 0.0
      %v5956 = vsel %vm5892, %v5762, 0.0
      %v5957 = vsel %vm5893, %v5763, 0.0
      %v5958 = vsel %vm5894, %v5764, 0.0
      %v5959 = vsel %vm5895, %v5765, 0.0
      %v5960 = vld [vmem:[#allocation7] sm:$0xff]
      %v5961 = vld [vmem:[#allocation7 + $0x8] sm:$0xff]
      %v5962 = vld [vmem:[#allocation7 + $0x10] sm:$0xff]
      %v5963 = vld [vmem:[#allocation7 + $0x18] sm:$0xff]
      %v5964 = vld [vmem:[#allocation7 + $0x20] sm:$0xff]
      %v5965 = vld [vmem:[#allocation7 + $0x28] sm:$0xff]
      %v5966 = vld [vmem:[#allocation7 + $0x30] sm:$0xff]
      %v5967 = vld [vmem:[#allocation7 + $0x38] sm:$0xff]
      %v5968 = vadd.f32 %v5896, %v5904
      %v5969 = vadd.f32 %v5968, %v5912
      %v5970 = vadd.f32 %v5969, %v5920
      %v5971 = vadd.f32 %v5970, %v5928
      %v5972 = vadd.f32 %v5971, %v5936
      %v5973 = vadd.f32 %v5972, %v5944
      %v5974 = vadd.f32 %v5973, %v5952
      %v5975 = vadd.f32 %v5897, %v5905
      %v5976 = vadd.f32 %v5975, %v5913
      %v5977 = vadd.f32 %v5976, %v5921
      %v5978 = vadd.f32 %v5977, %v5929
      %v5979 = vadd.f32 %v5978, %v5937
      %v5980 = vadd.f32 %v5979, %v5945
      %v5981 = vadd.f32 %v5980, %v5953
      %v5982 = vadd.f32 %v5898, %v5906
      %v5983 = vadd.f32 %v5982, %v5914
      %v5984 = vadd.f32 %v5983, %v5922
      %v5985 = vadd.f32 %v5984, %v5930
      %v5986 = vadd.f32 %v5985, %v5938
      %v5987 = vadd.f32 %v5986, %v5946
      %v5988 = vadd.f32 %v5987, %v5954
      %v5989 = vadd.f32 %v5899, %v5907
      %v5990 = vadd.f32 %v5989, %v5915
      %v5991 = vadd.f32 %v5990, %v5923
      %v5992 = vadd.f32 %v5991, %v5931
      %v5993 = vadd.f32 %v5992, %v5939
      %v5994 = vadd.f32 %v5993, %v5947
      %v5995 = vadd.f32 %v5994, %v5955
      %v5996 = vadd.f32 %v5900, %v5908
      %v5997 = vadd.f32 %v5996, %v5916
      %v5998 = vadd.f32 %v5997, %v5924
      %v5999 = vadd.f32 %v5998, %v5932
      %v6000 = vadd.f32 %v5999, %v5940
      %v6001 = vadd.f32 %v6000, %v5948
      %v6002 = vadd.f32 %v6001, %v5956
      %v6003 = vadd.f32 %v5901, %v5909
      %v6004 = vadd.f32 %v6003, %v5917
      %v6005 = vadd.f32 %v6004, %v5925
      %v6006 = vadd.f32 %v6005, %v5933
      %v6007 = vadd.f32 %v6006, %v5941
      %v6008 = vadd.f32 %v6007, %v5949
      %v6009 = vadd.f32 %v6008, %v5957
      %v6010 = vadd.f32 %v5902, %v5910
      %v6011 = vadd.f32 %v6010, %v5918
      %v6012 = vadd.f32 %v6011, %v5926
      %v6013 = vadd.f32 %v6012, %v5934
      %v6014 = vadd.f32 %v6013, %v5942
      %v6015 = vadd.f32 %v6014, %v5950
      %v6016 = vadd.f32 %v6015, %v5958
      %v6017 = vadd.f32 %v5903, %v5911
      %v6018 = vadd.f32 %v6017, %v5919
      %v6019 = vadd.f32 %v6018, %v5927
      %v6020 = vadd.f32 %v6019, %v5935
      %v6021 = vadd.f32 %v6020, %v5943
      %v6022 = vadd.f32 %v6021, %v5951
      %v6023 = vadd.f32 %v6022, %v5959
      %v6024 = vadd.f32 %v5960, %v5974
      %v6025 = vadd.f32 %v5961, %v5981
      %v6026 = vadd.f32 %v5962, %v5988
      %v6027 = vadd.f32 %v5963, %v5995
      %v6028 = vadd.f32 %v5964, %v6002
      %v6029 = vadd.f32 %v5965, %v6009
      %v6030 = vadd.f32 %v5966, %v6016
      %v6031 = vadd.f32 %v5967, %v6023
      %6032 = vst [vmem:[#allocation7] sm:$0xff] %v6024
      %6033 = vst [vmem:[#allocation7 + $0x8] sm:$0xff] %v6025
      %6034 = vst [vmem:[#allocation7 + $0x10] sm:$0xff] %v6026
      %6035 = vst [vmem:[#allocation7 + $0x18] sm:$0xff] %v6027
      %6036 = vst [vmem:[#allocation7 + $0x20] sm:$0xff] %v6028
      %6037 = vst [vmem:[#allocation7 + $0x28] sm:$0xff] %v6029
      %6038 = vst [vmem:[#allocation7 + $0x30] sm:$0xff] %v6030
      %6039 = vst [vmem:[#allocation7 + $0x38] sm:$0xff] %v6031
      %s6040 = scalar_lea.vmem [#allocation2], 3072
      %v6041 = vld [vmem:[%s6040] sm:$0xff]
      %v6042 = vld [vmem:[%s6040 + $0x8] sm:$0xff]
      %v6043 = vld [vmem:[%s6040 + $0x10] sm:$0xff]
      %v6044 = vld [vmem:[%s6040 + $0x18] sm:$0xff]
      %v6045 = vld [vmem:[%s6040 + $0x20] sm:$0xff]
      %v6046 = vld [vmem:[%s6040 + $0x28] sm:$0xff]
      %v6047 = vld [vmem:[%s6040 + $0x30] sm:$0xff]
      %v6048 = vld [vmem:[%s6040 + $0x38] sm:$0xff]
      %v6049 = vld [vmem:[%s6040 + $0x40] sm:$0xff]
      %v6050 = vld [vmem:[%s6040 + $0x48] sm:$0xff]
      %v6051 = vld [vmem:[%s6040 + $0x50] sm:$0xff]
      %v6052 = vld [vmem:[%s6040 + $0x58] sm:$0xff]
      %v6053 = vld [vmem:[%s6040 + $0x60] sm:$0xff]
      %v6054 = vld [vmem:[%s6040 + $0x68] sm:$0xff]
      %v6055 = vld [vmem:[%s6040 + $0x70] sm:$0xff]
      %v6056 = vld [vmem:[%s6040 + $0x78] sm:$0xff]
      %v6057 = vld [vmem:[%s6040 + $0x80] sm:$0xff]
      %v6058 = vld [vmem:[%s6040 + $0x88] sm:$0xff]
      %v6059 = vld [vmem:[%s6040 + $0x90] sm:$0xff]
      %v6060 = vld [vmem:[%s6040 + $0x98] sm:$0xff]
      %v6061 = vld [vmem:[%s6040 + $0xa0] sm:$0xff]
      %v6062 = vld [vmem:[%s6040 + $0xa8] sm:$0xff]
      %v6063 = vld [vmem:[%s6040 + $0xb0] sm:$0xff]
      %v6064 = vld [vmem:[%s6040 + $0xb8] sm:$0xff]
      %v6065 = vld [vmem:[%s6040 + $0xc0] sm:$0xff]
      %v6066 = vld [vmem:[%s6040 + $0xc8] sm:$0xff]
      %v6067 = vld [vmem:[%s6040 + $0xd0] sm:$0xff]
      %v6068 = vld [vmem:[%s6040 + $0xd8] sm:$0xff]
      %v6069 = vld [vmem:[%s6040 + $0xe0] sm:$0xff]
      %v6070 = vld [vmem:[%s6040 + $0xe8] sm:$0xff]
      %v6071 = vld [vmem:[%s6040 + $0xf0] sm:$0xff]
      %v6072 = vld [vmem:[%s6040 + $0xf8] sm:$0xff]
      %v6073 = vld [vmem:[%s6040 + $0x100] sm:$0xff]
      %v6074 = vld [vmem:[%s6040 + $0x108] sm:$0xff]
      %v6075 = vld [vmem:[%s6040 + $0x110] sm:$0xff]
      %v6076 = vld [vmem:[%s6040 + $0x118] sm:$0xff]
      %v6077 = vld [vmem:[%s6040 + $0x120] sm:$0xff]
      %v6078 = vld [vmem:[%s6040 + $0x128] sm:$0xff]
      %v6079 = vld [vmem:[%s6040 + $0x130] sm:$0xff]
      %v6080 = vld [vmem:[%s6040 + $0x138] sm:$0xff]
      %v6081 = vld [vmem:[%s6040 + $0x140] sm:$0xff]
      %v6082 = vld [vmem:[%s6040 + $0x148] sm:$0xff]
      %v6083 = vld [vmem:[%s6040 + $0x150] sm:$0xff]
      %v6084 = vld [vmem:[%s6040 + $0x158] sm:$0xff]
      %v6085 = vld [vmem:[%s6040 + $0x160] sm:$0xff]
      %v6086 = vld [vmem:[%s6040 + $0x168] sm:$0xff]
      %v6087 = vld [vmem:[%s6040 + $0x170] sm:$0xff]
      %v6088 = vld [vmem:[%s6040 + $0x178] sm:$0xff]
      %v6089 = vld [vmem:[%s6040 + $0x180] sm:$0xff]
      %v6090 = vld [vmem:[%s6040 + $0x188] sm:$0xff]
      %v6091 = vld [vmem:[%s6040 + $0x190] sm:$0xff]
      %v6092 = vld [vmem:[%s6040 + $0x198] sm:$0xff]
      %v6093 = vld [vmem:[%s6040 + $0x1a0] sm:$0xff]
      %v6094 = vld [vmem:[%s6040 + $0x1a8] sm:$0xff]
      %v6095 = vld [vmem:[%s6040 + $0x1b0] sm:$0xff]
      %v6096 = vld [vmem:[%s6040 + $0x1b8] sm:$0xff]
      %v6097 = vld [vmem:[%s6040 + $0x1c0] sm:$0xff]
      %v6098 = vld [vmem:[%s6040 + $0x1c8] sm:$0xff]
      %v6099 = vld [vmem:[%s6040 + $0x1d0] sm:$0xff]
      %v6100 = vld [vmem:[%s6040 + $0x1d8] sm:$0xff]
      %v6101 = vld [vmem:[%s6040 + $0x1e0] sm:$0xff]
      %v6102 = vld [vmem:[%s6040 + $0x1e8] sm:$0xff]
      %v6103 = vld [vmem:[%s6040 + $0x1f0] sm:$0xff]
      %v6104 = vld [vmem:[%s6040 + $0x1f8] sm:$0xff]
      %s6105 = scalar_lea.vmem [#allocation5], 3072
      %v6106 = vld [vmem:[%s6105] sm:$0xff]
      %v6107 = vld [vmem:[%s6105 + $0x8] sm:$0xff]
      %v6108 = vld [vmem:[%s6105 + $0x10] sm:$0xff]
      %v6109 = vld [vmem:[%s6105 + $0x18] sm:$0xff]
      %v6110 = vld [vmem:[%s6105 + $0x20] sm:$0xff]
      %v6111 = vld [vmem:[%s6105 + $0x28] sm:$0xff]
      %v6112 = vld [vmem:[%s6105 + $0x30] sm:$0xff]
      %v6113 = vld [vmem:[%s6105 + $0x38] sm:$0xff]
      %v6114 = vld [vmem:[%s6105 + $0x40] sm:$0xff]
      %v6115 = vld [vmem:[%s6105 + $0x48] sm:$0xff]
      %v6116 = vld [vmem:[%s6105 + $0x50] sm:$0xff]
      %v6117 = vld [vmem:[%s6105 + $0x58] sm:$0xff]
      %v6118 = vld [vmem:[%s6105 + $0x60] sm:$0xff]
      %v6119 = vld [vmem:[%s6105 + $0x68] sm:$0xff]
      %v6120 = vld [vmem:[%s6105 + $0x70] sm:$0xff]
      %v6121 = vld [vmem:[%s6105 + $0x78] sm:$0xff]
      %v6122 = vld [vmem:[%s6105 + $0x80] sm:$0xff]
      %v6123 = vld [vmem:[%s6105 + $0x88] sm:$0xff]
      %v6124 = vld [vmem:[%s6105 + $0x90] sm:$0xff]
      %v6125 = vld [vmem:[%s6105 + $0x98] sm:$0xff]
      %v6126 = vld [vmem:[%s6105 + $0xa0] sm:$0xff]
      %v6127 = vld [vmem:[%s6105 + $0xa8] sm:$0xff]
      %v6128 = vld [vmem:[%s6105 + $0xb0] sm:$0xff]
      %v6129 = vld [vmem:[%s6105 + $0xb8] sm:$0xff]
      %v6130 = vld [vmem:[%s6105 + $0xc0] sm:$0xff]
      %v6131 = vld [vmem:[%s6105 + $0xc8] sm:$0xff]
      %v6132 = vld [vmem:[%s6105 + $0xd0] sm:$0xff]
      %v6133 = vld [vmem:[%s6105 + $0xd8] sm:$0xff]
      %v6134 = vld [vmem:[%s6105 + $0xe0] sm:$0xff]
      %v6135 = vld [vmem:[%s6105 + $0xe8] sm:$0xff]
      %v6136 = vld [vmem:[%s6105 + $0xf0] sm:$0xff]
      %v6137 = vld [vmem:[%s6105 + $0xf8] sm:$0xff]
      %v6138 = vld [vmem:[%s6105 + $0x100] sm:$0xff]
      %v6139 = vld [vmem:[%s6105 + $0x108] sm:$0xff]
      %v6140 = vld [vmem:[%s6105 + $0x110] sm:$0xff]
      %v6141 = vld [vmem:[%s6105 + $0x118] sm:$0xff]
      %v6142 = vld [vmem:[%s6105 + $0x120] sm:$0xff]
      %v6143 = vld [vmem:[%s6105 + $0x128] sm:$0xff]
      %v6144 = vld [vmem:[%s6105 + $0x130] sm:$0xff]
      %v6145 = vld [vmem:[%s6105 + $0x138] sm:$0xff]
      %v6146 = vld [vmem:[%s6105 + $0x140] sm:$0xff]
      %v6147 = vld [vmem:[%s6105 + $0x148] sm:$0xff]
      %v6148 = vld [vmem:[%s6105 + $0x150] sm:$0xff]
      %v6149 = vld [vmem:[%s6105 + $0x158] sm:$0xff]
      %v6150 = vld [vmem:[%s6105 + $0x160] sm:$0xff]
      %v6151 = vld [vmem:[%s6105 + $0x168] sm:$0xff]
      %v6152 = vld [vmem:[%s6105 + $0x170] sm:$0xff]
      %v6153 = vld [vmem:[%s6105 + $0x178] sm:$0xff]
      %v6154 = vld [vmem:[%s6105 + $0x180] sm:$0xff]
      %v6155 = vld [vmem:[%s6105 + $0x188] sm:$0xff]
      %v6156 = vld [vmem:[%s6105 + $0x190] sm:$0xff]
      %v6157 = vld [vmem:[%s6105 + $0x198] sm:$0xff]
      %v6158 = vld [vmem:[%s6105 + $0x1a0] sm:$0xff]
      %v6159 = vld [vmem:[%s6105 + $0x1a8] sm:$0xff]
      %v6160 = vld [vmem:[%s6105 + $0x1b0] sm:$0xff]
      %v6161 = vld [vmem:[%s6105 + $0x1b8] sm:$0xff]
      %v6162 = vld [vmem:[%s6105 + $0x1c0] sm:$0xff]
      %v6163 = vld [vmem:[%s6105 + $0x1c8] sm:$0xff]
      %v6164 = vld [vmem:[%s6105 + $0x1d0] sm:$0xff]
      %v6165 = vld [vmem:[%s6105 + $0x1d8] sm:$0xff]
      %v6166 = vld [vmem:[%s6105 + $0x1e0] sm:$0xff]
      %v6167 = vld [vmem:[%s6105 + $0x1e8] sm:$0xff]
      %v6168 = vld [vmem:[%s6105 + $0x1f0] sm:$0xff]
      %v6169 = vld [vmem:[%s6105 + $0x1f8] sm:$0xff]
      %v6170 = vsub.f32 %v6041, %v6106
      %v6171 = vsub.f32 %v6042, %v6107
      %v6172 = vsub.f32 %v6043, %v6108
      %v6173 = vsub.f32 %v6044, %v6109
      %v6174 = vsub.f32 %v6045, %v6110
      %v6175 = vsub.f32 %v6046, %v6111
      %v6176 = vsub.f32 %v6047, %v6112
      %v6177 = vsub.f32 %v6048, %v6113
      %v6178 = vsub.f32 %v6049, %v6114
      %v6179 = vsub.f32 %v6050, %v6115
      %v6180 = vsub.f32 %v6051, %v6116
      %v6181 = vsub.f32 %v6052, %v6117
      %v6182 = vsub.f32 %v6053, %v6118
      %v6183 = vsub.f32 %v6054, %v6119
      %v6184 = vsub.f32 %v6055, %v6120
      %v6185 = vsub.f32 %v6056, %v6121
      %v6186 = vsub.f32 %v6057, %v6122
      %v6187 = vsub.f32 %v6058, %v6123
      %v6188 = vsub.f32 %v6059, %v6124
      %v6189 = vsub.f32 %v6060, %v6125
      %v6190 = vsub.f32 %v6061, %v6126
      %v6191 = vsub.f32 %v6062, %v6127
      %v6192 = vsub.f32 %v6063, %v6128
      %v6193 = vsub.f32 %v6064, %v6129
      %v6194 = vsub.f32 %v6065, %v6130
      %v6195 = vsub.f32 %v6066, %v6131
      %v6196 = vsub.f32 %v6067, %v6132
      %v6197 = vsub.f32 %v6068, %v6133
      %v6198 = vsub.f32 %v6069, %v6134
      %v6199 = vsub.f32 %v6070, %v6135
      %v6200 = vsub.f32 %v6071, %v6136
      %v6201 = vsub.f32 %v6072, %v6137
      %v6202 = vsub.f32 %v6073, %v6138
      %v6203 = vsub.f32 %v6074, %v6139
      %v6204 = vsub.f32 %v6075, %v6140
      %v6205 = vsub.f32 %v6076, %v6141
      %v6206 = vsub.f32 %v6077, %v6142
      %v6207 = vsub.f32 %v6078, %v6143
      %v6208 = vsub.f32 %v6079, %v6144
      %v6209 = vsub.f32 %v6080, %v6145
      %v6210 = vsub.f32 %v6081, %v6146
      %v6211 = vsub.f32 %v6082, %v6147
      %v6212 = vsub.f32 %v6083, %v6148
      %v6213 = vsub.f32 %v6084, %v6149
      %v6214 = vsub.f32 %v6085, %v6150
      %v6215 = vsub.f32 %v6086, %v6151
      %v6216 = vsub.f32 %v6087, %v6152
      %v6217 = vsub.f32 %v6088, %v6153
      %v6218 = vsub.f32 %v6089, %v6154
      %v6219 = vsub.f32 %v6090, %v6155
      %v6220 = vsub.f32 %v6091, %v6156
      %v6221 = vsub.f32 %v6092, %v6157
      %v6222 = vsub.f32 %v6093, %v6158
      %v6223 = vsub.f32 %v6094, %v6159
      %v6224 = vsub.f32 %v6095, %v6160
      %v6225 = vsub.f32 %v6096, %v6161
      %v6226 = vsub.f32 %v6097, %v6162
      %v6227 = vsub.f32 %v6098, %v6163
      %v6228 = vsub.f32 %v6099, %v6164
      %v6229 = vsub.f32 %v6100, %v6165
      %v6230 = vsub.f32 %v6101, %v6166
      %v6231 = vsub.f32 %v6102, %v6167
      %v6232 = vsub.f32 %v6103, %v6168
      %v6233 = vsub.f32 %v6104, %v6169
      %v6234 = vmul.f32 %v6170, %v6170
      %v6235 = vmul.f32 %v6171, %v6171
      %v6236 = vmul.f32 %v6172, %v6172
      %v6237 = vmul.f32 %v6173, %v6173
      %v6238 = vmul.f32 %v6174, %v6174
      %v6239 = vmul.f32 %v6175, %v6175
      %v6240 = vmul.f32 %v6176, %v6176
      %v6241 = vmul.f32 %v6177, %v6177
      %v6242 = vmul.f32 %v6178, %v6178
      %v6243 = vmul.f32 %v6179, %v6179
      %v6244 = vmul.f32 %v6180, %v6180
      %v6245 = vmul.f32 %v6181, %v6181
      %v6246 = vmul.f32 %v6182, %v6182
      %v6247 = vmul.f32 %v6183, %v6183
      %v6248 = vmul.f32 %v6184, %v6184
      %v6249 = vmul.f32 %v6185, %v6185
      %v6250 = vmul.f32 %v6186, %v6186
      %v6251 = vmul.f32 %v6187, %v6187
      %v6252 = vmul.f32 %v6188, %v6188
      %v6253 = vmul.f32 %v6189, %v6189
      %v6254 = vmul.f32 %v6190, %v6190
      %v6255 = vmul.f32 %v6191, %v6191
      %v6256 = vmul.f32 %v6192, %v6192
      %v6257 = vmul.f32 %v6193, %v6193
      %v6258 = vmul.f32 %v6194, %v6194
      %v6259 = vmul.f32 %v6195, %v6195
      %v6260 = vmul.f32 %v6196, %v6196
      %v6261 = vmul.f32 %v6197, %v6197
      %v6262 = vmul.f32 %v6198, %v6198
      %v6263 = vmul.f32 %v6199, %v6199
      %v6264 = vmul.f32 %v6200, %v6200
      %v6265 = vmul.f32 %v6201, %v6201
      %v6266 = vmul.f32 %v6202, %v6202
      %v6267 = vmul.f32 %v6203, %v6203
      %v6268 = vmul.f32 %v6204, %v6204
      %v6269 = vmul.f32 %v6205, %v6205
      %v6270 = vmul.f32 %v6206, %v6206
      %v6271 = vmul.f32 %v6207, %v6207
      %v6272 = vmul.f32 %v6208, %v6208
      %v6273 = vmul.f32 %v6209, %v6209
      %v6274 = vmul.f32 %v6210, %v6210
      %v6275 = vmul.f32 %v6211, %v6211
      %v6276 = vmul.f32 %v6212, %v6212
      %v6277 = vmul.f32 %v6213, %v6213
      %v6278 = vmul.f32 %v6214, %v6214
      %v6279 = vmul.f32 %v6215, %v6215
      %v6280 = vmul.f32 %v6216, %v6216
      %v6281 = vmul.f32 %v6217, %v6217
      %v6282 = vmul.f32 %v6218, %v6218
      %v6283 = vmul.f32 %v6219, %v6219
      %v6284 = vmul.f32 %v6220, %v6220
      %v6285 = vmul.f32 %v6221, %v6221
      %v6286 = vmul.f32 %v6222, %v6222
      %v6287 = vmul.f32 %v6223, %v6223
      %v6288 = vmul.f32 %v6224, %v6224
      %v6289 = vmul.f32 %v6225, %v6225
      %v6290 = vmul.f32 %v6226, %v6226
      %v6291 = vmul.f32 %v6227, %v6227
      %v6292 = vmul.f32 %v6228, %v6228
      %v6293 = vmul.f32 %v6229, %v6229
      %v6294 = vmul.f32 %v6230, %v6230
      %v6295 = vmul.f32 %v6231, %v6231
      %v6296 = vmul.f32 %v6232, %v6232
      %v6297 = vmul.f32 %v6233, %v6233
      %s6298 = sadd.s32 %s73, 3072
      %v6299 = vstv %s6298
      %v6300 = vadd.s32 %v6299, %v3043
      %v6301 = vadd.s32 %v6299, %v3044
      %v6302 = vadd.s32 %v6299, %v3045
      %v6303 = vadd.s32 %v6299, %v3046
      %v6304 = vadd.s32 %v6299, %v3047
      %v6305 = vadd.s32 %v6299, %v3048
      %v6306 = vadd.s32 %v6299, %v3049
      %v6307 = vadd.s32 %v6299, %v3050
      %v6308 = vadd.s32 %v6299, %v3051
      %v6309 = vadd.s32 %v6299, %v3052
      %v6310 = vadd.s32 %v6299, %v3053
      %v6311 = vadd.s32 %v6299, %v3054
      %v6312 = vadd.s32 %v6299, %v3055
      %v6313 = vadd.s32 %v6299, %v3056
      %v6314 = vadd.s32 %v6299, %v3057
      %v6315 = vadd.s32 %v6299, %v3058
      %v6316 = vadd.s32 %v6299, %v3059
      %v6317 = vadd.s32 %v6299, %v3060
      %v6318 = vadd.s32 %v6299, %v3061
      %v6319 = vadd.s32 %v6299, %v3062
      %v6320 = vadd.s32 %v6299, %v3063
      %v6321 = vadd.s32 %v6299, %v3064
      %v6322 = vadd.s32 %v6299, %v3065
      %v6323 = vadd.s32 %v6299, %v3066
      %v6324 = vadd.s32 %v6299, %v3067
      %v6325 = vadd.s32 %v6299, %v3068
      %v6326 = vadd.s32 %v6299, %v3069
      %v6327 = vadd.s32 %v6299, %v3070
      %v6328 = vadd.s32 %v6299, %v3071
      %v6329 = vadd.s32 %v6299, %v3072
      %v6330 = vadd.s32 %v6299, %v3073
      %v6331 = vadd.s32 %v6299, %v3074
      %v6332 = vadd.s32 %v6299, %v3075
      %v6333 = vadd.s32 %v6299, %v3076
      %v6334 = vadd.s32 %v6299, %v3077
      %v6335 = vadd.s32 %v6299, %v3078
      %v6336 = vadd.s32 %v6299, %v3079
      %v6337 = vadd.s32 %v6299, %v3080
      %v6338 = vadd.s32 %v6299, %v3081
      %v6339 = vadd.s32 %v6299, %v3082
      %v6340 = vadd.s32 %v6299, %v3083
      %v6341 = vadd.s32 %v6299, %v3084
      %v6342 = vadd.s32 %v6299, %v3085
      %v6343 = vadd.s32 %v6299, %v3086
      %v6344 = vadd.s32 %v6299, %v3087
      %v6345 = vadd.s32 %v6299, %v3088
      %v6346 = vadd.s32 %v6299, %v3089
      %v6347 = vadd.s32 %v6299, %v3090
      %v6348 = vadd.s32 %v6299, %v3091
      %v6349 = vadd.s32 %v6299, %v3092
      %v6350 = vadd.s32 %v6299, %v3093
      %v6351 = vadd.s32 %v6299, %v3094
      %v6352 = vadd.s32 %v6299, %v3095
      %v6353 = vadd.s32 %v6299, %v3096
      %v6354 = vadd.s32 %v6299, %v3097
      %v6355 = vadd.s32 %v6299, %v3098
      %v6356 = vadd.s32 %v6299, %v3099
      %v6357 = vadd.s32 %v6299, %v3100
      %v6358 = vadd.s32 %v6299, %v3101
      %v6359 = vadd.s32 %v6299, %v3102
      %v6360 = vadd.s32 %v6299, %v3103
      %v6361 = vadd.s32 %v6299, %v3104
      %v6362 = vadd.s32 %v6299, %v3105
      %v6363 = vadd.s32 %v6299, %v3106
      %vm6364 = vcmp.lt.s32.totalorder %v6300, 4096
      %vm6365 = vcmp.lt.s32.totalorder %v6301, 4096
      %vm6366 = vcmp.lt.s32.totalorder %v6302, 4096
      %vm6367 = vcmp.lt.s32.totalorder %v6303, 4096
      %vm6368 = vcmp.lt.s32.totalorder %v6304, 4096
      %vm6369 = vcmp.lt.s32.totalorder %v6305, 4096
      %vm6370 = vcmp.lt.s32.totalorder %v6306, 4096
      %vm6371 = vcmp.lt.s32.totalorder %v6307, 4096
      %vm6372 = vcmp.lt.s32.totalorder %v6308, 4096
      %vm6373 = vcmp.lt.s32.totalorder %v6309, 4096
      %vm6374 = vcmp.lt.s32.totalorder %v6310, 4096
      %vm6375 = vcmp.lt.s32.totalorder %v6311, 4096
      %vm6376 = vcmp.lt.s32.totalorder %v6312, 4096
      %vm6377 = vcmp.lt.s32.totalorder %v6313, 4096
      %vm6378 = vcmp.lt.s32.totalorder %v6314, 4096
      %vm6379 = vcmp.lt.s32.totalorder %v6315, 4096
      %vm6380 = vcmp.lt.s32.totalorder %v6316, 4096
      %vm6381 = vcmp.lt.s32.totalorder %v6317, 4096
      %vm6382 = vcmp.lt.s32.totalorder %v6318, 4096
      %vm6383 = vcmp.lt.s32.totalorder %v6319, 4096
      %vm6384 = vcmp.lt.s32.totalorder %v6320, 4096
      %vm6385 = vcmp.lt.s32.totalorder %v6321, 4096
      %vm6386 = vcmp.lt.s32.totalorder %v6322, 4096
      %vm6387 = vcmp.lt.s32.totalorder %v6323, 4096
      %vm6388 = vcmp.lt.s32.totalorder %v6324, 4096
      %vm6389 = vcmp.lt.s32.totalorder %v6325, 4096
      %vm6390 = vcmp.lt.s32.totalorder %v6326, 4096
      %vm6391 = vcmp.lt.s32.totalorder %v6327, 4096
      %vm6392 = vcmp.lt.s32.totalorder %v6328, 4096
      %vm6393 = vcmp.lt.s32.totalorder %v6329, 4096
      %vm6394 = vcmp.lt.s32.totalorder %v6330, 4096
      %vm6395 = vcmp.lt.s32.totalorder %v6331, 4096
      %vm6396 = vcmp.lt.s32.totalorder %v6332, 4096
      %vm6397 = vcmp.lt.s32.totalorder %v6333, 4096
      %vm6398 = vcmp.lt.s32.totalorder %v6334, 4096
      %vm6399 = vcmp.lt.s32.totalorder %v6335, 4096
      %vm6400 = vcmp.lt.s32.totalorder %v6336, 4096
      %vm6401 = vcmp.lt.s32.totalorder %v6337, 4096
      %vm6402 = vcmp.lt.s32.totalorder %v6338, 4096
      %vm6403 = vcmp.lt.s32.totalorder %v6339, 4096
      %vm6404 = vcmp.lt.s32.totalorder %v6340, 4096
      %vm6405 = vcmp.lt.s32.totalorder %v6341, 4096
      %vm6406 = vcmp.lt.s32.totalorder %v6342, 4096
      %vm6407 = vcmp.lt.s32.totalorder %v6343, 4096
      %vm6408 = vcmp.lt.s32.totalorder %v6344, 4096
      %vm6409 = vcmp.lt.s32.totalorder %v6345, 4096
      %vm6410 = vcmp.lt.s32.totalorder %v6346, 4096
      %vm6411 = vcmp.lt.s32.totalorder %v6347, 4096
      %vm6412 = vcmp.lt.s32.totalorder %v6348, 4096
      %vm6413 = vcmp.lt.s32.totalorder %v6349, 4096
      %vm6414 = vcmp.lt.s32.totalorder %v6350, 4096
      %vm6415 = vcmp.lt.s32.totalorder %v6351, 4096
      %vm6416 = vcmp.lt.s32.totalorder %v6352, 4096
      %vm6417 = vcmp.lt.s32.totalorder %v6353, 4096
      %vm6418 = vcmp.lt.s32.totalorder %v6354, 4096
      %vm6419 = vcmp.lt.s32.totalorder %v6355, 4096
      %vm6420 = vcmp.lt.s32.totalorder %v6356, 4096
      %vm6421 = vcmp.lt.s32.totalorder %v6357, 4096
      %vm6422 = vcmp.lt.s32.totalorder %v6358, 4096
      %vm6423 = vcmp.lt.s32.totalorder %v6359, 4096
      %vm6424 = vcmp.lt.s32.totalorder %v6360, 4096
      %vm6425 = vcmp.lt.s32.totalorder %v6361, 4096
      %vm6426 = vcmp.lt.s32.totalorder %v6362, 4096
      %vm6427 = vcmp.lt.s32.totalorder %v6363, 4096
      %v6428 = vsel %vm6364, %v6234, 0.0
      %v6429 = vsel %vm6365, %v6235, 0.0
      %v6430 = vsel %vm6366, %v6236, 0.0
      %v6431 = vsel %vm6367, %v6237, 0.0
      %v6432 = vsel %vm6368, %v6238, 0.0
      %v6433 = vsel %vm6369, %v6239, 0.0
      %v6434 = vsel %vm6370, %v6240, 0.0
      %v6435 = vsel %vm6371, %v6241, 0.0
      %v6436 = vsel %vm6372, %v6242, 0.0
      %v6437 = vsel %vm6373, %v6243, 0.0
      %v6438 = vsel %vm6374, %v6244, 0.0
      %v6439 = vsel %vm6375, %v6245, 0.0
      %v6440 = vsel %vm6376, %v6246, 0.0
      %v6441 = vsel %vm6377, %v6247, 0.0
      %v6442 = vsel %vm6378, %v6248, 0.0
      %v6443 = vsel %vm6379, %v6249, 0.0
      %v6444 = vsel %vm6380, %v6250, 0.0
      %v6445 = vsel %vm6381, %v6251, 0.0
      %v6446 = vsel %vm6382, %v6252, 0.0
      %v6447 = vsel %vm6383, %v6253, 0.0
      %v6448 = vsel %vm6384, %v6254, 0.0
      %v6449 = vsel %vm6385, %v6255, 0.0
      %v6450 = vsel %vm6386, %v6256, 0.0
      %v6451 = vsel %vm6387, %v6257, 0.0
      %v6452 = vsel %vm6388, %v6258, 0.0
      %v6453 = vsel %vm6389, %v6259, 0.0
      %v6454 = vsel %vm6390, %v6260, 0.0
      %v6455 = vsel %vm6391, %v6261, 0.0
      %v6456 = vsel %vm6392, %v6262, 0.0
      %v6457 = vsel %vm6393, %v6263, 0.0
      %v6458 = vsel %vm6394, %v6264, 0.0
      %v6459 = vsel %vm6395, %v6265, 0.0
      %v6460 = vsel %vm6396, %v6266, 0.0
      %v6461 = vsel %vm6397, %v6267, 0.0
      %v6462 = vsel %vm6398, %v6268, 0.0
      %v6463 = vsel %vm6399, %v6269, 0.0
      %v6464 = vsel %vm6400, %v6270, 0.0
      %v6465 = vsel %vm6401, %v6271, 0.0
      %v6466 = vsel %vm6402, %v6272, 0.0
      %v6467 = vsel %vm6403, %v6273, 0.0
      %v6468 = vsel %vm6404, %v6274, 0.0
      %v6469 = vsel %vm6405, %v6275, 0.0
      %v6470 = vsel %vm6406, %v6276, 0.0
      %v6471 = vsel %vm6407, %v6277, 0.0
      %v6472 = vsel %vm6408, %v6278, 0.0
      %v6473 = vsel %vm6409, %v6279, 0.0
      %v6474 = vsel %vm6410, %v6280, 0.0
      %v6475 = vsel %vm6411, %v6281, 0.0
      %v6476 = vsel %vm6412, %v6282, 0.0
      %v6477 = vsel %vm6413, %v6283, 0.0
      %v6478 = vsel %vm6414, %v6284, 0.0
      %v6479 = vsel %vm6415, %v6285, 0.0
      %v6480 = vsel %vm6416, %v6286, 0.0
      %v6481 = vsel %vm6417, %v6287, 0.0
      %v6482 = vsel %vm6418, %v6288, 0.0
      %v6483 = vsel %vm6419, %v6289, 0.0
      %v6484 = vsel %vm6420, %v6290, 0.0
      %v6485 = vsel %vm6421, %v6291, 0.0
      %v6486 = vsel %vm6422, %v6292, 0.0
      %v6487 = vsel %vm6423, %v6293, 0.0
      %v6488 = vsel %vm6424, %v6294, 0.0
      %v6489 = vsel %vm6425, %v6295, 0.0
      %v6490 = vsel %vm6426, %v6296, 0.0
      %v6491 = vsel %vm6427, %v6297, 0.0
      %v6492 = vld [vmem:[#allocation7] sm:$0xff]
      %v6493 = vld [vmem:[#allocation7 + $0x8] sm:$0xff]
      %v6494 = vld [vmem:[#allocation7 + $0x10] sm:$0xff]
      %v6495 = vld [vmem:[#allocation7 + $0x18] sm:$0xff]
      %v6496 = vld [vmem:[#allocation7 + $0x20] sm:$0xff]
      %v6497 = vld [vmem:[#allocation7 + $0x28] sm:$0xff]
      %v6498 = vld [vmem:[#allocation7 + $0x30] sm:$0xff]
      %v6499 = vld [vmem:[#allocation7 + $0x38] sm:$0xff]
      %v6500 = vadd.f32 %v6428, %v6436
      %v6501 = vadd.f32 %v6500, %v6444
      %v6502 = vadd.f32 %v6501, %v6452
      %v6503 = vadd.f32 %v6502, %v6460
      %v6504 = vadd.f32 %v6503, %v6468
      %v6505 = vadd.f32 %v6504, %v6476
      %v6506 = vadd.f32 %v6505, %v6484
      %v6507 = vadd.f32 %v6429, %v6437
      %v6508 = vadd.f32 %v6507, %v6445
      %v6509 = vadd.f32 %v6508, %v6453
      %v6510 = vadd.f32 %v6509, %v6461
      %v6511 = vadd.f32 %v6510, %v6469
      %v6512 = vadd.f32 %v6511, %v6477
      %v6513 = vadd.f32 %v6512, %v6485
      %v6514 = vadd.f32 %v6430, %v6438
      %v6515 = vadd.f32 %v6514, %v6446
      %v6516 = vadd.f32 %v6515, %v6454
      %v6517 = vadd.f32 %v6516, %v6462
      %v6518 = vadd.f32 %v6517, %v6470
      %v6519 = vadd.f32 %v6518, %v6478
      %v6520 = vadd.f32 %v6519, %v6486
      %v6521 = vadd.f32 %v6431, %v6439
      %v6522 = vadd.f32 %v6521, %v6447
      %v6523 = vadd.f32 %v6522, %v6455
      %v6524 = vadd.f32 %v6523, %v6463
      %v6525 = vadd.f32 %v6524, %v6471
      %v6526 = vadd.f32 %v6525, %v6479
      %v6527 = vadd.f32 %v6526, %v6487
      %v6528 = vadd.f32 %v6432, %v6440
      %v6529 = vadd.f32 %v6528, %v6448
      %v6530 = vadd.f32 %v6529, %v6456
      %v6531 = vadd.f32 %v6530, %v6464
      %v6532 = vadd.f32 %v6531, %v6472
      %v6533 = vadd.f32 %v6532, %v6480
      %v6534 = vadd.f32 %v6533, %v6488
      %v6535 = vadd.f32 %v6433, %v6441
      %v6536 = vadd.f32 %v6535, %v6449
      %v6537 = vadd.f32 %v6536, %v6457
      %v6538 = vadd.f32 %v6537, %v6465
      %v6539 = vadd.f32 %v6538, %v6473
      %v6540 = vadd.f32 %v6539, %v6481
      %v6541 = vadd.f32 %v6540, %v6489
      %v6542 = vadd.f32 %v6434, %v6442
      %v6543 = vadd.f32 %v6542, %v6450
      %v6544 = vadd.f32 %v6543, %v6458
      %v6545 = vadd.f32 %v6544, %v6466
      %v6546 = vadd.f32 %v6545, %v6474
      %v6547 = vadd.f32 %v6546, %v6482
      %v6548 = vadd.f32 %v6547, %v6490
      %v6549 = vadd.f32 %v6435, %v6443
      %v6550 = vadd.f32 %v6549, %v6451
      %v6551 = vadd.f32 %v6550, %v6459
      %v6552 = vadd.f32 %v6551, %v6467
      %v6553 = vadd.f32 %v6552, %v6475
      %v6554 = vadd.f32 %v6553, %v6483
      %v6555 = vadd.f32 %v6554, %v6491
      %v6556 = vadd.f32 %v6492, %v6506
      %v6557 = vadd.f32 %v6493, %v6513
      %v6558 = vadd.f32 %v6494, %v6520
      %v6559 = vadd.f32 %v6495, %v6527
      %v6560 = vadd.f32 %v6496, %v6534
      %v6561 = vadd.f32 %v6497, %v6541
      %v6562 = vadd.f32 %v6498, %v6548
      %v6563 = vadd.f32 %v6499, %v6555
      %6564 = vst [vmem:[#allocation7] sm:$0xff] %v6556
      %6565 = vst [vmem:[#allocation7 + $0x8] sm:$0xff] %v6557
      %6566 = vst [vmem:[#allocation7 + $0x10] sm:$0xff] %v6558
      %6567 = vst [vmem:[#allocation7 + $0x18] sm:$0xff] %v6559
      %6568 = vst [vmem:[#allocation7 + $0x20] sm:$0xff] %v6560
      %6569 = vst [vmem:[#allocation7 + $0x28] sm:$0xff] %v6561
      %6570 = vst [vmem:[#allocation7 + $0x30] sm:$0xff] %v6562
      %6571 = vst [vmem:[#allocation7 + $0x38] sm:$0xff] %v6563
      %s6572 = scalar_lea.vmem [#allocation2], 3584
      %v6573 = vld [vmem:[%s6572] sm:$0xff]
      %v6574 = vld [vmem:[%s6572 + $0x8] sm:$0xff]
      %v6575 = vld [vmem:[%s6572 + $0x10] sm:$0xff]
      %v6576 = vld [vmem:[%s6572 + $0x18] sm:$0xff]
      %v6577 = vld [vmem:[%s6572 + $0x20] sm:$0xff]
      %v6578 = vld [vmem:[%s6572 + $0x28] sm:$0xff]
      %v6579 = vld [vmem:[%s6572 + $0x30] sm:$0xff]
      %v6580 = vld [vmem:[%s6572 + $0x38] sm:$0xff]
      %v6581 = vld [vmem:[%s6572 + $0x40] sm:$0xff]
      %v6582 = vld [vmem:[%s6572 + $0x48] sm:$0xff]
      %v6583 = vld [vmem:[%s6572 + $0x50] sm:$0xff]
      %v6584 = vld [vmem:[%s6572 + $0x58] sm:$0xff]
      %v6585 = vld [vmem:[%s6572 + $0x60] sm:$0xff]
      %v6586 = vld [vmem:[%s6572 + $0x68] sm:$0xff]
      %v6587 = vld [vmem:[%s6572 + $0x70] sm:$0xff]
      %v6588 = vld [vmem:[%s6572 + $0x78] sm:$0xff]
      %v6589 = vld [vmem:[%s6572 + $0x80] sm:$0xff]
      %v6590 = vld [vmem:[%s6572 + $0x88] sm:$0xff]
      %v6591 = vld [vmem:[%s6572 + $0x90] sm:$0xff]
      %v6592 = vld [vmem:[%s6572 + $0x98] sm:$0xff]
      %v6593 = vld [vmem:[%s6572 + $0xa0] sm:$0xff]
      %v6594 = vld [vmem:[%s6572 + $0xa8] sm:$0xff]
      %v6595 = vld [vmem:[%s6572 + $0xb0] sm:$0xff]
      %v6596 = vld [vmem:[%s6572 + $0xb8] sm:$0xff]
      %v6597 = vld [vmem:[%s6572 + $0xc0] sm:$0xff]
      %v6598 = vld [vmem:[%s6572 + $0xc8] sm:$0xff]
      %v6599 = vld [vmem:[%s6572 + $0xd0] sm:$0xff]
      %v6600 = vld [vmem:[%s6572 + $0xd8] sm:$0xff]
      %v6601 = vld [vmem:[%s6572 + $0xe0] sm:$0xff]
      %v6602 = vld [vmem:[%s6572 + $0xe8] sm:$0xff]
      %v6603 = vld [vmem:[%s6572 + $0xf0] sm:$0xff]
      %v6604 = vld [vmem:[%s6572 + $0xf8] sm:$0xff]
      %v6605 = vld [vmem:[%s6572 + $0x100] sm:$0xff]
      %v6606 = vld [vmem:[%s6572 + $0x108] sm:$0xff]
      %v6607 = vld [vmem:[%s6572 + $0x110] sm:$0xff]
      %v6608 = vld [vmem:[%s6572 + $0x118] sm:$0xff]
      %v6609 = vld [vmem:[%s6572 + $0x120] sm:$0xff]
      %v6610 = vld [vmem:[%s6572 + $0x128] sm:$0xff]
      %v6611 = vld [vmem:[%s6572 + $0x130] sm:$0xff]
      %v6612 = vld [vmem:[%s6572 + $0x138] sm:$0xff]
      %v6613 = vld [vmem:[%s6572 + $0x140] sm:$0xff]
      %v6614 = vld [vmem:[%s6572 + $0x148] sm:$0xff]
      %v6615 = vld [vmem:[%s6572 + $0x150] sm:$0xff]
      %v6616 = vld [vmem:[%s6572 + $0x158] sm:$0xff]
      %v6617 = vld [vmem:[%s6572 + $0x160] sm:$0xff]
      %v6618 = vld [vmem:[%s6572 + $0x168] sm:$0xff]
      %v6619 = vld [vmem:[%s6572 + $0x170] sm:$0xff]
      %v6620 = vld [vmem:[%s6572 + $0x178] sm:$0xff]
      %v6621 = vld [vmem:[%s6572 + $0x180] sm:$0xff]
      %v6622 = vld [vmem:[%s6572 + $0x188] sm:$0xff]
      %v6623 = vld [vmem:[%s6572 + $0x190] sm:$0xff]
      %v6624 = vld [vmem:[%s6572 + $0x198] sm:$0xff]
      %v6625 = vld [vmem:[%s6572 + $0x1a0] sm:$0xff]
      %v6626 = vld [vmem:[%s6572 + $0x1a8] sm:$0xff]
      %v6627 = vld [vmem:[%s6572 + $0x1b0] sm:$0xff]
      %v6628 = vld [vmem:[%s6572 + $0x1b8] sm:$0xff]
      %v6629 = vld [vmem:[%s6572 + $0x1c0] sm:$0xff]
      %v6630 = vld [vmem:[%s6572 + $0x1c8] sm:$0xff]
      %v6631 = vld [vmem:[%s6572 + $0x1d0] sm:$0xff]
      %v6632 = vld [vmem:[%s6572 + $0x1d8] sm:$0xff]
      %v6633 = vld [vmem:[%s6572 + $0x1e0] sm:$0xff]
      %v6634 = vld [vmem:[%s6572 + $0x1e8] sm:$0xff]
      %v6635 = vld [vmem:[%s6572 + $0x1f0] sm:$0xff]
      %v6636 = vld [vmem:[%s6572 + $0x1f8] sm:$0xff]
      %s6637 = scalar_lea.vmem [#allocation5], 3584
      %v6638 = vld [vmem:[%s6637] sm:$0xff]
      %v6639 = vld [vmem:[%s6637 + $0x8] sm:$0xff]
      %v6640 = vld [vmem:[%s6637 + $0x10] sm:$0xff]
      %v6641 = vld [vmem:[%s6637 + $0x18] sm:$0xff]
      %v6642 = vld [vmem:[%s6637 + $0x20] sm:$0xff]
      %v6643 = vld [vmem:[%s6637 + $0x28] sm:$0xff]
      %v6644 = vld [vmem:[%s6637 + $0x30] sm:$0xff]
      %v6645 = vld [vmem:[%s6637 + $0x38] sm:$0xff]
      %v6646 = vld [vmem:[%s6637 + $0x40] sm:$0xff]
      %v6647 = vld [vmem:[%s6637 + $0x48] sm:$0xff]
      %v6648 = vld [vmem:[%s6637 + $0x50] sm:$0xff]
      %v6649 = vld [vmem:[%s6637 + $0x58] sm:$0xff]
      %v6650 = vld [vmem:[%s6637 + $0x60] sm:$0xff]
      %v6651 = vld [vmem:[%s6637 + $0x68] sm:$0xff]
      %v6652 = vld [vmem:[%s6637 + $0x70] sm:$0xff]
      %v6653 = vld [vmem:[%s6637 + $0x78] sm:$0xff]
      %v6654 = vld [vmem:[%s6637 + $0x80] sm:$0xff]
      %v6655 = vld [vmem:[%s6637 + $0x88] sm:$0xff]
      %v6656 = vld [vmem:[%s6637 + $0x90] sm:$0xff]
      %v6657 = vld [vmem:[%s6637 + $0x98] sm:$0xff]
      %v6658 = vld [vmem:[%s6637 + $0xa0] sm:$0xff]
      %v6659 = vld [vmem:[%s6637 + $0xa8] sm:$0xff]
      %v6660 = vld [vmem:[%s6637 + $0xb0] sm:$0xff]
      %v6661 = vld [vmem:[%s6637 + $0xb8] sm:$0xff]
      %v6662 = vld [vmem:[%s6637 + $0xc0] sm:$0xff]
      %v6663 = vld [vmem:[%s6637 + $0xc8] sm:$0xff]
      %v6664 = vld [vmem:[%s6637 + $0xd0] sm:$0xff]
      %v6665 = vld [vmem:[%s6637 + $0xd8] sm:$0xff]
      %v6666 = vld [vmem:[%s6637 + $0xe0] sm:$0xff]
      %v6667 = vld [vmem:[%s6637 + $0xe8] sm:$0xff]
      %v6668 = vld [vmem:[%s6637 + $0xf0] sm:$0xff]
      %v6669 = vld [vmem:[%s6637 + $0xf8] sm:$0xff]
      %v6670 = vld [vmem:[%s6637 + $0x100] sm:$0xff]
      %v6671 = vld [vmem:[%s6637 + $0x108] sm:$0xff]
      %v6672 = vld [vmem:[%s6637 + $0x110] sm:$0xff]
      %v6673 = vld [vmem:[%s6637 + $0x118] sm:$0xff]
      %v6674 = vld [vmem:[%s6637 + $0x120] sm:$0xff]
      %v6675 = vld [vmem:[%s6637 + $0x128] sm:$0xff]
      %v6676 = vld [vmem:[%s6637 + $0x130] sm:$0xff]
      %v6677 = vld [vmem:[%s6637 + $0x138] sm:$0xff]
      %v6678 = vld [vmem:[%s6637 + $0x140] sm:$0xff]
      %v6679 = vld [vmem:[%s6637 + $0x148] sm:$0xff]
      %v6680 = vld [vmem:[%s6637 + $0x150] sm:$0xff]
      %v6681 = vld [vmem:[%s6637 + $0x158] sm:$0xff]
      %v6682 = vld [vmem:[%s6637 + $0x160] sm:$0xff]
      %v6683 = vld [vmem:[%s6637 + $0x168] sm:$0xff]
      %v6684 = vld [vmem:[%s6637 + $0x170] sm:$0xff]
      %v6685 = vld [vmem:[%s6637 + $0x178] sm:$0xff]
      %v6686 = vld [vmem:[%s6637 + $0x180] sm:$0xff]
      %v6687 = vld [vmem:[%s6637 + $0x188] sm:$0xff]
      %v6688 = vld [vmem:[%s6637 + $0x190] sm:$0xff]
      %v6689 = vld [vmem:[%s6637 + $0x198] sm:$0xff]
      %v6690 = vld [vmem:[%s6637 + $0x1a0] sm:$0xff]
      %v6691 = vld [vmem:[%s6637 + $0x1a8] sm:$0xff]
      %v6692 = vld [vmem:[%s6637 + $0x1b0] sm:$0xff]
      %v6693 = vld [vmem:[%s6637 + $0x1b8] sm:$0xff]
      %v6694 = vld [vmem:[%s6637 + $0x1c0] sm:$0xff]
      %v6695 = vld [vmem:[%s6637 + $0x1c8] sm:$0xff]
      %v6696 = vld [vmem:[%s6637 + $0x1d0] sm:$0xff]
      %v6697 = vld [vmem:[%s6637 + $0x1d8] sm:$0xff]
      %v6698 = vld [vmem:[%s6637 + $0x1e0] sm:$0xff]
      %v6699 = vld [vmem:[%s6637 + $0x1e8] sm:$0xff]
      %v6700 = vld [vmem:[%s6637 + $0x1f0] sm:$0xff]
      %v6701 = vld [vmem:[%s6637 + $0x1f8] sm:$0xff]
      %v6702 = vsub.f32 %v6573, %v6638
      %v6703 = vsub.f32 %v6574, %v6639
      %v6704 = vsub.f32 %v6575, %v6640
      %v6705 = vsub.f32 %v6576, %v6641
      %v6706 = vsub.f32 %v6577, %v6642
      %v6707 = vsub.f32 %v6578, %v6643
      %v6708 = vsub.f32 %v6579, %v6644
      %v6709 = vsub.f32 %v6580, %v6645
      %v6710 = vsub.f32 %v6581, %v6646
      %v6711 = vsub.f32 %v6582, %v6647
      %v6712 = vsub.f32 %v6583, %v6648
      %v6713 = vsub.f32 %v6584, %v6649
      %v6714 = vsub.f32 %v6585, %v6650
      %v6715 = vsub.f32 %v6586, %v6651
      %v6716 = vsub.f32 %v6587, %v6652
      %v6717 = vsub.f32 %v6588, %v6653
      %v6718 = vsub.f32 %v6589, %v6654
      %v6719 = vsub.f32 %v6590, %v6655
      %v6720 = vsub.f32 %v6591, %v6656
      %v6721 = vsub.f32 %v6592, %v6657
      %v6722 = vsub.f32 %v6593, %v6658
      %v6723 = vsub.f32 %v6594, %v6659
      %v6724 = vsub.f32 %v6595, %v6660
      %v6725 = vsub.f32 %v6596, %v6661
      %v6726 = vsub.f32 %v6597, %v6662
      %v6727 = vsub.f32 %v6598, %v6663
      %v6728 = vsub.f32 %v6599, %v6664
      %v6729 = vsub.f32 %v6600, %v6665
      %v6730 = vsub.f32 %v6601, %v6666
      %v6731 = vsub.f32 %v6602, %v6667
      %v6732 = vsub.f32 %v6603, %v6668
      %v6733 = vsub.f32 %v6604, %v6669
      %v6734 = vsub.f32 %v6605, %v6670
      %v6735 = vsub.f32 %v6606, %v6671
      %v6736 = vsub.f32 %v6607, %v6672
      %v6737 = vsub.f32 %v6608, %v6673
      %v6738 = vsub.f32 %v6609, %v6674
      %v6739 = vsub.f32 %v6610, %v6675
      %v6740 = vsub.f32 %v6611, %v6676
      %v6741 = vsub.f32 %v6612, %v6677
      %v6742 = vsub.f32 %v6613, %v6678
      %v6743 = vsub.f32 %v6614, %v6679
      %v6744 = vsub.f32 %v6615, %v6680
      %v6745 = vsub.f32 %v6616, %v6681
      %v6746 = vsub.f32 %v6617, %v6682
      %v6747 = vsub.f32 %v6618, %v6683
      %v6748 = vsub.f32 %v6619, %v6684
      %v6749 = vsub.f32 %v6620, %v6685
      %v6750 = vsub.f32 %v6621, %v6686
      %v6751 = vsub.f32 %v6622, %v6687
      %v6752 = vsub.f32 %v6623, %v6688
      %v6753 = vsub.f32 %v6624, %v6689
      %v6754 = vsub.f32 %v6625, %v6690
      %v6755 = vsub.f32 %v6626, %v6691
      %v6756 = vsub.f32 %v6627, %v6692
      %v6757 = vsub.f32 %v6628, %v6693
      %v6758 = vsub.f32 %v6629, %v6694
      %v6759 = vsub.f32 %v6630, %v6695
      %v6760 = vsub.f32 %v6631, %v6696
      %v6761 = vsub.f32 %v6632, %v6697
      %v6762 = vsub.f32 %v6633, %v6698
      %v6763 = vsub.f32 %v6634, %v6699
      %v6764 = vsub.f32 %v6635, %v6700
      %v6765 = vsub.f32 %v6636, %v6701
      %v6766 = vmul.f32 %v6702, %v6702
      %v6767 = vmul.f32 %v6703, %v6703
      %v6768 = vmul.f32 %v6704, %v6704
      %v6769 = vmul.f32 %v6705, %v6705
      %v6770 = vmul.f32 %v6706, %v6706
      %v6771 = vmul.f32 %v6707, %v6707
      %v6772 = vmul.f32 %v6708, %v6708
      %v6773 = vmul.f32 %v6709, %v6709
      %v6774 = vmul.f32 %v6710, %v6710
      %v6775 = vmul.f32 %v6711, %v6711
      %v6776 = vmul.f32 %v6712, %v6712
      %v6777 = vmul.f32 %v6713, %v6713
      %v6778 = vmul.f32 %v6714, %v6714
      %v6779 = vmul.f32 %v6715, %v6715
      %v6780 = vmul.f32 %v6716, %v6716
      %v6781 = vmul.f32 %v6717, %v6717
      %v6782 = vmul.f32 %v6718, %v6718
      %v6783 = vmul.f32 %v6719, %v6719
      %v6784 = vmul.f32 %v6720, %v6720
      %v6785 = vmul.f32 %v6721, %v6721
      %v6786 = vmul.f32 %v6722, %v6722
      %v6787 = vmul.f32 %v6723, %v6723
      %v6788 = vmul.f32 %v6724, %v6724
      %v6789 = vmul.f32 %v6725, %v6725
      %v6790 = vmul.f32 %v6726, %v6726
      %v6791 = vmul.f32 %v6727, %v6727
      %v6792 = vmul.f32 %v6728, %v6728
      %v6793 = vmul.f32 %v6729, %v6729
      %v6794 = vmul.f32 %v6730, %v6730
      %v6795 = vmul.f32 %v6731, %v6731
      %v6796 = vmul.f32 %v6732, %v6732
      %v6797 = vmul.f32 %v6733, %v6733
      %v6798 = vmul.f32 %v6734, %v6734
      %v6799 = vmul.f32 %v6735, %v6735
      %v6800 = vmul.f32 %v6736, %v6736
      %v6801 = vmul.f32 %v6737, %v6737
      %v6802 = vmul.f32 %v6738, %v6738
      %v6803 = vmul.f32 %v6739, %v6739
      %v6804 = vmul.f32 %v6740, %v6740
      %v6805 = vmul.f32 %v6741, %v6741
      %v6806 = vmul.f32 %v6742, %v6742
      %v6807 = vmul.f32 %v6743, %v6743
      %v6808 = vmul.f32 %v6744, %v6744
      %v6809 = vmul.f32 %v6745, %v6745
      %v6810 = vmul.f32 %v6746, %v6746
      %v6811 = vmul.f32 %v6747, %v6747
      %v6812 = vmul.f32 %v6748, %v6748
      %v6813 = vmul.f32 %v6749, %v6749
      %v6814 = vmul.f32 %v6750, %v6750
      %v6815 = vmul.f32 %v6751, %v6751
      %v6816 = vmul.f32 %v6752, %v6752
      %v6817 = vmul.f32 %v6753, %v6753
      %v6818 = vmul.f32 %v6754, %v6754
      %v6819 = vmul.f32 %v6755, %v6755
      %v6820 = vmul.f32 %v6756, %v6756
      %v6821 = vmul.f32 %v6757, %v6757
      %v6822 = vmul.f32 %v6758, %v6758
      %v6823 = vmul.f32 %v6759, %v6759
      %v6824 = vmul.f32 %v6760, %v6760
      %v6825 = vmul.f32 %v6761, %v6761
      %v6826 = vmul.f32 %v6762, %v6762
      %v6827 = vmul.f32 %v6763, %v6763
      %v6828 = vmul.f32 %v6764, %v6764
      %v6829 = vmul.f32 %v6765, %v6765
      %s6830 = sadd.s32 %s73, 3584
      %v6831 = vstv %s6830
      %v6832 = vadd.s32 %v6831, %v3043
      %v6833 = vadd.s32 %v6831, %v3044
      %v6834 = vadd.s32 %v6831, %v3045
      %v6835 = vadd.s32 %v6831, %v3046
      %v6836 = vadd.s32 %v6831, %v3047
      %v6837 = vadd.s32 %v6831, %v3048
      %v6838 = vadd.s32 %v6831, %v3049
      %v6839 = vadd.s32 %v6831, %v3050
      %v6840 = vadd.s32 %v6831, %v3051
      %v6841 = vadd.s32 %v6831, %v3052
      %v6842 = vadd.s32 %v6831, %v3053
      %v6843 = vadd.s32 %v6831, %v3054
      %v6844 = vadd.s32 %v6831, %v3055
      %v6845 = vadd.s32 %v6831, %v3056
      %v6846 = vadd.s32 %v6831, %v3057
      %v6847 = vadd.s32 %v6831, %v3058
      %v6848 = vadd.s32 %v6831, %v3059
      %v6849 = vadd.s32 %v6831, %v3060
      %v6850 = vadd.s32 %v6831, %v3061
      %v6851 = vadd.s32 %v6831, %v3062
      %v6852 = vadd.s32 %v6831, %v3063
      %v6853 = vadd.s32 %v6831, %v3064
      %v6854 = vadd.s32 %v6831, %v3065
      %v6855 = vadd.s32 %v6831, %v3066
      %v6856 = vadd.s32 %v6831, %v3067
      %v6857 = vadd.s32 %v6831, %v3068
      %v6858 = vadd.s32 %v6831, %v3069
      %v6859 = vadd.s32 %v6831, %v3070
      %v6860 = vadd.s32 %v6831, %v3071
      %v6861 = vadd.s32 %v6831, %v3072
      %v6862 = vadd.s32 %v6831, %v3073
      %v6863 = vadd.s32 %v6831, %v3074
      %v6864 = vadd.s32 %v6831, %v3075
      %v6865 = vadd.s32 %v6831, %v3076
      %v6866 = vadd.s32 %v6831, %v3077
      %v6867 = vadd.s32 %v6831, %v3078
      %v6868 = vadd.s32 %v6831, %v3079
      %v6869 = vadd.s32 %v6831, %v3080
      %v6870 = vadd.s32 %v6831, %v3081
      %v6871 = vadd.s32 %v6831, %v3082
      %v6872 = vadd.s32 %v6831, %v3083
      %v6873 = vadd.s32 %v6831, %v3084
      %v6874 = vadd.s32 %v6831, %v3085
      %v6875 = vadd.s32 %v6831, %v3086
      %v6876 = vadd.s32 %v6831, %v3087
      %v6877 = vadd.s32 %v6831, %v3088
      %v6878 = vadd.s32 %v6831, %v3089
      %v6879 = vadd.s32 %v6831, %v3090
      %v6880 = vadd.s32 %v6831, %v3091
      %v6881 = vadd.s32 %v6831, %v3092
      %v6882 = vadd.s32 %v6831, %v3093
      %v6883 = vadd.s32 %v6831, %v3094
      %v6884 = vadd.s32 %v6831, %v3095
      %v6885 = vadd.s32 %v6831, %v3096
      %v6886 = vadd.s32 %v6831, %v3097
      %v6887 = vadd.s32 %v6831, %v3098
      %v6888 = vadd.s32 %v6831, %v3099
      %v6889 = vadd.s32 %v6831, %v3100
      %v6890 = vadd.s32 %v6831, %v3101
      %v6891 = vadd.s32 %v6831, %v3102
      %v6892 = vadd.s32 %v6831, %v3103
      %v6893 = vadd.s32 %v6831, %v3104
      %v6894 = vadd.s32 %v6831, %v3105
      %v6895 = vadd.s32 %v6831, %v3106
      %vm6896 = vcmp.lt.s32.totalorder %v6832, 4096
      %vm6897 = vcmp.lt.s32.totalorder %v6833, 4096
      %vm6898 = vcmp.lt.s32.totalorder %v6834, 4096
      %vm6899 = vcmp.lt.s32.totalorder %v6835, 4096
      %vm6900 = vcmp.lt.s32.totalorder %v6836, 4096
      %vm6901 = vcmp.lt.s32.totalorder %v6837, 4096
      %vm6902 = vcmp.lt.s32.totalorder %v6838, 4096
      %vm6903 = vcmp.lt.s32.totalorder %v6839, 4096
      %vm6904 = vcmp.lt.s32.totalorder %v6840, 4096
      %vm6905 = vcmp.lt.s32.totalorder %v6841, 4096
      %vm6906 = vcmp.lt.s32.totalorder %v6842, 4096
      %vm6907 = vcmp.lt.s32.totalorder %v6843, 4096
      %vm6908 = vcmp.lt.s32.totalorder %v6844, 4096
      %vm6909 = vcmp.lt.s32.totalorder %v6845, 4096
      %vm6910 = vcmp.lt.s32.totalorder %v6846, 4096
      %vm6911 = vcmp.lt.s32.totalorder %v6847, 4096
      %vm6912 = vcmp.lt.s32.totalorder %v6848, 4096
      %vm6913 = vcmp.lt.s32.totalorder %v6849, 4096
      %vm6914 = vcmp.lt.s32.totalorder %v6850, 4096
      %vm6915 = vcmp.lt.s32.totalorder %v6851, 4096
      %vm6916 = vcmp.lt.s32.totalorder %v6852, 4096
      %vm6917 = vcmp.lt.s32.totalorder %v6853, 4096
      %vm6918 = vcmp.lt.s32.totalorder %v6854, 4096
      %vm6919 = vcmp.lt.s32.totalorder %v6855, 4096
      %vm6920 = vcmp.lt.s32.totalorder %v6856, 4096
      %vm6921 = vcmp.lt.s32.totalorder %v6857, 4096
      %vm6922 = vcmp.lt.s32.totalorder %v6858, 4096
      %vm6923 = vcmp.lt.s32.totalorder %v6859, 4096
      %vm6924 = vcmp.lt.s32.totalorder %v6860, 4096
      %vm6925 = vcmp.lt.s32.totalorder %v6861, 4096
      %vm6926 = vcmp.lt.s32.totalorder %v6862, 4096
      %vm6927 = vcmp.lt.s32.totalorder %v6863, 4096
      %vm6928 = vcmp.lt.s32.totalorder %v6864, 4096
      %vm6929 = vcmp.lt.s32.totalorder %v6865, 4096
      %vm6930 = vcmp.lt.s32.totalorder %v6866, 4096
      %vm6931 = vcmp.lt.s32.totalorder %v6867, 4096
      %vm6932 = vcmp.lt.s32.totalorder %v6868, 4096
      %vm6933 = vcmp.lt.s32.totalorder %v6869, 4096
      %vm6934 = vcmp.lt.s32.totalorder %v6870, 4096
      %vm6935 = vcmp.lt.s32.totalorder %v6871, 4096
      %vm6936 = vcmp.lt.s32.totalorder %v6872, 4096
      %vm6937 = vcmp.lt.s32.totalorder %v6873, 4096
      %vm6938 = vcmp.lt.s32.totalorder %v6874, 4096
      %vm6939 = vcmp.lt.s32.totalorder %v6875, 4096
      %vm6940 = vcmp.lt.s32.totalorder %v6876, 4096
      %vm6941 = vcmp.lt.s32.totalorder %v6877, 4096
      %vm6942 = vcmp.lt.s32.totalorder %v6878, 4096
      %vm6943 = vcmp.lt.s32.totalorder %v6879, 4096
      %vm6944 = vcmp.lt.s32.totalorder %v6880, 4096
      %vm6945 = vcmp.lt.s32.totalorder %v6881, 4096
      %vm6946 = vcmp.lt.s32.totalorder %v6882, 4096
      %vm6947 = vcmp.lt.s32.totalorder %v6883, 4096
      %vm6948 = vcmp.lt.s32.totalorder %v6884, 4096
      %vm6949 = vcmp.lt.s32.totalorder %v6885, 4096
      %vm6950 = vcmp.lt.s32.totalorder %v6886, 4096
      %vm6951 = vcmp.lt.s32.totalorder %v6887, 4096
      %vm6952 = vcmp.lt.s32.totalorder %v6888, 4096
      %vm6953 = vcmp.lt.s32.totalorder %v6889, 4096
      %vm6954 = vcmp.lt.s32.totalorder %v6890, 4096
      %vm6955 = vcmp.lt.s32.totalorder %v6891, 4096
      %vm6956 = vcmp.lt.s32.totalorder %v6892, 4096
      %vm6957 = vcmp.lt.s32.totalorder %v6893, 4096
      %vm6958 = vcmp.lt.s32.totalorder %v6894, 4096
      %vm6959 = vcmp.lt.s32.totalorder %v6895, 4096
      %v6960 = vsel %vm6896, %v6766, 0.0
      %v6961 = vsel %vm6897, %v6767, 0.0
      %v6962 = vsel %vm6898, %v6768, 0.0
      %v6963 = vsel %vm6899, %v6769, 0.0
      %v6964 = vsel %vm6900, %v6770, 0.0
      %v6965 = vsel %vm6901, %v6771, 0.0
      %v6966 = vsel %vm6902, %v6772, 0.0
      %v6967 = vsel %vm6903, %v6773, 0.0
      %v6968 = vsel %vm6904, %v6774, 0.0
      %v6969 = vsel %vm6905, %v6775, 0.0
      %v6970 = vsel %vm6906, %v6776, 0.0
      %v6971 = vsel %vm6907, %v6777, 0.0
      %v6972 = vsel %vm6908, %v6778, 0.0
      %v6973 = vsel %vm6909, %v6779, 0.0
      %v6974 = vsel %vm6910, %v6780, 0.0
      %v6975 = vsel %vm6911, %v6781, 0.0
      %v6976 = vsel %vm6912, %v6782, 0.0
      %v6977 = vsel %vm6913, %v6783, 0.0
      %v6978 = vsel %vm6914, %v6784, 0.0
      %v6979 = vsel %vm6915, %v6785, 0.0
      %v6980 = vsel %vm6916, %v6786, 0.0
      %v6981 = vsel %vm6917, %v6787, 0.0
      %v6982 = vsel %vm6918, %v6788, 0.0
      %v6983 = vsel %vm6919, %v6789, 0.0
      %v6984 = vsel %vm6920, %v6790, 0.0
      %v6985 = vsel %vm6921, %v6791, 0.0
      %v6986 = vsel %vm6922, %v6792, 0.0
      %v6987 = vsel %vm6923, %v6793, 0.0
      %v6988 = vsel %vm6924, %v6794, 0.0
      %v6989 = vsel %vm6925, %v6795, 0.0
      %v6990 = vsel %vm6926, %v6796, 0.0
      %v6991 = vsel %vm6927, %v6797, 0.0
      %v6992 = vsel %vm6928, %v6798, 0.0
      %v6993 = vsel %vm6929, %v6799, 0.0
      %v6994 = vsel %vm6930, %v6800, 0.0
      %v6995 = vsel %vm6931, %v6801, 0.0
      %v6996 = vsel %vm6932, %v6802, 0.0
      %v6997 = vsel %vm6933, %v6803, 0.0
      %v6998 = vsel %vm6934, %v6804, 0.0
      %v6999 = vsel %vm6935, %v6805, 0.0
      %v7000 = vsel %vm6936, %v6806, 0.0
      %v7001 = vsel %vm6937, %v6807, 0.0
      %v7002 = vsel %vm6938, %v6808, 0.0
      %v7003 = vsel %vm6939, %v6809, 0.0
      %v7004 = vsel %vm6940, %v6810, 0.0
      %v7005 = vsel %vm6941, %v6811, 0.0
      %v7006 = vsel %vm6942, %v6812, 0.0
      %v7007 = vsel %vm6943, %v6813, 0.0
      %v7008 = vsel %vm6944, %v6814, 0.0
      %v7009 = vsel %vm6945, %v6815, 0.0
      %v7010 = vsel %vm6946, %v6816, 0.0
      %v7011 = vsel %vm6947, %v6817, 0.0
      %v7012 = vsel %vm6948, %v6818, 0.0
      %v7013 = vsel %vm6949, %v6819, 0.0
      %v7014 = vsel %vm6950, %v6820, 0.0
      %v7015 = vsel %vm6951, %v6821, 0.0
      %v7016 = vsel %vm6952, %v6822, 0.0
      %v7017 = vsel %vm6953, %v6823, 0.0
      %v7018 = vsel %vm6954, %v6824, 0.0
      %v7019 = vsel %vm6955, %v6825, 0.0
      %v7020 = vsel %vm6956, %v6826, 0.0
      %v7021 = vsel %vm6957, %v6827, 0.0
      %v7022 = vsel %vm6958, %v6828, 0.0
      %v7023 = vsel %vm6959, %v6829, 0.0
      %v7024 = vld [vmem:[#allocation7] sm:$0xff]
      %v7025 = vld [vmem:[#allocation7 + $0x8] sm:$0xff]
      %v7026 = vld [vmem:[#allocation7 + $0x10] sm:$0xff]
      %v7027 = vld [vmem:[#allocation7 + $0x18] sm:$0xff]
      %v7028 = vld [vmem:[#allocation7 + $0x20] sm:$0xff]
      %v7029 = vld [vmem:[#allocation7 + $0x28] sm:$0xff]
      %v7030 = vld [vmem:[#allocation7 + $0x30] sm:$0xff]
      %v7031 = vld [vmem:[#allocation7 + $0x38] sm:$0xff]
      %v7032 = vadd.f32 %v6960, %v6968
      %v7033 = vadd.f32 %v7032, %v6976
      %v7034 = vadd.f32 %v7033, %v6984
      %v7035 = vadd.f32 %v7034, %v6992
      %v7036 = vadd.f32 %v7035, %v7000
      %v7037 = vadd.f32 %v7036, %v7008
      %v7038 = vadd.f32 %v7037, %v7016
      %v7039 = vadd.f32 %v6961, %v6969
      %v7040 = vadd.f32 %v7039, %v6977
      %v7041 = vadd.f32 %v7040, %v6985
      %v7042 = vadd.f32 %v7041, %v6993
      %v7043 = vadd.f32 %v7042, %v7001
      %v7044 = vadd.f32 %v7043, %v7009
      %v7045 = vadd.f32 %v7044, %v7017
      %v7046 = vadd.f32 %v6962, %v6970
      %v7047 = vadd.f32 %v7046, %v6978
      %v7048 = vadd.f32 %v7047, %v6986
      %v7049 = vadd.f32 %v7048, %v6994
      %v7050 = vadd.f32 %v7049, %v7002
      %v7051 = vadd.f32 %v7050, %v7010
      %v7052 = vadd.f32 %v7051, %v7018
      %v7053 = vadd.f32 %v6963, %v6971
      %v7054 = vadd.f32 %v7053, %v6979
      %v7055 = vadd.f32 %v7054, %v6987
      %v7056 = vadd.f32 %v7055, %v6995
      %v7057 = vadd.f32 %v7056, %v7003
      %v7058 = vadd.f32 %v7057, %v7011
      %v7059 = vadd.f32 %v7058, %v7019
      %v7060 = vadd.f32 %v6964, %v6972
      %v7061 = vadd.f32 %v7060, %v6980
      %v7062 = vadd.f32 %v7061, %v6988
      %v7063 = vadd.f32 %v7062, %v6996
      %v7064 = vadd.f32 %v7063, %v7004
      %v7065 = vadd.f32 %v7064, %v7012
      %v7066 = vadd.f32 %v7065, %v7020
      %v7067 = vadd.f32 %v6965, %v6973
      %v7068 = vadd.f32 %v7067, %v6981
      %v7069 = vadd.f32 %v7068, %v6989
      %v7070 = vadd.f32 %v7069, %v6997
      %v7071 = vadd.f32 %v7070, %v7005
      %v7072 = vadd.f32 %v7071, %v7013
      %v7073 = vadd.f32 %v7072, %v7021
      %v7074 = vadd.f32 %v6966, %v6974
      %v7075 = vadd.f32 %v7074, %v6982
      %v7076 = vadd.f32 %v7075, %v6990
      %v7077 = vadd.f32 %v7076, %v6998
      %v7078 = vadd.f32 %v7077, %v7006
      %v7079 = vadd.f32 %v7078, %v7014
      %v7080 = vadd.f32 %v7079, %v7022
      %v7081 = vadd.f32 %v6967, %v6975
      %v7082 = vadd.f32 %v7081, %v6983
      %v7083 = vadd.f32 %v7082, %v6991
      %v7084 = vadd.f32 %v7083, %v6999
      %v7085 = vadd.f32 %v7084, %v7007
      %v7086 = vadd.f32 %v7085, %v7015
      %v7087 = vadd.f32 %v7086, %v7023
      %v7088 = vadd.f32 %v7024, %v7038
      %v7089 = vadd.f32 %v7025, %v7045
      %v7090 = vadd.f32 %v7026, %v7052
      %v7091 = vadd.f32 %v7027, %v7059
      %v7092 = vadd.f32 %v7028, %v7066
      %v7093 = vadd.f32 %v7029, %v7073
      %v7094 = vadd.f32 %v7030, %v7080
      %v7095 = vadd.f32 %v7031, %v7087
      %7096 = vst [vmem:[#allocation7] sm:$0xff] %v7088
      %7097 = vst [vmem:[#allocation7 + $0x8] sm:$0xff] %v7089
      %7098 = vst [vmem:[#allocation7 + $0x10] sm:$0xff] %v7090
      %7099 = vst [vmem:[#allocation7 + $0x18] sm:$0xff] %v7091
      %7100 = vst [vmem:[#allocation7 + $0x20] sm:$0xff] %v7092
      %7101 = vst [vmem:[#allocation7 + $0x28] sm:$0xff] %v7093
      %7102 = vst [vmem:[#allocation7 + $0x30] sm:$0xff] %v7094
      %7103 = vst [vmem:[#allocation7 + $0x38] sm:$0xff] %v7095
    $region29: #{tpu_custom_call.1} parent=1 // pred_fallthru
      _
    // Predicated region
    $region30: #{tpu_custom_call.1} parent=1 // pred_check
      _
    $region31: #{tpu_custom_call.1} parent=1 // pred_check_branch
      %7105 = sbr.rel (0) target = $region33
    $region32: #{tpu_custom_call.1} parent=1 // pred_region
      %s7107 = ssub.s32 1024, 1024
      %7108 = vsyncadd [#allocation4], %s7107
      %s7109 = sshll.u32 [#allocation7], 4
      %s7110 = int_to_ptr.vmem [resolvable:$true] %s7109
      %7115 = dma.vmem_to_hbm [thread:$0]  %s7110, 1024, %s2, [#allocation4], 128, 128, 8
    $region33: #{tpu_custom_call.1} parent=1 // pred_fallthru
      _
    // Predicated region
    $region34: #{tpu_custom_call.1} parent=1 // pred_check
      _
    $region35: #{tpu_custom_call.1} parent=1 // pred_check_branch
      %7117 = sbr.rel (0) target = $region37
    $region36: #{tpu_custom_call.1} parent=1 // pred_region
      %7118 = dma.done [#allocation4], 1024
    $region37: #{tpu_custom_call.1} parent=1 // pred_fallthru
      _
    %7119 = vsyncpa [#allocation3], 1
    %7120 = vsyncpa [#allocation6], 1
    %7121 = vsyncpa [#allocation4], 1

</llo_original>
